<compile_context>
chip_gen: v7x
topology: tpu7x:2x2x1
jax: 0.10.0
libtpu: 0.0.40
codegen_flags: <defaults>
</compile_context>

<pallas_src>
import functools
import math

import jax
import jax.numpy as jnp
from jax import lax
from jax.experimental import pallas as pl
from jax.experimental.pallas import tpu as pltpu

_HIGHEST = lax.Precision.HIGHEST


# -----------------------------------------------------------------------------
# Parameter preprocessing (XLA wrapper, not in-kernel): projection_norm_inf
# -----------------------------------------------------------------------------
def projection_norm_inf(W, kappa):
    """Row-wise projection onto the L1 ball of radius `kappa` (only rows whose L1
    norm exceeds it), i.e. enforce ||W||_inf <= kappa.  Vectorized (sort-based)
    equivalent of IGNN's numpy `projection_norm_inf`."""
    abs_w = jnp.abs(W)
    row_l1 = jnp.sum(abs_w, axis=1, keepdims=True)
    u = jnp.sort(abs_w, axis=1)[:, ::-1]                       # descending
    cssv = jnp.cumsum(u, axis=1) - kappa
    k = jnp.arange(1, W.shape[1] + 1, dtype=W.dtype)
    rho = jnp.sum((u * k - cssv) > 0, axis=1, keepdims=True)   # always >= 1
    theta = jnp.take_along_axis(cssv, rho - 1, axis=1) / rho.astype(W.dtype)
    w_proj = jnp.sign(W) * jnp.maximum(abs_w - theta, 0.0)
    return jnp.where(row_l1 > kappa, w_proj, W)


# -----------------------------------------------------------------------------
# Helpers
# -----------------------------------------------------------------------------
def _round_up(x, mult):
    return ((x + mult - 1) // mult) * mult


def _pad2(x, rows, cols):
    return jnp.pad(x, ((0, rows - x.shape[0]), (0, cols - x.shape[1])))


def _vmem_capacity_bytes():
    try:
        info = pltpu.get_tpu_info()
        cap = int(getattr(info, "vmem_capacity_bytes", 0) or 0)
        if cap > 0:
            return cap
    except Exception:
        pass
    return 64 << 20  # conservative default (v7x per-TC VMEM)


# -----------------------------------------------------------------------------
# Pallas kernel: fully VMEM-resident fixed-point solve with real early exit
# -----------------------------------------------------------------------------
def _make_ignn_kernel(*, n_outer, check_every, tol, rel_tol, md, precision, has_x0):
    def mm(a, b):
        return jnp.dot(a.astype(md), b.astype(md),
                       preferred_element_type=jnp.float32, precision=precision)

    def kernel(*refs):
        if has_x0:
            w_ref, a_ref, b_ref, x0_ref, out_ref, x_scr = refs
        else:
            w_ref, a_ref, b_ref, out_ref, x_scr = refs
            x0_ref = None

        # ImplicitFunction: X_0 = b_Omega when no explicit initial iterate is given.
        x_scr[...] = b_ref[...] if x0_ref is None else x0_ref[...]

        def step(X):
            # X_new = relu(W @ X @ A + b_Omega); MXU operands in md, f32 accumulation,
            # bias add / relu / convergence math in f32.
            WX = mm(w_ref[...], X)
            return jnp.maximum(mm(WX, a_ref[...]) + b_ref[...], 0.0)

        def cond(carry):
            it, err, scale = carry
            tol_eff = jnp.maximum(jnp.float32(tol), jnp.float32(rel_tol) * scale)
            return jnp.logical_and(it < n_outer, err >= tol_eff)

        def body(carry):
            it, _, _ = carry
            X = x_scr[...]
            for _ in range(check_every - 1):   # unchecked steps (amortize reduction)
                X = step(X)
            X_new = step(X)
            x_scr[...] = X_new
            err = jnp.max(jnp.abs(X_new - X))      # element-wise inf-norm, f32
            scale = jnp.max(jnp.abs(X_new))
            return it + jnp.int32(1), err, scale

        lax.while_loop(cond, body,
                       (jnp.int32(0), jnp.float32(1e30), jnp.float32(0.0)))
        out_ref[...] = x_scr[...]

    return kernel


# -----------------------------------------------------------------------------
# Wrapper: projection, b_Omega build, padding, VMEM sizing, pallas_call
# -----------------------------------------------------------------------------
def implicit_graph_forward(W, Omega_1, U, A, X_0=None, *,
                           kappa=0.99, A_rho=1.0, fw_mitr=300, tol=3e-6,
                           matmul_dtype=jnp.bfloat16, rel_tol_factor=2.0,
                           check_every=2):
    """ImplicitGraph.forward.  W:(m,m), Omega_1:(m,p), U:(p,n), A:(n,n) dense
    normalized adjacency, X_0:(m,n) or None.  Returns the (m,n) equilibrium
    (same A for support and equilibrium, i.e. the A_orig=None case)."""
    m, p = Omega_1.shape
    n = A.shape[0]
    assert W.shape == (m, m) and U.shape == (p, n) and A.shape == (n, n)

    md = jnp.dtype(matmul_dtype)
    f32 = jnp.float32
    W = W.astype(f32)
    if kappa:  # module: self.k = None when kappa == 0.0 -> no projection
        W = projection_norm_inf(W, kappa / A_rho)

    # b_Omega = support_1 = Omega_1 @ U @ A.  Loop-invariant -> built once in XLA,
    # so Omega_1 / U never occupy VMEM during the fixed-point loop.
    B = jnp.dot(jnp.dot(Omega_1.astype(f32), U.astype(f32), precision=_HIGHEST),
                A.astype(f32), precision=_HIGHEST)

    # Pad m and n to multiples of 128: full MXU output tiles, lane-dense output.
    # Zero padding is exact for this fixed-point map.  (Padding m to 256 does NOT
    # reduce MXU passes on any generation and only doubles VMEM/VPU cost.)
    mp = _round_up(m, 128)
    np_ = _round_up(n, 128)
    W_p = _pad2(W, mp, mp).astype(md)                 # single resident copy, pre-cast
    A_p = _pad2(A.astype(f32), np_, np_).astype(md)
    B_p = _pad2(B, mp, np_)
    has_x0 = X_0 is not None
    operands = [W_p, A_p, B_p]
    if has_x0:
        operands.append(_pad2(X_0.astype(f32), mp, np_))

    # --- generation-aware VMEM sizing (no grid => no double-buffering to pay) ---
    ws = md.itemsize
    est = (mp * mp * ws + np_ * np_ * ws                      # W, A resident
           + (3 + (1 if has_x0 else 0)) * mp * np_ * 4        # B, X0?, out, X scratch
           + 3 * mp * np_ * 4 + 2 * mp * np_ * ws)            # loop temporaries
    cap = _vmem_capacity_bytes()                              # 128 MiB v5e/v6e, 64 MiB v7x
    usable = int(0.85 * cap)                                  # headroom for compiler scratch
    if est > usable:
        # TODO(synk): streamed-A fallback (keep W/X/B resident, pltpu.emit_pipeline
        # over lane blocks of A per iteration; fp8 A on v7x) for n beyond the
        # resident-in-VMEM reach.
        raise NotImplementedError(
            f"resident-in-VMEM design needs ~{est >> 20} MiB > {usable >> 20} MiB usable")
    vmem_limit = int(min(max(est + (4 << 20), 16 << 20), usable))

    # Preserve the <= fw_mitr iteration budget exactly when K does not divide it.
    check_every = int(check_every)
    if check_every < 1 or int(fw_mitr) % check_every != 0:
        check_every = 1
    precision = _HIGHEST if md == jnp.dtype(jnp.float32) else None
    # dtype-scaled relative tolerance: bf16 settles into a ~eps*|X| limit cycle, so a
    # pure absolute 3e-6 threshold would never fire; for f32 this term is << tol.
    rel_tol = float(rel_tol_factor) * float(jnp.finfo(md).eps)

    kernel = _make_ignn_kernel(
        n_outer=int(fw_mitr) // check_every, check_every=check_every,
        tol=float(tol), rel_tol=rel_tol, md=md, precision=precision, has_x0=has_x0)

    out = pl.pallas_call(
        kernel,
        out_shape=jax.ShapeDtypeStruct((mp, np_), jnp.float32),
        in_specs=[pl.BlockSpec(memory_space=pltpu.MemorySpace.VMEM)] * len(operands),
        out_specs=pl.BlockSpec(memory_space=pltpu.MemorySpace.VMEM),
        scratch_shapes=[pltpu.VMEM((mp, np_), jnp.float32)],   # the iterate X
        compiler_params=pltpu.CompilerParams(vmem_limit_bytes=vmem_limit),
    )(*operands)
    return out[:m, :n]


# -----------------------------------------------------------------------------
# Pure-JAX f32 reference (unpadded, per-step convergence check, HIGHEST precision)
# -----------------------------------------------------------------------------
def _reference_forward(W, Omega_1, U, A, X_0=None, *, kappa=0.99, A_rho=1.0,
                       fw_mitr=300, tol=3e-6):
    f32 = jnp.float32
    W = W.astype(f32)
    if kappa:
        W = projection_norm_inf(W, kappa / A_rho)
    Af = A.astype(f32)
    B = jnp.dot(jnp.dot(Omega_1.astype(f32), U.astype(f32), precision=_HIGHEST),
                Af, precision=_HIGHEST)
    X0 = B if X_0 is None else X_0.astype(f32)

    def cond(c):
        it, err, _ = c
        return jnp.logical_and(it < fw_mitr, err >= tol)

    def body(c):
        it, _, X = c
        Xn = jnp.maximum(
            jnp.dot(jnp.dot(W, X, precision=_HIGHEST), Af, precision=_HIGHEST) + B, 0.0)
        return it + 1, jnp.max(jnp.abs(Xn - X)), Xn

    _, _, Xf = lax.while_loop(cond, body, (jnp.int32(0), jnp.float32(1e30), X0))
    return Xf


if __name__ == "__main__":
    key = jax.random.PRNGKey(0)
    p_feat, m_hid, n_nodes = 16, 32, 200          # in_features, out_features, num_node
    kappa, A_rho, fw_mitr, tol = 0.5, 1.0, 100, 3e-6

    k_w, k_o, k_u = jax.random.split(key, 3)
    stdv = 1.0 / math.sqrt(m_hid)                 # module init(): uniform(-stdv, stdv)
    W = jax.random.uniform(k_w, (m_hid, m_hid), jnp.float32, -stdv, stdv)
    Omega_1 = jax.random.uniform(k_o, (m_hid, p_feat), jnp.float32, -stdv, stdv)
    U = jax.random.uniform(k_u, (p_feat, n_nodes), jnp.float32, -1.0, 1.0)

    # Symmetric-normalized adjacency of a ring graph (spectral radius 1 -> the kappa
    # projection guarantees a contraction and the fixed point is well posed).
    idx = jnp.arange(n_nodes)
    Adj = jnp.zeros((n_nodes, n_nodes), jnp.float32)
    Adj = Adj.at[idx, (idx + 1) % n_nodes].set(1.0)
    Adj = Adj.at[(idx + 1) % n_nodes, idx].set(1.0)
    dinv = 1.0 / jnp.sqrt(jnp.sum(Adj, axis=1))
    A = Adj * dinv[:, None] * dinv[None, :]
    X_0 = jnp.zeros((m_hid, n_nodes), jnp.float32)

    common = dict(kappa=kappa, A_rho=A_rho, fw_mitr=fw_mitr, tol=tol)

    # f32 kernel on the X_0=None path (exercises the no-x0 kernel variant).
    out_f32 = implicit_graph_forward(W, Omega_1, U, A, None,
                                     matmul_dtype=jnp.float32, **common)
    # bf16 fast path with an explicit X_0 (exercises the x0 variant + early exit).
    out_bf16 = implicit_graph_forward(W, Omega_1, U, A, X_0,
                                      matmul_dtype=jnp.bfloat16, **common)
    jax.block_until_ready((out_f32, out_bf16))

    ref_fn = jax.jit(functools.partial(_reference_forward, **common))
    ref_none = ref_fn(W, Omega_1, U, A)
    ref_x0 = ref_fn(W, Omega_1, U, A, X_0)
    jax.block_until_ready((ref_none, ref_x0))

    # f32 kernel vs f32 reference: exact-semantics check.
    assert jnp.allclose(out_f32, ref_none, atol=1e-4, rtol=1e-4), \
        "f32 kernel mismatch vs f32 reference"

    # bf16 fast path vs the true f32 fixed point.  Max-norm error budget:
    #   stopping residual (rel_tol_factor*eps*|X|) / (1-kappa)
    # + W/A bf16 quantization bias (~2*eps*|X|) / (1-kappa), with a 2x safety factor.
    eps_bf16 = float(jnp.finfo(jnp.bfloat16).eps)
    scale = float(jnp.max(jnp.abs(ref_x0)))
    budget = 2.0 * (2.0 * eps_bf16 + 2.0 * eps_bf16) * scale / (1.0 - kappa)
    err_bf16 = float(jnp.max(jnp.abs(out_bf16 - ref_x0)))
    assert err_bf16 <= max(budget, 1e-2), \
        f"bf16 kernel drifted from the f32 fixed point: {err_bf16} > {budget}"

    print("KERNEL_OK")
</pallas_src>

<mosaic_0001>
module attributes {stable_mosaic.version = 11 : i64} {
  func.func @kernel(%arg0: memref<128x128xf32, #tpu.memory_space<vmem>>, %arg1: memref<256x256xf32, #tpu.memory_space<vmem>>, %arg2: memref<128x256xf32, #tpu.memory_space<vmem>>, %arg3: memref<128x256xf32, #tpu.memory_space<vmem>>, %arg4: memref<128x256xf32, #tpu.memory_space<vmem>>) attributes {dimension_semantics = [], scalar_prefetch = 0 : i64, scratch_operands = 1 : i64, tpu.core_type = #tpu.core_type<tc>} {
    %c0 = arith.constant 0 : index
    %c0_0 = arith.constant 0 : index
    %0 = vector.load %arg2[%c0, %c0_0] : memref<128x256xf32, #tpu.memory_space<vmem>>, vector<128x256xf32>
    %c0_1 = arith.constant 0 : index
    %c0_2 = arith.constant 0 : index
    %1 = vector.load %arg4[%c0_1, %c0_2] : memref<128x256xf32, #tpu.memory_space<vmem>>, vector<128x256xf32>
    tpu.vector_store %arg4[%c0_1, %c0_2], %0 {strides = array<i32>} : memref<128x256xf32, #tpu.memory_space<vmem>>, vector<128x256xf32>,
    %c0_i32 = arith.constant 0 : i32
    %cst = arith.constant 1.000000e+30 : f32
    %cst_3 = arith.constant 0.000000e+00 : f32
    %2:3 = scf.while (%arg5 = %c0_i32, %arg6 = %cst, %arg7 = %cst_3) : (i32, f32, f32) -> (i32, f32, f32) {
      %cst_8 = arith.constant 2.38418579E-7 : f32
      %5 = arith.mulf %cst_8, %arg7 : f32
      %cst_9 = arith.constant 3.000000e-06 : f32
      %6 = arith.maximumf %cst_9, %5 : f32
      %c50_i32 = arith.constant 50 : i32
      %7 = arith.cmpi slt, %arg5, %c50_i32 : i32
      %8 = arith.cmpf oge, %arg6, %6 : f32
      %9 = arith.andi %7, %8 : i1
      scf.condition(%9) %arg5, %arg6, %arg7 : i32, f32, f32
    } do {
    ^bb0(%arg5: i32, %arg6: f32, %arg7: f32):
      %c0_8 = arith.constant 0 : index
      %c0_9 = arith.constant 0 : index
      %5 = vector.load %arg4[%c0_8, %c0_9] : memref<128x256xf32, #tpu.memory_space<vmem>>, vector<128x256xf32>
      %c0_10 = arith.constant 0 : index
      %c0_11 = arith.constant 0 : index
      %6 = vector.load %arg0[%c0_10, %c0_11] : memref<128x128xf32, #tpu.memory_space<vmem>>, vector<128x128xf32>
      %cst_12 = arith.constant dense<0.000000e+00> : vector<128x256xf32>
      %7 = tpu.matmul %6, %5, %cst_12 {dimension_numbers = #tpu.dot_dimension_numbers<[1], [0], [0], [1], [0, 0, 1, 1], [], []>, precision = #tpu.contract_precision<fp32>} : vector<128x128xf32>, vector<128x256xf32>, vector<128x256xf32> -> vector<128x256xf32>
      %c0_13 = arith.constant 0 : index
      %c0_14 = arith.constant 0 : index
      %8 = vector.load %arg1[%c0_13, %c0_14] : memref<256x256xf32, #tpu.memory_space<vmem>>, vector<256x256xf32>
      %cst_15 = arith.constant dense<0.000000e+00> : vector<128x256xf32>
      %9 = tpu.matmul %7, %8, %cst_15 {dimension_numbers = #tpu.dot_dimension_numbers<[1], [0], [0], [1], [0, 0, 1, 1], [], []>, precision = #tpu.contract_precision<fp32>} : vector<128x256xf32>, vector<256x256xf32>, vector<128x256xf32> -> vector<128x256xf32>
      %c0_16 = arith.constant 0 : index
      %c0_17 = arith.constant 0 : index
      %10 = vector.load %arg2[%c0_16, %c0_17] : memref<128x256xf32, #tpu.memory_space<vmem>>, vector<128x256xf32>
      %11 = arith.addf %9, %10 : vector<128x256xf32>
      %cst_18 = arith.constant 0.000000e+00 : f32
      %12 = vector.broadcast %cst_18 : f32 to vector<128x256xf32>
      %13 = arith.maximumf %11, %12 : vector<128x256xf32>
      %c0_19 = arith.constant 0 : index
      %c0_20 = arith.constant 0 : index
      %14 = vector.load %arg0[%c0_19, %c0_20] : memref<128x128xf32, #tpu.memory_space<vmem>>, vector<128x128xf32>
      %cst_21 = arith.constant dense<0.000000e+00> : vector<128x256xf32>
      %15 = tpu.matmul %14, %13, %cst_21 {dimension_numbers = #tpu.dot_dimension_numbers<[1], [0], [0], [1], [0, 0, 1, 1], [], []>, precision = #tpu.contract_precision<fp32>} : vector<128x128xf32>, vector<128x256xf32>, vector<128x256xf32> -> vector<128x256xf32>
      %c0_22 = arith.constant 0 : index
      %c0_23 = arith.constant 0 : index
      %16 = vector.load %arg1[%c0_22, %c0_23] : memref<256x256xf32, #tpu.memory_space<vmem>>, vector<256x256xf32>
      %cst_24 = arith.constant dense<0.000000e+00> : vector<128x256xf32>
      %17 = tpu.matmul %15, %16, %cst_24 {dimension_numbers = #tpu.dot_dimension_numbers<[1], [0], [0], [1], [0, 0, 1, 1], [], []>, precision = #tpu.contract_precision<fp32>} : vector<128x256xf32>, vector<256x256xf32>, vector<128x256xf32> -> vector<128x256xf32>
      %c0_25 = arith.constant 0 : index
      %c0_26 = arith.constant 0 : index
      %18 = vector.load %arg2[%c0_25, %c0_26] : memref<128x256xf32, #tpu.memory_space<vmem>>, vector<128x256xf32>
      %19 = arith.addf %17, %18 : vector<128x256xf32>
      %cst_27 = arith.constant 0.000000e+00 : f32
      %20 = vector.broadcast %cst_27 : f32 to vector<128x256xf32>
      %21 = arith.maximumf %19, %20 : vector<128x256xf32>
      %c0_28 = arith.constant 0 : index
      %c0_29 = arith.constant 0 : index
      %22 = vector.load %arg4[%c0_28, %c0_29] : memref<128x256xf32, #tpu.memory_space<vmem>>, vector<128x256xf32>
      tpu.vector_store %arg4[%c0_28, %c0_29], %21 {strides = array<i32>} : memref<128x256xf32, #tpu.memory_space<vmem>>, vector<128x256xf32>,
      %23 = arith.subf %21, %13 : vector<128x256xf32>
      %24 = math.absf %23 : vector<128x256xf32>
      %25 = vector.shape_cast %24 : vector<128x256xf32> to vector<1x128x256xf32>
      %cst_30 = arith.constant dense<0xFF800000> : vector<1xf32>
      %26 = vector.multi_reduction <maximumf>, %25, %cst_30 [1, 2] : vector<1x128x256xf32> to vector<1xf32>
      %27 = vector.shape_cast %26 : vector<1xf32> to vector<1x1x1xf32>
      %28 = vector.extract %27[0, 0, 0] : f32 from vector<1x1x1xf32>
      %29 = math.absf %21 : vector<128x256xf32>
      %30 = vector.shape_cast %29 : vector<128x256xf32> to vector<1x128x256xf32>
      %cst_31 = arith.constant dense<0xFF800000> : vector<1xf32>
      %31 = vector.multi_reduction <maximumf>, %30, %cst_31 [1, 2] : vector<1x128x256xf32> to vector<1xf32>
      %32 = vector.shape_cast %31 : vector<1xf32> to vector<1x1x1xf32>
      %33 = vector.extract %32[0, 0, 0] : f32 from vector<1x1x1xf32>
      %c1_i32 = arith.constant 1 : i32
      %34 = arith.addi %arg5, %c1_i32 : i32
      scf.yield %34, %28, %33 : i32, f32, f32
    }
    %c0_4 = arith.constant 0 : index
    %c0_5 = arith.constant 0 : index
    %3 = vector.load %arg4[%c0_4, %c0_5] : memref<128x256xf32, #tpu.memory_space<vmem>>, vector<128x256xf32>
    %c0_6 = arith.constant 0 : index
    %c0_7 = arith.constant 0 : index
    %4 = vector.load %arg3[%c0_6, %c0_7] : memref<128x256xf32, #tpu.memory_space<vmem>>, vector<128x256xf32>
    tpu.vector_store %arg3[%c0_6, %c0_7], %3 {strides = array<i32>} : memref<128x256xf32, #tpu.memory_space<vmem>>, vector<128x256xf32>,
    return
  }
}

</mosaic_0001>

<llo_original>
// kernel: tpu_custom_call.1
$region0: #{tpu_custom_call.1}
  #allocation0 [shape = 'u32[]', space=smem, size = 0x4, offset = 0x4, fixed_abs, tag = 'smem constant byte address 0x4 - core index']
  #allocation1 [shape = 'u32[144,128]{1,0:T(1,128)}', space=vmem, size = 0x12000, scoped, tag = 'internal scratch']
  #allocation2 [shape = 'f32[128,256]{1,0:T(8,128)}', space=vmem, size = 0x20000, scoped, tag = 'scratch operand']
  %s0 = inlined_call_operand.hbm [shape: f32[128,128], index: 0, kind: input, shape index: {}]
  %s1 = inlined_call_operand.hbm [shape: f32[256,256], index: 1, kind: input, shape index: {}]
  %s2 = inlined_call_operand.hbm [shape: f32[128,256], index: 2, kind: input, shape index: {}]
  %s3 = inlined_call_operand.hbm [shape: f32[128,256], index: 3, kind: output, shape index: {}]
  %s4 = sld [smem:[#allocation0]]
  $region41: #{tpu_custom_call.1} parent=0
    _
  %s6 = ssub.s32 1, %s4
  %s7 = scalar_select 0, %s6, %s4
  $region1: #{tpu_custom_call.1} parent=0
    #allocation3 [shape = 'u8[65536]{0}', space=vmem, size = 0x10000, scoped, tag = 'input window, operand 0, single buffered']
    #allocation4 [shape = 's32[1]{0}', space=sflag, size = 0x4, scoped, tag = 'scoped memory for tpu_custom_call.1']
    #allocation5 [shape = 's32[1]{0}', space=sflag, size = 0x4, scoped, tag = 'scoped memory for tpu_custom_call.1']
    #allocation6 [shape = 'u8[262144]{0}', space=vmem, size = 0x40000, scoped, tag = 'input window, operand 1, single buffered']
    #allocation7 [shape = 's32[1]{0}', space=sflag, size = 0x4, scoped, tag = 'scoped memory for tpu_custom_call.1']
    #allocation8 [shape = 'u8[131072]{0}', space=vmem, size = 0x20000, scoped, tag = 'input window, operand 2, single buffered']
    #allocation9 [shape = 'u8[131072]{0}', space=vmem, size = 0x20000, scoped, tag = 'output window, operand 0, single buffered']
    %8 = vsyncpa [#allocation4], 0
    %9 = vsyncpa [#allocation7], 0
    %10 = vsyncpa [#allocation5], 0
    // Predicated region
    $region2: #{tpu_custom_call.1} parent=1 // pred_check
      _
    $region3: #{tpu_custom_call.1} parent=1 // pred_check_branch
      %12 = sbr.rel (0) target = $region5
    $region4: #{tpu_custom_call.1} parent=1 // pred_region
      %s14 = ssub.s32 2048, 2048
      %15 = vsyncadd [#allocation4], %s14
      %s16 = sshll.u32 [#allocation3], 4
      %s17 = int_to_ptr.vmem [resolvable:$true] %s16
      %22 = dma.hbm_to_vmem [thread:$0]  %s0, 2048, %s17, [#allocation4], 128, 128, 8
    $region5: #{tpu_custom_call.1} parent=1 // pred_fallthru
      _
    // Predicated region
    $region6: #{tpu_custom_call.1} parent=1 // pred_check
      _
    $region7: #{tpu_custom_call.1} parent=1 // pred_check_branch
      %24 = sbr.rel (0) target = $region9
    $region8: #{tpu_custom_call.1} parent=1 // pred_region
      %s26 = ssub.s32 8192, 8192
      %27 = vsyncadd [#allocation7], %s26
      %s28 = sshll.u32 [#allocation6], 4
      %s29 = int_to_ptr.vmem [resolvable:$true] %s28
      %34 = dma.hbm_to_vmem [thread:$0]  %s1, 8192, %s29, [#allocation7], 256, 256, 16
    $region9: #{tpu_custom_call.1} parent=1 // pred_fallthru
      _
    // Predicated region
    $region10: #{tpu_custom_call.1} parent=1 // pred_check
      _
    $region11: #{tpu_custom_call.1} parent=1 // pred_check_branch
      %36 = sbr.rel (0) target = $region13
    $region12: #{tpu_custom_call.1} parent=1 // pred_region
      %s38 = ssub.s32 4096, 4096
      %39 = vsyncadd [#allocation7], %s38
      %s40 = sshll.u32 [#allocation8], 4
      %s41 = int_to_ptr.vmem [resolvable:$true] %s40
      %46 = dma.hbm_to_vmem [thread:$0]  %s2, 4096, %s41, [#allocation7], 256, 256, 16
    $region13: #{tpu_custom_call.1} parent=1 // pred_fallthru
      _
    // Predicated region
    $region14: #{tpu_custom_call.1} parent=1 // pred_check
      _
    $region15: #{tpu_custom_call.1} parent=1 // pred_check_branch
      %48 = sbr.rel (0) target = $region17
    $region16: #{tpu_custom_call.1} parent=1 // pred_region
      %49 = dma.done [#allocation4], 2048
    $region17: #{tpu_custom_call.1} parent=1 // pred_fallthru
      _
    // Predicated region
    $region18: #{tpu_custom_call.1} parent=1 // pred_check
      _
    $region19: #{tpu_custom_call.1} parent=1 // pred_check_branch
      %51 = sbr.rel (0) target = $region21
    $region20: #{tpu_custom_call.1} parent=1 // pred_region
      %52 = dma.done [#allocation7], 8192
    $region21: #{tpu_custom_call.1} parent=1 // pred_fallthru
      _
    // Predicated region
    $region22: #{tpu_custom_call.1} parent=1 // pred_check
      _
    $region23: #{tpu_custom_call.1} parent=1 // pred_check_branch
      %54 = sbr.rel (0) target = $region25
    $region24: #{tpu_custom_call.1} parent=1 // pred_region
      %55 = dma.done [#allocation7], 4096
    $region25: #{tpu_custom_call.1} parent=1 // pred_fallthru
      _
    %v56 = vld [vmem:[#allocation8] sm:$0xff]
    %v57 = vld [vmem:[#allocation8 + $0x8] sm:$0xff]
    %v58 = vld [vmem:[#allocation8 + $0x10] sm:$0xff]
    %v59 = vld [vmem:[#allocation8 + $0x18] sm:$0xff]
    %v60 = vld [vmem:[#allocation8 + $0x20] sm:$0xff]
    %v61 = vld [vmem:[#allocation8 + $0x28] sm:$0xff]
    %v62 = vld [vmem:[#allocation8 + $0x30] sm:$0xff]
    %v63 = vld [vmem:[#allocation8 + $0x38] sm:$0xff]
    %v64 = vld [vmem:[#allocation8 + $0x40] sm:$0xff]
    %v65 = vld [vmem:[#allocation8 + $0x48] sm:$0xff]
    %v66 = vld [vmem:[#allocation8 + $0x50] sm:$0xff]
    %v67 = vld [vmem:[#allocation8 + $0x58] sm:$0xff]
    %v68 = vld [vmem:[#allocation8 + $0x60] sm:$0xff]
    %v69 = vld [vmem:[#allocation8 + $0x68] sm:$0xff]
    %v70 = vld [vmem:[#allocation8 + $0x70] sm:$0xff]
    %v71 = vld [vmem:[#allocation8 + $0x78] sm:$0xff]
    %v72 = vld [vmem:[#allocation8 + $0x80] sm:$0xff]
    %v73 = vld [vmem:[#allocation8 + $0x88] sm:$0xff]
    %v74 = vld [vmem:[#allocation8 + $0x90] sm:$0xff]
    %v75 = vld [vmem:[#allocation8 + $0x98] sm:$0xff]
    %v76 = vld [vmem:[#allocation8 + $0xa0] sm:$0xff]
    %v77 = vld [vmem:[#allocation8 + $0xa8] sm:$0xff]
    %v78 = vld [vmem:[#allocation8 + $0xb0] sm:$0xff]
    %v79 = vld [vmem:[#allocation8 + $0xb8] sm:$0xff]
    %v80 = vld [vmem:[#allocation8 + $0xc0] sm:$0xff]
    %v81 = vld [vmem:[#allocation8 + $0xc8] sm:$0xff]
    %v82 = vld [vmem:[#allocation8 + $0xd0] sm:$0xff]
    %v83 = vld [vmem:[#allocation8 + $0xd8] sm:$0xff]
    %v84 = vld [vmem:[#allocation8 + $0xe0] sm:$0xff]
    %v85 = vld [vmem:[#allocation8 + $0xe8] sm:$0xff]
    %v86 = vld [vmem:[#allocation8 + $0xf0] sm:$0xff]
    %v87 = vld [vmem:[#allocation8 + $0xf8] sm:$0xff]
    %88 = vst [vmem:[#allocation2] sm:$0xff] %v56
    %89 = vst [vmem:[#allocation2 + $0x8] sm:$0xff] %v57
    %90 = vst [vmem:[#allocation2 + $0x10] sm:$0xff] %v58
    %91 = vst [vmem:[#allocation2 + $0x18] sm:$0xff] %v59
    %92 = vst [vmem:[#allocation2 + $0x20] sm:$0xff] %v60
    %93 = vst [vmem:[#allocation2 + $0x28] sm:$0xff] %v61
    %94 = vst [vmem:[#allocation2 + $0x30] sm:$0xff] %v62
    %95 = vst [vmem:[#allocation2 + $0x38] sm:$0xff] %v63
    %96 = vst [vmem:[#allocation2 + $0x40] sm:$0xff] %v64
    %97 = vst [vmem:[#allocation2 + $0x48] sm:$0xff] %v65
    %98 = vst [vmem:[#allocation2 + $0x50] sm:$0xff] %v66
    %99 = vst [vmem:[#allocation2 + $0x58] sm:$0xff] %v67
    %100 = vst [vmem:[#allocation2 + $0x60] sm:$0xff] %v68
    %101 = vst [vmem:[#allocation2 + $0x68] sm:$0xff] %v69
    %102 = vst [vmem:[#allocation2 + $0x70] sm:$0xff] %v70
    %103 = vst [vmem:[#allocation2 + $0x78] sm:$0xff] %v71
    %104 = vst [vmem:[#allocation2 + $0x80] sm:$0xff] %v72
    %105 = vst [vmem:[#allocation2 + $0x88] sm:$0xff] %v73
    %106 = vst [vmem:[#allocation2 + $0x90] sm:$0xff] %v74
    %107 = vst [vmem:[#allocation2 + $0x98] sm:$0xff] %v75
    %108 = vst [vmem:[#allocation2 + $0xa0] sm:$0xff] %v76
    %109 = vst [vmem:[#allocation2 + $0xa8] sm:$0xff] %v77
    %110 = vst [vmem:[#allocation2 + $0xb0] sm:$0xff] %v78
    %111 = vst [vmem:[#allocation2 + $0xb8] sm:$0xff] %v79
    %112 = vst [vmem:[#allocation2 + $0xc0] sm:$0xff] %v80
    %113 = vst [vmem:[#allocation2 + $0xc8] sm:$0xff] %v81
    %114 = vst [vmem:[#allocation2 + $0xd0] sm:$0xff] %v82
    %115 = vst [vmem:[#allocation2 + $0xd8] sm:$0xff] %v83
    %116 = vst [vmem:[#allocation2 + $0xe0] sm:$0xff] %v84
    %117 = vst [vmem:[#allocation2 + $0xe8] sm:$0xff] %v85
    %118 = vst [vmem:[#allocation2 + $0xf0] sm:$0xff] %v86
    %119 = vst [vmem:[#allocation2 + $0xf8] sm:$0xff] %v87
    // While loop
    $region26: #{tpu_custom_call.1} parent=1 // loop_pre_header
      _
    $region27: #{tpu_custom_call.1} parent=1 // loop_header
      %s121 = sphi 0, %s8156
      %s122 = sphi 1e+30, %s8083
      %s123 = sphi 0.0, %s8155
      %s124 = smul.f32 %s123, 2.3841858e-07
      %s125 = smax.f32 %s124, 3e-06
      %p126 = scmp.lt.s32.totalorder %s121, 50
      %p127 = scmp.ge.f32.partialorder %s122, %s125
      %p128 = pnand %p126, %p127
      %p129 = pneg %p128
    $region28: #{tpu_custom_call.1} parent=1 // loop_header_branch
      %131 = sbr.rel (%p128) target = $region32
    $region29: #{tpu_custom_call.1} parent=1 // loop_body
      %v132 = vld [vmem:[#allocation2] sm:$0xff]
      %v133 = vld [vmem:[#allocation2 + $0x8] sm:$0xff]
      %v134 = vld [vmem:[#allocation2 + $0x10] sm:$0xff]
      %v135 = vld [vmem:[#allocation2 + $0x18] sm:$0xff]
      %v136 = vld [vmem:[#allocation2 + $0x20] sm:$0xff]
      %v137 = vld [vmem:[#allocation2 + $0x28] sm:$0xff]
      %v138 = vld [vmem:[#allocation2 + $0x30] sm:$0xff]
      %v139 = vld [vmem:[#allocation2 + $0x38] sm:$0xff]
      %v140 = vld [vmem:[#allocation2 + $0x40] sm:$0xff]
      %v141 = vld [vmem:[#allocation2 + $0x48] sm:$0xff]
      %v142 = vld [vmem:[#allocation2 + $0x50] sm:$0xff]
      %v143 = vld [vmem:[#allocation2 + $0x58] sm:$0xff]
      %v144 = vld [vmem:[#allocation2 + $0x60] sm:$0xff]
      %v145 = vld [vmem:[#allocation2 + $0x68] sm:$0xff]
      %v146 = vld [vmem:[#allocation2 + $0x70] sm:$0xff]
      %v147 = vld [vmem:[#allocation2 + $0x78] sm:$0xff]
      %v148 = vld [vmem:[#allocation2 + $0x80] sm:$0xff]
      %v149 = vld [vmem:[#allocation2 + $0x88] sm:$0xff]
      %v150 = vld [vmem:[#allocation2 + $0x90] sm:$0xff]
      %v151 = vld [vmem:[#allocation2 + $0x98] sm:$0xff]
      %v152 = vld [vmem:[#allocation2 + $0xa0] sm:$0xff]
      %v153 = vld [vmem:[#allocation2 + $0xa8] sm:$0xff]
      %v154 = vld [vmem:[#allocation2 + $0xb0] sm:$0xff]
      %v155 = vld [vmem:[#allocation2 + $0xb8] sm:$0xff]
      %v156 = vld [vmem:[#allocation2 + $0xc0] sm:$0xff]
      %v157 = vld [vmem:[#allocation2 + $0xc8] sm:$0xff]
      %v158 = vld [vmem:[#allocation2 + $0xd0] sm:$0xff]
      %v159 = vld [vmem:[#allocation2 + $0xd8] sm:$0xff]
      %v160 = vld [vmem:[#allocation2 + $0xe0] sm:$0xff]
      %v161 = vld [vmem:[#allocation2 + $0xe8] sm:$0xff]
      %v162 = vld [vmem:[#allocation2 + $0xf0] sm:$0xff]
      %v163 = vld [vmem:[#allocation2 + $0xf8] sm:$0xff]
      %v164 = vld [vmem:[#allocation3] sm:$0xff]
      %v165 = vld [vmem:[#allocation3 + $0x8] sm:$0xff]
      %v166 = vld [vmem:[#allocation3 + $0x10] sm:$0xff]
      %v167 = vld [vmem:[#allocation3 + $0x18] sm:$0xff]
      %v168 = vld [vmem:[#allocation3 + $0x20] sm:$0xff]
      %v169 = vld [vmem:[#allocation3 + $0x28] sm:$0xff]
      %v170 = vld [vmem:[#allocation3 + $0x30] sm:$0xff]
      %v171 = vld [vmem:[#allocation3 + $0x38] sm:$0xff]
      %v172 = vld [vmem:[#allocation3 + $0x40] sm:$0xff]
      %v173 = vld [vmem:[#allocation3 + $0x48] sm:$0xff]
      %v174 = vld [vmem:[#allocation3 + $0x50] sm:$0xff]
      %v175 = vld [vmem:[#allocation3 + $0x58] sm:$0xff]
      %v176 = vld [vmem:[#allocation3 + $0x60] sm:$0xff]
      %v177 = vld [vmem:[#allocation3 + $0x68] sm:$0xff]
      %v178 = vld [vmem:[#allocation3 + $0x70] sm:$0xff]
      %v179 = vld [vmem:[#allocation3 + $0x78] sm:$0xff]
      %v180 = vand.u32 %v133, 4294901760
      %181 = vmatprep.subr.mxu0 %v180
      %v182 = vand.u32 %v132, 4294901760
      %183 = vmatpush1.msra.mxu0 %v182
      %v184 = vand.u32 %v135, 4294901760
      %185 = vmatprep.subr.mxu0 %v184
      %v186 = vand.u32 %v134, 4294901760
      %187 = vmatpush1.msra.mxu0 %v186
      %v188 = vand.u32 %v137, 4294901760
      %189 = vmatprep.subr.mxu0 %v188
      %v190 = vand.u32 %v136, 4294901760
      %191 = vmatpush1.msra.mxu0 %v190
      %v192 = vand.u32 %v139, 4294901760
      %193 = vmatprep.subr.mxu0 %v192
      %v194 = vand.u32 %v138, 4294901760
      %195 = vmatpush1.msra.mxu0 %v194
      %v196 = vand.u32 %v141, 4294901760
      %197 = vmatprep.subr.mxu0 %v196
      %v198 = vand.u32 %v140, 4294901760
      %199 = vmatpush1.msra.mxu0 %v198
      %v200 = vand.u32 %v143, 4294901760
      %201 = vmatprep.subr.mxu0 %v200
      %v202 = vand.u32 %v142, 4294901760
      %203 = vmatpush1.msra.mxu0 %v202
      %v204 = vand.u32 %v145, 4294901760
      %205 = vmatprep.subr.mxu0 %v204
      %v206 = vand.u32 %v144, 4294901760
      %207 = vmatpush1.msra.mxu0 %v206
      %v208 = vand.u32 %v147, 4294901760
      %209 = vmatprep.subr.mxu0 %v208
      %v210 = vand.u32 %v146, 4294901760
      %211 = vmatpush1.msra.mxu0 %v210
      %v212 = vand.u32 %v149, 4294901760
      %213 = vmatprep.subr.mxu0 %v212
      %v214 = vand.u32 %v148, 4294901760
      %215 = vmatpush1.msra.mxu0 %v214
      %v216 = vand.u32 %v151, 4294901760
      %217 = vmatprep.subr.mxu0 %v216
      %v218 = vand.u32 %v150, 4294901760
      %219 = vmatpush1.msra.mxu0 %v218
      %v220 = vand.u32 %v153, 4294901760
      %221 = vmatprep.subr.mxu0 %v220
      %v222 = vand.u32 %v152, 4294901760
      %223 = vmatpush1.msra.mxu0 %v222
      %v224 = vand.u32 %v155, 4294901760
      %225 = vmatprep.subr.mxu0 %v224
      %v226 = vand.u32 %v154, 4294901760
      %227 = vmatpush1.msra.mxu0 %v226
      %v228 = vand.u32 %v157, 4294901760
      %229 = vmatprep.subr.mxu0 %v228
      %v230 = vand.u32 %v156, 4294901760
      %231 = vmatpush1.msra.mxu0 %v230
      %v232 = vand.u32 %v159, 4294901760
      %233 = vmatprep.subr.mxu0 %v232
      %v234 = vand.u32 %v158, 4294901760
      %235 = vmatpush1.msra.mxu0 %v234
      %v236 = vand.u32 %v161, 4294901760
      %237 = vmatprep.subr.mxu0 %v236
      %v238 = vand.u32 %v160, 4294901760
      %239 = vmatpush1.msra.mxu0 %v238
      %v240 = vand.u32 %v163, 4294901760
      %241 = vmatprep.subr.mxu0 %v240
      %v242 = vand.u32 %v162, 4294901760
      %243 = vmatpush1.msra.mxu0 %v242
      %244 = vmatprep.subr.mxu0 0.0
      %245 = vmatpush1.msra.mxu0 0.0
      %246 = vmatprep.subr.mxu0 0.0
      %247 = vmatpush1.msra.mxu0 0.0
      %248 = vmatprep.subr.mxu0 0.0
      %249 = vmatpush1.msra.mxu0 0.0
      %250 = vmatprep.subr.mxu0 0.0
      %251 = vmatpush1.msra.mxu0 0.0
      %252 = vmatprep.subr.mxu0 0.0
      %253 = vmatpush1.msra.mxu0 0.0
      %254 = vmatprep.subr.mxu0 0.0
      %255 = vmatpush1.msra.mxu0 0.0
      %256 = vmatprep.subr.mxu0 0.0
      %257 = vmatpush1.msra.mxu0 0.0
      %258 = vmatprep.subr.mxu0 0.0
      %259 = vmatpush1.msra.mxu0 0.0
      %260 = vmatprep.subr.mxu0 0.0
      %261 = vmatpush1.msra.mxu0 0.0
      %262 = vmatprep.subr.mxu0 0.0
      %263 = vmatpush1.msra.mxu0 0.0
      %264 = vmatprep.subr.mxu0 0.0
      %265 = vmatpush1.msra.mxu0 0.0
      %266 = vmatprep.subr.mxu0 0.0
      %267 = vmatpush1.msra.mxu0 0.0
      %268 = vmatprep.subr.mxu0 0.0
      %269 = vmatpush1.msra.mxu0 0.0
      %270 = vmatprep.subr.mxu0 0.0
      %271 = vmatpush1.msra.mxu0 0.0
      %272 = vmatprep.subr.mxu0 0.0
      %273 = vmatpush1.msra.mxu0 0.0
      %274 = vmatprep.subr.mxu0 0.0
      %275 = vmatpush1.msra.mxu0 0.0
      %276 = vmatprep.mubr.f32.mxu0 0.0
      %v277 = vand.u32 %v164, 4294901760
      %v278 = vsub.f32 %v164, %v277
      %v279 = vand.u32 %v278, 4294901760
      %v280 = vsub.f32 %v278, %v279
      %v281 = vand.u32 %v280, 4294901760
      %282 = vmatmul.mubr.f32.gmra.mrb[0].mxu0 %v281
      %v283 = vpop.f32.mrb[0].mxu0
      %v284 = vadd.f32 0.0, %v283
      %v285 = vpop.f32.mrb[0].mxu0
      %v286 = vadd.f32 0.0, %v285
      %287 = vmatprep.mubr.f32.mxu0 0.0
      %v288 = vand.u32 %v165, 4294901760
      %v289 = vsub.f32 %v165, %v288
      %v290 = vand.u32 %v289, 4294901760
      %v291 = vsub.f32 %v289, %v290
      %v292 = vand.u32 %v291, 4294901760
      %293 = vmatmul.mubr.f32.gmra.mrb[0].mxu0 %v292
      %v294 = vpop.f32.mrb[0].mxu0
      %v295 = vadd.f32 0.0, %v294
      %v296 = vpop.f32.mrb[0].mxu0
      %v297 = vadd.f32 0.0, %v296
      %298 = vmatprep.mubr.f32.mxu0 0.0
      %v299 = vand.u32 %v166, 4294901760
      %v300 = vsub.f32 %v166, %v299
      %v301 = vand.u32 %v300, 4294901760
      %v302 = vsub.f32 %v300, %v301
      %v303 = vand.u32 %v302, 4294901760
      %304 = vmatmul.mubr.f32.gmra.mrb[0].mxu0 %v303
      %v305 = vpop.f32.mrb[0].mxu0
      %v306 = vadd.f32 0.0, %v305
      %v307 = vpop.f32.mrb[0].mxu0
      %v308 = vadd.f32 0.0, %v307
      %309 = vmatprep.mubr.f32.mxu0 0.0
      %v310 = vand.u32 %v167, 4294901760
      %v311 = vsub.f32 %v167, %v310
      %v312 = vand.u32 %v311, 4294901760
      %v313 = vsub.f32 %v311, %v312
      %v314 = vand.u32 %v313, 4294901760
      %315 = vmatmul.mubr.f32.gmra.mrb[0].mxu0 %v314
      %v316 = vpop.f32.mrb[0].mxu0
      %v317 = vadd.f32 0.0, %v316
      %v318 = vpop.f32.mrb[0].mxu0
      %v319 = vadd.f32 0.0, %v318
      %320 = vmatprep.mubr.f32.mxu0 0.0
      %v321 = vand.u32 %v168, 4294901760
      %v322 = vsub.f32 %v168, %v321
      %v323 = vand.u32 %v322, 4294901760
      %v324 = vsub.f32 %v322, %v323
      %v325 = vand.u32 %v324, 4294901760
      %326 = vmatmul.mubr.f32.gmra.mrb[0].mxu0 %v325
      %v327 = vpop.f32.mrb[0].mxu0
      %v328 = vadd.f32 0.0, %v327
      %v329 = vpop.f32.mrb[0].mxu0
      %v330 = vadd.f32 0.0, %v329
      %331 = vmatprep.mubr.f32.mxu0 0.0
      %v332 = vand.u32 %v169, 4294901760
      %v333 = vsub.f32 %v169, %v332
      %v334 = vand.u32 %v333, 4294901760
      %v335 = vsub.f32 %v333, %v334
      %v336 = vand.u32 %v335, 4294901760
      %337 = vmatmul.mubr.f32.gmra.mrb[0].mxu0 %v336
      %v338 = vpop.f32.mrb[0].mxu0
      %v339 = vadd.f32 0.0, %v338
      %v340 = vpop.f32.mrb[0].mxu0
      %v341 = vadd.f32 0.0, %v340
      %342 = vmatprep.mubr.f32.mxu0 0.0
      %v343 = vand.u32 %v170, 4294901760
      %v344 = vsub.f32 %v170, %v343
      %v345 = vand.u32 %v344, 4294901760
      %v346 = vsub.f32 %v344, %v345
      %v347 = vand.u32 %v346, 4294901760
      %348 = vmatmul.mubr.f32.gmra.mrb[0].mxu0 %v347
      %v349 = vpop.f32.mrb[0].mxu0
      %v350 = vadd.f32 0.0, %v349
      %v351 = vpop.f32.mrb[0].mxu0
      %v352 = vadd.f32 0.0, %v351
      %353 = vmatprep.mubr.f32.mxu0 0.0
      %v354 = vand.u32 %v171, 4294901760
      %v355 = vsub.f32 %v171, %v354
      %v356 = vand.u32 %v355, 4294901760
      %v357 = vsub.f32 %v355, %v356
      %v358 = vand.u32 %v357, 4294901760
      %359 = vmatmul.mubr.f32.gmra.mrb[0].mxu0 %v358
      %v360 = vpop.f32.mrb[0].mxu0
      %v361 = vadd.f32 0.0, %v360
      %v362 = vpop.f32.mrb[0].mxu0
      %v363 = vadd.f32 0.0, %v362
      %364 = vmatprep.mubr.f32.mxu0 0.0
      %v365 = vand.u32 %v172, 4294901760
      %v366 = vsub.f32 %v172, %v365
      %v367 = vand.u32 %v366, 4294901760
      %v368 = vsub.f32 %v366, %v367
      %v369 = vand.u32 %v368, 4294901760
      %370 = vmatmul.mubr.f32.gmra.mrb[0].mxu0 %v369
      %v371 = vpop.f32.mrb[0].mxu0
      %v372 = vadd.f32 0.0, %v371
      %v373 = vpop.f32.mrb[0].mxu0
      %v374 = vadd.f32 0.0, %v373
      %375 = vmatprep.mubr.f32.mxu0 0.0
      %v376 = vand.u32 %v173, 4294901760
      %v377 = vsub.f32 %v173, %v376
      %v378 = vand.u32 %v377, 4294901760
      %v379 = vsub.f32 %v377, %v378
      %v380 = vand.u32 %v379, 4294901760
      %381 = vmatmul.mubr.f32.gmra.mrb[0].mxu0 %v380
      %v382 = vpop.f32.mrb[0].mxu0
      %v383 = vadd.f32 0.0, %v382
      %v384 = vpop.f32.mrb[0].mxu0
      %v385 = vadd.f32 0.0, %v384
      %386 = vmatprep.mubr.f32.mxu0 0.0
      %v387 = vand.u32 %v174, 4294901760
      %v388 = vsub.f32 %v174, %v387
      %v389 = vand.u32 %v388, 4294901760
      %v390 = vsub.f32 %v388, %v389
      %v391 = vand.u32 %v390, 4294901760
      %392 = vmatmul.mubr.f32.gmra.mrb[0].mxu0 %v391
      %v393 = vpop.f32.mrb[0].mxu0
      %v394 = vadd.f32 0.0, %v393
      %v395 = vpop.f32.mrb[0].mxu0
      %v396 = vadd.f32 0.0, %v395
      %397 = vmatprep.mubr.f32.mxu0 0.0
      %v398 = vand.u32 %v175, 4294901760
      %v399 = vsub.f32 %v175, %v398
      %v400 = vand.u32 %v399, 4294901760
      %v401 = vsub.f32 %v399, %v400
      %v402 = vand.u32 %v401, 4294901760
      %403 = vmatmul.mubr.f32.gmra.mrb[0].mxu0 %v402
      %v404 = vpop.f32.mrb[0].mxu0
      %v405 = vadd.f32 0.0, %v404
      %v406 = vpop.f32.mrb[0].mxu0
      %v407 = vadd.f32 0.0, %v406
      %408 = vmatprep.mubr.f32.mxu0 0.0
      %v409 = vand.u32 %v176, 4294901760
      %v410 = vsub.f32 %v176, %v409
      %v411 = vand.u32 %v410, 4294901760
      %v412 = vsub.f32 %v410, %v411
      %v413 = vand.u32 %v412, 4294901760
      %414 = vmatmul.mubr.f32.gmra.mrb[0].mxu0 %v413
      %v415 = vpop.f32.mrb[0].mxu0
      %v416 = vadd.f32 0.0, %v415
      %v417 = vpop.f32.mrb[0].mxu0
      %v418 = vadd.f32 0.0, %v417
      %419 = vmatprep.mubr.f32.mxu0 0.0
      %v420 = vand.u32 %v177, 4294901760
      %v421 = vsub.f32 %v177, %v420
      %v422 = vand.u32 %v421, 4294901760
      %v423 = vsub.f32 %v421, %v422
      %v424 = vand.u32 %v423, 4294901760
      %425 = vmatmul.mubr.f32.gmra.mrb[0].mxu0 %v424
      %v426 = vpop.f32.mrb[0].mxu0
      %v427 = vadd.f32 0.0, %v426
      %v428 = vpop.f32.mrb[0].mxu0
      %v429 = vadd.f32 0.0, %v428
      %430 = vmatprep.mubr.f32.mxu0 0.0
      %v431 = vand.u32 %v178, 4294901760
      %v432 = vsub.f32 %v178, %v431
      %v433 = vand.u32 %v432, 4294901760
      %v434 = vsub.f32 %v432, %v433
      %v435 = vand.u32 %v434, 4294901760
      %436 = vmatmul.mubr.f32.gmra.mrb[0].mxu0 %v435
      %v437 = vpop.f32.mrb[0].mxu0
      %v438 = vadd.f32 0.0, %v437
      %v439 = vpop.f32.mrb[0].mxu0
      %v440 = vadd.f32 0.0, %v439
      %441 = vmatprep.mubr.f32.mxu0 0.0
      %v442 = vand.u32 %v179, 4294901760
      %v443 = vsub.f32 %v179, %v442
      %v444 = vand.u32 %v443, 4294901760
      %v445 = vsub.f32 %v443, %v444
      %v446 = vand.u32 %v445, 4294901760
      %447 = vmatmul.mubr.f32.gmra.mrb[0].mxu0 %v446
      %v448 = vpop.f32.mrb[0].mxu0
      %v449 = vadd.f32 0.0, %v448
      %v450 = vpop.f32.mrb[0].mxu0
      %v451 = vadd.f32 0.0, %v450
      %452 = vdwg.mxu0
      %v453 = vand.u32 %v133, 4294901760
      %v454 = vsub.f32 %v133, %v453
      %v455 = vand.u32 %v454, 4294901760
      %v456 = vsub.f32 %v454, %v455
      %v457 = vand.u32 %v456, 4294901760
      %458 = vmatprep.subr.mxu0 %v457
      %v459 = vand.u32 %v132, 4294901760
      %v460 = vsub.f32 %v132, %v459
      %v461 = vand.u32 %v460, 4294901760
      %v462 = vsub.f32 %v460, %v461
      %v463 = vand.u32 %v462, 4294901760
      %464 = vmatpush1.msra.mxu0 %v463
      %v465 = vand.u32 %v135, 4294901760
      %v466 = vsub.f32 %v135, %v465
      %v467 = vand.u32 %v466, 4294901760
      %v468 = vsub.f32 %v466, %v467
      %v469 = vand.u32 %v468, 4294901760
      %470 = vmatprep.subr.mxu0 %v469
      %v471 = vand.u32 %v134, 4294901760
      %v472 = vsub.f32 %v134, %v471
      %v473 = vand.u32 %v472, 4294901760
      %v474 = vsub.f32 %v472, %v473
      %v475 = vand.u32 %v474, 4294901760
      %476 = vmatpush1.msra.mxu0 %v475
      %v477 = vand.u32 %v137, 4294901760
      %v478 = vsub.f32 %v137, %v477
      %v479 = vand.u32 %v478, 4294901760
      %v480 = vsub.f32 %v478, %v479
      %v481 = vand.u32 %v480, 4294901760
      %482 = vmatprep.subr.mxu0 %v481
      %v483 = vand.u32 %v136, 4294901760
      %v484 = vsub.f32 %v136, %v483
      %v485 = vand.u32 %v484, 4294901760
      %v486 = vsub.f32 %v484, %v485
      %v487 = vand.u32 %v486, 4294901760
      %488 = vmatpush1.msra.mxu0 %v487
      %v489 = vand.u32 %v139, 4294901760
      %v490 = vsub.f32 %v139, %v489
      %v491 = vand.u32 %v490, 4294901760
      %v492 = vsub.f32 %v490, %v491
      %v493 = vand.u32 %v492, 4294901760
      %494 = vmatprep.subr.mxu0 %v493
      %v495 = vand.u32 %v138, 4294901760
      %v496 = vsub.f32 %v138, %v495
      %v497 = vand.u32 %v496, 4294901760
      %v498 = vsub.f32 %v496, %v497
      %v499 = vand.u32 %v498, 4294901760
      %500 = vmatpush1.msra.mxu0 %v499
      %v501 = vand.u32 %v141, 4294901760
      %v502 = vsub.f32 %v141, %v501
      %v503 = vand.u32 %v502, 4294901760
      %v504 = vsub.f32 %v502, %v503
      %v505 = vand.u32 %v504, 4294901760
      %506 = vmatprep.subr.mxu0 %v505
      %v507 = vand.u32 %v140, 4294901760
      %v508 = vsub.f32 %v140, %v507
      %v509 = vand.u32 %v508, 4294901760
      %v510 = vsub.f32 %v508, %v509
      %v511 = vand.u32 %v510, 4294901760
      %512 = vmatpush1.msra.mxu0 %v511
      %v513 = vand.u32 %v143, 4294901760
      %v514 = vsub.f32 %v143, %v513
      %v515 = vand.u32 %v514, 4294901760
      %v516 = vsub.f32 %v514, %v515
      %v517 = vand.u32 %v516, 4294901760
      %518 = vmatprep.subr.mxu0 %v517
      %v519 = vand.u32 %v142, 4294901760
      %v520 = vsub.f32 %v142, %v519
      %v521 = vand.u32 %v520, 4294901760
      %v522 = vsub.f32 %v520, %v521
      %v523 = vand.u32 %v522, 4294901760
      %524 = vmatpush1.msra.mxu0 %v523
      %v525 = vand.u32 %v145, 4294901760
      %v526 = vsub.f32 %v145, %v525
      %v527 = vand.u32 %v526, 4294901760
      %v528 = vsub.f32 %v526, %v527
      %v529 = vand.u32 %v528, 4294901760
      %530 = vmatprep.subr.mxu0 %v529
      %v531 = vand.u32 %v144, 4294901760
      %v532 = vsub.f32 %v144, %v531
      %v533 = vand.u32 %v532, 4294901760
      %v534 = vsub.f32 %v532, %v533
      %v535 = vand.u32 %v534, 4294901760
      %536 = vmatpush1.msra.mxu0 %v535
      %v537 = vand.u32 %v147, 4294901760
      %v538 = vsub.f32 %v147, %v537
      %v539 = vand.u32 %v538, 4294901760
      %v540 = vsub.f32 %v538, %v539
      %v541 = vand.u32 %v540, 4294901760
      %542 = vmatprep.subr.mxu0 %v541
      %v543 = vand.u32 %v146, 4294901760
      %v544 = vsub.f32 %v146, %v543
      %v545 = vand.u32 %v544, 4294901760
      %v546 = vsub.f32 %v544, %v545
      %v547 = vand.u32 %v546, 4294901760
      %548 = vmatpush1.msra.mxu0 %v547
      %v549 = vand.u32 %v149, 4294901760
      %v550 = vsub.f32 %v149, %v549
      %v551 = vand.u32 %v550, 4294901760
      %v552 = vsub.f32 %v550, %v551
      %v553 = vand.u32 %v552, 4294901760
      %554 = vmatprep.subr.mxu0 %v553
      %v555 = vand.u32 %v148, 4294901760
      %v556 = vsub.f32 %v148, %v555
      %v557 = vand.u32 %v556, 4294901760
      %v558 = vsub.f32 %v556, %v557
      %v559 = vand.u32 %v558, 4294901760
      %560 = vmatpush1.msra.mxu0 %v559
      %v561 = vand.u32 %v151, 4294901760
      %v562 = vsub.f32 %v151, %v561
      %v563 = vand.u32 %v562, 4294901760
      %v564 = vsub.f32 %v562, %v563
      %v565 = vand.u32 %v564, 4294901760
      %566 = vmatprep.subr.mxu0 %v565
      %v567 = vand.u32 %v150, 4294901760
      %v568 = vsub.f32 %v150, %v567
      %v569 = vand.u32 %v568, 4294901760
      %v570 = vsub.f32 %v568, %v569
      %v571 = vand.u32 %v570, 4294901760
      %572 = vmatpush1.msra.mxu0 %v571
      %v573 = vand.u32 %v153, 4294901760
      %v574 = vsub.f32 %v153, %v573
      %v575 = vand.u32 %v574, 4294901760
      %v576 = vsub.f32 %v574, %v575
      %v577 = vand.u32 %v576, 4294901760
      %578 = vmatprep.subr.mxu0 %v577
      %v579 = vand.u32 %v152, 4294901760
      %v580 = vsub.f32 %v152, %v579
      %v581 = vand.u32 %v580, 4294901760
      %v582 = vsub.f32 %v580, %v581
      %v583 = vand.u32 %v582, 4294901760
      %584 = vmatpush1.msra.mxu0 %v583
      %v585 = vand.u32 %v155, 4294901760
      %v586 = vsub.f32 %v155, %v585
      %v587 = vand.u32 %v586, 4294901760
      %v588 = vsub.f32 %v586, %v587
      %v589 = vand.u32 %v588, 4294901760
      %590 = vmatprep.subr.mxu0 %v589
      %v591 = vand.u32 %v154, 4294901760
      %v592 = vsub.f32 %v154, %v591
      %v593 = vand.u32 %v592, 4294901760
      %v594 = vsub.f32 %v592, %v593
      %v595 = vand.u32 %v594, 4294901760
      %596 = vmatpush1.msra.mxu0 %v595
      %v597 = vand.u32 %v157, 4294901760
      %v598 = vsub.f32 %v157, %v597
      %v599 = vand.u32 %v598, 4294901760
      %v600 = vsub.f32 %v598, %v599
      %v601 = vand.u32 %v600, 4294901760
      %602 = vmatprep.subr.mxu0 %v601
      %v603 = vand.u32 %v156, 4294901760
      %v604 = vsub.f32 %v156, %v603
      %v605 = vand.u32 %v604, 4294901760
      %v606 = vsub.f32 %v604, %v605
      %v607 = vand.u32 %v606, 4294901760
      %608 = vmatpush1.msra.mxu0 %v607
      %v609 = vand.u32 %v159, 4294901760
      %v610 = vsub.f32 %v159, %v609
      %v611 = vand.u32 %v610, 4294901760
      %v612 = vsub.f32 %v610, %v611
      %v613 = vand.u32 %v612, 4294901760
      %614 = vmatprep.subr.mxu0 %v613
      %v615 = vand.u32 %v158, 4294901760
      %v616 = vsub.f32 %v158, %v615
      %v617 = vand.u32 %v616, 4294901760
      %v618 = vsub.f32 %v616, %v617
      %v619 = vand.u32 %v618, 4294901760
      %620 = vmatpush1.msra.mxu0 %v619
      %v621 = vand.u32 %v161, 4294901760
      %v622 = vsub.f32 %v161, %v621
      %v623 = vand.u32 %v622, 4294901760
      %v624 = vsub.f32 %v622, %v623
      %v625 = vand.u32 %v624, 4294901760
      %626 = vmatprep.subr.mxu0 %v625
      %v627 = vand.u32 %v160, 4294901760
      %v628 = vsub.f32 %v160, %v627
      %v629 = vand.u32 %v628, 4294901760
      %v630 = vsub.f32 %v628, %v629
      %v631 = vand.u32 %v630, 4294901760
      %632 = vmatpush1.msra.mxu0 %v631
      %v633 = vand.u32 %v163, 4294901760
      %v634 = vsub.f32 %v163, %v633
      %v635 = vand.u32 %v634, 4294901760
      %v636 = vsub.f32 %v634, %v635
      %v637 = vand.u32 %v636, 4294901760
      %638 = vmatprep.subr.mxu0 %v637
      %v639 = vand.u32 %v162, 4294901760
      %v640 = vsub.f32 %v162, %v639
      %v641 = vand.u32 %v640, 4294901760
      %v642 = vsub.f32 %v640, %v641
      %v643 = vand.u32 %v642, 4294901760
      %644 = vmatpush1.msra.mxu0 %v643
      %645 = vmatprep.subr.mxu0 0.0
      %646 = vmatpush1.msra.mxu0 0.0
      %647 = vmatprep.subr.mxu0 0.0
      %648 = vmatpush1.msra.mxu0 0.0
      %649 = vmatprep.subr.mxu0 0.0
      %650 = vmatpush1.msra.mxu0 0.0
      %651 = vmatprep.subr.mxu0 0.0
      %652 = vmatpush1.msra.mxu0 0.0
      %653 = vmatprep.subr.mxu0 0.0
      %654 = vmatpush1.msra.mxu0 0.0
      %655 = vmatprep.subr.mxu0 0.0
      %656 = vmatpush1.msra.mxu0 0.0
      %657 = vmatprep.subr.mxu0 0.0
      %658 = vmatpush1.msra.mxu0 0.0
      %659 = vmatprep.subr.mxu0 0.0
      %660 = vmatpush1.msra.mxu0 0.0
      %661 = vmatprep.subr.mxu0 0.0
      %662 = vmatpush1.msra.mxu0 0.0
      %663 = vmatprep.subr.mxu0 0.0
      %664 = vmatpush1.msra.mxu0 0.0
      %665 = vmatprep.subr.mxu0 0.0
      %666 = vmatpush1.msra.mxu0 0.0
      %667 = vmatprep.subr.mxu0 0.0
      %668 = vmatpush1.msra.mxu0 0.0
      %669 = vmatprep.subr.mxu0 0.0
      %670 = vmatpush1.msra.mxu0 0.0
      %671 = vmatprep.subr.mxu0 0.0
      %672 = vmatpush1.msra.mxu0 0.0
      %673 = vmatprep.subr.mxu0 0.0
      %674 = vmatpush1.msra.mxu0 0.0
      %675 = vmatprep.subr.mxu0 0.0
      %676 = vmatpush1.msra.mxu0 0.0
      %677 = vmatprep.mubr.f32.mxu0 0.0
      %v678 = vand.u32 %v164, 4294901760
      %679 = vmatmul.mubr.f32.gmra.mrb[0].mxu0 %v678
      %v680 = vpop.f32.mrb[0].mxu0
      %v681 = vadd.f32 %v284, %v680
      %v682 = vpop.f32.mrb[0].mxu0
      %v683 = vadd.f32 %v286, %v682
      %684 = vmatprep.mubr.f32.mxu0 0.0
      %v685 = vand.u32 %v165, 4294901760
      %686 = vmatmul.mubr.f32.gmra.mrb[0].mxu0 %v685
      %v687 = vpop.f32.mrb[0].mxu0
      %v688 = vadd.f32 %v295, %v687
      %v689 = vpop.f32.mrb[0].mxu0
      %v690 = vadd.f32 %v297, %v689
      %691 = vmatprep.mubr.f32.mxu0 0.0
      %v692 = vand.u32 %v166, 4294901760
      %693 = vmatmul.mubr.f32.gmra.mrb[0].mxu0 %v692
      %v694 = vpop.f32.mrb[0].mxu0
      %v695 = vadd.f32 %v306, %v694
      %v696 = vpop.f32.mrb[0].mxu0
      %v697 = vadd.f32 %v308, %v696
      %698 = vmatprep.mubr.f32.mxu0 0.0
      %v699 = vand.u32 %v167, 4294901760
      %700 = vmatmul.mubr.f32.gmra.mrb[0].mxu0 %v699
      %v701 = vpop.f32.mrb[0].mxu0
      %v702 = vadd.f32 %v317, %v701
      %v703 = vpop.f32.mrb[0].mxu0
      %v704 = vadd.f32 %v319, %v703
      %705 = vmatprep.mubr.f32.mxu0 0.0
      %v706 = vand.u32 %v168, 4294901760
      %707 = vmatmul.mubr.f32.gmra.mrb[0].mxu0 %v706
      %v708 = vpop.f32.mrb[0].mxu0
      %v709 = vadd.f32 %v328, %v708
      %v710 = vpop.f32.mrb[0].mxu0
      %v711 = vadd.f32 %v330, %v710
      %712 = vmatprep.mubr.f32.mxu0 0.0
      %v713 = vand.u32 %v169, 4294901760
      %714 = vmatmul.mubr.f32.gmra.mrb[0].mxu0 %v713
      %v715 = vpop.f32.mrb[0].mxu0
      %v716 = vadd.f32 %v339, %v715
      %v717 = vpop.f32.mrb[0].mxu0
      %v718 = vadd.f32 %v341, %v717
      %719 = vmatprep.mubr.f32.mxu0 0.0
      %v720 = vand.u32 %v170, 4294901760
      %721 = vmatmul.mubr.f32.gmra.mrb[0].mxu0 %v720
      %v722 = vpop.f32.mrb[0].mxu0
      %v723 = vadd.f32 %v350, %v722
      %v724 = vpop.f32.mrb[0].mxu0
      %v725 = vadd.f32 %v352, %v724
      %726 = vmatprep.mubr.f32.mxu0 0.0
      %v727 = vand.u32 %v171, 4294901760
      %728 = vmatmul.mubr.f32.gmra.mrb[0].mxu0 %v727
      %v729 = vpop.f32.mrb[0].mxu0
      %v730 = vadd.f32 %v361, %v729
      %v731 = vpop.f32.mrb[0].mxu0
      %v732 = vadd.f32 %v363, %v731
      %733 = vmatprep.mubr.f32.mxu0 0.0
      %v734 = vand.u32 %v172, 4294901760
      %735 = vmatmul.mubr.f32.gmra.mrb[0].mxu0 %v734
      %v736 = vpop.f32.mrb[0].mxu0
      %v737 = vadd.f32 %v372, %v736
      %v738 = vpop.f32.mrb[0].mxu0
      %v739 = vadd.f32 %v374, %v738
      %740 = vmatprep.mubr.f32.mxu0 0.0
      %v741 = vand.u32 %v173, 4294901760
      %742 = vmatmul.mubr.f32.gmra.mrb[0].mxu0 %v741
      %v743 = vpop.f32.mrb[0].mxu0
      %v744 = vadd.f32 %v383, %v743
      %v745 = vpop.f32.mrb[0].mxu0
      %v746 = vadd.f32 %v385, %v745
      %747 = vmatprep.mubr.f32.mxu0 0.0
      %v748 = vand.u32 %v174, 4294901760
      %749 = vmatmul.mubr.f32.gmra.mrb[0].mxu0 %v748
      %v750 = vpop.f32.mrb[0].mxu0
      %v751 = vadd.f32 %v394, %v750
      %v752 = vpop.f32.mrb[0].mxu0
      %v753 = vadd.f32 %v396, %v752
      %754 = vmatprep.mubr.f32.mxu0 0.0
      %v755 = vand.u32 %v175, 4294901760
      %756 = vmatmul.mubr.f32.gmra.mrb[0].mxu0 %v755
      %v757 = vpop.f32.mrb[0].mxu0
      %v758 = vadd.f32 %v405, %v757
      %v759 = vpop.f32.mrb[0].mxu0
      %v760 = vadd.f32 %v407, %v759
      %761 = vmatprep.mubr.f32.mxu0 0.0
      %v762 = vand.u32 %v176, 4294901760
      %763 = vmatmul.mubr.f32.gmra.mrb[0].mxu0 %v762
      %v764 = vpop.f32.mrb[0].mxu0
      %v765 = vadd.f32 %v416, %v764
      %v766 = vpop.f32.mrb[0].mxu0
      %v767 = vadd.f32 %v418, %v766
      %768 = vmatprep.mubr.f32.mxu0 0.0
      %v769 = vand.u32 %v177, 4294901760
      %770 = vmatmul.mubr.f32.gmra.mrb[0].mxu0 %v769
      %v771 = vpop.f32.mrb[0].mxu0
      %v772 = vadd.f32 %v427, %v771
      %v773 = vpop.f32.mrb[0].mxu0
      %v774 = vadd.f32 %v429, %v773
      %775 = vmatprep.mubr.f32.mxu0 0.0
      %v776 = vand.u32 %v178, 4294901760
      %777 = vmatmul.mubr.f32.gmra.mrb[0].mxu0 %v776
      %v778 = vpop.f32.mrb[0].mxu0
      %v779 = vadd.f32 %v438, %v778
      %v780 = vpop.f32.mrb[0].mxu0
      %v781 = vadd.f32 %v440, %v780
      %782 = vmatprep.mubr.f32.mxu0 0.0
      %v783 = vand.u32 %v179, 4294901760
      %784 = vmatmul.mubr.f32.gmra.mrb[0].mxu0 %v783
      %v785 = vpop.f32.mrb[0].mxu0
      %v786 = vadd.f32 %v449, %v785
      %v787 = vpop.f32.mrb[0].mxu0
      %v788 = vadd.f32 %v451, %v787
      %789 = vdwg.mxu0
      %v790 = vand.u32 %v133, 4294901760
      %v791 = vsub.f32 %v133, %v790
      %792 = vmatprep.subr.mxu0 %v791
      %v793 = vand.u32 %v132, 4294901760
      %v794 = vsub.f32 %v132, %v793
      %795 = vmatpush1.msra.mxu0 %v794
      %v796 = vand.u32 %v135, 4294901760
      %v797 = vsub.f32 %v135, %v796
      %798 = vmatprep.subr.mxu0 %v797
      %v799 = vand.u32 %v134, 4294901760
      %v800 = vsub.f32 %v134, %v799
      %801 = vmatpush1.msra.mxu0 %v800
      %v802 = vand.u32 %v137, 4294901760
      %v803 = vsub.f32 %v137, %v802
      %804 = vmatprep.subr.mxu0 %v803
      %v805 = vand.u32 %v136, 4294901760
      %v806 = vsub.f32 %v136, %v805
      %807 = vmatpush1.msra.mxu0 %v806
      %v808 = vand.u32 %v139, 4294901760
      %v809 = vsub.f32 %v139, %v808
      %810 = vmatprep.subr.mxu0 %v809
      %v811 = vand.u32 %v138, 4294901760
      %v812 = vsub.f32 %v138, %v811
      %813 = vmatpush1.msra.mxu0 %v812
      %v814 = vand.u32 %v141, 4294901760
      %v815 = vsub.f32 %v141, %v814
      %816 = vmatprep.subr.mxu0 %v815
      %v817 = vand.u32 %v140, 4294901760
      %v818 = vsub.f32 %v140, %v817
      %819 = vmatpush1.msra.mxu0 %v818
      %v820 = vand.u32 %v143, 4294901760
      %v821 = vsub.f32 %v143, %v820
      %822 = vmatprep.subr.mxu0 %v821
      %v823 = vand.u32 %v142, 4294901760
      %v824 = vsub.f32 %v142, %v823
      %825 = vmatpush1.msra.mxu0 %v824
      %v826 = vand.u32 %v145, 4294901760
      %v827 = vsub.f32 %v145, %v826
      %828 = vmatprep.subr.mxu0 %v827
      %v829 = vand.u32 %v144, 4294901760
      %v830 = vsub.f32 %v144, %v829
      %831 = vmatpush1.msra.mxu0 %v830
      %v832 = vand.u32 %v147, 4294901760
      %v833 = vsub.f32 %v147, %v832
      %834 = vmatprep.subr.mxu0 %v833
      %v835 = vand.u32 %v146, 4294901760
      %v836 = vsub.f32 %v146, %v835
      %837 = vmatpush1.msra.mxu0 %v836
      %v838 = vand.u32 %v149, 4294901760
      %v839 = vsub.f32 %v149, %v838
      %840 = vmatprep.subr.mxu0 %v839
      %v841 = vand.u32 %v148, 4294901760
      %v842 = vsub.f32 %v148, %v841
      %843 = vmatpush1.msra.mxu0 %v842
      %v844 = vand.u32 %v151, 4294901760
      %v845 = vsub.f32 %v151, %v844
      %846 = vmatprep.subr.mxu0 %v845
      %v847 = vand.u32 %v150, 4294901760
      %v848 = vsub.f32 %v150, %v847
      %849 = vmatpush1.msra.mxu0 %v848
      %v850 = vand.u32 %v153, 4294901760
      %v851 = vsub.f32 %v153, %v850
      %852 = vmatprep.subr.mxu0 %v851
      %v853 = vand.u32 %v152, 4294901760
      %v854 = vsub.f32 %v152, %v853
      %855 = vmatpush1.msra.mxu0 %v854
      %v856 = vand.u32 %v155, 4294901760
      %v857 = vsub.f32 %v155, %v856
      %858 = vmatprep.subr.mxu0 %v857
      %v859 = vand.u32 %v154, 4294901760
      %v860 = vsub.f32 %v154, %v859
      %861 = vmatpush1.msra.mxu0 %v860
      %v862 = vand.u32 %v157, 4294901760
      %v863 = vsub.f32 %v157, %v862
      %864 = vmatprep.subr.mxu0 %v863
      %v865 = vand.u32 %v156, 4294901760
      %v866 = vsub.f32 %v156, %v865
      %867 = vmatpush1.msra.mxu0 %v866
      %v868 = vand.u32 %v159, 4294901760
      %v869 = vsub.f32 %v159, %v868
      %870 = vmatprep.subr.mxu0 %v869
      %v871 = vand.u32 %v158, 4294901760
      %v872 = vsub.f32 %v158, %v871
      %873 = vmatpush1.msra.mxu0 %v872
      %v874 = vand.u32 %v161, 4294901760
      %v875 = vsub.f32 %v161, %v874
      %876 = vmatprep.subr.mxu0 %v875
      %v877 = vand.u32 %v160, 4294901760
      %v878 = vsub.f32 %v160, %v877
      %879 = vmatpush1.msra.mxu0 %v878
      %v880 = vand.u32 %v163, 4294901760
      %v881 = vsub.f32 %v163, %v880
      %882 = vmatprep.subr.mxu0 %v881
      %v883 = vand.u32 %v162, 4294901760
      %v884 = vsub.f32 %v162, %v883
      %885 = vmatpush1.msra.mxu0 %v884
      %886 = vmatprep.subr.mxu0 0.0
      %887 = vmatpush1.msra.mxu0 0.0
      %888 = vmatprep.subr.mxu0 0.0
      %889 = vmatpush1.msra.mxu0 0.0
      %890 = vmatprep.subr.mxu0 0.0
      %891 = vmatpush1.msra.mxu0 0.0
      %892 = vmatprep.subr.mxu0 0.0
      %893 = vmatpush1.msra.mxu0 0.0
      %894 = vmatprep.subr.mxu0 0.0
      %895 = vmatpush1.msra.mxu0 0.0
      %896 = vmatprep.subr.mxu0 0.0
      %897 = vmatpush1.msra.mxu0 0.0
      %898 = vmatprep.subr.mxu0 0.0
      %899 = vmatpush1.msra.mxu0 0.0
      %900 = vmatprep.subr.mxu0 0.0
      %901 = vmatpush1.msra.mxu0 0.0
      %902 = vmatprep.subr.mxu0 0.0
      %903 = vmatpush1.msra.mxu0 0.0
      %904 = vmatprep.subr.mxu0 0.0
      %905 = vmatpush1.msra.mxu0 0.0
      %906 = vmatprep.subr.mxu0 0.0
      %907 = vmatpush1.msra.mxu0 0.0
      %908 = vmatprep.subr.mxu0 0.0
      %909 = vmatpush1.msra.mxu0 0.0
      %910 = vmatprep.subr.mxu0 0.0
      %911 = vmatpush1.msra.mxu0 0.0
      %912 = vmatprep.subr.mxu0 0.0
      %913 = vmatpush1.msra.mxu0 0.0
      %914 = vmatprep.subr.mxu0 0.0
      %915 = vmatpush1.msra.mxu0 0.0
      %916 = vmatprep.subr.mxu0 0.0
      %917 = vmatpush1.msra.mxu0 0.0
      %918 = vmatprep.mubr.f32.mxu0 0.0
      %v919 = vand.u32 %v164, 4294901760
      %v920 = vsub.f32 %v164, %v919
      %921 = vmatmul.mubr.f32.gmra.mrb[0].mxu0 %v920
      %v922 = vpop.f32.mrb[0].mxu0
      %v923 = vadd.f32 %v681, %v922
      %v924 = vpop.f32.mrb[0].mxu0
      %v925 = vadd.f32 %v683, %v924
      %926 = vmatprep.mubr.f32.mxu0 0.0
      %v927 = vand.u32 %v165, 4294901760
      %v928 = vsub.f32 %v165, %v927
      %929 = vmatmul.mubr.f32.gmra.mrb[0].mxu0 %v928
      %v930 = vpop.f32.mrb[0].mxu0
      %v931 = vadd.f32 %v688, %v930
      %v932 = vpop.f32.mrb[0].mxu0
      %v933 = vadd.f32 %v690, %v932
      %934 = vmatprep.mubr.f32.mxu0 0.0
      %v935 = vand.u32 %v166, 4294901760
      %v936 = vsub.f32 %v166, %v935
      %937 = vmatmul.mubr.f32.gmra.mrb[0].mxu0 %v936
      %v938 = vpop.f32.mrb[0].mxu0
      %v939 = vadd.f32 %v695, %v938
      %v940 = vpop.f32.mrb[0].mxu0
      %v941 = vadd.f32 %v697, %v940
      %942 = vmatprep.mubr.f32.mxu0 0.0
      %v943 = vand.u32 %v167, 4294901760
      %v944 = vsub.f32 %v167, %v943
      %945 = vmatmul.mubr.f32.gmra.mrb[0].mxu0 %v944
      %v946 = vpop.f32.mrb[0].mxu0
      %v947 = vadd.f32 %v702, %v946
      %v948 = vpop.f32.mrb[0].mxu0
      %v949 = vadd.f32 %v704, %v948
      %950 = vmatprep.mubr.f32.mxu0 0.0
      %v951 = vand.u32 %v168, 4294901760
      %v952 = vsub.f32 %v168, %v951
      %953 = vmatmul.mubr.f32.gmra.mrb[0].mxu0 %v952
      %v954 = vpop.f32.mrb[0].mxu0
      %v955 = vadd.f32 %v709, %v954
      %v956 = vpop.f32.mrb[0].mxu0
      %v957 = vadd.f32 %v711, %v956
      %958 = vmatprep.mubr.f32.mxu0 0.0
      %v959 = vand.u32 %v169, 4294901760
      %v960 = vsub.f32 %v169, %v959
      %961 = vmatmul.mubr.f32.gmra.mrb[0].mxu0 %v960
      %v962 = vpop.f32.mrb[0].mxu0
      %v963 = vadd.f32 %v716, %v962
      %v964 = vpop.f32.mrb[0].mxu0
      %v965 = vadd.f32 %v718, %v964
      %966 = vmatprep.mubr.f32.mxu0 0.0
      %v967 = vand.u32 %v170, 4294901760
      %v968 = vsub.f32 %v170, %v967
      %969 = vmatmul.mubr.f32.gmra.mrb[0].mxu0 %v968
      %v970 = vpop.f32.mrb[0].mxu0
      %v971 = vadd.f32 %v723, %v970
      %v972 = vpop.f32.mrb[0].mxu0
      %v973 = vadd.f32 %v725, %v972
      %974 = vmatprep.mubr.f32.mxu0 0.0
      %v975 = vand.u32 %v171, 4294901760
      %v976 = vsub.f32 %v171, %v975
      %977 = vmatmul.mubr.f32.gmra.mrb[0].mxu0 %v976
      %v978 = vpop.f32.mrb[0].mxu0
      %v979 = vadd.f32 %v730, %v978
      %v980 = vpop.f32.mrb[0].mxu0
      %v981 = vadd.f32 %v732, %v980
      %982 = vmatprep.mubr.f32.mxu0 0.0
      %v983 = vand.u32 %v172, 4294901760
      %v984 = vsub.f32 %v172, %v983
      %985 = vmatmul.mubr.f32.gmra.mrb[0].mxu0 %v984
      %v986 = vpop.f32.mrb[0].mxu0
      %v987 = vadd.f32 %v737, %v986
      %v988 = vpop.f32.mrb[0].mxu0
      %v989 = vadd.f32 %v739, %v988
      %990 = vmatprep.mubr.f32.mxu0 0.0
      %v991 = vand.u32 %v173, 4294901760
      %v992 = vsub.f32 %v173, %v991
      %993 = vmatmul.mubr.f32.gmra.mrb[0].mxu0 %v992
      %v994 = vpop.f32.mrb[0].mxu0
      %v995 = vadd.f32 %v744, %v994
      %v996 = vpop.f32.mrb[0].mxu0
      %v997 = vadd.f32 %v746, %v996
      %998 = vmatprep.mubr.f32.mxu0 0.0
      %v999 = vand.u32 %v174, 4294901760
      %v1000 = vsub.f32 %v174, %v999
      %1001 = vmatmul.mubr.f32.gmra.mrb[0].mxu0 %v1000
      %v1002 = vpop.f32.mrb[0].mxu0
      %v1003 = vadd.f32 %v751, %v1002
      %v1004 = vpop.f32.mrb[0].mxu0
      %v1005 = vadd.f32 %v753, %v1004
      %1006 = vmatprep.mubr.f32.mxu0 0.0
      %v1007 = vand.u32 %v175, 4294901760
      %v1008 = vsub.f32 %v175, %v1007
      %1009 = vmatmul.mubr.f32.gmra.mrb[0].mxu0 %v1008
      %v1010 = vpop.f32.mrb[0].mxu0
      %v1011 = vadd.f32 %v758, %v1010
      %v1012 = vpop.f32.mrb[0].mxu0
      %v1013 = vadd.f32 %v760, %v1012
      %1014 = vmatprep.mubr.f32.mxu0 0.0
      %v1015 = vand.u32 %v176, 4294901760
      %v1016 = vsub.f32 %v176, %v1015
      %1017 = vmatmul.mubr.f32.gmra.mrb[0].mxu0 %v1016
      %v1018 = vpop.f32.mrb[0].mxu0
      %v1019 = vadd.f32 %v765, %v1018
      %v1020 = vpop.f32.mrb[0].mxu0
      %v1021 = vadd.f32 %v767, %v1020
      %1022 = vmatprep.mubr.f32.mxu0 0.0
      %v1023 = vand.u32 %v177, 4294901760
      %v1024 = vsub.f32 %v177, %v1023
      %1025 = vmatmul.mubr.f32.gmra.mrb[0].mxu0 %v1024
      %v1026 = vpop.f32.mrb[0].mxu0
      %v1027 = vadd.f32 %v772, %v1026
      %v1028 = vpop.f32.mrb[0].mxu0
      %v1029 = vadd.f32 %v774, %v1028
      %1030 = vmatprep.mubr.f32.mxu0 0.0
      %v1031 = vand.u32 %v178, 4294901760
      %v1032 = vsub.f32 %v178, %v1031
      %1033 = vmatmul.mubr.f32.gmra.mrb[0].mxu0 %v1032
      %v1034 = vpop.f32.mrb[0].mxu0
      %v1035 = vadd.f32 %v779, %v1034
      %v1036 = vpop.f32.mrb[0].mxu0
      %v1037 = vadd.f32 %v781, %v1036
      %1038 = vmatprep.mubr.f32.mxu0 0.0
      %v1039 = vand.u32 %v179, 4294901760
      %v1040 = vsub.f32 %v179, %v1039
      %1041 = vmatmul.mubr.f32.gmra.mrb[0].mxu0 %v1040
      %v1042 = vpop.f32.mrb[0].mxu0
      %v1043 = vadd.f32 %v786, %v1042
      %v1044 = vpop.f32.mrb[0].mxu0
      %v1045 = vadd.f32 %v788, %v1044
      %1046 = vdwg.mxu0
      %v1047 = vand.u32 %v133, 4294901760
      %1048 = vmatprep.subr.mxu0 %v1047
      %v1049 = vand.u32 %v132, 4294901760
      %1050 = vmatpush1.msra.mxu0 %v1049
      %v1051 = vand.u32 %v135, 4294901760
      %1052 = vmatprep.subr.mxu0 %v1051
      %v1053 = vand.u32 %v134, 4294901760
      %1054 = vmatpush1.msra.mxu0 %v1053
      %v1055 = vand.u32 %v137, 4294901760
      %1056 = vmatprep.subr.mxu0 %v1055
      %v1057 = vand.u32 %v136, 4294901760
      %1058 = vmatpush1.msra.mxu0 %v1057
      %v1059 = vand.u32 %v139, 4294901760
      %1060 = vmatprep.subr.mxu0 %v1059
      %v1061 = vand.u32 %v138, 4294901760
      %1062 = vmatpush1.msra.mxu0 %v1061
      %v1063 = vand.u32 %v141, 4294901760
      %1064 = vmatprep.subr.mxu0 %v1063
      %v1065 = vand.u32 %v140, 4294901760
      %1066 = vmatpush1.msra.mxu0 %v1065
      %v1067 = vand.u32 %v143, 4294901760
      %1068 = vmatprep.subr.mxu0 %v1067
      %v1069 = vand.u32 %v142, 4294901760
      %1070 = vmatpush1.msra.mxu0 %v1069
      %v1071 = vand.u32 %v145, 4294901760
      %1072 = vmatprep.subr.mxu0 %v1071
      %v1073 = vand.u32 %v144, 4294901760
      %1074 = vmatpush1.msra.mxu0 %v1073
      %v1075 = vand.u32 %v147, 4294901760
      %1076 = vmatprep.subr.mxu0 %v1075
      %v1077 = vand.u32 %v146, 4294901760
      %1078 = vmatpush1.msra.mxu0 %v1077
      %v1079 = vand.u32 %v149, 4294901760
      %1080 = vmatprep.subr.mxu0 %v1079
      %v1081 = vand.u32 %v148, 4294901760
      %1082 = vmatpush1.msra.mxu0 %v1081
      %v1083 = vand.u32 %v151, 4294901760
      %1084 = vmatprep.subr.mxu0 %v1083
      %v1085 = vand.u32 %v150, 4294901760
      %1086 = vmatpush1.msra.mxu0 %v1085
      %v1087 = vand.u32 %v153, 4294901760
      %1088 = vmatprep.subr.mxu0 %v1087
      %v1089 = vand.u32 %v152, 4294901760
      %1090 = vmatpush1.msra.mxu0 %v1089
      %v1091 = vand.u32 %v155, 4294901760
      %1092 = vmatprep.subr.mxu0 %v1091
      %v1093 = vand.u32 %v154, 4294901760
      %1094 = vmatpush1.msra.mxu0 %v1093
      %v1095 = vand.u32 %v157, 4294901760
      %1096 = vmatprep.subr.mxu0 %v1095
      %v1097 = vand.u32 %v156, 4294901760
      %1098 = vmatpush1.msra.mxu0 %v1097
      %v1099 = vand.u32 %v159, 4294901760
      %1100 = vmatprep.subr.mxu0 %v1099
      %v1101 = vand.u32 %v158, 4294901760
      %1102 = vmatpush1.msra.mxu0 %v1101
      %v1103 = vand.u32 %v161, 4294901760
      %1104 = vmatprep.subr.mxu0 %v1103
      %v1105 = vand.u32 %v160, 4294901760
      %1106 = vmatpush1.msra.mxu0 %v1105
      %v1107 = vand.u32 %v163, 4294901760
      %1108 = vmatprep.subr.mxu0 %v1107
      %v1109 = vand.u32 %v162, 4294901760
      %1110 = vmatpush1.msra.mxu0 %v1109
      %1111 = vmatprep.subr.mxu0 0.0
      %1112 = vmatpush1.msra.mxu0 0.0
      %1113 = vmatprep.subr.mxu0 0.0
      %1114 = vmatpush1.msra.mxu0 0.0
      %1115 = vmatprep.subr.mxu0 0.0
      %1116 = vmatpush1.msra.mxu0 0.0
      %1117 = vmatprep.subr.mxu0 0.0
      %1118 = vmatpush1.msra.mxu0 0.0
      %1119 = vmatprep.subr.mxu0 0.0
      %1120 = vmatpush1.msra.mxu0 0.0
      %1121 = vmatprep.subr.mxu0 0.0
      %1122 = vmatpush1.msra.mxu0 0.0
      %1123 = vmatprep.subr.mxu0 0.0
      %1124 = vmatpush1.msra.mxu0 0.0
      %1125 = vmatprep.subr.mxu0 0.0
      %1126 = vmatpush1.msra.mxu0 0.0
      %1127 = vmatprep.subr.mxu0 0.0
      %1128 = vmatpush1.msra.mxu0 0.0
      %1129 = vmatprep.subr.mxu0 0.0
      %1130 = vmatpush1.msra.mxu0 0.0
      %1131 = vmatprep.subr.mxu0 0.0
      %1132 = vmatpush1.msra.mxu0 0.0
      %1133 = vmatprep.subr.mxu0 0.0
      %1134 = vmatpush1.msra.mxu0 0.0
      %1135 = vmatprep.subr.mxu0 0.0
      %1136 = vmatpush1.msra.mxu0 0.0
      %1137 = vmatprep.subr.mxu0 0.0
      %1138 = vmatpush1.msra.mxu0 0.0
      %1139 = vmatprep.subr.mxu0 0.0
      %1140 = vmatpush1.msra.mxu0 0.0
      %1141 = vmatprep.subr.mxu0 0.0
      %1142 = vmatpush1.msra.mxu0 0.0
      %1143 = vmatprep.mubr.f32.mxu0 0.0
      %v1144 = vand.u32 %v164, 4294901760
      %v1145 = vsub.f32 %v164, %v1144
      %v1146 = vand.u32 %v1145, 4294901760
      %1147 = vmatmul.mubr.f32.gmra.mrb[0].mxu0 %v1146
      %v1148 = vpop.f32.mrb[0].mxu0
      %v1149 = vadd.f32 %v923, %v1148
      %v1150 = vpop.f32.mrb[0].mxu0
      %v1151 = vadd.f32 %v925, %v1150
      %1152 = vmatprep.mubr.f32.mxu0 0.0
      %v1153 = vand.u32 %v165, 4294901760
      %v1154 = vsub.f32 %v165, %v1153
      %v1155 = vand.u32 %v1154, 4294901760
      %1156 = vmatmul.mubr.f32.gmra.mrb[0].mxu0 %v1155
      %v1157 = vpop.f32.mrb[0].mxu0
      %v1158 = vadd.f32 %v931, %v1157
      %v1159 = vpop.f32.mrb[0].mxu0
      %v1160 = vadd.f32 %v933, %v1159
      %1161 = vmatprep.mubr.f32.mxu0 0.0
      %v1162 = vand.u32 %v166, 4294901760
      %v1163 = vsub.f32 %v166, %v1162
      %v1164 = vand.u32 %v1163, 4294901760
      %1165 = vmatmul.mubr.f32.gmra.mrb[0].mxu0 %v1164
      %v1166 = vpop.f32.mrb[0].mxu0
      %v1167 = vadd.f32 %v939, %v1166
      %v1168 = vpop.f32.mrb[0].mxu0
      %v1169 = vadd.f32 %v941, %v1168
      %1170 = vmatprep.mubr.f32.mxu0 0.0
      %v1171 = vand.u32 %v167, 4294901760
      %v1172 = vsub.f32 %v167, %v1171
      %v1173 = vand.u32 %v1172, 4294901760
      %1174 = vmatmul.mubr.f32.gmra.mrb[0].mxu0 %v1173
      %v1175 = vpop.f32.mrb[0].mxu0
      %v1176 = vadd.f32 %v947, %v1175
      %v1177 = vpop.f32.mrb[0].mxu0
      %v1178 = vadd.f32 %v949, %v1177
      %1179 = vmatprep.mubr.f32.mxu0 0.0
      %v1180 = vand.u32 %v168, 4294901760
      %v1181 = vsub.f32 %v168, %v1180
      %v1182 = vand.u32 %v1181, 4294901760
      %1183 = vmatmul.mubr.f32.gmra.mrb[0].mxu0 %v1182
      %v1184 = vpop.f32.mrb[0].mxu0
      %v1185 = vadd.f32 %v955, %v1184
      %v1186 = vpop.f32.mrb[0].mxu0
      %v1187 = vadd.f32 %v957, %v1186
      %1188 = vmatprep.mubr.f32.mxu0 0.0
      %v1189 = vand.u32 %v169, 4294901760
      %v1190 = vsub.f32 %v169, %v1189
      %v1191 = vand.u32 %v1190, 4294901760
      %1192 = vmatmul.mubr.f32.gmra.mrb[0].mxu0 %v1191
      %v1193 = vpop.f32.mrb[0].mxu0
      %v1194 = vadd.f32 %v963, %v1193
      %v1195 = vpop.f32.mrb[0].mxu0
      %v1196 = vadd.f32 %v965, %v1195
      %1197 = vmatprep.mubr.f32.mxu0 0.0
      %v1198 = vand.u32 %v170, 4294901760
      %v1199 = vsub.f32 %v170, %v1198
      %v1200 = vand.u32 %v1199, 4294901760
      %1201 = vmatmul.mubr.f32.gmra.mrb[0].mxu0 %v1200
      %v1202 = vpop.f32.mrb[0].mxu0
      %v1203 = vadd.f32 %v971, %v1202
      %v1204 = vpop.f32.mrb[0].mxu0
      %v1205 = vadd.f32 %v973, %v1204
      %1206 = vmatprep.mubr.f32.mxu0 0.0
      %v1207 = vand.u32 %v171, 4294901760
      %v1208 = vsub.f32 %v171, %v1207
      %v1209 = vand.u32 %v1208, 4294901760
      %1210 = vmatmul.mubr.f32.gmra.mrb[0].mxu0 %v1209
      %v1211 = vpop.f32.mrb[0].mxu0
      %v1212 = vadd.f32 %v979, %v1211
      %v1213 = vpop.f32.mrb[0].mxu0
      %v1214 = vadd.f32 %v981, %v1213
      %1215 = vmatprep.mubr.f32.mxu0 0.0
      %v1216 = vand.u32 %v172, 4294901760
      %v1217 = vsub.f32 %v172, %v1216
      %v1218 = vand.u32 %v1217, 4294901760
      %1219 = vmatmul.mubr.f32.gmra.mrb[0].mxu0 %v1218
      %v1220 = vpop.f32.mrb[0].mxu0
      %v1221 = vadd.f32 %v987, %v1220
      %v1222 = vpop.f32.mrb[0].mxu0
      %v1223 = vadd.f32 %v989, %v1222
      %1224 = vmatprep.mubr.f32.mxu0 0.0
      %v1225 = vand.u32 %v173, 4294901760
      %v1226 = vsub.f32 %v173, %v1225
      %v1227 = vand.u32 %v1226, 4294901760
      %1228 = vmatmul.mubr.f32.gmra.mrb[0].mxu0 %v1227
      %v1229 = vpop.f32.mrb[0].mxu0
      %v1230 = vadd.f32 %v995, %v1229
      %v1231 = vpop.f32.mrb[0].mxu0
      %v1232 = vadd.f32 %v997, %v1231
      %1233 = vmatprep.mubr.f32.mxu0 0.0
      %v1234 = vand.u32 %v174, 4294901760
      %v1235 = vsub.f32 %v174, %v1234
      %v1236 = vand.u32 %v1235, 4294901760
      %1237 = vmatmul.mubr.f32.gmra.mrb[0].mxu0 %v1236
      %v1238 = vpop.f32.mrb[0].mxu0
      %v1239 = vadd.f32 %v1003, %v1238
      %v1240 = vpop.f32.mrb[0].mxu0
      %v1241 = vadd.f32 %v1005, %v1240
      %1242 = vmatprep.mubr.f32.mxu0 0.0
      %v1243 = vand.u32 %v175, 4294901760
      %v1244 = vsub.f32 %v175, %v1243
      %v1245 = vand.u32 %v1244, 4294901760
      %1246 = vmatmul.mubr.f32.gmra.mrb[0].mxu0 %v1245
      %v1247 = vpop.f32.mrb[0].mxu0
      %v1248 = vadd.f32 %v1011, %v1247
      %v1249 = vpop.f32.mrb[0].mxu0
      %v1250 = vadd.f32 %v1013, %v1249
      %1251 = vmatprep.mubr.f32.mxu0 0.0
      %v1252 = vand.u32 %v176, 4294901760
      %v1253 = vsub.f32 %v176, %v1252
      %v1254 = vand.u32 %v1253, 4294901760
      %1255 = vmatmul.mubr.f32.gmra.mrb[0].mxu0 %v1254
      %v1256 = vpop.f32.mrb[0].mxu0
      %v1257 = vadd.f32 %v1019, %v1256
      %v1258 = vpop.f32.mrb[0].mxu0
      %v1259 = vadd.f32 %v1021, %v1258
      %1260 = vmatprep.mubr.f32.mxu0 0.0
      %v1261 = vand.u32 %v177, 4294901760
      %v1262 = vsub.f32 %v177, %v1261
      %v1263 = vand.u32 %v1262, 4294901760
      %1264 = vmatmul.mubr.f32.gmra.mrb[0].mxu0 %v1263
      %v1265 = vpop.f32.mrb[0].mxu0
      %v1266 = vadd.f32 %v1027, %v1265
      %v1267 = vpop.f32.mrb[0].mxu0
      %v1268 = vadd.f32 %v1029, %v1267
      %1269 = vmatprep.mubr.f32.mxu0 0.0
      %v1270 = vand.u32 %v178, 4294901760
      %v1271 = vsub.f32 %v178, %v1270
      %v1272 = vand.u32 %v1271, 4294901760
      %1273 = vmatmul.mubr.f32.gmra.mrb[0].mxu0 %v1272
      %v1274 = vpop.f32.mrb[0].mxu0
      %v1275 = vadd.f32 %v1035, %v1274
      %v1276 = vpop.f32.mrb[0].mxu0
      %v1277 = vadd.f32 %v1037, %v1276
      %1278 = vmatprep.mubr.f32.mxu0 0.0
      %v1279 = vand.u32 %v179, 4294901760
      %v1280 = vsub.f32 %v179, %v1279
      %v1281 = vand.u32 %v1280, 4294901760
      %1282 = vmatmul.mubr.f32.gmra.mrb[0].mxu0 %v1281
      %v1283 = vpop.f32.mrb[0].mxu0
      %v1284 = vadd.f32 %v1043, %v1283
      %v1285 = vpop.f32.mrb[0].mxu0
      %v1286 = vadd.f32 %v1045, %v1285
      %1287 = vdwg.mxu0
      %v1288 = vand.u32 %v133, 4294901760
      %v1289 = vsub.f32 %v133, %v1288
      %v1290 = vand.u32 %v1289, 4294901760
      %1291 = vmatprep.subr.mxu0 %v1290
      %v1292 = vand.u32 %v132, 4294901760
      %v1293 = vsub.f32 %v132, %v1292
      %v1294 = vand.u32 %v1293, 4294901760
      %1295 = vmatpush1.msra.mxu0 %v1294
      %v1296 = vand.u32 %v135, 4294901760
      %v1297 = vsub.f32 %v135, %v1296
      %v1298 = vand.u32 %v1297, 4294901760
      %1299 = vmatprep.subr.mxu0 %v1298
      %v1300 = vand.u32 %v134, 4294901760
      %v1301 = vsub.f32 %v134, %v1300
      %v1302 = vand.u32 %v1301, 4294901760
      %1303 = vmatpush1.msra.mxu0 %v1302
      %v1304 = vand.u32 %v137, 4294901760
      %v1305 = vsub.f32 %v137, %v1304
      %v1306 = vand.u32 %v1305, 4294901760
      %1307 = vmatprep.subr.mxu0 %v1306
      %v1308 = vand.u32 %v136, 4294901760
      %v1309 = vsub.f32 %v136, %v1308
      %v1310 = vand.u32 %v1309, 4294901760
      %1311 = vmatpush1.msra.mxu0 %v1310
      %v1312 = vand.u32 %v139, 4294901760
      %v1313 = vsub.f32 %v139, %v1312
      %v1314 = vand.u32 %v1313, 4294901760
      %1315 = vmatprep.subr.mxu0 %v1314
      %v1316 = vand.u32 %v138, 4294901760
      %v1317 = vsub.f32 %v138, %v1316
      %v1318 = vand.u32 %v1317, 4294901760
      %1319 = vmatpush1.msra.mxu0 %v1318
      %v1320 = vand.u32 %v141, 4294901760
      %v1321 = vsub.f32 %v141, %v1320
      %v1322 = vand.u32 %v1321, 4294901760
      %1323 = vmatprep.subr.mxu0 %v1322
      %v1324 = vand.u32 %v140, 4294901760
      %v1325 = vsub.f32 %v140, %v1324
      %v1326 = vand.u32 %v1325, 4294901760
      %1327 = vmatpush1.msra.mxu0 %v1326
      %v1328 = vand.u32 %v143, 4294901760
      %v1329 = vsub.f32 %v143, %v1328
      %v1330 = vand.u32 %v1329, 4294901760
      %1331 = vmatprep.subr.mxu0 %v1330
      %v1332 = vand.u32 %v142, 4294901760
      %v1333 = vsub.f32 %v142, %v1332
      %v1334 = vand.u32 %v1333, 4294901760
      %1335 = vmatpush1.msra.mxu0 %v1334
      %v1336 = vand.u32 %v145, 4294901760
      %v1337 = vsub.f32 %v145, %v1336
      %v1338 = vand.u32 %v1337, 4294901760
      %1339 = vmatprep.subr.mxu0 %v1338
      %v1340 = vand.u32 %v144, 4294901760
      %v1341 = vsub.f32 %v144, %v1340
      %v1342 = vand.u32 %v1341, 4294901760
      %1343 = vmatpush1.msra.mxu0 %v1342
      %v1344 = vand.u32 %v147, 4294901760
      %v1345 = vsub.f32 %v147, %v1344
      %v1346 = vand.u32 %v1345, 4294901760
      %1347 = vmatprep.subr.mxu0 %v1346
      %v1348 = vand.u32 %v146, 4294901760
      %v1349 = vsub.f32 %v146, %v1348
      %v1350 = vand.u32 %v1349, 4294901760
      %1351 = vmatpush1.msra.mxu0 %v1350
      %v1352 = vand.u32 %v149, 4294901760
      %v1353 = vsub.f32 %v149, %v1352
      %v1354 = vand.u32 %v1353, 4294901760
      %1355 = vmatprep.subr.mxu0 %v1354
      %v1356 = vand.u32 %v148, 4294901760
      %v1357 = vsub.f32 %v148, %v1356
      %v1358 = vand.u32 %v1357, 4294901760
      %1359 = vmatpush1.msra.mxu0 %v1358
      %v1360 = vand.u32 %v151, 4294901760
      %v1361 = vsub.f32 %v151, %v1360
      %v1362 = vand.u32 %v1361, 4294901760
      %1363 = vmatprep.subr.mxu0 %v1362
      %v1364 = vand.u32 %v150, 4294901760
      %v1365 = vsub.f32 %v150, %v1364
      %v1366 = vand.u32 %v1365, 4294901760
      %1367 = vmatpush1.msra.mxu0 %v1366
      %v1368 = vand.u32 %v153, 4294901760
      %v1369 = vsub.f32 %v153, %v1368
      %v1370 = vand.u32 %v1369, 4294901760
      %1371 = vmatprep.subr.mxu0 %v1370
      %v1372 = vand.u32 %v152, 4294901760
      %v1373 = vsub.f32 %v152, %v1372
      %v1374 = vand.u32 %v1373, 4294901760
      %1375 = vmatpush1.msra.mxu0 %v1374
      %v1376 = vand.u32 %v155, 4294901760
      %v1377 = vsub.f32 %v155, %v1376
      %v1378 = vand.u32 %v1377, 4294901760
      %1379 = vmatprep.subr.mxu0 %v1378
      %v1380 = vand.u32 %v154, 4294901760
      %v1381 = vsub.f32 %v154, %v1380
      %v1382 = vand.u32 %v1381, 4294901760
      %1383 = vmatpush1.msra.mxu0 %v1382
      %v1384 = vand.u32 %v157, 4294901760
      %v1385 = vsub.f32 %v157, %v1384
      %v1386 = vand.u32 %v1385, 4294901760
      %1387 = vmatprep.subr.mxu0 %v1386
      %v1388 = vand.u32 %v156, 4294901760
      %v1389 = vsub.f32 %v156, %v1388
      %v1390 = vand.u32 %v1389, 4294901760
      %1391 = vmatpush1.msra.mxu0 %v1390
      %v1392 = vand.u32 %v159, 4294901760
      %v1393 = vsub.f32 %v159, %v1392
      %v1394 = vand.u32 %v1393, 4294901760
      %1395 = vmatprep.subr.mxu0 %v1394
      %v1396 = vand.u32 %v158, 4294901760
      %v1397 = vsub.f32 %v158, %v1396
      %v1398 = vand.u32 %v1397, 4294901760
      %1399 = vmatpush1.msra.mxu0 %v1398
      %v1400 = vand.u32 %v161, 4294901760
      %v1401 = vsub.f32 %v161, %v1400
      %v1402 = vand.u32 %v1401, 4294901760
      %1403 = vmatprep.subr.mxu0 %v1402
      %v1404 = vand.u32 %v160, 4294901760
      %v1405 = vsub.f32 %v160, %v1404
      %v1406 = vand.u32 %v1405, 4294901760
      %1407 = vmatpush1.msra.mxu0 %v1406
      %v1408 = vand.u32 %v163, 4294901760
      %v1409 = vsub.f32 %v163, %v1408
      %v1410 = vand.u32 %v1409, 4294901760
      %1411 = vmatprep.subr.mxu0 %v1410
      %v1412 = vand.u32 %v162, 4294901760
      %v1413 = vsub.f32 %v162, %v1412
      %v1414 = vand.u32 %v1413, 4294901760
      %1415 = vmatpush1.msra.mxu0 %v1414
      %1416 = vmatprep.subr.mxu0 0.0
      %1417 = vmatpush1.msra.mxu0 0.0
      %1418 = vmatprep.subr.mxu0 0.0
      %1419 = vmatpush1.msra.mxu0 0.0
      %1420 = vmatprep.subr.mxu0 0.0
      %1421 = vmatpush1.msra.mxu0 0.0
      %1422 = vmatprep.subr.mxu0 0.0
      %1423 = vmatpush1.msra.mxu0 0.0
      %1424 = vmatprep.subr.mxu0 0.0
      %1425 = vmatpush1.msra.mxu0 0.0
      %1426 = vmatprep.subr.mxu0 0.0
      %1427 = vmatpush1.msra.mxu0 0.0
      %1428 = vmatprep.subr.mxu0 0.0
      %1429 = vmatpush1.msra.mxu0 0.0
      %1430 = vmatprep.subr.mxu0 0.0
      %1431 = vmatpush1.msra.mxu0 0.0
      %1432 = vmatprep.subr.mxu0 0.0
      %1433 = vmatpush1.msra.mxu0 0.0
      %1434 = vmatprep.subr.mxu0 0.0
      %1435 = vmatpush1.msra.mxu0 0.0
      %1436 = vmatprep.subr.mxu0 0.0
      %1437 = vmatpush1.msra.mxu0 0.0
      %1438 = vmatprep.subr.mxu0 0.0
      %1439 = vmatpush1.msra.mxu0 0.0
      %1440 = vmatprep.subr.mxu0 0.0
      %1441 = vmatpush1.msra.mxu0 0.0
      %1442 = vmatprep.subr.mxu0 0.0
      %1443 = vmatpush1.msra.mxu0 0.0
      %1444 = vmatprep.subr.mxu0 0.0
      %1445 = vmatpush1.msra.mxu0 0.0
      %1446 = vmatprep.subr.mxu0 0.0
      %1447 = vmatpush1.msra.mxu0 0.0
      %1448 = vmatprep.mubr.f32.mxu0 0.0
      %v1449 = vand.u32 %v164, 4294901760
      %1450 = vmatmul.mubr.f32.gmra.mrb[0].mxu0 %v1449
      %v1451 = vpop.f32.mrb[0].mxu0
      %v1452 = vadd.f32 %v1149, %v1451
      %v1453 = vpop.f32.mrb[0].mxu0
      %v1454 = vadd.f32 %v1151, %v1453
      %1455 = vmatprep.mubr.f32.mxu0 0.0
      %v1456 = vand.u32 %v165, 4294901760
      %1457 = vmatmul.mubr.f32.gmra.mrb[0].mxu0 %v1456
      %v1458 = vpop.f32.mrb[0].mxu0
      %v1459 = vadd.f32 %v1158, %v1458
      %v1460 = vpop.f32.mrb[0].mxu0
      %v1461 = vadd.f32 %v1160, %v1460
      %1462 = vmatprep.mubr.f32.mxu0 0.0
      %v1463 = vand.u32 %v166, 4294901760
      %1464 = vmatmul.mubr.f32.gmra.mrb[0].mxu0 %v1463
      %v1465 = vpop.f32.mrb[0].mxu0
      %v1466 = vadd.f32 %v1167, %v1465
      %v1467 = vpop.f32.mrb[0].mxu0
      %v1468 = vadd.f32 %v1169, %v1467
      %1469 = vmatprep.mubr.f32.mxu0 0.0
      %v1470 = vand.u32 %v167, 4294901760
      %1471 = vmatmul.mubr.f32.gmra.mrb[0].mxu0 %v1470
      %v1472 = vpop.f32.mrb[0].mxu0
      %v1473 = vadd.f32 %v1176, %v1472
      %v1474 = vpop.f32.mrb[0].mxu0
      %v1475 = vadd.f32 %v1178, %v1474
      %1476 = vmatprep.mubr.f32.mxu0 0.0
      %v1477 = vand.u32 %v168, 4294901760
      %1478 = vmatmul.mubr.f32.gmra.mrb[0].mxu0 %v1477
      %v1479 = vpop.f32.mrb[0].mxu0
      %v1480 = vadd.f32 %v1185, %v1479
      %v1481 = vpop.f32.mrb[0].mxu0
      %v1482 = vadd.f32 %v1187, %v1481
      %1483 = vmatprep.mubr.f32.mxu0 0.0
      %v1484 = vand.u32 %v169, 4294901760
      %1485 = vmatmul.mubr.f32.gmra.mrb[0].mxu0 %v1484
      %v1486 = vpop.f32.mrb[0].mxu0
      %v1487 = vadd.f32 %v1194, %v1486
      %v1488 = vpop.f32.mrb[0].mxu0
      %v1489 = vadd.f32 %v1196, %v1488
      %1490 = vmatprep.mubr.f32.mxu0 0.0
      %v1491 = vand.u32 %v170, 4294901760
      %1492 = vmatmul.mubr.f32.gmra.mrb[0].mxu0 %v1491
      %v1493 = vpop.f32.mrb[0].mxu0
      %v1494 = vadd.f32 %v1203, %v1493
      %v1495 = vpop.f32.mrb[0].mxu0
      %v1496 = vadd.f32 %v1205, %v1495
      %1497 = vmatprep.mubr.f32.mxu0 0.0
      %v1498 = vand.u32 %v171, 4294901760
      %1499 = vmatmul.mubr.f32.gmra.mrb[0].mxu0 %v1498
      %v1500 = vpop.f32.mrb[0].mxu0
      %v1501 = vadd.f32 %v1212, %v1500
      %v1502 = vpop.f32.mrb[0].mxu0
      %v1503 = vadd.f32 %v1214, %v1502
      %1504 = vmatprep.mubr.f32.mxu0 0.0
      %v1505 = vand.u32 %v172, 4294901760
      %1506 = vmatmul.mubr.f32.gmra.mrb[0].mxu0 %v1505
      %v1507 = vpop.f32.mrb[0].mxu0
      %v1508 = vadd.f32 %v1221, %v1507
      %v1509 = vpop.f32.mrb[0].mxu0
      %v1510 = vadd.f32 %v1223, %v1509
      %1511 = vmatprep.mubr.f32.mxu0 0.0
      %v1512 = vand.u32 %v173, 4294901760
      %1513 = vmatmul.mubr.f32.gmra.mrb[0].mxu0 %v1512
      %v1514 = vpop.f32.mrb[0].mxu0
      %v1515 = vadd.f32 %v1230, %v1514
      %v1516 = vpop.f32.mrb[0].mxu0
      %v1517 = vadd.f32 %v1232, %v1516
      %1518 = vmatprep.mubr.f32.mxu0 0.0
      %v1519 = vand.u32 %v174, 4294901760
      %1520 = vmatmul.mubr.f32.gmra.mrb[0].mxu0 %v1519
      %v1521 = vpop.f32.mrb[0].mxu0
      %v1522 = vadd.f32 %v1239, %v1521
      %v1523 = vpop.f32.mrb[0].mxu0
      %v1524 = vadd.f32 %v1241, %v1523
      %1525 = vmatprep.mubr.f32.mxu0 0.0
      %v1526 = vand.u32 %v175, 4294901760
      %1527 = vmatmul.mubr.f32.gmra.mrb[0].mxu0 %v1526
      %v1528 = vpop.f32.mrb[0].mxu0
      %v1529 = vadd.f32 %v1248, %v1528
      %v1530 = vpop.f32.mrb[0].mxu0
      %v1531 = vadd.f32 %v1250, %v1530
      %1532 = vmatprep.mubr.f32.mxu0 0.0
      %v1533 = vand.u32 %v176, 4294901760
      %1534 = vmatmul.mubr.f32.gmra.mrb[0].mxu0 %v1533
      %v1535 = vpop.f32.mrb[0].mxu0
      %v1536 = vadd.f32 %v1257, %v1535
      %v1537 = vpop.f32.mrb[0].mxu0
      %v1538 = vadd.f32 %v1259, %v1537
      %1539 = vmatprep.mubr.f32.mxu0 0.0
      %v1540 = vand.u32 %v177, 4294901760
      %1541 = vmatmul.mubr.f32.gmra.mrb[0].mxu0 %v1540
      %v1542 = vpop.f32.mrb[0].mxu0
      %v1543 = vadd.f32 %v1266, %v1542
      %v1544 = vpop.f32.mrb[0].mxu0
      %v1545 = vadd.f32 %v1268, %v1544
      %1546 = vmatprep.mubr.f32.mxu0 0.0
      %v1547 = vand.u32 %v178, 4294901760
      %1548 = vmatmul.mubr.f32.gmra.mrb[0].mxu0 %v1547
      %v1549 = vpop.f32.mrb[0].mxu0
      %v1550 = vadd.f32 %v1275, %v1549
      %v1551 = vpop.f32.mrb[0].mxu0
      %v1552 = vadd.f32 %v1277, %v1551
      %1553 = vmatprep.mubr.f32.mxu0 0.0
      %v1554 = vand.u32 %v179, 4294901760
      %1555 = vmatmul.mubr.f32.gmra.mrb[0].mxu0 %v1554
      %v1556 = vpop.f32.mrb[0].mxu0
      %v1557 = vadd.f32 %v1284, %v1556
      %v1558 = vpop.f32.mrb[0].mxu0
      %v1559 = vadd.f32 %v1286, %v1558
      %1560 = vdwg.mxu0
      %v1561 = vand.u32 %v133, 4294901760
      %1562 = vmatprep.subr.mxu0 %v1561
      %v1563 = vand.u32 %v132, 4294901760
      %1564 = vmatpush1.msra.mxu0 %v1563
      %v1565 = vand.u32 %v135, 4294901760
      %1566 = vmatprep.subr.mxu0 %v1565
      %v1567 = vand.u32 %v134, 4294901760
      %1568 = vmatpush1.msra.mxu0 %v1567
      %v1569 = vand.u32 %v137, 4294901760
      %1570 = vmatprep.subr.mxu0 %v1569
      %v1571 = vand.u32 %v136, 4294901760
      %1572 = vmatpush1.msra.mxu0 %v1571
      %v1573 = vand.u32 %v139, 4294901760
      %1574 = vmatprep.subr.mxu0 %v1573
      %v1575 = vand.u32 %v138, 4294901760
      %1576 = vmatpush1.msra.mxu0 %v1575
      %v1577 = vand.u32 %v141, 4294901760
      %1578 = vmatprep.subr.mxu0 %v1577
      %v1579 = vand.u32 %v140, 4294901760
      %1580 = vmatpush1.msra.mxu0 %v1579
      %v1581 = vand.u32 %v143, 4294901760
      %1582 = vmatprep.subr.mxu0 %v1581
      %v1583 = vand.u32 %v142, 4294901760
      %1584 = vmatpush1.msra.mxu0 %v1583
      %v1585 = vand.u32 %v145, 4294901760
      %1586 = vmatprep.subr.mxu0 %v1585
      %v1587 = vand.u32 %v144, 4294901760
      %1588 = vmatpush1.msra.mxu0 %v1587
      %v1589 = vand.u32 %v147, 4294901760
      %1590 = vmatprep.subr.mxu0 %v1589
      %v1591 = vand.u32 %v146, 4294901760
      %1592 = vmatpush1.msra.mxu0 %v1591
      %v1593 = vand.u32 %v149, 4294901760
      %1594 = vmatprep.subr.mxu0 %v1593
      %v1595 = vand.u32 %v148, 4294901760
      %1596 = vmatpush1.msra.mxu0 %v1595
      %v1597 = vand.u32 %v151, 4294901760
      %1598 = vmatprep.subr.mxu0 %v1597
      %v1599 = vand.u32 %v150, 4294901760
      %1600 = vmatpush1.msra.mxu0 %v1599
      %v1601 = vand.u32 %v153, 4294901760
      %1602 = vmatprep.subr.mxu0 %v1601
      %v1603 = vand.u32 %v152, 4294901760
      %1604 = vmatpush1.msra.mxu0 %v1603
      %v1605 = vand.u32 %v155, 4294901760
      %1606 = vmatprep.subr.mxu0 %v1605
      %v1607 = vand.u32 %v154, 4294901760
      %1608 = vmatpush1.msra.mxu0 %v1607
      %v1609 = vand.u32 %v157, 4294901760
      %1610 = vmatprep.subr.mxu0 %v1609
      %v1611 = vand.u32 %v156, 4294901760
      %1612 = vmatpush1.msra.mxu0 %v1611
      %v1613 = vand.u32 %v159, 4294901760
      %1614 = vmatprep.subr.mxu0 %v1613
      %v1615 = vand.u32 %v158, 4294901760
      %1616 = vmatpush1.msra.mxu0 %v1615
      %v1617 = vand.u32 %v161, 4294901760
      %1618 = vmatprep.subr.mxu0 %v1617
      %v1619 = vand.u32 %v160, 4294901760
      %1620 = vmatpush1.msra.mxu0 %v1619
      %v1621 = vand.u32 %v163, 4294901760
      %1622 = vmatprep.subr.mxu0 %v1621
      %v1623 = vand.u32 %v162, 4294901760
      %1624 = vmatpush1.msra.mxu0 %v1623
      %1625 = vmatprep.subr.mxu0 0.0
      %1626 = vmatpush1.msra.mxu0 0.0
      %1627 = vmatprep.subr.mxu0 0.0
      %1628 = vmatpush1.msra.mxu0 0.0
      %1629 = vmatprep.subr.mxu0 0.0
      %1630 = vmatpush1.msra.mxu0 0.0
      %1631 = vmatprep.subr.mxu0 0.0
      %1632 = vmatpush1.msra.mxu0 0.0
      %1633 = vmatprep.subr.mxu0 0.0
      %1634 = vmatpush1.msra.mxu0 0.0
      %1635 = vmatprep.subr.mxu0 0.0
      %1636 = vmatpush1.msra.mxu0 0.0
      %1637 = vmatprep.subr.mxu0 0.0
      %1638 = vmatpush1.msra.mxu0 0.0
      %1639 = vmatprep.subr.mxu0 0.0
      %1640 = vmatpush1.msra.mxu0 0.0
      %1641 = vmatprep.subr.mxu0 0.0
      %1642 = vmatpush1.msra.mxu0 0.0
      %1643 = vmatprep.subr.mxu0 0.0
      %1644 = vmatpush1.msra.mxu0 0.0
      %1645 = vmatprep.subr.mxu0 0.0
      %1646 = vmatpush1.msra.mxu0 0.0
      %1647 = vmatprep.subr.mxu0 0.0
      %1648 = vmatpush1.msra.mxu0 0.0
      %1649 = vmatprep.subr.mxu0 0.0
      %1650 = vmatpush1.msra.mxu0 0.0
      %1651 = vmatprep.subr.mxu0 0.0
      %1652 = vmatpush1.msra.mxu0 0.0
      %1653 = vmatprep.subr.mxu0 0.0
      %1654 = vmatpush1.msra.mxu0 0.0
      %1655 = vmatprep.subr.mxu0 0.0
      %1656 = vmatpush1.msra.mxu0 0.0
      %1657 = vmatprep.mubr.f32.mxu0 0.0
      %v1658 = vand.u32 %v164, 4294901760
      %1659 = vmatmul.mubr.f32.gmra.mrb[0].mxu0 %v1658
      %v1660 = vpop.f32.mrb[0].mxu0
      %v1661 = vadd.f32 %v1452, %v1660
      %v1662 = vpop.f32.mrb[0].mxu0
      %v1663 = vadd.f32 %v1454, %v1662
      %1664 = vmatprep.mubr.f32.mxu0 0.0
      %v1665 = vand.u32 %v165, 4294901760
      %1666 = vmatmul.mubr.f32.gmra.mrb[0].mxu0 %v1665
      %v1667 = vpop.f32.mrb[0].mxu0
      %v1668 = vadd.f32 %v1459, %v1667
      %v1669 = vpop.f32.mrb[0].mxu0
      %v1670 = vadd.f32 %v1461, %v1669
      %1671 = vmatprep.mubr.f32.mxu0 0.0
      %v1672 = vand.u32 %v166, 4294901760
      %1673 = vmatmul.mubr.f32.gmra.mrb[0].mxu0 %v1672
      %v1674 = vpop.f32.mrb[0].mxu0
      %v1675 = vadd.f32 %v1466, %v1674
      %v1676 = vpop.f32.mrb[0].mxu0
      %v1677 = vadd.f32 %v1468, %v1676
      %1678 = vmatprep.mubr.f32.mxu0 0.0
      %v1679 = vand.u32 %v167, 4294901760
      %1680 = vmatmul.mubr.f32.gmra.mrb[0].mxu0 %v1679
      %v1681 = vpop.f32.mrb[0].mxu0
      %v1682 = vadd.f32 %v1473, %v1681
      %v1683 = vpop.f32.mrb[0].mxu0
      %v1684 = vadd.f32 %v1475, %v1683
      %1685 = vmatprep.mubr.f32.mxu0 0.0
      %v1686 = vand.u32 %v168, 4294901760
      %1687 = vmatmul.mubr.f32.gmra.mrb[0].mxu0 %v1686
      %v1688 = vpop.f32.mrb[0].mxu0
      %v1689 = vadd.f32 %v1480, %v1688
      %v1690 = vpop.f32.mrb[0].mxu0
      %v1691 = vadd.f32 %v1482, %v1690
      %1692 = vmatprep.mubr.f32.mxu0 0.0
      %v1693 = vand.u32 %v169, 4294901760
      %1694 = vmatmul.mubr.f32.gmra.mrb[0].mxu0 %v1693
      %v1695 = vpop.f32.mrb[0].mxu0
      %v1696 = vadd.f32 %v1487, %v1695
      %v1697 = vpop.f32.mrb[0].mxu0
      %v1698 = vadd.f32 %v1489, %v1697
      %1699 = vmatprep.mubr.f32.mxu0 0.0
      %v1700 = vand.u32 %v170, 4294901760
      %1701 = vmatmul.mubr.f32.gmra.mrb[0].mxu0 %v1700
      %v1702 = vpop.f32.mrb[0].mxu0
      %v1703 = vadd.f32 %v1494, %v1702
      %v1704 = vpop.f32.mrb[0].mxu0
      %v1705 = vadd.f32 %v1496, %v1704
      %1706 = vmatprep.mubr.f32.mxu0 0.0
      %v1707 = vand.u32 %v171, 4294901760
      %1708 = vmatmul.mubr.f32.gmra.mrb[0].mxu0 %v1707
      %v1709 = vpop.f32.mrb[0].mxu0
      %v1710 = vadd.f32 %v1501, %v1709
      %v1711 = vpop.f32.mrb[0].mxu0
      %v1712 = vadd.f32 %v1503, %v1711
      %1713 = vmatprep.mubr.f32.mxu0 0.0
      %v1714 = vand.u32 %v172, 4294901760
      %1715 = vmatmul.mubr.f32.gmra.mrb[0].mxu0 %v1714
      %v1716 = vpop.f32.mrb[0].mxu0
      %v1717 = vadd.f32 %v1508, %v1716
      %v1718 = vpop.f32.mrb[0].mxu0
      %v1719 = vadd.f32 %v1510, %v1718
      %1720 = vmatprep.mubr.f32.mxu0 0.0
      %v1721 = vand.u32 %v173, 4294901760
      %1722 = vmatmul.mubr.f32.gmra.mrb[0].mxu0 %v1721
      %v1723 = vpop.f32.mrb[0].mxu0
      %v1724 = vadd.f32 %v1515, %v1723
      %v1725 = vpop.f32.mrb[0].mxu0
      %v1726 = vadd.f32 %v1517, %v1725
      %1727 = vmatprep.mubr.f32.mxu0 0.0
      %v1728 = vand.u32 %v174, 4294901760
      %1729 = vmatmul.mubr.f32.gmra.mrb[0].mxu0 %v1728
      %v1730 = vpop.f32.mrb[0].mxu0
      %v1731 = vadd.f32 %v1522, %v1730
      %v1732 = vpop.f32.mrb[0].mxu0
      %v1733 = vadd.f32 %v1524, %v1732
      %1734 = vmatprep.mubr.f32.mxu0 0.0
      %v1735 = vand.u32 %v175, 4294901760
      %1736 = vmatmul.mubr.f32.gmra.mrb[0].mxu0 %v1735
      %v1737 = vpop.f32.mrb[0].mxu0
      %v1738 = vadd.f32 %v1529, %v1737
      %v1739 = vpop.f32.mrb[0].mxu0
      %v1740 = vadd.f32 %v1531, %v1739
      %1741 = vmatprep.mubr.f32.mxu0 0.0
      %v1742 = vand.u32 %v176, 4294901760
      %1743 = vmatmul.mubr.f32.gmra.mrb[0].mxu0 %v1742
      %v1744 = vpop.f32.mrb[0].mxu0
      %v1745 = vadd.f32 %v1536, %v1744
      %v1746 = vpop.f32.mrb[0].mxu0
      %v1747 = vadd.f32 %v1538, %v1746
      %1748 = vmatprep.mubr.f32.mxu0 0.0
      %v1749 = vand.u32 %v177, 4294901760
      %1750 = vmatmul.mubr.f32.gmra.mrb[0].mxu0 %v1749
      %v1751 = vpop.f32.mrb[0].mxu0
      %v1752 = vadd.f32 %v1543, %v1751
      %v1753 = vpop.f32.mrb[0].mxu0
      %v1754 = vadd.f32 %v1545, %v1753
      %1755 = vmatprep.mubr.f32.mxu0 0.0
      %v1756 = vand.u32 %v178, 4294901760
      %1757 = vmatmul.mubr.f32.gmra.mrb[0].mxu0 %v1756
      %v1758 = vpop.f32.mrb[0].mxu0
      %v1759 = vadd.f32 %v1550, %v1758
      %v1760 = vpop.f32.mrb[0].mxu0
      %v1761 = vadd.f32 %v1552, %v1760
      %1762 = vmatprep.mubr.f32.mxu0 0.0
      %v1763 = vand.u32 %v179, 4294901760
      %1764 = vmatmul.mubr.f32.gmra.mrb[0].mxu0 %v1763
      %v1765 = vpop.f32.mrb[0].mxu0
      %v1766 = vadd.f32 %v1557, %v1765
      %v1767 = vpop.f32.mrb[0].mxu0
      %v1768 = vadd.f32 %v1559, %v1767
      %1769 = vdwg.mxu0
      %v1770 = vld [vmem:[#allocation6] sm:$0xff]
      %v1771 = vld [vmem:[#allocation6 + $0x8] sm:$0xff]
      %v1772 = vld [vmem:[#allocation6 + $0x10] sm:$0xff]
      %v1773 = vld [vmem:[#allocation6 + $0x18] sm:$0xff]
      %v1774 = vld [vmem:[#allocation6 + $0x20] sm:$0xff]
      %v1775 = vld [vmem:[#allocation6 + $0x28] sm:$0xff]
      %v1776 = vld [vmem:[#allocation6 + $0x30] sm:$0xff]
      %v1777 = vld [vmem:[#allocation6 + $0x38] sm:$0xff]
      %v1778 = vld [vmem:[#allocation6 + $0x40] sm:$0xff]
      %v1779 = vld [vmem:[#allocation6 + $0x48] sm:$0xff]
      %v1780 = vld [vmem:[#allocation6 + $0x50] sm:$0xff]
      %v1781 = vld [vmem:[#allocation6 + $0x58] sm:$0xff]
      %v1782 = vld [vmem:[#allocation6 + $0x60] sm:$0xff]
      %v1783 = vld [vmem:[#allocation6 + $0x68] sm:$0xff]
      %v1784 = vld [vmem:[#allocation6 + $0x70] sm:$0xff]
      %v1785 = vld [vmem:[#allocation6 + $0x78] sm:$0xff]
      %v1786 = vld [vmem:[#allocation6 + $0x80] sm:$0xff]
      %v1787 = vld [vmem:[#allocation6 + $0x88] sm:$0xff]
      %v1788 = vld [vmem:[#allocation6 + $0x90] sm:$0xff]
      %v1789 = vld [vmem:[#allocation6 + $0x98] sm:$0xff]
      %v1790 = vld [vmem:[#allocation6 + $0xa0] sm:$0xff]
      %v1791 = vld [vmem:[#allocation6 + $0xa8] sm:$0xff]
      %v1792 = vld [vmem:[#allocation6 + $0xb0] sm:$0xff]
      %v1793 = vld [vmem:[#allocation6 + $0xb8] sm:$0xff]
      %v1794 = vld [vmem:[#allocation6 + $0xc0] sm:$0xff]
      %v1795 = vld [vmem:[#allocation6 + $0xc8] sm:$0xff]
      %v1796 = vld [vmem:[#allocation6 + $0xd0] sm:$0xff]
      %v1797 = vld [vmem:[#allocation6 + $0xd8] sm:$0xff]
      %v1798 = vld [vmem:[#allocation6 + $0xe0] sm:$0xff]
      %v1799 = vld [vmem:[#allocation6 + $0xe8] sm:$0xff]
      %v1800 = vld [vmem:[#allocation6 + $0xf0] sm:$0xff]
      %v1801 = vld [vmem:[#allocation6 + $0xf8] sm:$0xff]
      %v1802 = vld [vmem:[#allocation6 + $0x100] sm:$0xff]
      %v1803 = vld [vmem:[#allocation6 + $0x108] sm:$0xff]
      %v1804 = vld [vmem:[#allocation6 + $0x110] sm:$0xff]
      %v1805 = vld [vmem:[#allocation6 + $0x118] sm:$0xff]
      %v1806 = vld [vmem:[#allocation6 + $0x120] sm:$0xff]
      %v1807 = vld [vmem:[#allocation6 + $0x128] sm:$0xff]
      %v1808 = vld [vmem:[#allocation6 + $0x130] sm:$0xff]
      %v1809 = vld [vmem:[#allocation6 + $0x138] sm:$0xff]
      %v1810 = vld [vmem:[#allocation6 + $0x140] sm:$0xff]
      %v1811 = vld [vmem:[#allocation6 + $0x148] sm:$0xff]
      %v1812 = vld [vmem:[#allocation6 + $0x150] sm:$0xff]
      %v1813 = vld [vmem:[#allocation6 + $0x158] sm:$0xff]
      %v1814 = vld [vmem:[#allocation6 + $0x160] sm:$0xff]
      %v1815 = vld [vmem:[#allocation6 + $0x168] sm:$0xff]
      %v1816 = vld [vmem:[#allocation6 + $0x170] sm:$0xff]
      %v1817 = vld [vmem:[#allocation6 + $0x178] sm:$0xff]
      %v1818 = vld [vmem:[#allocation6 + $0x180] sm:$0xff]
      %v1819 = vld [vmem:[#allocation6 + $0x188] sm:$0xff]
      %v1820 = vld [vmem:[#allocation6 + $0x190] sm:$0xff]
      %v1821 = vld [vmem:[#allocation6 + $0x198] sm:$0xff]
      %v1822 = vld [vmem:[#allocation6 + $0x1a0] sm:$0xff]
      %v1823 = vld [vmem:[#allocation6 + $0x1a8] sm:$0xff]
      %v1824 = vld [vmem:[#allocation6 + $0x1b0] sm:$0xff]
      %v1825 = vld [vmem:[#allocation6 + $0x1b8] sm:$0xff]
      %v1826 = vld [vmem:[#allocation6 + $0x1c0] sm:$0xff]
      %v1827 = vld [vmem:[#allocation6 + $0x1c8] sm:$0xff]
      %v1828 = vld [vmem:[#allocation6 + $0x1d0] sm:$0xff]
      %v1829 = vld [vmem:[#allocation6 + $0x1d8] sm:$0xff]
      %v1830 = vld [vmem:[#allocation6 + $0x1e0] sm:$0xff]
      %v1831 = vld [vmem:[#allocation6 + $0x1e8] sm:$0xff]
      %v1832 = vld [vmem:[#allocation6 + $0x1f0] sm:$0xff]
      %v1833 = vld [vmem:[#allocation6 + $0x1f8] sm:$0xff]
      %v1834 = vld [vmem:[#allocation8] sm:$0xff]
      %v1835 = vld [vmem:[#allocation8 + $0x8] sm:$0xff]
      %v1836 = vld [vmem:[#allocation8 + $0x10] sm:$0xff]
      %v1837 = vld [vmem:[#allocation8 + $0x18] sm:$0xff]
      %v1838 = vld [vmem:[#allocation8 + $0x20] sm:$0xff]
      %v1839 = vld [vmem:[#allocation8 + $0x28] sm:$0xff]
      %v1840 = vld [vmem:[#allocation8 + $0x30] sm:$0xff]
      %v1841 = vld [vmem:[#allocation8 + $0x38] sm:$0xff]
      %v1842 = vld [vmem:[#allocation8 + $0x40] sm:$0xff]
      %v1843 = vld [vmem:[#allocation8 + $0x48] sm:$0xff]
      %v1844 = vld [vmem:[#allocation8 + $0x50] sm:$0xff]
      %v1845 = vld [vmem:[#allocation8 + $0x58] sm:$0xff]
      %v1846 = vld [vmem:[#allocation8 + $0x60] sm:$0xff]
      %v1847 = vld [vmem:[#allocation8 + $0x68] sm:$0xff]
      %v1848 = vld [vmem:[#allocation8 + $0x70] sm:$0xff]
      %v1849 = vld [vmem:[#allocation8 + $0x78] sm:$0xff]
      %v1850 = vld [vmem:[#allocation8 + $0x80] sm:$0xff]
      %v1851 = vld [vmem:[#allocation8 + $0x88] sm:$0xff]
      %v1852 = vld [vmem:[#allocation8 + $0x90] sm:$0xff]
      %v1853 = vld [vmem:[#allocation8 + $0x98] sm:$0xff]
      %v1854 = vld [vmem:[#allocation8 + $0xa0] sm:$0xff]
      %v1855 = vld [vmem:[#allocation8 + $0xa8] sm:$0xff]
      %v1856 = vld [vmem:[#allocation8 + $0xb0] sm:$0xff]
      %v1857 = vld [vmem:[#allocation8 + $0xb8] sm:$0xff]
      %v1858 = vld [vmem:[#allocation8 + $0xc0] sm:$0xff]
      %v1859 = vld [vmem:[#allocation8 + $0xc8] sm:$0xff]
      %v1860 = vld [vmem:[#allocation8 + $0xd0] sm:$0xff]
      %v1861 = vld [vmem:[#allocation8 + $0xd8] sm:$0xff]
      %v1862 = vld [vmem:[#allocation8 + $0xe0] sm:$0xff]
      %v1863 = vld [vmem:[#allocation8 + $0xe8] sm:$0xff]
      %v1864 = vld [vmem:[#allocation8 + $0xf0] sm:$0xff]
      %v1865 = vld [vmem:[#allocation8 + $0xf8] sm:$0xff]
      %v1866 = vand.u32 %v1771, 4294901760
      %1867 = vmatprep.subr.mxu0 %v1866
      %v1868 = vand.u32 %v1770, 4294901760
      %1869 = vmatpush1.msra.mxu0 %v1868
      %v1870 = vand.u32 %v1773, 4294901760
      %1871 = vmatprep.subr.mxu0 %v1870
      %v1872 = vand.u32 %v1772, 4294901760
      %1873 = vmatpush1.msra.mxu0 %v1872
      %v1874 = vand.u32 %v1775, 4294901760
      %1875 = vmatprep.subr.mxu0 %v1874
      %v1876 = vand.u32 %v1774, 4294901760
      %1877 = vmatpush1.msra.mxu0 %v1876
      %v1878 = vand.u32 %v1777, 4294901760
      %1879 = vmatprep.subr.mxu0 %v1878
      %v1880 = vand.u32 %v1776, 4294901760
      %1881 = vmatpush1.msra.mxu0 %v1880
      %v1882 = vand.u32 %v1779, 4294901760
      %1883 = vmatprep.subr.mxu0 %v1882
      %v1884 = vand.u32 %v1778, 4294901760
      %1885 = vmatpush1.msra.mxu0 %v1884
      %v1886 = vand.u32 %v1781, 4294901760
      %1887 = vmatprep.subr.mxu0 %v1886
      %v1888 = vand.u32 %v1780, 4294901760
      %1889 = vmatpush1.msra.mxu0 %v1888
      %v1890 = vand.u32 %v1783, 4294901760
      %1891 = vmatprep.subr.mxu0 %v1890
      %v1892 = vand.u32 %v1782, 4294901760
      %1893 = vmatpush1.msra.mxu0 %v1892
      %v1894 = vand.u32 %v1785, 4294901760
      %1895 = vmatprep.subr.mxu0 %v1894
      %v1896 = vand.u32 %v1784, 4294901760
      %1897 = vmatpush1.msra.mxu0 %v1896
      %v1898 = vand.u32 %v1787, 4294901760
      %1899 = vmatprep.subr.mxu0 %v1898
      %v1900 = vand.u32 %v1786, 4294901760
      %1901 = vmatpush1.msra.mxu0 %v1900
      %v1902 = vand.u32 %v1789, 4294901760
      %1903 = vmatprep.subr.mxu0 %v1902
      %v1904 = vand.u32 %v1788, 4294901760
      %1905 = vmatpush1.msra.mxu0 %v1904
      %v1906 = vand.u32 %v1791, 4294901760
      %1907 = vmatprep.subr.mxu0 %v1906
      %v1908 = vand.u32 %v1790, 4294901760
      %1909 = vmatpush1.msra.mxu0 %v1908
      %v1910 = vand.u32 %v1793, 4294901760
      %1911 = vmatprep.subr.mxu0 %v1910
      %v1912 = vand.u32 %v1792, 4294901760
      %1913 = vmatpush1.msra.mxu0 %v1912
      %v1914 = vand.u32 %v1795, 4294901760
      %1915 = vmatprep.subr.mxu0 %v1914
      %v1916 = vand.u32 %v1794, 4294901760
      %1917 = vmatpush1.msra.mxu0 %v1916
      %v1918 = vand.u32 %v1797, 4294901760
      %1919 = vmatprep.subr.mxu0 %v1918
      %v1920 = vand.u32 %v1796, 4294901760
      %1921 = vmatpush1.msra.mxu0 %v1920
      %v1922 = vand.u32 %v1799, 4294901760
      %1923 = vmatprep.subr.mxu0 %v1922
      %v1924 = vand.u32 %v1798, 4294901760
      %1925 = vmatpush1.msra.mxu0 %v1924
      %v1926 = vand.u32 %v1801, 4294901760
      %1927 = vmatprep.subr.mxu0 %v1926
      %v1928 = vand.u32 %v1800, 4294901760
      %1929 = vmatpush1.msra.mxu0 %v1928
      %v1930 = vand.u32 %v1803, 4294901760
      %1931 = vmatprep.subr.mxu0 %v1930
      %v1932 = vand.u32 %v1802, 4294901760
      %1933 = vmatpush1.msra.mxu0 %v1932
      %v1934 = vand.u32 %v1805, 4294901760
      %1935 = vmatprep.subr.mxu0 %v1934
      %v1936 = vand.u32 %v1804, 4294901760
      %1937 = vmatpush1.msra.mxu0 %v1936
      %v1938 = vand.u32 %v1807, 4294901760
      %1939 = vmatprep.subr.mxu0 %v1938
      %v1940 = vand.u32 %v1806, 4294901760
      %1941 = vmatpush1.msra.mxu0 %v1940
      %v1942 = vand.u32 %v1809, 4294901760
      %1943 = vmatprep.subr.mxu0 %v1942
      %v1944 = vand.u32 %v1808, 4294901760
      %1945 = vmatpush1.msra.mxu0 %v1944
      %v1946 = vand.u32 %v1811, 4294901760
      %1947 = vmatprep.subr.mxu0 %v1946
      %v1948 = vand.u32 %v1810, 4294901760
      %1949 = vmatpush1.msra.mxu0 %v1948
      %v1950 = vand.u32 %v1813, 4294901760
      %1951 = vmatprep.subr.mxu0 %v1950
      %v1952 = vand.u32 %v1812, 4294901760
      %1953 = vmatpush1.msra.mxu0 %v1952
      %v1954 = vand.u32 %v1815, 4294901760
      %1955 = vmatprep.subr.mxu0 %v1954
      %v1956 = vand.u32 %v1814, 4294901760
      %1957 = vmatpush1.msra.mxu0 %v1956
      %v1958 = vand.u32 %v1817, 4294901760
      %1959 = vmatprep.subr.mxu0 %v1958
      %v1960 = vand.u32 %v1816, 4294901760
      %1961 = vmatpush1.msra.mxu0 %v1960
      %v1962 = vand.u32 %v1819, 4294901760
      %1963 = vmatprep.subr.mxu0 %v1962
      %v1964 = vand.u32 %v1818, 4294901760
      %1965 = vmatpush1.msra.mxu0 %v1964
      %v1966 = vand.u32 %v1821, 4294901760
      %1967 = vmatprep.subr.mxu0 %v1966
      %v1968 = vand.u32 %v1820, 4294901760
      %1969 = vmatpush1.msra.mxu0 %v1968
      %v1970 = vand.u32 %v1823, 4294901760
      %1971 = vmatprep.subr.mxu0 %v1970
      %v1972 = vand.u32 %v1822, 4294901760
      %1973 = vmatpush1.msra.mxu0 %v1972
      %v1974 = vand.u32 %v1825, 4294901760
      %1975 = vmatprep.subr.mxu0 %v1974
      %v1976 = vand.u32 %v1824, 4294901760
      %1977 = vmatpush1.msra.mxu0 %v1976
      %v1978 = vand.u32 %v1827, 4294901760
      %1979 = vmatprep.subr.mxu0 %v1978
      %v1980 = vand.u32 %v1826, 4294901760
      %1981 = vmatpush1.msra.mxu0 %v1980
      %v1982 = vand.u32 %v1829, 4294901760
      %1983 = vmatprep.subr.mxu0 %v1982
      %v1984 = vand.u32 %v1828, 4294901760
      %1985 = vmatpush1.msra.mxu0 %v1984
      %v1986 = vand.u32 %v1831, 4294901760
      %1987 = vmatprep.subr.mxu0 %v1986
      %v1988 = vand.u32 %v1830, 4294901760
      %1989 = vmatpush1.msra.mxu0 %v1988
      %v1990 = vand.u32 %v1833, 4294901760
      %1991 = vmatprep.subr.mxu0 %v1990
      %v1992 = vand.u32 %v1832, 4294901760
      %1993 = vmatpush1.msra.mxu0 %v1992
      %v1994 = vand.u32 %v1663, 4294901760
      %v1995 = vsub.f32 %v1663, %v1994
      %v1996 = vand.u32 %v1995, 4294901760
      %v1997 = vsub.f32 %v1995, %v1996
      %v1998 = vand.u32 %v1997, 4294901760
      %1999 = vmatprep.mubr.f32.mxu0 %v1998
      %v2000 = vand.u32 %v1661, 4294901760
      %v2001 = vsub.f32 %v1661, %v2000
      %v2002 = vand.u32 %v2001, 4294901760
      %v2003 = vsub.f32 %v2001, %v2002
      %v2004 = vand.u32 %v2003, 4294901760
      %2005 = vmatmul.mubr.f32.gmra.mrb[0].mxu0 %v2004
      %v2006 = vpop.f32.mrb[0].mxu0
      %v2007 = vadd.f32 %v1834, %v2006
      %v2008 = vpop.f32.mrb[0].mxu0
      %v2009 = vadd.f32 %v1835, %v2008
      %v2010 = vand.u32 %v1670, 4294901760
      %v2011 = vsub.f32 %v1670, %v2010
      %v2012 = vand.u32 %v2011, 4294901760
      %v2013 = vsub.f32 %v2011, %v2012
      %v2014 = vand.u32 %v2013, 4294901760
      %2015 = vmatprep.mubr.f32.mxu0 %v2014
      %v2016 = vand.u32 %v1668, 4294901760
      %v2017 = vsub.f32 %v1668, %v2016
      %v2018 = vand.u32 %v2017, 4294901760
      %v2019 = vsub.f32 %v2017, %v2018
      %v2020 = vand.u32 %v2019, 4294901760
      %2021 = vmatmul.mubr.f32.gmra.mrb[0].mxu0 %v2020
      %v2022 = vpop.f32.mrb[0].mxu0
      %v2023 = vadd.f32 %v1836, %v2022
      %v2024 = vpop.f32.mrb[0].mxu0
      %v2025 = vadd.f32 %v1837, %v2024
      %v2026 = vand.u32 %v1677, 4294901760
      %v2027 = vsub.f32 %v1677, %v2026
      %v2028 = vand.u32 %v2027, 4294901760
      %v2029 = vsub.f32 %v2027, %v2028
      %v2030 = vand.u32 %v2029, 4294901760
      %2031 = vmatprep.mubr.f32.mxu0 %v2030
      %v2032 = vand.u32 %v1675, 4294901760
      %v2033 = vsub.f32 %v1675, %v2032
      %v2034 = vand.u32 %v2033, 4294901760
      %v2035 = vsub.f32 %v2033, %v2034
      %v2036 = vand.u32 %v2035, 4294901760
      %2037 = vmatmul.mubr.f32.gmra.mrb[0].mxu0 %v2036
      %v2038 = vpop.f32.mrb[0].mxu0
      %v2039 = vadd.f32 %v1838, %v2038
      %v2040 = vpop.f32.mrb[0].mxu0
      %v2041 = vadd.f32 %v1839, %v2040
      %v2042 = vand.u32 %v1684, 4294901760
      %v2043 = vsub.f32 %v1684, %v2042
      %v2044 = vand.u32 %v2043, 4294901760
      %v2045 = vsub.f32 %v2043, %v2044
      %v2046 = vand.u32 %v2045, 4294901760
      %2047 = vmatprep.mubr.f32.mxu0 %v2046
      %v2048 = vand.u32 %v1682, 4294901760
      %v2049 = vsub.f32 %v1682, %v2048
      %v2050 = vand.u32 %v2049, 4294901760
      %v2051 = vsub.f32 %v2049, %v2050
      %v2052 = vand.u32 %v2051, 4294901760
      %2053 = vmatmul.mubr.f32.gmra.mrb[0].mxu0 %v2052
      %v2054 = vpop.f32.mrb[0].mxu0
      %v2055 = vadd.f32 %v1840, %v2054
      %v2056 = vpop.f32.mrb[0].mxu0
      %v2057 = vadd.f32 %v1841, %v2056
      %v2058 = vand.u32 %v1691, 4294901760
      %v2059 = vsub.f32 %v1691, %v2058
      %v2060 = vand.u32 %v2059, 4294901760
      %v2061 = vsub.f32 %v2059, %v2060
      %v2062 = vand.u32 %v2061, 4294901760
      %2063 = vmatprep.mubr.f32.mxu0 %v2062
      %v2064 = vand.u32 %v1689, 4294901760
      %v2065 = vsub.f32 %v1689, %v2064
      %v2066 = vand.u32 %v2065, 4294901760
      %v2067 = vsub.f32 %v2065, %v2066
      %v2068 = vand.u32 %v2067, 4294901760
      %2069 = vmatmul.mubr.f32.gmra.mrb[0].mxu0 %v2068
      %v2070 = vpop.f32.mrb[0].mxu0
      %v2071 = vadd.f32 %v1842, %v2070
      %v2072 = vpop.f32.mrb[0].mxu0
      %v2073 = vadd.f32 %v1843, %v2072
      %v2074 = vand.u32 %v1698, 4294901760
      %v2075 = vsub.f32 %v1698, %v2074
      %v2076 = vand.u32 %v2075, 4294901760
      %v2077 = vsub.f32 %v2075, %v2076
      %v2078 = vand.u32 %v2077, 4294901760
      %2079 = vmatprep.mubr.f32.mxu0 %v2078
      %v2080 = vand.u32 %v1696, 4294901760
      %v2081 = vsub.f32 %v1696, %v2080
      %v2082 = vand.u32 %v2081, 4294901760
      %v2083 = vsub.f32 %v2081, %v2082
      %v2084 = vand.u32 %v2083, 4294901760
      %2085 = vmatmul.mubr.f32.gmra.mrb[0].mxu0 %v2084
      %v2086 = vpop.f32.mrb[0].mxu0
      %v2087 = vadd.f32 %v1844, %v2086
      %v2088 = vpop.f32.mrb[0].mxu0
      %v2089 = vadd.f32 %v1845, %v2088
      %v2090 = vand.u32 %v1705, 4294901760
      %v2091 = vsub.f32 %v1705, %v2090
      %v2092 = vand.u32 %v2091, 4294901760
      %v2093 = vsub.f32 %v2091, %v2092
      %v2094 = vand.u32 %v2093, 4294901760
      %2095 = vmatprep.mubr.f32.mxu0 %v2094
      %v2096 = vand.u32 %v1703, 4294901760
      %v2097 = vsub.f32 %v1703, %v2096
      %v2098 = vand.u32 %v2097, 4294901760
      %v2099 = vsub.f32 %v2097, %v2098
      %v2100 = vand.u32 %v2099, 4294901760
      %2101 = vmatmul.mubr.f32.gmra.mrb[0].mxu0 %v2100
      %v2102 = vpop.f32.mrb[0].mxu0
      %v2103 = vadd.f32 %v1846, %v2102
      %v2104 = vpop.f32.mrb[0].mxu0
      %v2105 = vadd.f32 %v1847, %v2104
      %v2106 = vand.u32 %v1712, 4294901760
      %v2107 = vsub.f32 %v1712, %v2106
      %v2108 = vand.u32 %v2107, 4294901760
      %v2109 = vsub.f32 %v2107, %v2108
      %v2110 = vand.u32 %v2109, 4294901760
      %2111 = vmatprep.mubr.f32.mxu0 %v2110
      %v2112 = vand.u32 %v1710, 4294901760
      %v2113 = vsub.f32 %v1710, %v2112
      %v2114 = vand.u32 %v2113, 4294901760
      %v2115 = vsub.f32 %v2113, %v2114
      %v2116 = vand.u32 %v2115, 4294901760
      %2117 = vmatmul.mubr.f32.gmra.mrb[0].mxu0 %v2116
      %v2118 = vpop.f32.mrb[0].mxu0
      %v2119 = vadd.f32 %v1848, %v2118
      %v2120 = vpop.f32.mrb[0].mxu0
      %v2121 = vadd.f32 %v1849, %v2120
      %v2122 = vand.u32 %v1719, 4294901760
      %v2123 = vsub.f32 %v1719, %v2122
      %v2124 = vand.u32 %v2123, 4294901760
      %v2125 = vsub.f32 %v2123, %v2124
      %v2126 = vand.u32 %v2125, 4294901760
      %2127 = vmatprep.mubr.f32.mxu0 %v2126
      %v2128 = vand.u32 %v1717, 4294901760
      %v2129 = vsub.f32 %v1717, %v2128
      %v2130 = vand.u32 %v2129, 4294901760
      %v2131 = vsub.f32 %v2129, %v2130
      %v2132 = vand.u32 %v2131, 4294901760
      %2133 = vmatmul.mubr.f32.gmra.mrb[0].mxu0 %v2132
      %v2134 = vpop.f32.mrb[0].mxu0
      %v2135 = vadd.f32 %v1850, %v2134
      %v2136 = vpop.f32.mrb[0].mxu0
      %v2137 = vadd.f32 %v1851, %v2136
      %v2138 = vand.u32 %v1726, 4294901760
      %v2139 = vsub.f32 %v1726, %v2138
      %v2140 = vand.u32 %v2139, 4294901760
      %v2141 = vsub.f32 %v2139, %v2140
      %v2142 = vand.u32 %v2141, 4294901760
      %2143 = vmatprep.mubr.f32.mxu0 %v2142
      %v2144 = vand.u32 %v1724, 4294901760
      %v2145 = vsub.f32 %v1724, %v2144
      %v2146 = vand.u32 %v2145, 4294901760
      %v2147 = vsub.f32 %v2145, %v2146
      %v2148 = vand.u32 %v2147, 4294901760
      %2149 = vmatmul.mubr.f32.gmra.mrb[0].mxu0 %v2148
      %v2150 = vpop.f32.mrb[0].mxu0
      %v2151 = vadd.f32 %v1852, %v2150
      %v2152 = vpop.f32.mrb[0].mxu0
      %v2153 = vadd.f32 %v1853, %v2152
      %v2154 = vand.u32 %v1733, 4294901760
      %v2155 = vsub.f32 %v1733, %v2154
      %v2156 = vand.u32 %v2155, 4294901760
      %v2157 = vsub.f32 %v2155, %v2156
      %v2158 = vand.u32 %v2157, 4294901760
      %2159 = vmatprep.mubr.f32.mxu0 %v2158
      %v2160 = vand.u32 %v1731, 4294901760
      %v2161 = vsub.f32 %v1731, %v2160
      %v2162 = vand.u32 %v2161, 4294901760
      %v2163 = vsub.f32 %v2161, %v2162
      %v2164 = vand.u32 %v2163, 4294901760
      %2165 = vmatmul.mubr.f32.gmra.mrb[0].mxu0 %v2164
      %v2166 = vpop.f32.mrb[0].mxu0
      %v2167 = vadd.f32 %v1854, %v2166
      %v2168 = vpop.f32.mrb[0].mxu0
      %v2169 = vadd.f32 %v1855, %v2168
      %v2170 = vand.u32 %v1740, 4294901760
      %v2171 = vsub.f32 %v1740, %v2170
      %v2172 = vand.u32 %v2171, 4294901760
      %v2173 = vsub.f32 %v2171, %v2172
      %v2174 = vand.u32 %v2173, 4294901760
      %2175 = vmatprep.mubr.f32.mxu0 %v2174
      %v2176 = vand.u32 %v1738, 4294901760
      %v2177 = vsub.f32 %v1738, %v2176
      %v2178 = vand.u32 %v2177, 4294901760
      %v2179 = vsub.f32 %v2177, %v2178
      %v2180 = vand.u32 %v2179, 4294901760
      %2181 = vmatmul.mubr.f32.gmra.mrb[0].mxu0 %v2180
      %v2182 = vpop.f32.mrb[0].mxu0
      %v2183 = vadd.f32 %v1856, %v2182
      %v2184 = vpop.f32.mrb[0].mxu0
      %v2185 = vadd.f32 %v1857, %v2184
      %v2186 = vand.u32 %v1747, 4294901760
      %v2187 = vsub.f32 %v1747, %v2186
      %v2188 = vand.u32 %v2187, 4294901760
      %v2189 = vsub.f32 %v2187, %v2188
      %v2190 = vand.u32 %v2189, 4294901760
      %2191 = vmatprep.mubr.f32.mxu0 %v2190
      %v2192 = vand.u32 %v1745, 4294901760
      %v2193 = vsub.f32 %v1745, %v2192
      %v2194 = vand.u32 %v2193, 4294901760
      %v2195 = vsub.f32 %v2193, %v2194
      %v2196 = vand.u32 %v2195, 4294901760
      %2197 = vmatmul.mubr.f32.gmra.mrb[0].mxu0 %v2196
      %v2198 = vpop.f32.mrb[0].mxu0
      %v2199 = vadd.f32 %v1858, %v2198
      %v2200 = vpop.f32.mrb[0].mxu0
      %v2201 = vadd.f32 %v1859, %v2200
      %v2202 = vand.u32 %v1754, 4294901760
      %v2203 = vsub.f32 %v1754, %v2202
      %v2204 = vand.u32 %v2203, 4294901760
      %v2205 = vsub.f32 %v2203, %v2204
      %v2206 = vand.u32 %v2205, 4294901760
      %2207 = vmatprep.mubr.f32.mxu0 %v2206
      %v2208 = vand.u32 %v1752, 4294901760
      %v2209 = vsub.f32 %v1752, %v2208
      %v2210 = vand.u32 %v2209, 4294901760
      %v2211 = vsub.f32 %v2209, %v2210
      %v2212 = vand.u32 %v2211, 4294901760
      %2213 = vmatmul.mubr.f32.gmra.mrb[0].mxu0 %v2212
      %v2214 = vpop.f32.mrb[0].mxu0
      %v2215 = vadd.f32 %v1860, %v2214
      %v2216 = vpop.f32.mrb[0].mxu0
      %v2217 = vadd.f32 %v1861, %v2216
      %v2218 = vand.u32 %v1761, 4294901760
      %v2219 = vsub.f32 %v1761, %v2218
      %v2220 = vand.u32 %v2219, 4294901760
      %v2221 = vsub.f32 %v2219, %v2220
      %v2222 = vand.u32 %v2221, 4294901760
      %2223 = vmatprep.mubr.f32.mxu0 %v2222
      %v2224 = vand.u32 %v1759, 4294901760
      %v2225 = vsub.f32 %v1759, %v2224
      %v2226 = vand.u32 %v2225, 4294901760
      %v2227 = vsub.f32 %v2225, %v2226
      %v2228 = vand.u32 %v2227, 4294901760
      %2229 = vmatmul.mubr.f32.gmra.mrb[0].mxu0 %v2228
      %v2230 = vpop.f32.mrb[0].mxu0
      %v2231 = vadd.f32 %v1862, %v2230
      %v2232 = vpop.f32.mrb[0].mxu0
      %v2233 = vadd.f32 %v1863, %v2232
      %v2234 = vand.u32 %v1768, 4294901760
      %v2235 = vsub.f32 %v1768, %v2234
      %v2236 = vand.u32 %v2235, 4294901760
      %v2237 = vsub.f32 %v2235, %v2236
      %v2238 = vand.u32 %v2237, 4294901760
      %2239 = vmatprep.mubr.f32.mxu0 %v2238
      %v2240 = vand.u32 %v1766, 4294901760
      %v2241 = vsub.f32 %v1766, %v2240
      %v2242 = vand.u32 %v2241, 4294901760
      %v2243 = vsub.f32 %v2241, %v2242
      %v2244 = vand.u32 %v2243, 4294901760
      %2245 = vmatmul.mubr.f32.gmra.mrb[0].mxu0 %v2244
      %v2246 = vpop.f32.mrb[0].mxu0
      %v2247 = vadd.f32 %v1864, %v2246
      %v2248 = vpop.f32.mrb[0].mxu0
      %v2249 = vadd.f32 %v1865, %v2248
      %2250 = vdwg.mxu0
      %v2251 = vand.u32 %v1771, 4294901760
      %v2252 = vsub.f32 %v1771, %v2251
      %v2253 = vand.u32 %v2252, 4294901760
      %v2254 = vsub.f32 %v2252, %v2253
      %v2255 = vand.u32 %v2254, 4294901760
      %2256 = vmatprep.subr.mxu0 %v2255
      %v2257 = vand.u32 %v1770, 4294901760
      %v2258 = vsub.f32 %v1770, %v2257
      %v2259 = vand.u32 %v2258, 4294901760
      %v2260 = vsub.f32 %v2258, %v2259
      %v2261 = vand.u32 %v2260, 4294901760
      %2262 = vmatpush1.msra.mxu0 %v2261
      %v2263 = vand.u32 %v1773, 4294901760
      %v2264 = vsub.f32 %v1773, %v2263
      %v2265 = vand.u32 %v2264, 4294901760
      %v2266 = vsub.f32 %v2264, %v2265
      %v2267 = vand.u32 %v2266, 4294901760
      %2268 = vmatprep.subr.mxu0 %v2267
      %v2269 = vand.u32 %v1772, 4294901760
      %v2270 = vsub.f32 %v1772, %v2269
      %v2271 = vand.u32 %v2270, 4294901760
      %v2272 = vsub.f32 %v2270, %v2271
      %v2273 = vand.u32 %v2272, 4294901760
      %2274 = vmatpush1.msra.mxu0 %v2273
      %v2275 = vand.u32 %v1775, 4294901760
      %v2276 = vsub.f32 %v1775, %v2275
      %v2277 = vand.u32 %v2276, 4294901760
      %v2278 = vsub.f32 %v2276, %v2277
      %v2279 = vand.u32 %v2278, 4294901760
      %2280 = vmatprep.subr.mxu0 %v2279
      %v2281 = vand.u32 %v1774, 4294901760
      %v2282 = vsub.f32 %v1774, %v2281
      %v2283 = vand.u32 %v2282, 4294901760
      %v2284 = vsub.f32 %v2282, %v2283
      %v2285 = vand.u32 %v2284, 4294901760
      %2286 = vmatpush1.msra.mxu0 %v2285
      %v2287 = vand.u32 %v1777, 4294901760
      %v2288 = vsub.f32 %v1777, %v2287
      %v2289 = vand.u32 %v2288, 4294901760
      %v2290 = vsub.f32 %v2288, %v2289
      %v2291 = vand.u32 %v2290, 4294901760
      %2292 = vmatprep.subr.mxu0 %v2291
      %v2293 = vand.u32 %v1776, 4294901760
      %v2294 = vsub.f32 %v1776, %v2293
      %v2295 = vand.u32 %v2294, 4294901760
      %v2296 = vsub.f32 %v2294, %v2295
      %v2297 = vand.u32 %v2296, 4294901760
      %2298 = vmatpush1.msra.mxu0 %v2297
      %v2299 = vand.u32 %v1779, 4294901760
      %v2300 = vsub.f32 %v1779, %v2299
      %v2301 = vand.u32 %v2300, 4294901760
      %v2302 = vsub.f32 %v2300, %v2301
      %v2303 = vand.u32 %v2302, 4294901760
      %2304 = vmatprep.subr.mxu0 %v2303
      %v2305 = vand.u32 %v1778, 4294901760
      %v2306 = vsub.f32 %v1778, %v2305
      %v2307 = vand.u32 %v2306, 4294901760
      %v2308 = vsub.f32 %v2306, %v2307
      %v2309 = vand.u32 %v2308, 4294901760
      %2310 = vmatpush1.msra.mxu0 %v2309
      %v2311 = vand.u32 %v1781, 4294901760
      %v2312 = vsub.f32 %v1781, %v2311
      %v2313 = vand.u32 %v2312, 4294901760
      %v2314 = vsub.f32 %v2312, %v2313
      %v2315 = vand.u32 %v2314, 4294901760
      %2316 = vmatprep.subr.mxu0 %v2315
      %v2317 = vand.u32 %v1780, 4294901760
      %v2318 = vsub.f32 %v1780, %v2317
      %v2319 = vand.u32 %v2318, 4294901760
      %v2320 = vsub.f32 %v2318, %v2319
      %v2321 = vand.u32 %v2320, 4294901760
      %2322 = vmatpush1.msra.mxu0 %v2321
      %v2323 = vand.u32 %v1783, 4294901760
      %v2324 = vsub.f32 %v1783, %v2323
      %v2325 = vand.u32 %v2324, 4294901760
      %v2326 = vsub.f32 %v2324, %v2325
      %v2327 = vand.u32 %v2326, 4294901760
      %2328 = vmatprep.subr.mxu0 %v2327
      %v2329 = vand.u32 %v1782, 4294901760
      %v2330 = vsub.f32 %v1782, %v2329
      %v2331 = vand.u32 %v2330, 4294901760
      %v2332 = vsub.f32 %v2330, %v2331
      %v2333 = vand.u32 %v2332, 4294901760
      %2334 = vmatpush1.msra.mxu0 %v2333
      %v2335 = vand.u32 %v1785, 4294901760
      %v2336 = vsub.f32 %v1785, %v2335
      %v2337 = vand.u32 %v2336, 4294901760
      %v2338 = vsub.f32 %v2336, %v2337
      %v2339 = vand.u32 %v2338, 4294901760
      %2340 = vmatprep.subr.mxu0 %v2339
      %v2341 = vand.u32 %v1784, 4294901760
      %v2342 = vsub.f32 %v1784, %v2341
      %v2343 = vand.u32 %v2342, 4294901760
      %v2344 = vsub.f32 %v2342, %v2343
      %v2345 = vand.u32 %v2344, 4294901760
      %2346 = vmatpush1.msra.mxu0 %v2345
      %v2347 = vand.u32 %v1787, 4294901760
      %v2348 = vsub.f32 %v1787, %v2347
      %v2349 = vand.u32 %v2348, 4294901760
      %v2350 = vsub.f32 %v2348, %v2349
      %v2351 = vand.u32 %v2350, 4294901760
      %2352 = vmatprep.subr.mxu0 %v2351
      %v2353 = vand.u32 %v1786, 4294901760
      %v2354 = vsub.f32 %v1786, %v2353
      %v2355 = vand.u32 %v2354, 4294901760
      %v2356 = vsub.f32 %v2354, %v2355
      %v2357 = vand.u32 %v2356, 4294901760
      %2358 = vmatpush1.msra.mxu0 %v2357
      %v2359 = vand.u32 %v1789, 4294901760
      %v2360 = vsub.f32 %v1789, %v2359
      %v2361 = vand.u32 %v2360, 4294901760
      %v2362 = vsub.f32 %v2360, %v2361
      %v2363 = vand.u32 %v2362, 4294901760
      %2364 = vmatprep.subr.mxu0 %v2363
      %v2365 = vand.u32 %v1788, 4294901760
      %v2366 = vsub.f32 %v1788, %v2365
      %v2367 = vand.u32 %v2366, 4294901760
      %v2368 = vsub.f32 %v2366, %v2367
      %v2369 = vand.u32 %v2368, 4294901760
      %2370 = vmatpush1.msra.mxu0 %v2369
      %v2371 = vand.u32 %v1791, 4294901760
      %v2372 = vsub.f32 %v1791, %v2371
      %v2373 = vand.u32 %v2372, 4294901760
      %v2374 = vsub.f32 %v2372, %v2373
      %v2375 = vand.u32 %v2374, 4294901760
      %2376 = vmatprep.subr.mxu0 %v2375
      %v2377 = vand.u32 %v1790, 4294901760
      %v2378 = vsub.f32 %v1790, %v2377
      %v2379 = vand.u32 %v2378, 4294901760
      %v2380 = vsub.f32 %v2378, %v2379
      %v2381 = vand.u32 %v2380, 4294901760
      %2382 = vmatpush1.msra.mxu0 %v2381
      %v2383 = vand.u32 %v1793, 4294901760
      %v2384 = vsub.f32 %v1793, %v2383
      %v2385 = vand.u32 %v2384, 4294901760
      %v2386 = vsub.f32 %v2384, %v2385
      %v2387 = vand.u32 %v2386, 4294901760
      %2388 = vmatprep.subr.mxu0 %v2387
      %v2389 = vand.u32 %v1792, 4294901760
      %v2390 = vsub.f32 %v1792, %v2389
      %v2391 = vand.u32 %v2390, 4294901760
      %v2392 = vsub.f32 %v2390, %v2391
      %v2393 = vand.u32 %v2392, 4294901760
      %2394 = vmatpush1.msra.mxu0 %v2393
      %v2395 = vand.u32 %v1795, 4294901760
      %v2396 = vsub.f32 %v1795, %v2395
      %v2397 = vand.u32 %v2396, 4294901760
      %v2398 = vsub.f32 %v2396, %v2397
      %v2399 = vand.u32 %v2398, 4294901760
      %2400 = vmatprep.subr.mxu0 %v2399
      %v2401 = vand.u32 %v1794, 4294901760
      %v2402 = vsub.f32 %v1794, %v2401
      %v2403 = vand.u32 %v2402, 4294901760
      %v2404 = vsub.f32 %v2402, %v2403
      %v2405 = vand.u32 %v2404, 4294901760
      %2406 = vmatpush1.msra.mxu0 %v2405
      %v2407 = vand.u32 %v1797, 4294901760
      %v2408 = vsub.f32 %v1797, %v2407
      %v2409 = vand.u32 %v2408, 4294901760
      %v2410 = vsub.f32 %v2408, %v2409
      %v2411 = vand.u32 %v2410, 4294901760
      %2412 = vmatprep.subr.mxu0 %v2411
      %v2413 = vand.u32 %v1796, 4294901760
      %v2414 = vsub.f32 %v1796, %v2413
      %v2415 = vand.u32 %v2414, 4294901760
      %v2416 = vsub.f32 %v2414, %v2415
      %v2417 = vand.u32 %v2416, 4294901760
      %2418 = vmatpush1.msra.mxu0 %v2417
      %v2419 = vand.u32 %v1799, 4294901760
      %v2420 = vsub.f32 %v1799, %v2419
      %v2421 = vand.u32 %v2420, 4294901760
      %v2422 = vsub.f32 %v2420, %v2421
      %v2423 = vand.u32 %v2422, 4294901760
      %2424 = vmatprep.subr.mxu0 %v2423
      %v2425 = vand.u32 %v1798, 4294901760
      %v2426 = vsub.f32 %v1798, %v2425
      %v2427 = vand.u32 %v2426, 4294901760
      %v2428 = vsub.f32 %v2426, %v2427
      %v2429 = vand.u32 %v2428, 4294901760
      %2430 = vmatpush1.msra.mxu0 %v2429
      %v2431 = vand.u32 %v1801, 4294901760
      %v2432 = vsub.f32 %v1801, %v2431
      %v2433 = vand.u32 %v2432, 4294901760
      %v2434 = vsub.f32 %v2432, %v2433
      %v2435 = vand.u32 %v2434, 4294901760
      %2436 = vmatprep.subr.mxu0 %v2435
      %v2437 = vand.u32 %v1800, 4294901760
      %v2438 = vsub.f32 %v1800, %v2437
      %v2439 = vand.u32 %v2438, 4294901760
      %v2440 = vsub.f32 %v2438, %v2439
      %v2441 = vand.u32 %v2440, 4294901760
      %2442 = vmatpush1.msra.mxu0 %v2441
      %v2443 = vand.u32 %v1803, 4294901760
      %v2444 = vsub.f32 %v1803, %v2443
      %v2445 = vand.u32 %v2444, 4294901760
      %v2446 = vsub.f32 %v2444, %v2445
      %v2447 = vand.u32 %v2446, 4294901760
      %2448 = vmatprep.subr.mxu0 %v2447
      %v2449 = vand.u32 %v1802, 4294901760
      %v2450 = vsub.f32 %v1802, %v2449
      %v2451 = vand.u32 %v2450, 4294901760
      %v2452 = vsub.f32 %v2450, %v2451
      %v2453 = vand.u32 %v2452, 4294901760
      %2454 = vmatpush1.msra.mxu0 %v2453
      %v2455 = vand.u32 %v1805, 4294901760
      %v2456 = vsub.f32 %v1805, %v2455
      %v2457 = vand.u32 %v2456, 4294901760
      %v2458 = vsub.f32 %v2456, %v2457
      %v2459 = vand.u32 %v2458, 4294901760
      %2460 = vmatprep.subr.mxu0 %v2459
      %v2461 = vand.u32 %v1804, 4294901760
      %v2462 = vsub.f32 %v1804, %v2461
      %v2463 = vand.u32 %v2462, 4294901760
      %v2464 = vsub.f32 %v2462, %v2463
      %v2465 = vand.u32 %v2464, 4294901760
      %2466 = vmatpush1.msra.mxu0 %v2465
      %v2467 = vand.u32 %v1807, 4294901760
      %v2468 = vsub.f32 %v1807, %v2467
      %v2469 = vand.u32 %v2468, 4294901760
      %v2470 = vsub.f32 %v2468, %v2469
      %v2471 = vand.u32 %v2470, 4294901760
      %2472 = vmatprep.subr.mxu0 %v2471
      %v2473 = vand.u32 %v1806, 4294901760
      %v2474 = vsub.f32 %v1806, %v2473
      %v2475 = vand.u32 %v2474, 4294901760
      %v2476 = vsub.f32 %v2474, %v2475
      %v2477 = vand.u32 %v2476, 4294901760
      %2478 = vmatpush1.msra.mxu0 %v2477
      %v2479 = vand.u32 %v1809, 4294901760
      %v2480 = vsub.f32 %v1809, %v2479
      %v2481 = vand.u32 %v2480, 4294901760
      %v2482 = vsub.f32 %v2480, %v2481
      %v2483 = vand.u32 %v2482, 4294901760
      %2484 = vmatprep.subr.mxu0 %v2483
      %v2485 = vand.u32 %v1808, 4294901760
      %v2486 = vsub.f32 %v1808, %v2485
      %v2487 = vand.u32 %v2486, 4294901760
      %v2488 = vsub.f32 %v2486, %v2487
      %v2489 = vand.u32 %v2488, 4294901760
      %2490 = vmatpush1.msra.mxu0 %v2489
      %v2491 = vand.u32 %v1811, 4294901760
      %v2492 = vsub.f32 %v1811, %v2491
      %v2493 = vand.u32 %v2492, 4294901760
      %v2494 = vsub.f32 %v2492, %v2493
      %v2495 = vand.u32 %v2494, 4294901760
      %2496 = vmatprep.subr.mxu0 %v2495
      %v2497 = vand.u32 %v1810, 4294901760
      %v2498 = vsub.f32 %v1810, %v2497
      %v2499 = vand.u32 %v2498, 4294901760
      %v2500 = vsub.f32 %v2498, %v2499
      %v2501 = vand.u32 %v2500, 4294901760
      %2502 = vmatpush1.msra.mxu0 %v2501
      %v2503 = vand.u32 %v1813, 4294901760
      %v2504 = vsub.f32 %v1813, %v2503
      %v2505 = vand.u32 %v2504, 4294901760
      %v2506 = vsub.f32 %v2504, %v2505
      %v2507 = vand.u32 %v2506, 4294901760
      %2508 = vmatprep.subr.mxu0 %v2507
      %v2509 = vand.u32 %v1812, 4294901760
      %v2510 = vsub.f32 %v1812, %v2509
      %v2511 = vand.u32 %v2510, 4294901760
      %v2512 = vsub.f32 %v2510, %v2511
      %v2513 = vand.u32 %v2512, 4294901760
      %2514 = vmatpush1.msra.mxu0 %v2513
      %v2515 = vand.u32 %v1815, 4294901760
      %v2516 = vsub.f32 %v1815, %v2515
      %v2517 = vand.u32 %v2516, 4294901760
      %v2518 = vsub.f32 %v2516, %v2517
      %v2519 = vand.u32 %v2518, 4294901760
      %2520 = vmatprep.subr.mxu0 %v2519
      %v2521 = vand.u32 %v1814, 4294901760
      %v2522 = vsub.f32 %v1814, %v2521
      %v2523 = vand.u32 %v2522, 4294901760
      %v2524 = vsub.f32 %v2522, %v2523
      %v2525 = vand.u32 %v2524, 4294901760
      %2526 = vmatpush1.msra.mxu0 %v2525
      %v2527 = vand.u32 %v1817, 4294901760
      %v2528 = vsub.f32 %v1817, %v2527
      %v2529 = vand.u32 %v2528, 4294901760
      %v2530 = vsub.f32 %v2528, %v2529
      %v2531 = vand.u32 %v2530, 4294901760
      %2532 = vmatprep.subr.mxu0 %v2531
      %v2533 = vand.u32 %v1816, 4294901760
      %v2534 = vsub.f32 %v1816, %v2533
      %v2535 = vand.u32 %v2534, 4294901760
      %v2536 = vsub.f32 %v2534, %v2535
      %v2537 = vand.u32 %v2536, 4294901760
      %2538 = vmatpush1.msra.mxu0 %v2537
      %v2539 = vand.u32 %v1819, 4294901760
      %v2540 = vsub.f32 %v1819, %v2539
      %v2541 = vand.u32 %v2540, 4294901760
      %v2542 = vsub.f32 %v2540, %v2541
      %v2543 = vand.u32 %v2542, 4294901760
      %2544 = vmatprep.subr.mxu0 %v2543
      %v2545 = vand.u32 %v1818, 4294901760
      %v2546 = vsub.f32 %v1818, %v2545
      %v2547 = vand.u32 %v2546, 4294901760
      %v2548 = vsub.f32 %v2546, %v2547
      %v2549 = vand.u32 %v2548, 4294901760
      %2550 = vmatpush1.msra.mxu0 %v2549
      %v2551 = vand.u32 %v1821, 4294901760
      %v2552 = vsub.f32 %v1821, %v2551
      %v2553 = vand.u32 %v2552, 4294901760
      %v2554 = vsub.f32 %v2552, %v2553
      %v2555 = vand.u32 %v2554, 4294901760
      %2556 = vmatprep.subr.mxu0 %v2555
      %v2557 = vand.u32 %v1820, 4294901760
      %v2558 = vsub.f32 %v1820, %v2557
      %v2559 = vand.u32 %v2558, 4294901760
      %v2560 = vsub.f32 %v2558, %v2559
      %v2561 = vand.u32 %v2560, 4294901760
      %2562 = vmatpush1.msra.mxu0 %v2561
      %v2563 = vand.u32 %v1823, 4294901760
      %v2564 = vsub.f32 %v1823, %v2563
      %v2565 = vand.u32 %v2564, 4294901760
      %v2566 = vsub.f32 %v2564, %v2565
      %v2567 = vand.u32 %v2566, 4294901760
      %2568 = vmatprep.subr.mxu0 %v2567
      %v2569 = vand.u32 %v1822, 4294901760
      %v2570 = vsub.f32 %v1822, %v2569
      %v2571 = vand.u32 %v2570, 4294901760
      %v2572 = vsub.f32 %v2570, %v2571
      %v2573 = vand.u32 %v2572, 4294901760
      %2574 = vmatpush1.msra.mxu0 %v2573
      %v2575 = vand.u32 %v1825, 4294901760
      %v2576 = vsub.f32 %v1825, %v2575
      %v2577 = vand.u32 %v2576, 4294901760
      %v2578 = vsub.f32 %v2576, %v2577
      %v2579 = vand.u32 %v2578, 4294901760
      %2580 = vmatprep.subr.mxu0 %v2579
      %v2581 = vand.u32 %v1824, 4294901760
      %v2582 = vsub.f32 %v1824, %v2581
      %v2583 = vand.u32 %v2582, 4294901760
      %v2584 = vsub.f32 %v2582, %v2583
      %v2585 = vand.u32 %v2584, 4294901760
      %2586 = vmatpush1.msra.mxu0 %v2585
      %v2587 = vand.u32 %v1827, 4294901760
      %v2588 = vsub.f32 %v1827, %v2587
      %v2589 = vand.u32 %v2588, 4294901760
      %v2590 = vsub.f32 %v2588, %v2589
      %v2591 = vand.u32 %v2590, 4294901760
      %2592 = vmatprep.subr.mxu0 %v2591
      %v2593 = vand.u32 %v1826, 4294901760
      %v2594 = vsub.f32 %v1826, %v2593
      %v2595 = vand.u32 %v2594, 4294901760
      %v2596 = vsub.f32 %v2594, %v2595
      %v2597 = vand.u32 %v2596, 4294901760
      %2598 = vmatpush1.msra.mxu0 %v2597
      %v2599 = vand.u32 %v1829, 4294901760
      %v2600 = vsub.f32 %v1829, %v2599
      %v2601 = vand.u32 %v2600, 4294901760
      %v2602 = vsub.f32 %v2600, %v2601
      %v2603 = vand.u32 %v2602, 4294901760
      %2604 = vmatprep.subr.mxu0 %v2603
      %v2605 = vand.u32 %v1828, 4294901760
      %v2606 = vsub.f32 %v1828, %v2605
      %v2607 = vand.u32 %v2606, 4294901760
      %v2608 = vsub.f32 %v2606, %v2607
      %v2609 = vand.u32 %v2608, 4294901760
      %2610 = vmatpush1.msra.mxu0 %v2609
      %v2611 = vand.u32 %v1831, 4294901760
      %v2612 = vsub.f32 %v1831, %v2611
      %v2613 = vand.u32 %v2612, 4294901760
      %v2614 = vsub.f32 %v2612, %v2613
      %v2615 = vand.u32 %v2614, 4294901760
      %2616 = vmatprep.subr.mxu0 %v2615
      %v2617 = vand.u32 %v1830, 4294901760
      %v2618 = vsub.f32 %v1830, %v2617
      %v2619 = vand.u32 %v2618, 4294901760
      %v2620 = vsub.f32 %v2618, %v2619
      %v2621 = vand.u32 %v2620, 4294901760
      %2622 = vmatpush1.msra.mxu0 %v2621
      %v2623 = vand.u32 %v1833, 4294901760
      %v2624 = vsub.f32 %v1833, %v2623
      %v2625 = vand.u32 %v2624, 4294901760
      %v2626 = vsub.f32 %v2624, %v2625
      %v2627 = vand.u32 %v2626, 4294901760
      %2628 = vmatprep.subr.mxu0 %v2627
      %v2629 = vand.u32 %v1832, 4294901760
      %v2630 = vsub.f32 %v1832, %v2629
      %v2631 = vand.u32 %v2630, 4294901760
      %v2632 = vsub.f32 %v2630, %v2631
      %v2633 = vand.u32 %v2632, 4294901760
      %2634 = vmatpush1.msra.mxu0 %v2633
      %v2635 = vand.u32 %v1663, 4294901760
      %2636 = vmatprep.mubr.f32.mxu0 %v2635
      %v2637 = vand.u32 %v1661, 4294901760
      %2638 = vmatmul.mubr.f32.gmra.mrb[0].mxu0 %v2637
      %v2639 = vpop.f32.mrb[0].mxu0
      %v2640 = vadd.f32 %v2007, %v2639
      %v2641 = vpop.f32.mrb[0].mxu0
      %v2642 = vadd.f32 %v2009, %v2641
      %v2643 = vand.u32 %v1670, 4294901760
      %2644 = vmatprep.mubr.f32.mxu0 %v2643
      %v2645 = vand.u32 %v1668, 4294901760
      %2646 = vmatmul.mubr.f32.gmra.mrb[0].mxu0 %v2645
      %v2647 = vpop.f32.mrb[0].mxu0
      %v2648 = vadd.f32 %v2023, %v2647
      %v2649 = vpop.f32.mrb[0].mxu0
      %v2650 = vadd.f32 %v2025, %v2649
      %v2651 = vand.u32 %v1677, 4294901760
      %2652 = vmatprep.mubr.f32.mxu0 %v2651
      %v2653 = vand.u32 %v1675, 4294901760
      %2654 = vmatmul.mubr.f32.gmra.mrb[0].mxu0 %v2653
      %v2655 = vpop.f32.mrb[0].mxu0
      %v2656 = vadd.f32 %v2039, %v2655
      %v2657 = vpop.f32.mrb[0].mxu0
      %v2658 = vadd.f32 %v2041, %v2657
      %v2659 = vand.u32 %v1684, 4294901760
      %2660 = vmatprep.mubr.f32.mxu0 %v2659
      %v2661 = vand.u32 %v1682, 4294901760
      %2662 = vmatmul.mubr.f32.gmra.mrb[0].mxu0 %v2661
      %v2663 = vpop.f32.mrb[0].mxu0
      %v2664 = vadd.f32 %v2055, %v2663
      %v2665 = vpop.f32.mrb[0].mxu0
      %v2666 = vadd.f32 %v2057, %v2665
      %v2667 = vand.u32 %v1691, 4294901760
      %2668 = vmatprep.mubr.f32.mxu0 %v2667
      %v2669 = vand.u32 %v1689, 4294901760
      %2670 = vmatmul.mubr.f32.gmra.mrb[0].mxu0 %v2669
      %v2671 = vpop.f32.mrb[0].mxu0
      %v2672 = vadd.f32 %v2071, %v2671
      %v2673 = vpop.f32.mrb[0].mxu0
      %v2674 = vadd.f32 %v2073, %v2673
      %v2675 = vand.u32 %v1698, 4294901760
      %2676 = vmatprep.mubr.f32.mxu0 %v2675
      %v2677 = vand.u32 %v1696, 4294901760
      %2678 = vmatmul.mubr.f32.gmra.mrb[0].mxu0 %v2677
      %v2679 = vpop.f32.mrb[0].mxu0
      %v2680 = vadd.f32 %v2087, %v2679
      %v2681 = vpop.f32.mrb[0].mxu0
      %v2682 = vadd.f32 %v2089, %v2681
      %v2683 = vand.u32 %v1705, 4294901760
      %2684 = vmatprep.mubr.f32.mxu0 %v2683
      %v2685 = vand.u32 %v1703, 4294901760
      %2686 = vmatmul.mubr.f32.gmra.mrb[0].mxu0 %v2685
      %v2687 = vpop.f32.mrb[0].mxu0
      %v2688 = vadd.f32 %v2103, %v2687
      %v2689 = vpop.f32.mrb[0].mxu0
      %v2690 = vadd.f32 %v2105, %v2689
      %v2691 = vand.u32 %v1712, 4294901760
      %2692 = vmatprep.mubr.f32.mxu0 %v2691
      %v2693 = vand.u32 %v1710, 4294901760
      %2694 = vmatmul.mubr.f32.gmra.mrb[0].mxu0 %v2693
      %v2695 = vpop.f32.mrb[0].mxu0
      %v2696 = vadd.f32 %v2119, %v2695
      %v2697 = vpop.f32.mrb[0].mxu0
      %v2698 = vadd.f32 %v2121, %v2697
      %v2699 = vand.u32 %v1719, 4294901760
      %2700 = vmatprep.mubr.f32.mxu0 %v2699
      %v2701 = vand.u32 %v1717, 4294901760
      %2702 = vmatmul.mubr.f32.gmra.mrb[0].mxu0 %v2701
      %v2703 = vpop.f32.mrb[0].mxu0
      %v2704 = vadd.f32 %v2135, %v2703
      %v2705 = vpop.f32.mrb[0].mxu0
      %v2706 = vadd.f32 %v2137, %v2705
      %v2707 = vand.u32 %v1726, 4294901760
      %2708 = vmatprep.mubr.f32.mxu0 %v2707
      %v2709 = vand.u32 %v1724, 4294901760
      %2710 = vmatmul.mubr.f32.gmra.mrb[0].mxu0 %v2709
      %v2711 = vpop.f32.mrb[0].mxu0
      %v2712 = vadd.f32 %v2151, %v2711
      %v2713 = vpop.f32.mrb[0].mxu0
      %v2714 = vadd.f32 %v2153, %v2713
      %v2715 = vand.u32 %v1733, 4294901760
      %2716 = vmatprep.mubr.f32.mxu0 %v2715
      %v2717 = vand.u32 %v1731, 4294901760
      %2718 = vmatmul.mubr.f32.gmra.mrb[0].mxu0 %v2717
      %v2719 = vpop.f32.mrb[0].mxu0
      %v2720 = vadd.f32 %v2167, %v2719
      %v2721 = vpop.f32.mrb[0].mxu0
      %v2722 = vadd.f32 %v2169, %v2721
      %v2723 = vand.u32 %v1740, 4294901760
      %2724 = vmatprep.mubr.f32.mxu0 %v2723
      %v2725 = vand.u32 %v1738, 4294901760
      %2726 = vmatmul.mubr.f32.gmra.mrb[0].mxu0 %v2725
      %v2727 = vpop.f32.mrb[0].mxu0
      %v2728 = vadd.f32 %v2183, %v2727
      %v2729 = vpop.f32.mrb[0].mxu0
      %v2730 = vadd.f32 %v2185, %v2729
      %v2731 = vand.u32 %v1747, 4294901760
      %2732 = vmatprep.mubr.f32.mxu0 %v2731
      %v2733 = vand.u32 %v1745, 4294901760
      %2734 = vmatmul.mubr.f32.gmra.mrb[0].mxu0 %v2733
      %v2735 = vpop.f32.mrb[0].mxu0
      %v2736 = vadd.f32 %v2199, %v2735
      %v2737 = vpop.f32.mrb[0].mxu0
      %v2738 = vadd.f32 %v2201, %v2737
      %v2739 = vand.u32 %v1754, 4294901760
      %2740 = vmatprep.mubr.f32.mxu0 %v2739
      %v2741 = vand.u32 %v1752, 4294901760
      %2742 = vmatmul.mubr.f32.gmra.mrb[0].mxu0 %v2741
      %v2743 = vpop.f32.mrb[0].mxu0
      %v2744 = vadd.f32 %v2215, %v2743
      %v2745 = vpop.f32.mrb[0].mxu0
      %v2746 = vadd.f32 %v2217, %v2745
      %v2747 = vand.u32 %v1761, 4294901760
      %2748 = vmatprep.mubr.f32.mxu0 %v2747
      %v2749 = vand.u32 %v1759, 4294901760
      %2750 = vmatmul.mubr.f32.gmra.mrb[0].mxu0 %v2749
      %v2751 = vpop.f32.mrb[0].mxu0
      %v2752 = vadd.f32 %v2231, %v2751
      %v2753 = vpop.f32.mrb[0].mxu0
      %v2754 = vadd.f32 %v2233, %v2753
      %v2755 = vand.u32 %v1768, 4294901760
      %2756 = vmatprep.mubr.f32.mxu0 %v2755
      %v2757 = vand.u32 %v1766, 4294901760
      %2758 = vmatmul.mubr.f32.gmra.mrb[0].mxu0 %v2757
      %v2759 = vpop.f32.mrb[0].mxu0
      %v2760 = vadd.f32 %v2247, %v2759
      %v2761 = vpop.f32.mrb[0].mxu0
      %v2762 = vadd.f32 %v2249, %v2761
      %2763 = vdwg.mxu0
      %v2764 = vand.u32 %v1771, 4294901760
      %v2765 = vsub.f32 %v1771, %v2764
      %2766 = vmatprep.subr.mxu0 %v2765
      %v2767 = vand.u32 %v1770, 4294901760
      %v2768 = vsub.f32 %v1770, %v2767
      %2769 = vmatpush1.msra.mxu0 %v2768
      %v2770 = vand.u32 %v1773, 4294901760
      %v2771 = vsub.f32 %v1773, %v2770
      %2772 = vmatprep.subr.mxu0 %v2771
      %v2773 = vand.u32 %v1772, 4294901760
      %v2774 = vsub.f32 %v1772, %v2773
      %2775 = vmatpush1.msra.mxu0 %v2774
      %v2776 = vand.u32 %v1775, 4294901760
      %v2777 = vsub.f32 %v1775, %v2776
      %2778 = vmatprep.subr.mxu0 %v2777
      %v2779 = vand.u32 %v1774, 4294901760
      %v2780 = vsub.f32 %v1774, %v2779
      %2781 = vmatpush1.msra.mxu0 %v2780
      %v2782 = vand.u32 %v1777, 4294901760
      %v2783 = vsub.f32 %v1777, %v2782
      %2784 = vmatprep.subr.mxu0 %v2783
      %v2785 = vand.u32 %v1776, 4294901760
      %v2786 = vsub.f32 %v1776, %v2785
      %2787 = vmatpush1.msra.mxu0 %v2786
      %v2788 = vand.u32 %v1779, 4294901760
      %v2789 = vsub.f32 %v1779, %v2788
      %2790 = vmatprep.subr.mxu0 %v2789
      %v2791 = vand.u32 %v1778, 4294901760
      %v2792 = vsub.f32 %v1778, %v2791
      %2793 = vmatpush1.msra.mxu0 %v2792
      %v2794 = vand.u32 %v1781, 4294901760
      %v2795 = vsub.f32 %v1781, %v2794
      %2796 = vmatprep.subr.mxu0 %v2795
      %v2797 = vand.u32 %v1780, 4294901760
      %v2798 = vsub.f32 %v1780, %v2797
      %2799 = vmatpush1.msra.mxu0 %v2798
      %v2800 = vand.u32 %v1783, 4294901760
      %v2801 = vsub.f32 %v1783, %v2800
      %2802 = vmatprep.subr.mxu0 %v2801
      %v2803 = vand.u32 %v1782, 4294901760
      %v2804 = vsub.f32 %v1782, %v2803
      %2805 = vmatpush1.msra.mxu0 %v2804
      %v2806 = vand.u32 %v1785, 4294901760
      %v2807 = vsub.f32 %v1785, %v2806
      %2808 = vmatprep.subr.mxu0 %v2807
      %v2809 = vand.u32 %v1784, 4294901760
      %v2810 = vsub.f32 %v1784, %v2809
      %2811 = vmatpush1.msra.mxu0 %v2810
      %v2812 = vand.u32 %v1787, 4294901760
      %v2813 = vsub.f32 %v1787, %v2812
      %2814 = vmatprep.subr.mxu0 %v2813
      %v2815 = vand.u32 %v1786, 4294901760
      %v2816 = vsub.f32 %v1786, %v2815
      %2817 = vmatpush1.msra.mxu0 %v2816
      %v2818 = vand.u32 %v1789, 4294901760
      %v2819 = vsub.f32 %v1789, %v2818
      %2820 = vmatprep.subr.mxu0 %v2819
      %v2821 = vand.u32 %v1788, 4294901760
      %v2822 = vsub.f32 %v1788, %v2821
      %2823 = vmatpush1.msra.mxu0 %v2822
      %v2824 = vand.u32 %v1791, 4294901760
      %v2825 = vsub.f32 %v1791, %v2824
      %2826 = vmatprep.subr.mxu0 %v2825
      %v2827 = vand.u32 %v1790, 4294901760
      %v2828 = vsub.f32 %v1790, %v2827
      %2829 = vmatpush1.msra.mxu0 %v2828
      %v2830 = vand.u32 %v1793, 4294901760
      %v2831 = vsub.f32 %v1793, %v2830
      %2832 = vmatprep.subr.mxu0 %v2831
      %v2833 = vand.u32 %v1792, 4294901760
      %v2834 = vsub.f32 %v1792, %v2833
      %2835 = vmatpush1.msra.mxu0 %v2834
      %v2836 = vand.u32 %v1795, 4294901760
      %v2837 = vsub.f32 %v1795, %v2836
      %2838 = vmatprep.subr.mxu0 %v2837
      %v2839 = vand.u32 %v1794, 4294901760
      %v2840 = vsub.f32 %v1794, %v2839
      %2841 = vmatpush1.msra.mxu0 %v2840
      %v2842 = vand.u32 %v1797, 4294901760
      %v2843 = vsub.f32 %v1797, %v2842
      %2844 = vmatprep.subr.mxu0 %v2843
      %v2845 = vand.u32 %v1796, 4294901760
      %v2846 = vsub.f32 %v1796, %v2845
      %2847 = vmatpush1.msra.mxu0 %v2846
      %v2848 = vand.u32 %v1799, 4294901760
      %v2849 = vsub.f32 %v1799, %v2848
      %2850 = vmatprep.subr.mxu0 %v2849
      %v2851 = vand.u32 %v1798, 4294901760
      %v2852 = vsub.f32 %v1798, %v2851
      %2853 = vmatpush1.msra.mxu0 %v2852
      %v2854 = vand.u32 %v1801, 4294901760
      %v2855 = vsub.f32 %v1801, %v2854
      %2856 = vmatprep.subr.mxu0 %v2855
      %v2857 = vand.u32 %v1800, 4294901760
      %v2858 = vsub.f32 %v1800, %v2857
      %2859 = vmatpush1.msra.mxu0 %v2858
      %v2860 = vand.u32 %v1803, 4294901760
      %v2861 = vsub.f32 %v1803, %v2860
      %2862 = vmatprep.subr.mxu0 %v2861
      %v2863 = vand.u32 %v1802, 4294901760
      %v2864 = vsub.f32 %v1802, %v2863
      %2865 = vmatpush1.msra.mxu0 %v2864
      %v2866 = vand.u32 %v1805, 4294901760
      %v2867 = vsub.f32 %v1805, %v2866
      %2868 = vmatprep.subr.mxu0 %v2867
      %v2869 = vand.u32 %v1804, 4294901760
      %v2870 = vsub.f32 %v1804, %v2869
      %2871 = vmatpush1.msra.mxu0 %v2870
      %v2872 = vand.u32 %v1807, 4294901760
      %v2873 = vsub.f32 %v1807, %v2872
      %2874 = vmatprep.subr.mxu0 %v2873
      %v2875 = vand.u32 %v1806, 4294901760
      %v2876 = vsub.f32 %v1806, %v2875
      %2877 = vmatpush1.msra.mxu0 %v2876
      %v2878 = vand.u32 %v1809, 4294901760
      %v2879 = vsub.f32 %v1809, %v2878
      %2880 = vmatprep.subr.mxu0 %v2879
      %v2881 = vand.u32 %v1808, 4294901760
      %v2882 = vsub.f32 %v1808, %v2881
      %2883 = vmatpush1.msra.mxu0 %v2882
      %v2884 = vand.u32 %v1811, 4294901760
      %v2885 = vsub.f32 %v1811, %v2884
      %2886 = vmatprep.subr.mxu0 %v2885
      %v2887 = vand.u32 %v1810, 4294901760
      %v2888 = vsub.f32 %v1810, %v2887
      %2889 = vmatpush1.msra.mxu0 %v2888
      %v2890 = vand.u32 %v1813, 4294901760
      %v2891 = vsub.f32 %v1813, %v2890
      %2892 = vmatprep.subr.mxu0 %v2891
      %v2893 = vand.u32 %v1812, 4294901760
      %v2894 = vsub.f32 %v1812, %v2893
      %2895 = vmatpush1.msra.mxu0 %v2894
      %v2896 = vand.u32 %v1815, 4294901760
      %v2897 = vsub.f32 %v1815, %v2896
      %2898 = vmatprep.subr.mxu0 %v2897
      %v2899 = vand.u32 %v1814, 4294901760
      %v2900 = vsub.f32 %v1814, %v2899
      %2901 = vmatpush1.msra.mxu0 %v2900
      %v2902 = vand.u32 %v1817, 4294901760
      %v2903 = vsub.f32 %v1817, %v2902
      %2904 = vmatprep.subr.mxu0 %v2903
      %v2905 = vand.u32 %v1816, 4294901760
      %v2906 = vsub.f32 %v1816, %v2905
      %2907 = vmatpush1.msra.mxu0 %v2906
      %v2908 = vand.u32 %v1819, 4294901760
      %v2909 = vsub.f32 %v1819, %v2908
      %2910 = vmatprep.subr.mxu0 %v2909
      %v2911 = vand.u32 %v1818, 4294901760
      %v2912 = vsub.f32 %v1818, %v2911
      %2913 = vmatpush1.msra.mxu0 %v2912
      %v2914 = vand.u32 %v1821, 4294901760
      %v2915 = vsub.f32 %v1821, %v2914
      %2916 = vmatprep.subr.mxu0 %v2915
      %v2917 = vand.u32 %v1820, 4294901760
      %v2918 = vsub.f32 %v1820, %v2917
      %2919 = vmatpush1.msra.mxu0 %v2918
      %v2920 = vand.u32 %v1823, 4294901760
      %v2921 = vsub.f32 %v1823, %v2920
      %2922 = vmatprep.subr.mxu0 %v2921
      %v2923 = vand.u32 %v1822, 4294901760
      %v2924 = vsub.f32 %v1822, %v2923
      %2925 = vmatpush1.msra.mxu0 %v2924
      %v2926 = vand.u32 %v1825, 4294901760
      %v2927 = vsub.f32 %v1825, %v2926
      %2928 = vmatprep.subr.mxu0 %v2927
      %v2929 = vand.u32 %v1824, 4294901760
      %v2930 = vsub.f32 %v1824, %v2929
      %2931 = vmatpush1.msra.mxu0 %v2930
      %v2932 = vand.u32 %v1827, 4294901760
      %v2933 = vsub.f32 %v1827, %v2932
      %2934 = vmatprep.subr.mxu0 %v2933
      %v2935 = vand.u32 %v1826, 4294901760
      %v2936 = vsub.f32 %v1826, %v2935
      %2937 = vmatpush1.msra.mxu0 %v2936
      %v2938 = vand.u32 %v1829, 4294901760
      %v2939 = vsub.f32 %v1829, %v2938
      %2940 = vmatprep.subr.mxu0 %v2939
      %v2941 = vand.u32 %v1828, 4294901760
      %v2942 = vsub.f32 %v1828, %v2941
      %2943 = vmatpush1.msra.mxu0 %v2942
      %v2944 = vand.u32 %v1831, 4294901760
      %v2945 = vsub.f32 %v1831, %v2944
      %2946 = vmatprep.subr.mxu0 %v2945
      %v2947 = vand.u32 %v1830, 4294901760
      %v2948 = vsub.f32 %v1830, %v2947
      %2949 = vmatpush1.msra.mxu0 %v2948
      %v2950 = vand.u32 %v1833, 4294901760
      %v2951 = vsub.f32 %v1833, %v2950
      %2952 = vmatprep.subr.mxu0 %v2951
      %v2953 = vand.u32 %v1832, 4294901760
      %v2954 = vsub.f32 %v1832, %v2953
      %2955 = vmatpush1.msra.mxu0 %v2954
      %v2956 = vand.u32 %v1663, 4294901760
      %v2957 = vsub.f32 %v1663, %v2956
      %2958 = vmatprep.mubr.f32.mxu0 %v2957
      %v2959 = vand.u32 %v1661, 4294901760
      %v2960 = vsub.f32 %v1661, %v2959
      %2961 = vmatmul.mubr.f32.gmra.mrb[0].mxu0 %v2960
      %v2962 = vpop.f32.mrb[0].mxu0
      %v2963 = vadd.f32 %v2640, %v2962
      %v2964 = vpop.f32.mrb[0].mxu0
      %v2965 = vadd.f32 %v2642, %v2964
      %v2966 = vand.u32 %v1670, 4294901760
      %v2967 = vsub.f32 %v1670, %v2966
      %2968 = vmatprep.mubr.f32.mxu0 %v2967
      %v2969 = vand.u32 %v1668, 4294901760
      %v2970 = vsub.f32 %v1668, %v2969
      %2971 = vmatmul.mubr.f32.gmra.mrb[0].mxu0 %v2970
      %v2972 = vpop.f32.mrb[0].mxu0
      %v2973 = vadd.f32 %v2648, %v2972
      %v2974 = vpop.f32.mrb[0].mxu0
      %v2975 = vadd.f32 %v2650, %v2974
      %v2976 = vand.u32 %v1677, 4294901760
      %v2977 = vsub.f32 %v1677, %v2976
      %2978 = vmatprep.mubr.f32.mxu0 %v2977
      %v2979 = vand.u32 %v1675, 4294901760
      %v2980 = vsub.f32 %v1675, %v2979
      %2981 = vmatmul.mubr.f32.gmra.mrb[0].mxu0 %v2980
      %v2982 = vpop.f32.mrb[0].mxu0
      %v2983 = vadd.f32 %v2656, %v2982
      %v2984 = vpop.f32.mrb[0].mxu0
      %v2985 = vadd.f32 %v2658, %v2984
      %v2986 = vand.u32 %v1684, 4294901760
      %v2987 = vsub.f32 %v1684, %v2986
      %2988 = vmatprep.mubr.f32.mxu0 %v2987
      %v2989 = vand.u32 %v1682, 4294901760
      %v2990 = vsub.f32 %v1682, %v2989
      %2991 = vmatmul.mubr.f32.gmra.mrb[0].mxu0 %v2990
      %v2992 = vpop.f32.mrb[0].mxu0
      %v2993 = vadd.f32 %v2664, %v2992
      %v2994 = vpop.f32.mrb[0].mxu0
      %v2995 = vadd.f32 %v2666, %v2994
      %v2996 = vand.u32 %v1691, 4294901760
      %v2997 = vsub.f32 %v1691, %v2996
      %2998 = vmatprep.mubr.f32.mxu0 %v2997
      %v2999 = vand.u32 %v1689, 4294901760
      %v3000 = vsub.f32 %v1689, %v2999
      %3001 = vmatmul.mubr.f32.gmra.mrb[0].mxu0 %v3000
      %v3002 = vpop.f32.mrb[0].mxu0
      %v3003 = vadd.f32 %v2672, %v3002
      %v3004 = vpop.f32.mrb[0].mxu0
      %v3005 = vadd.f32 %v2674, %v3004
      %v3006 = vand.u32 %v1698, 4294901760
      %v3007 = vsub.f32 %v1698, %v3006
      %3008 = vmatprep.mubr.f32.mxu0 %v3007
      %v3009 = vand.u32 %v1696, 4294901760
      %v3010 = vsub.f32 %v1696, %v3009
      %3011 = vmatmul.mubr.f32.gmra.mrb[0].mxu0 %v3010
      %v3012 = vpop.f32.mrb[0].mxu0
      %v3013 = vadd.f32 %v2680, %v3012
      %v3014 = vpop.f32.mrb[0].mxu0
      %v3015 = vadd.f32 %v2682, %v3014
      %v3016 = vand.u32 %v1705, 4294901760
      %v3017 = vsub.f32 %v1705, %v3016
      %3018 = vmatprep.mubr.f32.mxu0 %v3017
      %v3019 = vand.u32 %v1703, 4294901760
      %v3020 = vsub.f32 %v1703, %v3019
      %3021 = vmatmul.mubr.f32.gmra.mrb[0].mxu0 %v3020
      %v3022 = vpop.f32.mrb[0].mxu0
      %v3023 = vadd.f32 %v2688, %v3022
      %v3024 = vpop.f32.mrb[0].mxu0
      %v3025 = vadd.f32 %v2690, %v3024
      %v3026 = vand.u32 %v1712, 4294901760
      %v3027 = vsub.f32 %v1712, %v3026
      %3028 = vmatprep.mubr.f32.mxu0 %v3027
      %v3029 = vand.u32 %v1710, 4294901760
      %v3030 = vsub.f32 %v1710, %v3029
      %3031 = vmatmul.mubr.f32.gmra.mrb[0].mxu0 %v3030
      %v3032 = vpop.f32.mrb[0].mxu0
      %v3033 = vadd.f32 %v2696, %v3032
      %v3034 = vpop.f32.mrb[0].mxu0
      %v3035 = vadd.f32 %v2698, %v3034
      %v3036 = vand.u32 %v1719, 4294901760
      %v3037 = vsub.f32 %v1719, %v3036
      %3038 = vmatprep.mubr.f32.mxu0 %v3037
      %v3039 = vand.u32 %v1717, 4294901760
      %v3040 = vsub.f32 %v1717, %v3039
      %3041 = vmatmul.mubr.f32.gmra.mrb[0].mxu0 %v3040
      %v3042 = vpop.f32.mrb[0].mxu0
      %v3043 = vadd.f32 %v2704, %v3042
      %v3044 = vpop.f32.mrb[0].mxu0
      %v3045 = vadd.f32 %v2706, %v3044
      %v3046 = vand.u32 %v1726, 4294901760
      %v3047 = vsub.f32 %v1726, %v3046
      %3048 = vmatprep.mubr.f32.mxu0 %v3047
      %v3049 = vand.u32 %v1724, 4294901760
      %v3050 = vsub.f32 %v1724, %v3049
      %3051 = vmatmul.mubr.f32.gmra.mrb[0].mxu0 %v3050
      %v3052 = vpop.f32.mrb[0].mxu0
      %v3053 = vadd.f32 %v2712, %v3052
      %v3054 = vpop.f32.mrb[0].mxu0
      %v3055 = vadd.f32 %v2714, %v3054
      %v3056 = vand.u32 %v1733, 4294901760
      %v3057 = vsub.f32 %v1733, %v3056
      %3058 = vmatprep.mubr.f32.mxu0 %v3057
      %v3059 = vand.u32 %v1731, 4294901760
      %v3060 = vsub.f32 %v1731, %v3059
      %3061 = vmatmul.mubr.f32.gmra.mrb[0].mxu0 %v3060
      %v3062 = vpop.f32.mrb[0].mxu0
      %v3063 = vadd.f32 %v2720, %v3062
      %v3064 = vpop.f32.mrb[0].mxu0
      %v3065 = vadd.f32 %v2722, %v3064
      %v3066 = vand.u32 %v1740, 4294901760
      %v3067 = vsub.f32 %v1740, %v3066
      %3068 = vmatprep.mubr.f32.mxu0 %v3067
      %v3069 = vand.u32 %v1738, 4294901760
      %v3070 = vsub.f32 %v1738, %v3069
      %3071 = vmatmul.mubr.f32.gmra.mrb[0].mxu0 %v3070
      %v3072 = vpop.f32.mrb[0].mxu0
      %v3073 = vadd.f32 %v2728, %v3072
      %v3074 = vpop.f32.mrb[0].mxu0
      %v3075 = vadd.f32 %v2730, %v3074
      %v3076 = vand.u32 %v1747, 4294901760
      %v3077 = vsub.f32 %v1747, %v3076
      %3078 = vmatprep.mubr.f32.mxu0 %v3077
      %v3079 = vand.u32 %v1745, 4294901760
      %v3080 = vsub.f32 %v1745, %v3079
      %3081 = vmatmul.mubr.f32.gmra.mrb[0].mxu0 %v3080
      %v3082 = vpop.f32.mrb[0].mxu0
      %v3083 = vadd.f32 %v2736, %v3082
      %v3084 = vpop.f32.mrb[0].mxu0
      %v3085 = vadd.f32 %v2738, %v3084
      %v3086 = vand.u32 %v1754, 4294901760
      %v3087 = vsub.f32 %v1754, %v3086
      %3088 = vmatprep.mubr.f32.mxu0 %v3087
      %v3089 = vand.u32 %v1752, 4294901760
      %v3090 = vsub.f32 %v1752, %v3089
      %3091 = vmatmul.mubr.f32.gmra.mrb[0].mxu0 %v3090
      %v3092 = vpop.f32.mrb[0].mxu0
      %v3093 = vadd.f32 %v2744, %v3092
      %v3094 = vpop.f32.mrb[0].mxu0
      %v3095 = vadd.f32 %v2746, %v3094
      %v3096 = vand.u32 %v1761, 4294901760
      %v3097 = vsub.f32 %v1761, %v3096
      %3098 = vmatprep.mubr.f32.mxu0 %v3097
      %v3099 = vand.u32 %v1759, 4294901760
      %v3100 = vsub.f32 %v1759, %v3099
      %3101 = vmatmul.mubr.f32.gmra.mrb[0].mxu0 %v3100
      %v3102 = vpop.f32.mrb[0].mxu0
      %v3103 = vadd.f32 %v2752, %v3102
      %v3104 = vpop.f32.mrb[0].mxu0
      %v3105 = vadd.f32 %v2754, %v3104
      %v3106 = vand.u32 %v1768, 4294901760
      %v3107 = vsub.f32 %v1768, %v3106
      %3108 = vmatprep.mubr.f32.mxu0 %v3107
      %v3109 = vand.u32 %v1766, 4294901760
      %v3110 = vsub.f32 %v1766, %v3109
      %3111 = vmatmul.mubr.f32.gmra.mrb[0].mxu0 %v3110
      %v3112 = vpop.f32.mrb[0].mxu0
      %v3113 = vadd.f32 %v2760, %v3112
      %v3114 = vpop.f32.mrb[0].mxu0
      %v3115 = vadd.f32 %v2762, %v3114
      %3116 = vdwg.mxu0
      %v3117 = vand.u32 %v1771, 4294901760
      %3118 = vmatprep.subr.mxu0 %v3117
      %v3119 = vand.u32 %v1770, 4294901760
      %3120 = vmatpush1.msra.mxu0 %v3119
      %v3121 = vand.u32 %v1773, 4294901760
      %3122 = vmatprep.subr.mxu0 %v3121
      %v3123 = vand.u32 %v1772, 4294901760
      %3124 = vmatpush1.msra.mxu0 %v3123
      %v3125 = vand.u32 %v1775, 4294901760
      %3126 = vmatprep.subr.mxu0 %v3125
      %v3127 = vand.u32 %v1774, 4294901760
      %3128 = vmatpush1.msra.mxu0 %v3127
      %v3129 = vand.u32 %v1777, 4294901760
      %3130 = vmatprep.subr.mxu0 %v3129
      %v3131 = vand.u32 %v1776, 4294901760
      %3132 = vmatpush1.msra.mxu0 %v3131
      %v3133 = vand.u32 %v1779, 4294901760
      %3134 = vmatprep.subr.mxu0 %v3133
      %v3135 = vand.u32 %v1778, 4294901760
      %3136 = vmatpush1.msra.mxu0 %v3135
      %v3137 = vand.u32 %v1781, 4294901760
      %3138 = vmatprep.subr.mxu0 %v3137
      %v3139 = vand.u32 %v1780, 4294901760
      %3140 = vmatpush1.msra.mxu0 %v3139
      %v3141 = vand.u32 %v1783, 4294901760
      %3142 = vmatprep.subr.mxu0 %v3141
      %v3143 = vand.u32 %v1782, 4294901760
      %3144 = vmatpush1.msra.mxu0 %v3143
      %v3145 = vand.u32 %v1785, 4294901760
      %3146 = vmatprep.subr.mxu0 %v3145
      %v3147 = vand.u32 %v1784, 4294901760
      %3148 = vmatpush1.msra.mxu0 %v3147
      %v3149 = vand.u32 %v1787, 4294901760
      %3150 = vmatprep.subr.mxu0 %v3149
      %v3151 = vand.u32 %v1786, 4294901760
      %3152 = vmatpush1.msra.mxu0 %v3151
      %v3153 = vand.u32 %v1789, 4294901760
      %3154 = vmatprep.subr.mxu0 %v3153
      %v3155 = vand.u32 %v1788, 4294901760
      %3156 = vmatpush1.msra.mxu0 %v3155
      %v3157 = vand.u32 %v1791, 4294901760
      %3158 = vmatprep.subr.mxu0 %v3157
      %v3159 = vand.u32 %v1790, 4294901760
      %3160 = vmatpush1.msra.mxu0 %v3159
      %v3161 = vand.u32 %v1793, 4294901760
      %3162 = vmatprep.subr.mxu0 %v3161
      %v3163 = vand.u32 %v1792, 4294901760
      %3164 = vmatpush1.msra.mxu0 %v3163
      %v3165 = vand.u32 %v1795, 4294901760
      %3166 = vmatprep.subr.mxu0 %v3165
      %v3167 = vand.u32 %v1794, 4294901760
      %3168 = vmatpush1.msra.mxu0 %v3167
      %v3169 = vand.u32 %v1797, 4294901760
      %3170 = vmatprep.subr.mxu0 %v3169
      %v3171 = vand.u32 %v1796, 4294901760
      %3172 = vmatpush1.msra.mxu0 %v3171
      %v3173 = vand.u32 %v1799, 4294901760
      %3174 = vmatprep.subr.mxu0 %v3173
      %v3175 = vand.u32 %v1798, 4294901760
      %3176 = vmatpush1.msra.mxu0 %v3175
      %v3177 = vand.u32 %v1801, 4294901760
      %3178 = vmatprep.subr.mxu0 %v3177
      %v3179 = vand.u32 %v1800, 4294901760
      %3180 = vmatpush1.msra.mxu0 %v3179
      %v3181 = vand.u32 %v1803, 4294901760
      %3182 = vmatprep.subr.mxu0 %v3181
      %v3183 = vand.u32 %v1802, 4294901760
      %3184 = vmatpush1.msra.mxu0 %v3183
      %v3185 = vand.u32 %v1805, 4294901760
      %3186 = vmatprep.subr.mxu0 %v3185
      %v3187 = vand.u32 %v1804, 4294901760
      %3188 = vmatpush1.msra.mxu0 %v3187
      %v3189 = vand.u32 %v1807, 4294901760
      %3190 = vmatprep.subr.mxu0 %v3189
      %v3191 = vand.u32 %v1806, 4294901760
      %3192 = vmatpush1.msra.mxu0 %v3191
      %v3193 = vand.u32 %v1809, 4294901760
      %3194 = vmatprep.subr.mxu0 %v3193
      %v3195 = vand.u32 %v1808, 4294901760
      %3196 = vmatpush1.msra.mxu0 %v3195
      %v3197 = vand.u32 %v1811, 4294901760
      %3198 = vmatprep.subr.mxu0 %v3197
      %v3199 = vand.u32 %v1810, 4294901760
      %3200 = vmatpush1.msra.mxu0 %v3199
      %v3201 = vand.u32 %v1813, 4294901760
      %3202 = vmatprep.subr.mxu0 %v3201
      %v3203 = vand.u32 %v1812, 4294901760
      %3204 = vmatpush1.msra.mxu0 %v3203
      %v3205 = vand.u32 %v1815, 4294901760
      %3206 = vmatprep.subr.mxu0 %v3205
      %v3207 = vand.u32 %v1814, 4294901760
      %3208 = vmatpush1.msra.mxu0 %v3207
      %v3209 = vand.u32 %v1817, 4294901760
      %3210 = vmatprep.subr.mxu0 %v3209
      %v3211 = vand.u32 %v1816, 4294901760
      %3212 = vmatpush1.msra.mxu0 %v3211
      %v3213 = vand.u32 %v1819, 4294901760
      %3214 = vmatprep.subr.mxu0 %v3213
      %v3215 = vand.u32 %v1818, 4294901760
      %3216 = vmatpush1.msra.mxu0 %v3215
      %v3217 = vand.u32 %v1821, 4294901760
      %3218 = vmatprep.subr.mxu0 %v3217
      %v3219 = vand.u32 %v1820, 4294901760
      %3220 = vmatpush1.msra.mxu0 %v3219
      %v3221 = vand.u32 %v1823, 4294901760
      %3222 = vmatprep.subr.mxu0 %v3221
      %v3223 = vand.u32 %v1822, 4294901760
      %3224 = vmatpush1.msra.mxu0 %v3223
      %v3225 = vand.u32 %v1825, 4294901760
      %3226 = vmatprep.subr.mxu0 %v3225
      %v3227 = vand.u32 %v1824, 4294901760
      %3228 = vmatpush1.msra.mxu0 %v3227
      %v3229 = vand.u32 %v1827, 4294901760
      %3230 = vmatprep.subr.mxu0 %v3229
      %v3231 = vand.u32 %v1826, 4294901760
      %3232 = vmatpush1.msra.mxu0 %v3231
      %v3233 = vand.u32 %v1829, 4294901760
      %3234 = vmatprep.subr.mxu0 %v3233
      %v3235 = vand.u32 %v1828, 4294901760
      %3236 = vmatpush1.msra.mxu0 %v3235
      %v3237 = vand.u32 %v1831, 4294901760
      %3238 = vmatprep.subr.mxu0 %v3237
      %v3239 = vand.u32 %v1830, 4294901760
      %3240 = vmatpush1.msra.mxu0 %v3239
      %v3241 = vand.u32 %v1833, 4294901760
      %3242 = vmatprep.subr.mxu0 %v3241
      %v3243 = vand.u32 %v1832, 4294901760
      %3244 = vmatpush1.msra.mxu0 %v3243
      %v3245 = vand.u32 %v1663, 4294901760
      %v3246 = vsub.f32 %v1663, %v3245
      %v3247 = vand.u32 %v3246, 4294901760
      %3248 = vmatprep.mubr.f32.mxu0 %v3247
      %v3249 = vand.u32 %v1661, 4294901760
      %v3250 = vsub.f32 %v1661, %v3249
      %v3251 = vand.u32 %v3250, 4294901760
      %3252 = vmatmul.mubr.f32.gmra.mrb[0].mxu0 %v3251
      %v3253 = vpop.f32.mrb[0].mxu0
      %v3254 = vadd.f32 %v2963, %v3253
      %v3255 = vpop.f32.mrb[0].mxu0
      %v3256 = vadd.f32 %v2965, %v3255
      %v3257 = vand.u32 %v1670, 4294901760
      %v3258 = vsub.f32 %v1670, %v3257
      %v3259 = vand.u32 %v3258, 4294901760
      %3260 = vmatprep.mubr.f32.mxu0 %v3259
      %v3261 = vand.u32 %v1668, 4294901760
      %v3262 = vsub.f32 %v1668, %v3261
      %v3263 = vand.u32 %v3262, 4294901760
      %3264 = vmatmul.mubr.f32.gmra.mrb[0].mxu0 %v3263
      %v3265 = vpop.f32.mrb[0].mxu0
      %v3266 = vadd.f32 %v2973, %v3265
      %v3267 = vpop.f32.mrb[0].mxu0
      %v3268 = vadd.f32 %v2975, %v3267
      %v3269 = vand.u32 %v1677, 4294901760
      %v3270 = vsub.f32 %v1677, %v3269
      %v3271 = vand.u32 %v3270, 4294901760
      %3272 = vmatprep.mubr.f32.mxu0 %v3271
      %v3273 = vand.u32 %v1675, 4294901760
      %v3274 = vsub.f32 %v1675, %v3273
      %v3275 = vand.u32 %v3274, 4294901760
      %3276 = vmatmul.mubr.f32.gmra.mrb[0].mxu0 %v3275
      %v3277 = vpop.f32.mrb[0].mxu0
      %v3278 = vadd.f32 %v2983, %v3277
      %v3279 = vpop.f32.mrb[0].mxu0
      %v3280 = vadd.f32 %v2985, %v3279
      %v3281 = vand.u32 %v1684, 4294901760
      %v3282 = vsub.f32 %v1684, %v3281
      %v3283 = vand.u32 %v3282, 4294901760
      %3284 = vmatprep.mubr.f32.mxu0 %v3283
      %v3285 = vand.u32 %v1682, 4294901760
      %v3286 = vsub.f32 %v1682, %v3285
      %v3287 = vand.u32 %v3286, 4294901760
      %3288 = vmatmul.mubr.f32.gmra.mrb[0].mxu0 %v3287
      %v3289 = vpop.f32.mrb[0].mxu0
      %v3290 = vadd.f32 %v2993, %v3289
      %v3291 = vpop.f32.mrb[0].mxu0
      %v3292 = vadd.f32 %v2995, %v3291
      %v3293 = vand.u32 %v1691, 4294901760
      %v3294 = vsub.f32 %v1691, %v3293
      %v3295 = vand.u32 %v3294, 4294901760
      %3296 = vmatprep.mubr.f32.mxu0 %v3295
      %v3297 = vand.u32 %v1689, 4294901760
      %v3298 = vsub.f32 %v1689, %v3297
      %v3299 = vand.u32 %v3298, 4294901760
      %3300 = vmatmul.mubr.f32.gmra.mrb[0].mxu0 %v3299
      %v3301 = vpop.f32.mrb[0].mxu0
      %v3302 = vadd.f32 %v3003, %v3301
      %v3303 = vpop.f32.mrb[0].mxu0
      %v3304 = vadd.f32 %v3005, %v3303
      %v3305 = vand.u32 %v1698, 4294901760
      %v3306 = vsub.f32 %v1698, %v3305
      %v3307 = vand.u32 %v3306, 4294901760
      %3308 = vmatprep.mubr.f32.mxu0 %v3307
      %v3309 = vand.u32 %v1696, 4294901760
      %v3310 = vsub.f32 %v1696, %v3309
      %v3311 = vand.u32 %v3310, 4294901760
      %3312 = vmatmul.mubr.f32.gmra.mrb[0].mxu0 %v3311
      %v3313 = vpop.f32.mrb[0].mxu0
      %v3314 = vadd.f32 %v3013, %v3313
      %v3315 = vpop.f32.mrb[0].mxu0
      %v3316 = vadd.f32 %v3015, %v3315
      %v3317 = vand.u32 %v1705, 4294901760
      %v3318 = vsub.f32 %v1705, %v3317
      %v3319 = vand.u32 %v3318, 4294901760
      %3320 = vmatprep.mubr.f32.mxu0 %v3319
      %v3321 = vand.u32 %v1703, 4294901760
      %v3322 = vsub.f32 %v1703, %v3321
      %v3323 = vand.u32 %v3322, 4294901760
      %3324 = vmatmul.mubr.f32.gmra.mrb[0].mxu0 %v3323
      %v3325 = vpop.f32.mrb[0].mxu0
      %v3326 = vadd.f32 %v3023, %v3325
      %v3327 = vpop.f32.mrb[0].mxu0
      %v3328 = vadd.f32 %v3025, %v3327
      %v3329 = vand.u32 %v1712, 4294901760
      %v3330 = vsub.f32 %v1712, %v3329
      %v3331 = vand.u32 %v3330, 4294901760
      %3332 = vmatprep.mubr.f32.mxu0 %v3331
      %v3333 = vand.u32 %v1710, 4294901760
      %v3334 = vsub.f32 %v1710, %v3333
      %v3335 = vand.u32 %v3334, 4294901760
      %3336 = vmatmul.mubr.f32.gmra.mrb[0].mxu0 %v3335
      %v3337 = vpop.f32.mrb[0].mxu0
      %v3338 = vadd.f32 %v3033, %v3337
      %v3339 = vpop.f32.mrb[0].mxu0
      %v3340 = vadd.f32 %v3035, %v3339
      %v3341 = vand.u32 %v1719, 4294901760
      %v3342 = vsub.f32 %v1719, %v3341
      %v3343 = vand.u32 %v3342, 4294901760
      %3344 = vmatprep.mubr.f32.mxu0 %v3343
      %v3345 = vand.u32 %v1717, 4294901760
      %v3346 = vsub.f32 %v1717, %v3345
      %v3347 = vand.u32 %v3346, 4294901760
      %3348 = vmatmul.mubr.f32.gmra.mrb[0].mxu0 %v3347
      %v3349 = vpop.f32.mrb[0].mxu0
      %v3350 = vadd.f32 %v3043, %v3349
      %v3351 = vpop.f32.mrb[0].mxu0
      %v3352 = vadd.f32 %v3045, %v3351
      %v3353 = vand.u32 %v1726, 4294901760
      %v3354 = vsub.f32 %v1726, %v3353
      %v3355 = vand.u32 %v3354, 4294901760
      %3356 = vmatprep.mubr.f32.mxu0 %v3355
      %v3357 = vand.u32 %v1724, 4294901760
      %v3358 = vsub.f32 %v1724, %v3357
      %v3359 = vand.u32 %v3358, 4294901760
      %3360 = vmatmul.mubr.f32.gmra.mrb[0].mxu0 %v3359
      %v3361 = vpop.f32.mrb[0].mxu0
      %v3362 = vadd.f32 %v3053, %v3361
      %v3363 = vpop.f32.mrb[0].mxu0
      %v3364 = vadd.f32 %v3055, %v3363
      %v3365 = vand.u32 %v1733, 4294901760
      %v3366 = vsub.f32 %v1733, %v3365
      %v3367 = vand.u32 %v3366, 4294901760
      %3368 = vmatprep.mubr.f32.mxu0 %v3367
      %v3369 = vand.u32 %v1731, 4294901760
      %v3370 = vsub.f32 %v1731, %v3369
      %v3371 = vand.u32 %v3370, 4294901760
      %3372 = vmatmul.mubr.f32.gmra.mrb[0].mxu0 %v3371
      %v3373 = vpop.f32.mrb[0].mxu0
      %v3374 = vadd.f32 %v3063, %v3373
      %v3375 = vpop.f32.mrb[0].mxu0
      %v3376 = vadd.f32 %v3065, %v3375
      %v3377 = vand.u32 %v1740, 4294901760
      %v3378 = vsub.f32 %v1740, %v3377
      %v3379 = vand.u32 %v3378, 4294901760
      %3380 = vmatprep.mubr.f32.mxu0 %v3379
      %v3381 = vand.u32 %v1738, 4294901760
      %v3382 = vsub.f32 %v1738, %v3381
      %v3383 = vand.u32 %v3382, 4294901760
      %3384 = vmatmul.mubr.f32.gmra.mrb[0].mxu0 %v3383
      %v3385 = vpop.f32.mrb[0].mxu0
      %v3386 = vadd.f32 %v3073, %v3385
      %v3387 = vpop.f32.mrb[0].mxu0
      %v3388 = vadd.f32 %v3075, %v3387
      %v3389 = vand.u32 %v1747, 4294901760
      %v3390 = vsub.f32 %v1747, %v3389
      %v3391 = vand.u32 %v3390, 4294901760
      %3392 = vmatprep.mubr.f32.mxu0 %v3391
      %v3393 = vand.u32 %v1745, 4294901760
      %v3394 = vsub.f32 %v1745, %v3393
      %v3395 = vand.u32 %v3394, 4294901760
      %3396 = vmatmul.mubr.f32.gmra.mrb[0].mxu0 %v3395
      %v3397 = vpop.f32.mrb[0].mxu0
      %v3398 = vadd.f32 %v3083, %v3397
      %v3399 = vpop.f32.mrb[0].mxu0
      %v3400 = vadd.f32 %v3085, %v3399
      %v3401 = vand.u32 %v1754, 4294901760
      %v3402 = vsub.f32 %v1754, %v3401
      %v3403 = vand.u32 %v3402, 4294901760
      %3404 = vmatprep.mubr.f32.mxu0 %v3403
      %v3405 = vand.u32 %v1752, 4294901760
      %v3406 = vsub.f32 %v1752, %v3405
      %v3407 = vand.u32 %v3406, 4294901760
      %3408 = vmatmul.mubr.f32.gmra.mrb[0].mxu0 %v3407
      %v3409 = vpop.f32.mrb[0].mxu0
      %v3410 = vadd.f32 %v3093, %v3409
      %v3411 = vpop.f32.mrb[0].mxu0
      %v3412 = vadd.f32 %v3095, %v3411
      %v3413 = vand.u32 %v1761, 4294901760
      %v3414 = vsub.f32 %v1761, %v3413
      %v3415 = vand.u32 %v3414, 4294901760
      %3416 = vmatprep.mubr.f32.mxu0 %v3415
      %v3417 = vand.u32 %v1759, 4294901760
      %v3418 = vsub.f32 %v1759, %v3417
      %v3419 = vand.u32 %v3418, 4294901760
      %3420 = vmatmul.mubr.f32.gmra.mrb[0].mxu0 %v3419
      %v3421 = vpop.f32.mrb[0].mxu0
      %v3422 = vadd.f32 %v3103, %v3421
      %v3423 = vpop.f32.mrb[0].mxu0
      %v3424 = vadd.f32 %v3105, %v3423
      %v3425 = vand.u32 %v1768, 4294901760
      %v3426 = vsub.f32 %v1768, %v3425
      %v3427 = vand.u32 %v3426, 4294901760
      %3428 = vmatprep.mubr.f32.mxu0 %v3427
      %v3429 = vand.u32 %v1766, 4294901760
      %v3430 = vsub.f32 %v1766, %v3429
      %v3431 = vand.u32 %v3430, 4294901760
      %3432 = vmatmul.mubr.f32.gmra.mrb[0].mxu0 %v3431
      %v3433 = vpop.f32.mrb[0].mxu0
      %v3434 = vadd.f32 %v3113, %v3433
      %v3435 = vpop.f32.mrb[0].mxu0
      %v3436 = vadd.f32 %v3115, %v3435
      %3437 = vdwg.mxu0
      %v3438 = vand.u32 %v1771, 4294901760
      %v3439 = vsub.f32 %v1771, %v3438
      %v3440 = vand.u32 %v3439, 4294901760
      %3441 = vmatprep.subr.mxu0 %v3440
      %v3442 = vand.u32 %v1770, 4294901760
      %v3443 = vsub.f32 %v1770, %v3442
      %v3444 = vand.u32 %v3443, 4294901760
      %3445 = vmatpush1.msra.mxu0 %v3444
      %v3446 = vand.u32 %v1773, 4294901760
      %v3447 = vsub.f32 %v1773, %v3446
      %v3448 = vand.u32 %v3447, 4294901760
      %3449 = vmatprep.subr.mxu0 %v3448
      %v3450 = vand.u32 %v1772, 4294901760
      %v3451 = vsub.f32 %v1772, %v3450
      %v3452 = vand.u32 %v3451, 4294901760
      %3453 = vmatpush1.msra.mxu0 %v3452
      %v3454 = vand.u32 %v1775, 4294901760
      %v3455 = vsub.f32 %v1775, %v3454
      %v3456 = vand.u32 %v3455, 4294901760
      %3457 = vmatprep.subr.mxu0 %v3456
      %v3458 = vand.u32 %v1774, 4294901760
      %v3459 = vsub.f32 %v1774, %v3458
      %v3460 = vand.u32 %v3459, 4294901760
      %3461 = vmatpush1.msra.mxu0 %v3460
      %v3462 = vand.u32 %v1777, 4294901760
      %v3463 = vsub.f32 %v1777, %v3462
      %v3464 = vand.u32 %v3463, 4294901760
      %3465 = vmatprep.subr.mxu0 %v3464
      %v3466 = vand.u32 %v1776, 4294901760
      %v3467 = vsub.f32 %v1776, %v3466
      %v3468 = vand.u32 %v3467, 4294901760
      %3469 = vmatpush1.msra.mxu0 %v3468
      %v3470 = vand.u32 %v1779, 4294901760
      %v3471 = vsub.f32 %v1779, %v3470
      %v3472 = vand.u32 %v3471, 4294901760
      %3473 = vmatprep.subr.mxu0 %v3472
      %v3474 = vand.u32 %v1778, 4294901760
      %v3475 = vsub.f32 %v1778, %v3474
      %v3476 = vand.u32 %v3475, 4294901760
      %3477 = vmatpush1.msra.mxu0 %v3476
      %v3478 = vand.u32 %v1781, 4294901760
      %v3479 = vsub.f32 %v1781, %v3478
      %v3480 = vand.u32 %v3479, 4294901760
      %3481 = vmatprep.subr.mxu0 %v3480
      %v3482 = vand.u32 %v1780, 4294901760
      %v3483 = vsub.f32 %v1780, %v3482
      %v3484 = vand.u32 %v3483, 4294901760
      %3485 = vmatpush1.msra.mxu0 %v3484
      %v3486 = vand.u32 %v1783, 4294901760
      %v3487 = vsub.f32 %v1783, %v3486
      %v3488 = vand.u32 %v3487, 4294901760
      %3489 = vmatprep.subr.mxu0 %v3488
      %v3490 = vand.u32 %v1782, 4294901760
      %v3491 = vsub.f32 %v1782, %v3490
      %v3492 = vand.u32 %v3491, 4294901760
      %3493 = vmatpush1.msra.mxu0 %v3492
      %v3494 = vand.u32 %v1785, 4294901760
      %v3495 = vsub.f32 %v1785, %v3494
      %v3496 = vand.u32 %v3495, 4294901760
      %3497 = vmatprep.subr.mxu0 %v3496
      %v3498 = vand.u32 %v1784, 4294901760
      %v3499 = vsub.f32 %v1784, %v3498
      %v3500 = vand.u32 %v3499, 4294901760
      %3501 = vmatpush1.msra.mxu0 %v3500
      %v3502 = vand.u32 %v1787, 4294901760
      %v3503 = vsub.f32 %v1787, %v3502
      %v3504 = vand.u32 %v3503, 4294901760
      %3505 = vmatprep.subr.mxu0 %v3504
      %v3506 = vand.u32 %v1786, 4294901760
      %v3507 = vsub.f32 %v1786, %v3506
      %v3508 = vand.u32 %v3507, 4294901760
      %3509 = vmatpush1.msra.mxu0 %v3508
      %v3510 = vand.u32 %v1789, 4294901760
      %v3511 = vsub.f32 %v1789, %v3510
      %v3512 = vand.u32 %v3511, 4294901760
      %3513 = vmatprep.subr.mxu0 %v3512
      %v3514 = vand.u32 %v1788, 4294901760
      %v3515 = vsub.f32 %v1788, %v3514
      %v3516 = vand.u32 %v3515, 4294901760
      %3517 = vmatpush1.msra.mxu0 %v3516
      %v3518 = vand.u32 %v1791, 4294901760
      %v3519 = vsub.f32 %v1791, %v3518
      %v3520 = vand.u32 %v3519, 4294901760
      %3521 = vmatprep.subr.mxu0 %v3520
      %v3522 = vand.u32 %v1790, 4294901760
      %v3523 = vsub.f32 %v1790, %v3522
      %v3524 = vand.u32 %v3523, 4294901760
      %3525 = vmatpush1.msra.mxu0 %v3524
      %v3526 = vand.u32 %v1793, 4294901760
      %v3527 = vsub.f32 %v1793, %v3526
      %v3528 = vand.u32 %v3527, 4294901760
      %3529 = vmatprep.subr.mxu0 %v3528
      %v3530 = vand.u32 %v1792, 4294901760
      %v3531 = vsub.f32 %v1792, %v3530
      %v3532 = vand.u32 %v3531, 4294901760
      %3533 = vmatpush1.msra.mxu0 %v3532
      %v3534 = vand.u32 %v1795, 4294901760
      %v3535 = vsub.f32 %v1795, %v3534
      %v3536 = vand.u32 %v3535, 4294901760
      %3537 = vmatprep.subr.mxu0 %v3536
      %v3538 = vand.u32 %v1794, 4294901760
      %v3539 = vsub.f32 %v1794, %v3538
      %v3540 = vand.u32 %v3539, 4294901760
      %3541 = vmatpush1.msra.mxu0 %v3540
      %v3542 = vand.u32 %v1797, 4294901760
      %v3543 = vsub.f32 %v1797, %v3542
      %v3544 = vand.u32 %v3543, 4294901760
      %3545 = vmatprep.subr.mxu0 %v3544
      %v3546 = vand.u32 %v1796, 4294901760
      %v3547 = vsub.f32 %v1796, %v3546
      %v3548 = vand.u32 %v3547, 4294901760
      %3549 = vmatpush1.msra.mxu0 %v3548
      %v3550 = vand.u32 %v1799, 4294901760
      %v3551 = vsub.f32 %v1799, %v3550
      %v3552 = vand.u32 %v3551, 4294901760
      %3553 = vmatprep.subr.mxu0 %v3552
      %v3554 = vand.u32 %v1798, 4294901760
      %v3555 = vsub.f32 %v1798, %v3554
      %v3556 = vand.u32 %v3555, 4294901760
      %3557 = vmatpush1.msra.mxu0 %v3556
      %v3558 = vand.u32 %v1801, 4294901760
      %v3559 = vsub.f32 %v1801, %v3558
      %v3560 = vand.u32 %v3559, 4294901760
      %3561 = vmatprep.subr.mxu0 %v3560
      %v3562 = vand.u32 %v1800, 4294901760
      %v3563 = vsub.f32 %v1800, %v3562
      %v3564 = vand.u32 %v3563, 4294901760
      %3565 = vmatpush1.msra.mxu0 %v3564
      %v3566 = vand.u32 %v1803, 4294901760
      %v3567 = vsub.f32 %v1803, %v3566
      %v3568 = vand.u32 %v3567, 4294901760
      %3569 = vmatprep.subr.mxu0 %v3568
      %v3570 = vand.u32 %v1802, 4294901760
      %v3571 = vsub.f32 %v1802, %v3570
      %v3572 = vand.u32 %v3571, 4294901760
      %3573 = vmatpush1.msra.mxu0 %v3572
      %v3574 = vand.u32 %v1805, 4294901760
      %v3575 = vsub.f32 %v1805, %v3574
      %v3576 = vand.u32 %v3575, 4294901760
      %3577 = vmatprep.subr.mxu0 %v3576
      %v3578 = vand.u32 %v1804, 4294901760
      %v3579 = vsub.f32 %v1804, %v3578
      %v3580 = vand.u32 %v3579, 4294901760
      %3581 = vmatpush1.msra.mxu0 %v3580
      %v3582 = vand.u32 %v1807, 4294901760
      %v3583 = vsub.f32 %v1807, %v3582
      %v3584 = vand.u32 %v3583, 4294901760
      %3585 = vmatprep.subr.mxu0 %v3584
      %v3586 = vand.u32 %v1806, 4294901760
      %v3587 = vsub.f32 %v1806, %v3586
      %v3588 = vand.u32 %v3587, 4294901760
      %3589 = vmatpush1.msra.mxu0 %v3588
      %v3590 = vand.u32 %v1809, 4294901760
      %v3591 = vsub.f32 %v1809, %v3590
      %v3592 = vand.u32 %v3591, 4294901760
      %3593 = vmatprep.subr.mxu0 %v3592
      %v3594 = vand.u32 %v1808, 4294901760
      %v3595 = vsub.f32 %v1808, %v3594
      %v3596 = vand.u32 %v3595, 4294901760
      %3597 = vmatpush1.msra.mxu0 %v3596
      %v3598 = vand.u32 %v1811, 4294901760
      %v3599 = vsub.f32 %v1811, %v3598
      %v3600 = vand.u32 %v3599, 4294901760
      %3601 = vmatprep.subr.mxu0 %v3600
      %v3602 = vand.u32 %v1810, 4294901760
      %v3603 = vsub.f32 %v1810, %v3602
      %v3604 = vand.u32 %v3603, 4294901760
      %3605 = vmatpush1.msra.mxu0 %v3604
      %v3606 = vand.u32 %v1813, 4294901760
      %v3607 = vsub.f32 %v1813, %v3606
      %v3608 = vand.u32 %v3607, 4294901760
      %3609 = vmatprep.subr.mxu0 %v3608
      %v3610 = vand.u32 %v1812, 4294901760
      %v3611 = vsub.f32 %v1812, %v3610
      %v3612 = vand.u32 %v3611, 4294901760
      %3613 = vmatpush1.msra.mxu0 %v3612
      %v3614 = vand.u32 %v1815, 4294901760
      %v3615 = vsub.f32 %v1815, %v3614
      %v3616 = vand.u32 %v3615, 4294901760
      %3617 = vmatprep.subr.mxu0 %v3616
      %v3618 = vand.u32 %v1814, 4294901760
      %v3619 = vsub.f32 %v1814, %v3618
      %v3620 = vand.u32 %v3619, 4294901760
      %3621 = vmatpush1.msra.mxu0 %v3620
      %v3622 = vand.u32 %v1817, 4294901760
      %v3623 = vsub.f32 %v1817, %v3622
      %v3624 = vand.u32 %v3623, 4294901760
      %3625 = vmatprep.subr.mxu0 %v3624
      %v3626 = vand.u32 %v1816, 4294901760
      %v3627 = vsub.f32 %v1816, %v3626
      %v3628 = vand.u32 %v3627, 4294901760
      %3629 = vmatpush1.msra.mxu0 %v3628
      %v3630 = vand.u32 %v1819, 4294901760
      %v3631 = vsub.f32 %v1819, %v3630
      %v3632 = vand.u32 %v3631, 4294901760
      %3633 = vmatprep.subr.mxu0 %v3632
      %v3634 = vand.u32 %v1818, 4294901760
      %v3635 = vsub.f32 %v1818, %v3634
      %v3636 = vand.u32 %v3635, 4294901760
      %3637 = vmatpush1.msra.mxu0 %v3636
      %v3638 = vand.u32 %v1821, 4294901760
      %v3639 = vsub.f32 %v1821, %v3638
      %v3640 = vand.u32 %v3639, 4294901760
      %3641 = vmatprep.subr.mxu0 %v3640
      %v3642 = vand.u32 %v1820, 4294901760
      %v3643 = vsub.f32 %v1820, %v3642
      %v3644 = vand.u32 %v3643, 4294901760
      %3645 = vmatpush1.msra.mxu0 %v3644
      %v3646 = vand.u32 %v1823, 4294901760
      %v3647 = vsub.f32 %v1823, %v3646
      %v3648 = vand.u32 %v3647, 4294901760
      %3649 = vmatprep.subr.mxu0 %v3648
      %v3650 = vand.u32 %v1822, 4294901760
      %v3651 = vsub.f32 %v1822, %v3650
      %v3652 = vand.u32 %v3651, 4294901760
      %3653 = vmatpush1.msra.mxu0 %v3652
      %v3654 = vand.u32 %v1825, 4294901760
      %v3655 = vsub.f32 %v1825, %v3654
      %v3656 = vand.u32 %v3655, 4294901760
      %3657 = vmatprep.subr.mxu0 %v3656
      %v3658 = vand.u32 %v1824, 4294901760
      %v3659 = vsub.f32 %v1824, %v3658
      %v3660 = vand.u32 %v3659, 4294901760
      %3661 = vmatpush1.msra.mxu0 %v3660
      %v3662 = vand.u32 %v1827, 4294901760
      %v3663 = vsub.f32 %v1827, %v3662
      %v3664 = vand.u32 %v3663, 4294901760
      %3665 = vmatprep.subr.mxu0 %v3664
      %v3666 = vand.u32 %v1826, 4294901760
      %v3667 = vsub.f32 %v1826, %v3666
      %v3668 = vand.u32 %v3667, 4294901760
      %3669 = vmatpush1.msra.mxu0 %v3668
      %v3670 = vand.u32 %v1829, 4294901760
      %v3671 = vsub.f32 %v1829, %v3670
      %v3672 = vand.u32 %v3671, 4294901760
      %3673 = vmatprep.subr.mxu0 %v3672
      %v3674 = vand.u32 %v1828, 4294901760
      %v3675 = vsub.f32 %v1828, %v3674
      %v3676 = vand.u32 %v3675, 4294901760
      %3677 = vmatpush1.msra.mxu0 %v3676
      %v3678 = vand.u32 %v1831, 4294901760
      %v3679 = vsub.f32 %v1831, %v3678
      %v3680 = vand.u32 %v3679, 4294901760
      %3681 = vmatprep.subr.mxu0 %v3680
      %v3682 = vand.u32 %v1830, 4294901760
      %v3683 = vsub.f32 %v1830, %v3682
      %v3684 = vand.u32 %v3683, 4294901760
      %3685 = vmatpush1.msra.mxu0 %v3684
      %v3686 = vand.u32 %v1833, 4294901760
      %v3687 = vsub.f32 %v1833, %v3686
      %v3688 = vand.u32 %v3687, 4294901760
      %3689 = vmatprep.subr.mxu0 %v3688
      %v3690 = vand.u32 %v1832, 4294901760
      %v3691 = vsub.f32 %v1832, %v3690
      %v3692 = vand.u32 %v3691, 4294901760
      %3693 = vmatpush1.msra.mxu0 %v3692
      %v3694 = vand.u32 %v1663, 4294901760
      %3695 = vmatprep.mubr.f32.mxu0 %v3694
      %v3696 = vand.u32 %v1661, 4294901760
      %3697 = vmatmul.mubr.f32.gmra.mrb[0].mxu0 %v3696
      %v3698 = vpop.f32.mrb[0].mxu0
      %v3699 = vadd.f32 %v3254, %v3698
      %v3700 = vpop.f32.mrb[0].mxu0
      %v3701 = vadd.f32 %v3256, %v3700
      %v3702 = vand.u32 %v1670, 4294901760
      %3703 = vmatprep.mubr.f32.mxu0 %v3702
      %v3704 = vand.u32 %v1668, 4294901760
      %3705 = vmatmul.mubr.f32.gmra.mrb[0].mxu0 %v3704
      %v3706 = vpop.f32.mrb[0].mxu0
      %v3707 = vadd.f32 %v3266, %v3706
      %v3708 = vpop.f32.mrb[0].mxu0
      %v3709 = vadd.f32 %v3268, %v3708
      %v3710 = vand.u32 %v1677, 4294901760
      %3711 = vmatprep.mubr.f32.mxu0 %v3710
      %v3712 = vand.u32 %v1675, 4294901760
      %3713 = vmatmul.mubr.f32.gmra.mrb[0].mxu0 %v3712
      %v3714 = vpop.f32.mrb[0].mxu0
      %v3715 = vadd.f32 %v3278, %v3714
      %v3716 = vpop.f32.mrb[0].mxu0
      %v3717 = vadd.f32 %v3280, %v3716
      %v3718 = vand.u32 %v1684, 4294901760
      %3719 = vmatprep.mubr.f32.mxu0 %v3718
      %v3720 = vand.u32 %v1682, 4294901760
      %3721 = vmatmul.mubr.f32.gmra.mrb[0].mxu0 %v3720
      %v3722 = vpop.f32.mrb[0].mxu0
      %v3723 = vadd.f32 %v3290, %v3722
      %v3724 = vpop.f32.mrb[0].mxu0
      %v3725 = vadd.f32 %v3292, %v3724
      %v3726 = vand.u32 %v1691, 4294901760
      %3727 = vmatprep.mubr.f32.mxu0 %v3726
      %v3728 = vand.u32 %v1689, 4294901760
      %3729 = vmatmul.mubr.f32.gmra.mrb[0].mxu0 %v3728
      %v3730 = vpop.f32.mrb[0].mxu0
      %v3731 = vadd.f32 %v3302, %v3730
      %v3732 = vpop.f32.mrb[0].mxu0
      %v3733 = vadd.f32 %v3304, %v3732
      %v3734 = vand.u32 %v1698, 4294901760
      %3735 = vmatprep.mubr.f32.mxu0 %v3734
      %v3736 = vand.u32 %v1696, 4294901760
      %3737 = vmatmul.mubr.f32.gmra.mrb[0].mxu0 %v3736
      %v3738 = vpop.f32.mrb[0].mxu0
      %v3739 = vadd.f32 %v3314, %v3738
      %v3740 = vpop.f32.mrb[0].mxu0
      %v3741 = vadd.f32 %v3316, %v3740
      %v3742 = vand.u32 %v1705, 4294901760
      %3743 = vmatprep.mubr.f32.mxu0 %v3742
      %v3744 = vand.u32 %v1703, 4294901760
      %3745 = vmatmul.mubr.f32.gmra.mrb[0].mxu0 %v3744
      %v3746 = vpop.f32.mrb[0].mxu0
      %v3747 = vadd.f32 %v3326, %v3746
      %v3748 = vpop.f32.mrb[0].mxu0
      %v3749 = vadd.f32 %v3328, %v3748
      %v3750 = vand.u32 %v1712, 4294901760
      %3751 = vmatprep.mubr.f32.mxu0 %v3750
      %v3752 = vand.u32 %v1710, 4294901760
      %3753 = vmatmul.mubr.f32.gmra.mrb[0].mxu0 %v3752
      %v3754 = vpop.f32.mrb[0].mxu0
      %v3755 = vadd.f32 %v3338, %v3754
      %v3756 = vpop.f32.mrb[0].mxu0
      %v3757 = vadd.f32 %v3340, %v3756
      %v3758 = vand.u32 %v1719, 4294901760
      %3759 = vmatprep.mubr.f32.mxu0 %v3758
      %v3760 = vand.u32 %v1717, 4294901760
      %3761 = vmatmul.mubr.f32.gmra.mrb[0].mxu0 %v3760
      %v3762 = vpop.f32.mrb[0].mxu0
      %v3763 = vadd.f32 %v3350, %v3762
      %v3764 = vpop.f32.mrb[0].mxu0
      %v3765 = vadd.f32 %v3352, %v3764
      %v3766 = vand.u32 %v1726, 4294901760
      %3767 = vmatprep.mubr.f32.mxu0 %v3766
      %v3768 = vand.u32 %v1724, 4294901760
      %3769 = vmatmul.mubr.f32.gmra.mrb[0].mxu0 %v3768
      %v3770 = vpop.f32.mrb[0].mxu0
      %v3771 = vadd.f32 %v3362, %v3770
      %v3772 = vpop.f32.mrb[0].mxu0
      %v3773 = vadd.f32 %v3364, %v3772
      %v3774 = vand.u32 %v1733, 4294901760
      %3775 = vmatprep.mubr.f32.mxu0 %v3774
      %v3776 = vand.u32 %v1731, 4294901760
      %3777 = vmatmul.mubr.f32.gmra.mrb[0].mxu0 %v3776
      %v3778 = vpop.f32.mrb[0].mxu0
      %v3779 = vadd.f32 %v3374, %v3778
      %v3780 = vpop.f32.mrb[0].mxu0
      %v3781 = vadd.f32 %v3376, %v3780
      %v3782 = vand.u32 %v1740, 4294901760
      %3783 = vmatprep.mubr.f32.mxu0 %v3782
      %v3784 = vand.u32 %v1738, 4294901760
      %3785 = vmatmul.mubr.f32.gmra.mrb[0].mxu0 %v3784
      %v3786 = vpop.f32.mrb[0].mxu0
      %v3787 = vadd.f32 %v3386, %v3786
      %v3788 = vpop.f32.mrb[0].mxu0
      %v3789 = vadd.f32 %v3388, %v3788
      %v3790 = vand.u32 %v1747, 4294901760
      %3791 = vmatprep.mubr.f32.mxu0 %v3790
      %v3792 = vand.u32 %v1745, 4294901760
      %3793 = vmatmul.mubr.f32.gmra.mrb[0].mxu0 %v3792
      %v3794 = vpop.f32.mrb[0].mxu0
      %v3795 = vadd.f32 %v3398, %v3794
      %v3796 = vpop.f32.mrb[0].mxu0
      %v3797 = vadd.f32 %v3400, %v3796
      %v3798 = vand.u32 %v1754, 4294901760
      %3799 = vmatprep.mubr.f32.mxu0 %v3798
      %v3800 = vand.u32 %v1752, 4294901760
      %3801 = vmatmul.mubr.f32.gmra.mrb[0].mxu0 %v3800
      %v3802 = vpop.f32.mrb[0].mxu0
      %v3803 = vadd.f32 %v3410, %v3802
      %v3804 = vpop.f32.mrb[0].mxu0
      %v3805 = vadd.f32 %v3412, %v3804
      %v3806 = vand.u32 %v1761, 4294901760
      %3807 = vmatprep.mubr.f32.mxu0 %v3806
      %v3808 = vand.u32 %v1759, 4294901760
      %3809 = vmatmul.mubr.f32.gmra.mrb[0].mxu0 %v3808
      %v3810 = vpop.f32.mrb[0].mxu0
      %v3811 = vadd.f32 %v3422, %v3810
      %v3812 = vpop.f32.mrb[0].mxu0
      %v3813 = vadd.f32 %v3424, %v3812
      %v3814 = vand.u32 %v1768, 4294901760
      %3815 = vmatprep.mubr.f32.mxu0 %v3814
      %v3816 = vand.u32 %v1766, 4294901760
      %3817 = vmatmul.mubr.f32.gmra.mrb[0].mxu0 %v3816
      %v3818 = vpop.f32.mrb[0].mxu0
      %v3819 = vadd.f32 %v3434, %v3818
      %v3820 = vpop.f32.mrb[0].mxu0
      %v3821 = vadd.f32 %v3436, %v3820
      %3822 = vdwg.mxu0
      %v3823 = vand.u32 %v1771, 4294901760
      %3824 = vmatprep.subr.mxu0 %v3823
      %v3825 = vand.u32 %v1770, 4294901760
      %3826 = vmatpush1.msra.mxu0 %v3825
      %v3827 = vand.u32 %v1773, 4294901760
      %3828 = vmatprep.subr.mxu0 %v3827
      %v3829 = vand.u32 %v1772, 4294901760
      %3830 = vmatpush1.msra.mxu0 %v3829
      %v3831 = vand.u32 %v1775, 4294901760
      %3832 = vmatprep.subr.mxu0 %v3831
      %v3833 = vand.u32 %v1774, 4294901760
      %3834 = vmatpush1.msra.mxu0 %v3833
      %v3835 = vand.u32 %v1777, 4294901760
      %3836 = vmatprep.subr.mxu0 %v3835
      %v3837 = vand.u32 %v1776, 4294901760
      %3838 = vmatpush1.msra.mxu0 %v3837
      %v3839 = vand.u32 %v1779, 4294901760
      %3840 = vmatprep.subr.mxu0 %v3839
      %v3841 = vand.u32 %v1778, 4294901760
      %3842 = vmatpush1.msra.mxu0 %v3841
      %v3843 = vand.u32 %v1781, 4294901760
      %3844 = vmatprep.subr.mxu0 %v3843
      %v3845 = vand.u32 %v1780, 4294901760
      %3846 = vmatpush1.msra.mxu0 %v3845
      %v3847 = vand.u32 %v1783, 4294901760
      %3848 = vmatprep.subr.mxu0 %v3847
      %v3849 = vand.u32 %v1782, 4294901760
      %3850 = vmatpush1.msra.mxu0 %v3849
      %v3851 = vand.u32 %v1785, 4294901760
      %3852 = vmatprep.subr.mxu0 %v3851
      %v3853 = vand.u32 %v1784, 4294901760
      %3854 = vmatpush1.msra.mxu0 %v3853
      %v3855 = vand.u32 %v1787, 4294901760
      %3856 = vmatprep.subr.mxu0 %v3855
      %v3857 = vand.u32 %v1786, 4294901760
      %3858 = vmatpush1.msra.mxu0 %v3857
      %v3859 = vand.u32 %v1789, 4294901760
      %3860 = vmatprep.subr.mxu0 %v3859
      %v3861 = vand.u32 %v1788, 4294901760
      %3862 = vmatpush1.msra.mxu0 %v3861
      %v3863 = vand.u32 %v1791, 4294901760
      %3864 = vmatprep.subr.mxu0 %v3863
      %v3865 = vand.u32 %v1790, 4294901760
      %3866 = vmatpush1.msra.mxu0 %v3865
      %v3867 = vand.u32 %v1793, 4294901760
      %3868 = vmatprep.subr.mxu0 %v3867
      %v3869 = vand.u32 %v1792, 4294901760
      %3870 = vmatpush1.msra.mxu0 %v3869
      %v3871 = vand.u32 %v1795, 4294901760
      %3872 = vmatprep.subr.mxu0 %v3871
      %v3873 = vand.u32 %v1794, 4294901760
      %3874 = vmatpush1.msra.mxu0 %v3873
      %v3875 = vand.u32 %v1797, 4294901760
      %3876 = vmatprep.subr.mxu0 %v3875
      %v3877 = vand.u32 %v1796, 4294901760
      %3878 = vmatpush1.msra.mxu0 %v3877
      %v3879 = vand.u32 %v1799, 4294901760
      %3880 = vmatprep.subr.mxu0 %v3879
      %v3881 = vand.u32 %v1798, 4294901760
      %3882 = vmatpush1.msra.mxu0 %v3881
      %v3883 = vand.u32 %v1801, 4294901760
      %3884 = vmatprep.subr.mxu0 %v3883
      %v3885 = vand.u32 %v1800, 4294901760
      %3886 = vmatpush1.msra.mxu0 %v3885
      %v3887 = vand.u32 %v1803, 4294901760
      %3888 = vmatprep.subr.mxu0 %v3887
      %v3889 = vand.u32 %v1802, 4294901760
      %3890 = vmatpush1.msra.mxu0 %v3889
      %v3891 = vand.u32 %v1805, 4294901760
      %3892 = vmatprep.subr.mxu0 %v3891
      %v3893 = vand.u32 %v1804, 4294901760
      %3894 = vmatpush1.msra.mxu0 %v3893
      %v3895 = vand.u32 %v1807, 4294901760
      %3896 = vmatprep.subr.mxu0 %v3895
      %v3897 = vand.u32 %v1806, 4294901760
      %3898 = vmatpush1.msra.mxu0 %v3897
      %v3899 = vand.u32 %v1809, 4294901760
      %3900 = vmatprep.subr.mxu0 %v3899
      %v3901 = vand.u32 %v1808, 4294901760
      %3902 = vmatpush1.msra.mxu0 %v3901
      %v3903 = vand.u32 %v1811, 4294901760
      %3904 = vmatprep.subr.mxu0 %v3903
      %v3905 = vand.u32 %v1810, 4294901760
      %3906 = vmatpush1.msra.mxu0 %v3905
      %v3907 = vand.u32 %v1813, 4294901760
      %3908 = vmatprep.subr.mxu0 %v3907
      %v3909 = vand.u32 %v1812, 4294901760
      %3910 = vmatpush1.msra.mxu0 %v3909
      %v3911 = vand.u32 %v1815, 4294901760
      %3912 = vmatprep.subr.mxu0 %v3911
      %v3913 = vand.u32 %v1814, 4294901760
      %3914 = vmatpush1.msra.mxu0 %v3913
      %v3915 = vand.u32 %v1817, 4294901760
      %3916 = vmatprep.subr.mxu0 %v3915
      %v3917 = vand.u32 %v1816, 4294901760
      %3918 = vmatpush1.msra.mxu0 %v3917
      %v3919 = vand.u32 %v1819, 4294901760
      %3920 = vmatprep.subr.mxu0 %v3919
      %v3921 = vand.u32 %v1818, 4294901760
      %3922 = vmatpush1.msra.mxu0 %v3921
      %v3923 = vand.u32 %v1821, 4294901760
      %3924 = vmatprep.subr.mxu0 %v3923
      %v3925 = vand.u32 %v1820, 4294901760
      %3926 = vmatpush1.msra.mxu0 %v3925
      %v3927 = vand.u32 %v1823, 4294901760
      %3928 = vmatprep.subr.mxu0 %v3927
      %v3929 = vand.u32 %v1822, 4294901760
      %3930 = vmatpush1.msra.mxu0 %v3929
      %v3931 = vand.u32 %v1825, 4294901760
      %3932 = vmatprep.subr.mxu0 %v3931
      %v3933 = vand.u32 %v1824, 4294901760
      %3934 = vmatpush1.msra.mxu0 %v3933
      %v3935 = vand.u32 %v1827, 4294901760
      %3936 = vmatprep.subr.mxu0 %v3935
      %v3937 = vand.u32 %v1826, 4294901760
      %3938 = vmatpush1.msra.mxu0 %v3937
      %v3939 = vand.u32 %v1829, 4294901760
      %3940 = vmatprep.subr.mxu0 %v3939
      %v3941 = vand.u32 %v1828, 4294901760
      %3942 = vmatpush1.msra.mxu0 %v3941
      %v3943 = vand.u32 %v1831, 4294901760
      %3944 = vmatprep.subr.mxu0 %v3943
      %v3945 = vand.u32 %v1830, 4294901760
      %3946 = vmatpush1.msra.mxu0 %v3945
      %v3947 = vand.u32 %v1833, 4294901760
      %3948 = vmatprep.subr.mxu0 %v3947
      %v3949 = vand.u32 %v1832, 4294901760
      %3950 = vmatpush1.msra.mxu0 %v3949
      %v3951 = vand.u32 %v1663, 4294901760
      %3952 = vmatprep.mubr.f32.mxu0 %v3951
      %v3953 = vand.u32 %v1661, 4294901760
      %3954 = vmatmul.mubr.f32.gmra.mrb[0].mxu0 %v3953
      %v3955 = vpop.f32.mrb[0].mxu0
      %v3956 = vadd.f32 %v3699, %v3955
      %v3957 = vpop.f32.mrb[0].mxu0
      %v3958 = vadd.f32 %v3701, %v3957
      %v3959 = vand.u32 %v1670, 4294901760
      %3960 = vmatprep.mubr.f32.mxu0 %v3959
      %v3961 = vand.u32 %v1668, 4294901760
      %3962 = vmatmul.mubr.f32.gmra.mrb[0].mxu0 %v3961
      %v3963 = vpop.f32.mrb[0].mxu0
      %v3964 = vadd.f32 %v3707, %v3963
      %v3965 = vpop.f32.mrb[0].mxu0
      %v3966 = vadd.f32 %v3709, %v3965
      %v3967 = vand.u32 %v1677, 4294901760
      %3968 = vmatprep.mubr.f32.mxu0 %v3967
      %v3969 = vand.u32 %v1675, 4294901760
      %3970 = vmatmul.mubr.f32.gmra.mrb[0].mxu0 %v3969
      %v3971 = vpop.f32.mrb[0].mxu0
      %v3972 = vadd.f32 %v3715, %v3971
      %v3973 = vpop.f32.mrb[0].mxu0
      %v3974 = vadd.f32 %v3717, %v3973
      %v3975 = vand.u32 %v1684, 4294901760
      %3976 = vmatprep.mubr.f32.mxu0 %v3975
      %v3977 = vand.u32 %v1682, 4294901760
      %3978 = vmatmul.mubr.f32.gmra.mrb[0].mxu0 %v3977
      %v3979 = vpop.f32.mrb[0].mxu0
      %v3980 = vadd.f32 %v3723, %v3979
      %v3981 = vpop.f32.mrb[0].mxu0
      %v3982 = vadd.f32 %v3725, %v3981
      %v3983 = vand.u32 %v1691, 4294901760
      %3984 = vmatprep.mubr.f32.mxu0 %v3983
      %v3985 = vand.u32 %v1689, 4294901760
      %3986 = vmatmul.mubr.f32.gmra.mrb[0].mxu0 %v3985
      %v3987 = vpop.f32.mrb[0].mxu0
      %v3988 = vadd.f32 %v3731, %v3987
      %v3989 = vpop.f32.mrb[0].mxu0
      %v3990 = vadd.f32 %v3733, %v3989
      %v3991 = vand.u32 %v1698, 4294901760
      %3992 = vmatprep.mubr.f32.mxu0 %v3991
      %v3993 = vand.u32 %v1696, 4294901760
      %3994 = vmatmul.mubr.f32.gmra.mrb[0].mxu0 %v3993
      %v3995 = vpop.f32.mrb[0].mxu0
      %v3996 = vadd.f32 %v3739, %v3995
      %v3997 = vpop.f32.mrb[0].mxu0
      %v3998 = vadd.f32 %v3741, %v3997
      %v3999 = vand.u32 %v1705, 4294901760
      %4000 = vmatprep.mubr.f32.mxu0 %v3999
      %v4001 = vand.u32 %v1703, 4294901760
      %4002 = vmatmul.mubr.f32.gmra.mrb[0].mxu0 %v4001
      %v4003 = vpop.f32.mrb[0].mxu0
      %v4004 = vadd.f32 %v3747, %v4003
      %v4005 = vpop.f32.mrb[0].mxu0
      %v4006 = vadd.f32 %v3749, %v4005
      %v4007 = vand.u32 %v1712, 4294901760
      %4008 = vmatprep.mubr.f32.mxu0 %v4007
      %v4009 = vand.u32 %v1710, 4294901760
      %4010 = vmatmul.mubr.f32.gmra.mrb[0].mxu0 %v4009
      %v4011 = vpop.f32.mrb[0].mxu0
      %v4012 = vadd.f32 %v3755, %v4011
      %v4013 = vpop.f32.mrb[0].mxu0
      %v4014 = vadd.f32 %v3757, %v4013
      %v4015 = vand.u32 %v1719, 4294901760
      %4016 = vmatprep.mubr.f32.mxu0 %v4015
      %v4017 = vand.u32 %v1717, 4294901760
      %4018 = vmatmul.mubr.f32.gmra.mrb[0].mxu0 %v4017
      %v4019 = vpop.f32.mrb[0].mxu0
      %v4020 = vadd.f32 %v3763, %v4019
      %v4021 = vpop.f32.mrb[0].mxu0
      %v4022 = vadd.f32 %v3765, %v4021
      %v4023 = vand.u32 %v1726, 4294901760
      %4024 = vmatprep.mubr.f32.mxu0 %v4023
      %v4025 = vand.u32 %v1724, 4294901760
      %4026 = vmatmul.mubr.f32.gmra.mrb[0].mxu0 %v4025
      %v4027 = vpop.f32.mrb[0].mxu0
      %v4028 = vadd.f32 %v3771, %v4027
      %v4029 = vpop.f32.mrb[0].mxu0
      %v4030 = vadd.f32 %v3773, %v4029
      %v4031 = vand.u32 %v1733, 4294901760
      %4032 = vmatprep.mubr.f32.mxu0 %v4031
      %v4033 = vand.u32 %v1731, 4294901760
      %4034 = vmatmul.mubr.f32.gmra.mrb[0].mxu0 %v4033
      %v4035 = vpop.f32.mrb[0].mxu0
      %v4036 = vadd.f32 %v3779, %v4035
      %v4037 = vpop.f32.mrb[0].mxu0
      %v4038 = vadd.f32 %v3781, %v4037
      %v4039 = vand.u32 %v1740, 4294901760
      %4040 = vmatprep.mubr.f32.mxu0 %v4039
      %v4041 = vand.u32 %v1738, 4294901760
      %4042 = vmatmul.mubr.f32.gmra.mrb[0].mxu0 %v4041
      %v4043 = vpop.f32.mrb[0].mxu0
      %v4044 = vadd.f32 %v3787, %v4043
      %v4045 = vpop.f32.mrb[0].mxu0
      %v4046 = vadd.f32 %v3789, %v4045
      %v4047 = vand.u32 %v1747, 4294901760
      %4048 = vmatprep.mubr.f32.mxu0 %v4047
      %v4049 = vand.u32 %v1745, 4294901760
      %4050 = vmatmul.mubr.f32.gmra.mrb[0].mxu0 %v4049
      %v4051 = vpop.f32.mrb[0].mxu0
      %v4052 = vadd.f32 %v3795, %v4051
      %v4053 = vpop.f32.mrb[0].mxu0
      %v4054 = vadd.f32 %v3797, %v4053
      %v4055 = vand.u32 %v1754, 4294901760
      %4056 = vmatprep.mubr.f32.mxu0 %v4055
      %v4057 = vand.u32 %v1752, 4294901760
      %4058 = vmatmul.mubr.f32.gmra.mrb[0].mxu0 %v4057
      %v4059 = vpop.f32.mrb[0].mxu0
      %v4060 = vadd.f32 %v3803, %v4059
      %v4061 = vpop.f32.mrb[0].mxu0
      %v4062 = vadd.f32 %v3805, %v4061
      %v4063 = vand.u32 %v1761, 4294901760
      %4064 = vmatprep.mubr.f32.mxu0 %v4063
      %v4065 = vand.u32 %v1759, 4294901760
      %4066 = vmatmul.mubr.f32.gmra.mrb[0].mxu0 %v4065
      %v4067 = vpop.f32.mrb[0].mxu0
      %v4068 = vadd.f32 %v3811, %v4067
      %v4069 = vpop.f32.mrb[0].mxu0
      %v4070 = vadd.f32 %v3813, %v4069
      %v4071 = vand.u32 %v1768, 4294901760
      %4072 = vmatprep.mubr.f32.mxu0 %v4071
      %v4073 = vand.u32 %v1766, 4294901760
      %4074 = vmatmul.mubr.f32.gmra.mrb[0].mxu0 %v4073
      %v4075 = vpop.f32.mrb[0].mxu0
      %v4076 = vadd.f32 %v3819, %v4075
      %v4077 = vpop.f32.mrb[0].mxu0
      %v4078 = vadd.f32 %v3821, %v4077
      %4079 = vdwg.mxu0
      %v4080 = vmax.f32 %v3956, 0.0
      %v4081 = vmax.f32 %v3958, 0.0
      %v4082 = vmax.f32 %v3964, 0.0
      %v4083 = vmax.f32 %v3966, 0.0
      %v4084 = vmax.f32 %v3972, 0.0
      %v4085 = vmax.f32 %v3974, 0.0
      %v4086 = vmax.f32 %v3980, 0.0
      %v4087 = vmax.f32 %v3982, 0.0
      %v4088 = vmax.f32 %v3988, 0.0
      %v4089 = vmax.f32 %v3990, 0.0
      %v4090 = vmax.f32 %v3996, 0.0
      %v4091 = vmax.f32 %v3998, 0.0
      %v4092 = vmax.f32 %v4004, 0.0
      %v4093 = vmax.f32 %v4006, 0.0
      %v4094 = vmax.f32 %v4012, 0.0
      %v4095 = vmax.f32 %v4014, 0.0
      %v4096 = vmax.f32 %v4020, 0.0
      %v4097 = vmax.f32 %v4022, 0.0
      %v4098 = vmax.f32 %v4028, 0.0
      %v4099 = vmax.f32 %v4030, 0.0
      %v4100 = vmax.f32 %v4036, 0.0
      %v4101 = vmax.f32 %v4038, 0.0
      %v4102 = vmax.f32 %v4044, 0.0
      %v4103 = vmax.f32 %v4046, 0.0
      %v4104 = vmax.f32 %v4052, 0.0
      %v4105 = vmax.f32 %v4054, 0.0
      %v4106 = vmax.f32 %v4060, 0.0
      %v4107 = vmax.f32 %v4062, 0.0
      %v4108 = vmax.f32 %v4068, 0.0
      %v4109 = vmax.f32 %v4070, 0.0
      %v4110 = vmax.f32 %v4076, 0.0
      %v4111 = vmax.f32 %v4078, 0.0
      %v4112 = vand.u32 %v4081, 4294901760
      %4113 = vmatprep.subr.mxu0 %v4112
      %v4114 = vand.u32 %v4080, 4294901760
      %4115 = vmatpush1.msra.mxu0 %v4114
      %v4116 = vand.u32 %v4083, 4294901760
      %4117 = vmatprep.subr.mxu0 %v4116
      %v4118 = vand.u32 %v4082, 4294901760
      %4119 = vmatpush1.msra.mxu0 %v4118
      %v4120 = vand.u32 %v4085, 4294901760
      %4121 = vmatprep.subr.mxu0 %v4120
      %v4122 = vand.u32 %v4084, 4294901760
      %4123 = vmatpush1.msra.mxu0 %v4122
      %v4124 = vand.u32 %v4087, 4294901760
      %4125 = vmatprep.subr.mxu0 %v4124
      %v4126 = vand.u32 %v4086, 4294901760
      %4127 = vmatpush1.msra.mxu0 %v4126
      %v4128 = vand.u32 %v4089, 4294901760
      %4129 = vmatprep.subr.mxu0 %v4128
      %v4130 = vand.u32 %v4088, 4294901760
      %4131 = vmatpush1.msra.mxu0 %v4130
      %v4132 = vand.u32 %v4091, 4294901760
      %4133 = vmatprep.subr.mxu0 %v4132
      %v4134 = vand.u32 %v4090, 4294901760
      %4135 = vmatpush1.msra.mxu0 %v4134
      %v4136 = vand.u32 %v4093, 4294901760
      %4137 = vmatprep.subr.mxu0 %v4136
      %v4138 = vand.u32 %v4092, 4294901760
      %4139 = vmatpush1.msra.mxu0 %v4138
      %v4140 = vand.u32 %v4095, 4294901760
      %4141 = vmatprep.subr.mxu0 %v4140
      %v4142 = vand.u32 %v4094, 4294901760
      %4143 = vmatpush1.msra.mxu0 %v4142
      %v4144 = vand.u32 %v4097, 4294901760
      %4145 = vmatprep.subr.mxu0 %v4144
      %v4146 = vand.u32 %v4096, 4294901760
      %4147 = vmatpush1.msra.mxu0 %v4146
      %v4148 = vand.u32 %v4099, 4294901760
      %4149 = vmatprep.subr.mxu0 %v4148
      %v4150 = vand.u32 %v4098, 4294901760
      %4151 = vmatpush1.msra.mxu0 %v4150
      %v4152 = vand.u32 %v4101, 4294901760
      %4153 = vmatprep.subr.mxu0 %v4152
      %v4154 = vand.u32 %v4100, 4294901760
      %4155 = vmatpush1.msra.mxu0 %v4154
      %v4156 = vand.u32 %v4103, 4294901760
      %4157 = vmatprep.subr.mxu0 %v4156
      %v4158 = vand.u32 %v4102, 4294901760
      %4159 = vmatpush1.msra.mxu0 %v4158
      %v4160 = vand.u32 %v4105, 4294901760
      %4161 = vmatprep.subr.mxu0 %v4160
      %v4162 = vand.u32 %v4104, 4294901760
      %4163 = vmatpush1.msra.mxu0 %v4162
      %v4164 = vand.u32 %v4107, 4294901760
      %4165 = vmatprep.subr.mxu0 %v4164
      %v4166 = vand.u32 %v4106, 4294901760
      %4167 = vmatpush1.msra.mxu0 %v4166
      %v4168 = vand.u32 %v4109, 4294901760
      %4169 = vmatprep.subr.mxu0 %v4168
      %v4170 = vand.u32 %v4108, 4294901760
      %4171 = vmatpush1.msra.mxu0 %v4170
      %v4172 = vand.u32 %v4111, 4294901760
      %4173 = vmatprep.subr.mxu0 %v4172
      %v4174 = vand.u32 %v4110, 4294901760
      %4175 = vmatpush1.msra.mxu0 %v4174
      %4176 = vmatprep.subr.mxu0 0.0
      %4177 = vmatpush1.msra.mxu0 0.0
      %4178 = vmatprep.subr.mxu0 0.0
      %4179 = vmatpush1.msra.mxu0 0.0
      %4180 = vmatprep.subr.mxu0 0.0
      %4181 = vmatpush1.msra.mxu0 0.0
      %4182 = vmatprep.subr.mxu0 0.0
      %4183 = vmatpush1.msra.mxu0 0.0
      %4184 = vmatprep.subr.mxu0 0.0
      %4185 = vmatpush1.msra.mxu0 0.0
      %4186 = vmatprep.subr.mxu0 0.0
      %4187 = vmatpush1.msra.mxu0 0.0
      %4188 = vmatprep.subr.mxu0 0.0
      %4189 = vmatpush1.msra.mxu0 0.0
      %4190 = vmatprep.subr.mxu0 0.0
      %4191 = vmatpush1.msra.mxu0 0.0
      %4192 = vmatprep.subr.mxu0 0.0
      %4193 = vmatpush1.msra.mxu0 0.0
      %4194 = vmatprep.subr.mxu0 0.0
      %4195 = vmatpush1.msra.mxu0 0.0
      %4196 = vmatprep.subr.mxu0 0.0
      %4197 = vmatpush1.msra.mxu0 0.0
      %4198 = vmatprep.subr.mxu0 0.0
      %4199 = vmatpush1.msra.mxu0 0.0
      %4200 = vmatprep.subr.mxu0 0.0
      %4201 = vmatpush1.msra.mxu0 0.0
      %4202 = vmatprep.subr.mxu0 0.0
      %4203 = vmatpush1.msra.mxu0 0.0
      %4204 = vmatprep.subr.mxu0 0.0
      %4205 = vmatpush1.msra.mxu0 0.0
      %4206 = vmatprep.subr.mxu0 0.0
      %4207 = vmatpush1.msra.mxu0 0.0
      %4208 = vmatprep.mubr.f32.mxu0 0.0
      %v4209 = vand.u32 %v164, 4294901760
      %v4210 = vsub.f32 %v164, %v4209
      %v4211 = vand.u32 %v4210, 4294901760
      %v4212 = vsub.f32 %v4210, %v4211
      %v4213 = vand.u32 %v4212, 4294901760
      %4214 = vmatmul.mubr.f32.gmra.mrb[0].mxu0 %v4213
      %v4215 = vpop.f32.mrb[0].mxu0
      %v4216 = vadd.f32 0.0, %v4215
      %v4217 = vpop.f32.mrb[0].mxu0
      %v4218 = vadd.f32 0.0, %v4217
      %4219 = vmatprep.mubr.f32.mxu0 0.0
      %v4220 = vand.u32 %v165, 4294901760
      %v4221 = vsub.f32 %v165, %v4220
      %v4222 = vand.u32 %v4221, 4294901760
      %v4223 = vsub.f32 %v4221, %v4222
      %v4224 = vand.u32 %v4223, 4294901760
      %4225 = vmatmul.mubr.f32.gmra.mrb[0].mxu0 %v4224
      %v4226 = vpop.f32.mrb[0].mxu0
      %v4227 = vadd.f32 0.0, %v4226
      %v4228 = vpop.f32.mrb[0].mxu0
      %v4229 = vadd.f32 0.0, %v4228
      %4230 = vmatprep.mubr.f32.mxu0 0.0
      %v4231 = vand.u32 %v166, 4294901760
      %v4232 = vsub.f32 %v166, %v4231
      %v4233 = vand.u32 %v4232, 4294901760
      %v4234 = vsub.f32 %v4232, %v4233
      %v4235 = vand.u32 %v4234, 4294901760
      %4236 = vmatmul.mubr.f32.gmra.mrb[0].mxu0 %v4235
      %v4237 = vpop.f32.mrb[0].mxu0
      %v4238 = vadd.f32 0.0, %v4237
      %v4239 = vpop.f32.mrb[0].mxu0
      %v4240 = vadd.f32 0.0, %v4239
      %4241 = vmatprep.mubr.f32.mxu0 0.0
      %v4242 = vand.u32 %v167, 4294901760
      %v4243 = vsub.f32 %v167, %v4242
      %v4244 = vand.u32 %v4243, 4294901760
      %v4245 = vsub.f32 %v4243, %v4244
      %v4246 = vand.u32 %v4245, 4294901760
      %4247 = vmatmul.mubr.f32.gmra.mrb[0].mxu0 %v4246
      %v4248 = vpop.f32.mrb[0].mxu0
      %v4249 = vadd.f32 0.0, %v4248
      %v4250 = vpop.f32.mrb[0].mxu0
      %v4251 = vadd.f32 0.0, %v4250
      %4252 = vmatprep.mubr.f32.mxu0 0.0
      %v4253 = vand.u32 %v168, 4294901760
      %v4254 = vsub.f32 %v168, %v4253
      %v4255 = vand.u32 %v4254, 4294901760
      %v4256 = vsub.f32 %v4254, %v4255
      %v4257 = vand.u32 %v4256, 4294901760
      %4258 = vmatmul.mubr.f32.gmra.mrb[0].mxu0 %v4257
      %v4259 = vpop.f32.mrb[0].mxu0
      %v4260 = vadd.f32 0.0, %v4259
      %v4261 = vpop.f32.mrb[0].mxu0
      %v4262 = vadd.f32 0.0, %v4261
      %4263 = vmatprep.mubr.f32.mxu0 0.0
      %v4264 = vand.u32 %v169, 4294901760
      %v4265 = vsub.f32 %v169, %v4264
      %v4266 = vand.u32 %v4265, 4294901760
      %v4267 = vsub.f32 %v4265, %v4266
      %v4268 = vand.u32 %v4267, 4294901760
      %4269 = vmatmul.mubr.f32.gmra.mrb[0].mxu0 %v4268
      %v4270 = vpop.f32.mrb[0].mxu0
      %v4271 = vadd.f32 0.0, %v4270
      %v4272 = vpop.f32.mrb[0].mxu0
      %v4273 = vadd.f32 0.0, %v4272
      %4274 = vmatprep.mubr.f32.mxu0 0.0
      %v4275 = vand.u32 %v170, 4294901760
      %v4276 = vsub.f32 %v170, %v4275
      %v4277 = vand.u32 %v4276, 4294901760
      %v4278 = vsub.f32 %v4276, %v4277
      %v4279 = vand.u32 %v4278, 4294901760
      %4280 = vmatmul.mubr.f32.gmra.mrb[0].mxu0 %v4279
      %v4281 = vpop.f32.mrb[0].mxu0
      %v4282 = vadd.f32 0.0, %v4281
      %v4283 = vpop.f32.mrb[0].mxu0
      %v4284 = vadd.f32 0.0, %v4283
      %4285 = vmatprep.mubr.f32.mxu0 0.0
      %v4286 = vand.u32 %v171, 4294901760
      %v4287 = vsub.f32 %v171, %v4286
      %v4288 = vand.u32 %v4287, 4294901760
      %v4289 = vsub.f32 %v4287, %v4288
      %v4290 = vand.u32 %v4289, 4294901760
      %4291 = vmatmul.mubr.f32.gmra.mrb[0].mxu0 %v4290
      %v4292 = vpop.f32.mrb[0].mxu0
      %v4293 = vadd.f32 0.0, %v4292
      %v4294 = vpop.f32.mrb[0].mxu0
      %v4295 = vadd.f32 0.0, %v4294
      %4296 = vmatprep.mubr.f32.mxu0 0.0
      %v4297 = vand.u32 %v172, 4294901760
      %v4298 = vsub.f32 %v172, %v4297
      %v4299 = vand.u32 %v4298, 4294901760
      %v4300 = vsub.f32 %v4298, %v4299
      %v4301 = vand.u32 %v4300, 4294901760
      %4302 = vmatmul.mubr.f32.gmra.mrb[0].mxu0 %v4301
      %v4303 = vpop.f32.mrb[0].mxu0
      %v4304 = vadd.f32 0.0, %v4303
      %v4305 = vpop.f32.mrb[0].mxu0
      %v4306 = vadd.f32 0.0, %v4305
      %4307 = vmatprep.mubr.f32.mxu0 0.0
      %v4308 = vand.u32 %v173, 4294901760
      %v4309 = vsub.f32 %v173, %v4308
      %v4310 = vand.u32 %v4309, 4294901760
      %v4311 = vsub.f32 %v4309, %v4310
      %v4312 = vand.u32 %v4311, 4294901760
      %4313 = vmatmul.mubr.f32.gmra.mrb[0].mxu0 %v4312
      %v4314 = vpop.f32.mrb[0].mxu0
      %v4315 = vadd.f32 0.0, %v4314
      %v4316 = vpop.f32.mrb[0].mxu0
      %v4317 = vadd.f32 0.0, %v4316
      %4318 = vmatprep.mubr.f32.mxu0 0.0
      %v4319 = vand.u32 %v174, 4294901760
      %v4320 = vsub.f32 %v174, %v4319
      %v4321 = vand.u32 %v4320, 4294901760
      %v4322 = vsub.f32 %v4320, %v4321
      %v4323 = vand.u32 %v4322, 4294901760
      %4324 = vmatmul.mubr.f32.gmra.mrb[0].mxu0 %v4323
      %v4325 = vpop.f32.mrb[0].mxu0
      %v4326 = vadd.f32 0.0, %v4325
      %v4327 = vpop.f32.mrb[0].mxu0
      %v4328 = vadd.f32 0.0, %v4327
      %4329 = vmatprep.mubr.f32.mxu0 0.0
      %v4330 = vand.u32 %v175, 4294901760
      %v4331 = vsub.f32 %v175, %v4330
      %v4332 = vand.u32 %v4331, 4294901760
      %v4333 = vsub.f32 %v4331, %v4332
      %v4334 = vand.u32 %v4333, 4294901760
      %4335 = vmatmul.mubr.f32.gmra.mrb[0].mxu0 %v4334
      %v4336 = vpop.f32.mrb[0].mxu0
      %v4337 = vadd.f32 0.0, %v4336
      %v4338 = vpop.f32.mrb[0].mxu0
      %v4339 = vadd.f32 0.0, %v4338
      %4340 = vmatprep.mubr.f32.mxu0 0.0
      %v4341 = vand.u32 %v176, 4294901760
      %v4342 = vsub.f32 %v176, %v4341
      %v4343 = vand.u32 %v4342, 4294901760
      %v4344 = vsub.f32 %v4342, %v4343
      %v4345 = vand.u32 %v4344, 4294901760
      %4346 = vmatmul.mubr.f32.gmra.mrb[0].mxu0 %v4345
      %v4347 = vpop.f32.mrb[0].mxu0
      %v4348 = vadd.f32 0.0, %v4347
      %v4349 = vpop.f32.mrb[0].mxu0
      %v4350 = vadd.f32 0.0, %v4349
      %4351 = vmatprep.mubr.f32.mxu0 0.0
      %v4352 = vand.u32 %v177, 4294901760
      %v4353 = vsub.f32 %v177, %v4352
      %v4354 = vand.u32 %v4353, 4294901760
      %v4355 = vsub.f32 %v4353, %v4354
      %v4356 = vand.u32 %v4355, 4294901760
      %4357 = vmatmul.mubr.f32.gmra.mrb[0].mxu0 %v4356
      %v4358 = vpop.f32.mrb[0].mxu0
      %v4359 = vadd.f32 0.0, %v4358
      %v4360 = vpop.f32.mrb[0].mxu0
      %v4361 = vadd.f32 0.0, %v4360
      %4362 = vmatprep.mubr.f32.mxu0 0.0
      %v4363 = vand.u32 %v178, 4294901760
      %v4364 = vsub.f32 %v178, %v4363
      %v4365 = vand.u32 %v4364, 4294901760
      %v4366 = vsub.f32 %v4364, %v4365
      %v4367 = vand.u32 %v4366, 4294901760
      %4368 = vmatmul.mubr.f32.gmra.mrb[0].mxu0 %v4367
      %v4369 = vpop.f32.mrb[0].mxu0
      %v4370 = vadd.f32 0.0, %v4369
      %v4371 = vpop.f32.mrb[0].mxu0
      %v4372 = vadd.f32 0.0, %v4371
      %4373 = vmatprep.mubr.f32.mxu0 0.0
      %v4374 = vand.u32 %v179, 4294901760
      %v4375 = vsub.f32 %v179, %v4374
      %v4376 = vand.u32 %v4375, 4294901760
      %v4377 = vsub.f32 %v4375, %v4376
      %v4378 = vand.u32 %v4377, 4294901760
      %4379 = vmatmul.mubr.f32.gmra.mrb[0].mxu0 %v4378
      %v4380 = vpop.f32.mrb[0].mxu0
      %v4381 = vadd.f32 0.0, %v4380
      %v4382 = vpop.f32.mrb[0].mxu0
      %v4383 = vadd.f32 0.0, %v4382
      %4384 = vdwg.mxu0
      %v4385 = vand.u32 %v4081, 4294901760
      %v4386 = vsub.f32 %v4081, %v4385
      %v4387 = vand.u32 %v4386, 4294901760
      %v4388 = vsub.f32 %v4386, %v4387
      %v4389 = vand.u32 %v4388, 4294901760
      %4390 = vmatprep.subr.mxu0 %v4389
      %v4391 = vand.u32 %v4080, 4294901760
      %v4392 = vsub.f32 %v4080, %v4391
      %v4393 = vand.u32 %v4392, 4294901760
      %v4394 = vsub.f32 %v4392, %v4393
      %v4395 = vand.u32 %v4394, 4294901760
      %4396 = vmatpush1.msra.mxu0 %v4395
      %v4397 = vand.u32 %v4083, 4294901760
      %v4398 = vsub.f32 %v4083, %v4397
      %v4399 = vand.u32 %v4398, 4294901760
      %v4400 = vsub.f32 %v4398, %v4399
      %v4401 = vand.u32 %v4400, 4294901760
      %4402 = vmatprep.subr.mxu0 %v4401
      %v4403 = vand.u32 %v4082, 4294901760
      %v4404 = vsub.f32 %v4082, %v4403
      %v4405 = vand.u32 %v4404, 4294901760
      %v4406 = vsub.f32 %v4404, %v4405
      %v4407 = vand.u32 %v4406, 4294901760
      %4408 = vmatpush1.msra.mxu0 %v4407
      %v4409 = vand.u32 %v4085, 4294901760
      %v4410 = vsub.f32 %v4085, %v4409
      %v4411 = vand.u32 %v4410, 4294901760
      %v4412 = vsub.f32 %v4410, %v4411
      %v4413 = vand.u32 %v4412, 4294901760
      %4414 = vmatprep.subr.mxu0 %v4413
      %v4415 = vand.u32 %v4084, 4294901760
      %v4416 = vsub.f32 %v4084, %v4415
      %v4417 = vand.u32 %v4416, 4294901760
      %v4418 = vsub.f32 %v4416, %v4417
      %v4419 = vand.u32 %v4418, 4294901760
      %4420 = vmatpush1.msra.mxu0 %v4419
      %v4421 = vand.u32 %v4087, 4294901760
      %v4422 = vsub.f32 %v4087, %v4421
      %v4423 = vand.u32 %v4422, 4294901760
      %v4424 = vsub.f32 %v4422, %v4423
      %v4425 = vand.u32 %v4424, 4294901760
      %4426 = vmatprep.subr.mxu0 %v4425
      %v4427 = vand.u32 %v4086, 4294901760
      %v4428 = vsub.f32 %v4086, %v4427
      %v4429 = vand.u32 %v4428, 4294901760
      %v4430 = vsub.f32 %v4428, %v4429
      %v4431 = vand.u32 %v4430, 4294901760
      %4432 = vmatpush1.msra.mxu0 %v4431
      %v4433 = vand.u32 %v4089, 4294901760
      %v4434 = vsub.f32 %v4089, %v4433
      %v4435 = vand.u32 %v4434, 4294901760
      %v4436 = vsub.f32 %v4434, %v4435
      %v4437 = vand.u32 %v4436, 4294901760
      %4438 = vmatprep.subr.mxu0 %v4437
      %v4439 = vand.u32 %v4088, 4294901760
      %v4440 = vsub.f32 %v4088, %v4439
      %v4441 = vand.u32 %v4440, 4294901760
      %v4442 = vsub.f32 %v4440, %v4441
      %v4443 = vand.u32 %v4442, 4294901760
      %4444 = vmatpush1.msra.mxu0 %v4443
      %v4445 = vand.u32 %v4091, 4294901760
      %v4446 = vsub.f32 %v4091, %v4445
      %v4447 = vand.u32 %v4446, 4294901760
      %v4448 = vsub.f32 %v4446, %v4447
      %v4449 = vand.u32 %v4448, 4294901760
      %4450 = vmatprep.subr.mxu0 %v4449
      %v4451 = vand.u32 %v4090, 4294901760
      %v4452 = vsub.f32 %v4090, %v4451
      %v4453 = vand.u32 %v4452, 4294901760
      %v4454 = vsub.f32 %v4452, %v4453
      %v4455 = vand.u32 %v4454, 4294901760
      %4456 = vmatpush1.msra.mxu0 %v4455
      %v4457 = vand.u32 %v4093, 4294901760
      %v4458 = vsub.f32 %v4093, %v4457
      %v4459 = vand.u32 %v4458, 4294901760
      %v4460 = vsub.f32 %v4458, %v4459
      %v4461 = vand.u32 %v4460, 4294901760
      %4462 = vmatprep.subr.mxu0 %v4461
      %v4463 = vand.u32 %v4092, 4294901760
      %v4464 = vsub.f32 %v4092, %v4463
      %v4465 = vand.u32 %v4464, 4294901760
      %v4466 = vsub.f32 %v4464, %v4465
      %v4467 = vand.u32 %v4466, 4294901760
      %4468 = vmatpush1.msra.mxu0 %v4467
      %v4469 = vand.u32 %v4095, 4294901760
      %v4470 = vsub.f32 %v4095, %v4469
      %v4471 = vand.u32 %v4470, 4294901760
      %v4472 = vsub.f32 %v4470, %v4471
      %v4473 = vand.u32 %v4472, 4294901760
      %4474 = vmatprep.subr.mxu0 %v4473
      %v4475 = vand.u32 %v4094, 4294901760
      %v4476 = vsub.f32 %v4094, %v4475
      %v4477 = vand.u32 %v4476, 4294901760
      %v4478 = vsub.f32 %v4476, %v4477
      %v4479 = vand.u32 %v4478, 4294901760
      %4480 = vmatpush1.msra.mxu0 %v4479
      %v4481 = vand.u32 %v4097, 4294901760
      %v4482 = vsub.f32 %v4097, %v4481
      %v4483 = vand.u32 %v4482, 4294901760
      %v4484 = vsub.f32 %v4482, %v4483
      %v4485 = vand.u32 %v4484, 4294901760
      %4486 = vmatprep.subr.mxu0 %v4485
      %v4487 = vand.u32 %v4096, 4294901760
      %v4488 = vsub.f32 %v4096, %v4487
      %v4489 = vand.u32 %v4488, 4294901760
      %v4490 = vsub.f32 %v4488, %v4489
      %v4491 = vand.u32 %v4490, 4294901760
      %4492 = vmatpush1.msra.mxu0 %v4491
      %v4493 = vand.u32 %v4099, 4294901760
      %v4494 = vsub.f32 %v4099, %v4493
      %v4495 = vand.u32 %v4494, 4294901760
      %v4496 = vsub.f32 %v4494, %v4495
      %v4497 = vand.u32 %v4496, 4294901760
      %4498 = vmatprep.subr.mxu0 %v4497
      %v4499 = vand.u32 %v4098, 4294901760
      %v4500 = vsub.f32 %v4098, %v4499
      %v4501 = vand.u32 %v4500, 4294901760
      %v4502 = vsub.f32 %v4500, %v4501
      %v4503 = vand.u32 %v4502, 4294901760
      %4504 = vmatpush1.msra.mxu0 %v4503
      %v4505 = vand.u32 %v4101, 4294901760
      %v4506 = vsub.f32 %v4101, %v4505
      %v4507 = vand.u32 %v4506, 4294901760
      %v4508 = vsub.f32 %v4506, %v4507
      %v4509 = vand.u32 %v4508, 4294901760
      %4510 = vmatprep.subr.mxu0 %v4509
      %v4511 = vand.u32 %v4100, 4294901760
      %v4512 = vsub.f32 %v4100, %v4511
      %v4513 = vand.u32 %v4512, 4294901760
      %v4514 = vsub.f32 %v4512, %v4513
      %v4515 = vand.u32 %v4514, 4294901760
      %4516 = vmatpush1.msra.mxu0 %v4515
      %v4517 = vand.u32 %v4103, 4294901760
      %v4518 = vsub.f32 %v4103, %v4517
      %v4519 = vand.u32 %v4518, 4294901760
      %v4520 = vsub.f32 %v4518, %v4519
      %v4521 = vand.u32 %v4520, 4294901760
      %4522 = vmatprep.subr.mxu0 %v4521
      %v4523 = vand.u32 %v4102, 4294901760
      %v4524 = vsub.f32 %v4102, %v4523
      %v4525 = vand.u32 %v4524, 4294901760
      %v4526 = vsub.f32 %v4524, %v4525
      %v4527 = vand.u32 %v4526, 4294901760
      %4528 = vmatpush1.msra.mxu0 %v4527
      %v4529 = vand.u32 %v4105, 4294901760
      %v4530 = vsub.f32 %v4105, %v4529
      %v4531 = vand.u32 %v4530, 4294901760
      %v4532 = vsub.f32 %v4530, %v4531
      %v4533 = vand.u32 %v4532, 4294901760
      %4534 = vmatprep.subr.mxu0 %v4533
      %v4535 = vand.u32 %v4104, 4294901760
      %v4536 = vsub.f32 %v4104, %v4535
      %v4537 = vand.u32 %v4536, 4294901760
      %v4538 = vsub.f32 %v4536, %v4537
      %v4539 = vand.u32 %v4538, 4294901760
      %4540 = vmatpush1.msra.mxu0 %v4539
      %v4541 = vand.u32 %v4107, 4294901760
      %v4542 = vsub.f32 %v4107, %v4541
      %v4543 = vand.u32 %v4542, 4294901760
      %v4544 = vsub.f32 %v4542, %v4543
      %v4545 = vand.u32 %v4544, 4294901760
      %4546 = vmatprep.subr.mxu0 %v4545
      %v4547 = vand.u32 %v4106, 4294901760
      %v4548 = vsub.f32 %v4106, %v4547
      %v4549 = vand.u32 %v4548, 4294901760
      %v4550 = vsub.f32 %v4548, %v4549
      %v4551 = vand.u32 %v4550, 4294901760
      %4552 = vmatpush1.msra.mxu0 %v4551
      %v4553 = vand.u32 %v4109, 4294901760
      %v4554 = vsub.f32 %v4109, %v4553
      %v4555 = vand.u32 %v4554, 4294901760
      %v4556 = vsub.f32 %v4554, %v4555
      %v4557 = vand.u32 %v4556, 4294901760
      %4558 = vmatprep.subr.mxu0 %v4557
      %v4559 = vand.u32 %v4108, 4294901760
      %v4560 = vsub.f32 %v4108, %v4559
      %v4561 = vand.u32 %v4560, 4294901760
      %v4562 = vsub.f32 %v4560, %v4561
      %v4563 = vand.u32 %v4562, 4294901760
      %4564 = vmatpush1.msra.mxu0 %v4563
      %v4565 = vand.u32 %v4111, 4294901760
      %v4566 = vsub.f32 %v4111, %v4565
      %v4567 = vand.u32 %v4566, 4294901760
      %v4568 = vsub.f32 %v4566, %v4567
      %v4569 = vand.u32 %v4568, 4294901760
      %4570 = vmatprep.subr.mxu0 %v4569
      %v4571 = vand.u32 %v4110, 4294901760
      %v4572 = vsub.f32 %v4110, %v4571
      %v4573 = vand.u32 %v4572, 4294901760
      %v4574 = vsub.f32 %v4572, %v4573
      %v4575 = vand.u32 %v4574, 4294901760
      %4576 = vmatpush1.msra.mxu0 %v4575
      %4577 = vmatprep.subr.mxu0 0.0
      %4578 = vmatpush1.msra.mxu0 0.0
      %4579 = vmatprep.subr.mxu0 0.0
      %4580 = vmatpush1.msra.mxu0 0.0
      %4581 = vmatprep.subr.mxu0 0.0
      %4582 = vmatpush1.msra.mxu0 0.0
      %4583 = vmatprep.subr.mxu0 0.0
      %4584 = vmatpush1.msra.mxu0 0.0
      %4585 = vmatprep.subr.mxu0 0.0
      %4586 = vmatpush1.msra.mxu0 0.0
      %4587 = vmatprep.subr.mxu0 0.0
      %4588 = vmatpush1.msra.mxu0 0.0
      %4589 = vmatprep.subr.mxu0 0.0
      %4590 = vmatpush1.msra.mxu0 0.0
      %4591 = vmatprep.subr.mxu0 0.0
      %4592 = vmatpush1.msra.mxu0 0.0
      %4593 = vmatprep.subr.mxu0 0.0
      %4594 = vmatpush1.msra.mxu0 0.0
      %4595 = vmatprep.subr.mxu0 0.0
      %4596 = vmatpush1.msra.mxu0 0.0
      %4597 = vmatprep.subr.mxu0 0.0
      %4598 = vmatpush1.msra.mxu0 0.0
      %4599 = vmatprep.subr.mxu0 0.0
      %4600 = vmatpush1.msra.mxu0 0.0
      %4601 = vmatprep.subr.mxu0 0.0
      %4602 = vmatpush1.msra.mxu0 0.0
      %4603 = vmatprep.subr.mxu0 0.0
      %4604 = vmatpush1.msra.mxu0 0.0
      %4605 = vmatprep.subr.mxu0 0.0
      %4606 = vmatpush1.msra.mxu0 0.0
      %4607 = vmatprep.subr.mxu0 0.0
      %4608 = vmatpush1.msra.mxu0 0.0
      %4609 = vmatprep.mubr.f32.mxu0 0.0
      %v4610 = vand.u32 %v164, 4294901760
      %4611 = vmatmul.mubr.f32.gmra.mrb[0].mxu0 %v4610
      %v4612 = vpop.f32.mrb[0].mxu0
      %v4613 = vadd.f32 %v4216, %v4612
      %v4614 = vpop.f32.mrb[0].mxu0
      %v4615 = vadd.f32 %v4218, %v4614
      %4616 = vmatprep.mubr.f32.mxu0 0.0
      %v4617 = vand.u32 %v165, 4294901760
      %4618 = vmatmul.mubr.f32.gmra.mrb[0].mxu0 %v4617
      %v4619 = vpop.f32.mrb[0].mxu0
      %v4620 = vadd.f32 %v4227, %v4619
      %v4621 = vpop.f32.mrb[0].mxu0
      %v4622 = vadd.f32 %v4229, %v4621
      %4623 = vmatprep.mubr.f32.mxu0 0.0
      %v4624 = vand.u32 %v166, 4294901760
      %4625 = vmatmul.mubr.f32.gmra.mrb[0].mxu0 %v4624
      %v4626 = vpop.f32.mrb[0].mxu0
      %v4627 = vadd.f32 %v4238, %v4626
      %v4628 = vpop.f32.mrb[0].mxu0
      %v4629 = vadd.f32 %v4240, %v4628
      %4630 = vmatprep.mubr.f32.mxu0 0.0
      %v4631 = vand.u32 %v167, 4294901760
      %4632 = vmatmul.mubr.f32.gmra.mrb[0].mxu0 %v4631
      %v4633 = vpop.f32.mrb[0].mxu0
      %v4634 = vadd.f32 %v4249, %v4633
      %v4635 = vpop.f32.mrb[0].mxu0
      %v4636 = vadd.f32 %v4251, %v4635
      %4637 = vmatprep.mubr.f32.mxu0 0.0
      %v4638 = vand.u32 %v168, 4294901760
      %4639 = vmatmul.mubr.f32.gmra.mrb[0].mxu0 %v4638
      %v4640 = vpop.f32.mrb[0].mxu0
      %v4641 = vadd.f32 %v4260, %v4640
      %v4642 = vpop.f32.mrb[0].mxu0
      %v4643 = vadd.f32 %v4262, %v4642
      %4644 = vmatprep.mubr.f32.mxu0 0.0
      %v4645 = vand.u32 %v169, 4294901760
      %4646 = vmatmul.mubr.f32.gmra.mrb[0].mxu0 %v4645
      %v4647 = vpop.f32.mrb[0].mxu0
      %v4648 = vadd.f32 %v4271, %v4647
      %v4649 = vpop.f32.mrb[0].mxu0
      %v4650 = vadd.f32 %v4273, %v4649
      %4651 = vmatprep.mubr.f32.mxu0 0.0
      %v4652 = vand.u32 %v170, 4294901760
      %4653 = vmatmul.mubr.f32.gmra.mrb[0].mxu0 %v4652
      %v4654 = vpop.f32.mrb[0].mxu0
      %v4655 = vadd.f32 %v4282, %v4654
      %v4656 = vpop.f32.mrb[0].mxu0
      %v4657 = vadd.f32 %v4284, %v4656
      %4658 = vmatprep.mubr.f32.mxu0 0.0
      %v4659 = vand.u32 %v171, 4294901760
      %4660 = vmatmul.mubr.f32.gmra.mrb[0].mxu0 %v4659
      %v4661 = vpop.f32.mrb[0].mxu0
      %v4662 = vadd.f32 %v4293, %v4661
      %v4663 = vpop.f32.mrb[0].mxu0
      %v4664 = vadd.f32 %v4295, %v4663
      %4665 = vmatprep.mubr.f32.mxu0 0.0
      %v4666 = vand.u32 %v172, 4294901760
      %4667 = vmatmul.mubr.f32.gmra.mrb[0].mxu0 %v4666
      %v4668 = vpop.f32.mrb[0].mxu0
      %v4669 = vadd.f32 %v4304, %v4668
      %v4670 = vpop.f32.mrb[0].mxu0
      %v4671 = vadd.f32 %v4306, %v4670
      %4672 = vmatprep.mubr.f32.mxu0 0.0
      %v4673 = vand.u32 %v173, 4294901760
      %4674 = vmatmul.mubr.f32.gmra.mrb[0].mxu0 %v4673
      %v4675 = vpop.f32.mrb[0].mxu0
      %v4676 = vadd.f32 %v4315, %v4675
      %v4677 = vpop.f32.mrb[0].mxu0
      %v4678 = vadd.f32 %v4317, %v4677
      %4679 = vmatprep.mubr.f32.mxu0 0.0
      %v4680 = vand.u32 %v174, 4294901760
      %4681 = vmatmul.mubr.f32.gmra.mrb[0].mxu0 %v4680
      %v4682 = vpop.f32.mrb[0].mxu0
      %v4683 = vadd.f32 %v4326, %v4682
      %v4684 = vpop.f32.mrb[0].mxu0
      %v4685 = vadd.f32 %v4328, %v4684
      %4686 = vmatprep.mubr.f32.mxu0 0.0
      %v4687 = vand.u32 %v175, 4294901760
      %4688 = vmatmul.mubr.f32.gmra.mrb[0].mxu0 %v4687
      %v4689 = vpop.f32.mrb[0].mxu0
      %v4690 = vadd.f32 %v4337, %v4689
      %v4691 = vpop.f32.mrb[0].mxu0
      %v4692 = vadd.f32 %v4339, %v4691
      %4693 = vmatprep.mubr.f32.mxu0 0.0
      %v4694 = vand.u32 %v176, 4294901760
      %4695 = vmatmul.mubr.f32.gmra.mrb[0].mxu0 %v4694
      %v4696 = vpop.f32.mrb[0].mxu0
      %v4697 = vadd.f32 %v4348, %v4696
      %v4698 = vpop.f32.mrb[0].mxu0
      %v4699 = vadd.f32 %v4350, %v4698
      %4700 = vmatprep.mubr.f32.mxu0 0.0
      %v4701 = vand.u32 %v177, 4294901760
      %4702 = vmatmul.mubr.f32.gmra.mrb[0].mxu0 %v4701
      %v4703 = vpop.f32.mrb[0].mxu0
      %v4704 = vadd.f32 %v4359, %v4703
      %v4705 = vpop.f32.mrb[0].mxu0
      %v4706 = vadd.f32 %v4361, %v4705
      %4707 = vmatprep.mubr.f32.mxu0 0.0
      %v4708 = vand.u32 %v178, 4294901760
      %4709 = vmatmul.mubr.f32.gmra.mrb[0].mxu0 %v4708
      %v4710 = vpop.f32.mrb[0].mxu0
      %v4711 = vadd.f32 %v4370, %v4710
      %v4712 = vpop.f32.mrb[0].mxu0
      %v4713 = vadd.f32 %v4372, %v4712
      %4714 = vmatprep.mubr.f32.mxu0 0.0
      %v4715 = vand.u32 %v179, 4294901760
      %4716 = vmatmul.mubr.f32.gmra.mrb[0].mxu0 %v4715
      %v4717 = vpop.f32.mrb[0].mxu0
      %v4718 = vadd.f32 %v4381, %v4717
      %v4719 = vpop.f32.mrb[0].mxu0
      %v4720 = vadd.f32 %v4383, %v4719
      %4721 = vdwg.mxu0
      %v4722 = vand.u32 %v4081, 4294901760
      %v4723 = vsub.f32 %v4081, %v4722
      %4724 = vmatprep.subr.mxu0 %v4723
      %v4725 = vand.u32 %v4080, 4294901760
      %v4726 = vsub.f32 %v4080, %v4725
      %4727 = vmatpush1.msra.mxu0 %v4726
      %v4728 = vand.u32 %v4083, 4294901760
      %v4729 = vsub.f32 %v4083, %v4728
      %4730 = vmatprep.subr.mxu0 %v4729
      %v4731 = vand.u32 %v4082, 4294901760
      %v4732 = vsub.f32 %v4082, %v4731
      %4733 = vmatpush1.msra.mxu0 %v4732
      %v4734 = vand.u32 %v4085, 4294901760
      %v4735 = vsub.f32 %v4085, %v4734
      %4736 = vmatprep.subr.mxu0 %v4735
      %v4737 = vand.u32 %v4084, 4294901760
      %v4738 = vsub.f32 %v4084, %v4737
      %4739 = vmatpush1.msra.mxu0 %v4738
      %v4740 = vand.u32 %v4087, 4294901760
      %v4741 = vsub.f32 %v4087, %v4740
      %4742 = vmatprep.subr.mxu0 %v4741
      %v4743 = vand.u32 %v4086, 4294901760
      %v4744 = vsub.f32 %v4086, %v4743
      %4745 = vmatpush1.msra.mxu0 %v4744
      %v4746 = vand.u32 %v4089, 4294901760
      %v4747 = vsub.f32 %v4089, %v4746
      %4748 = vmatprep.subr.mxu0 %v4747
      %v4749 = vand.u32 %v4088, 4294901760
      %v4750 = vsub.f32 %v4088, %v4749
      %4751 = vmatpush1.msra.mxu0 %v4750
      %v4752 = vand.u32 %v4091, 4294901760
      %v4753 = vsub.f32 %v4091, %v4752
      %4754 = vmatprep.subr.mxu0 %v4753
      %v4755 = vand.u32 %v4090, 4294901760
      %v4756 = vsub.f32 %v4090, %v4755
      %4757 = vmatpush1.msra.mxu0 %v4756
      %v4758 = vand.u32 %v4093, 4294901760
      %v4759 = vsub.f32 %v4093, %v4758
      %4760 = vmatprep.subr.mxu0 %v4759
      %v4761 = vand.u32 %v4092, 4294901760
      %v4762 = vsub.f32 %v4092, %v4761
      %4763 = vmatpush1.msra.mxu0 %v4762
      %v4764 = vand.u32 %v4095, 4294901760
      %v4765 = vsub.f32 %v4095, %v4764
      %4766 = vmatprep.subr.mxu0 %v4765
      %v4767 = vand.u32 %v4094, 4294901760
      %v4768 = vsub.f32 %v4094, %v4767
      %4769 = vmatpush1.msra.mxu0 %v4768
      %v4770 = vand.u32 %v4097, 4294901760
      %v4771 = vsub.f32 %v4097, %v4770
      %4772 = vmatprep.subr.mxu0 %v4771
      %v4773 = vand.u32 %v4096, 4294901760
      %v4774 = vsub.f32 %v4096, %v4773
      %4775 = vmatpush1.msra.mxu0 %v4774
      %v4776 = vand.u32 %v4099, 4294901760
      %v4777 = vsub.f32 %v4099, %v4776
      %4778 = vmatprep.subr.mxu0 %v4777
      %v4779 = vand.u32 %v4098, 4294901760
      %v4780 = vsub.f32 %v4098, %v4779
      %4781 = vmatpush1.msra.mxu0 %v4780
      %v4782 = vand.u32 %v4101, 4294901760
      %v4783 = vsub.f32 %v4101, %v4782
      %4784 = vmatprep.subr.mxu0 %v4783
      %v4785 = vand.u32 %v4100, 4294901760
      %v4786 = vsub.f32 %v4100, %v4785
      %4787 = vmatpush1.msra.mxu0 %v4786
      %v4788 = vand.u32 %v4103, 4294901760
      %v4789 = vsub.f32 %v4103, %v4788
      %4790 = vmatprep.subr.mxu0 %v4789
      %v4791 = vand.u32 %v4102, 4294901760
      %v4792 = vsub.f32 %v4102, %v4791
      %4793 = vmatpush1.msra.mxu0 %v4792
      %v4794 = vand.u32 %v4105, 4294901760
      %v4795 = vsub.f32 %v4105, %v4794
      %4796 = vmatprep.subr.mxu0 %v4795
      %v4797 = vand.u32 %v4104, 4294901760
      %v4798 = vsub.f32 %v4104, %v4797
      %4799 = vmatpush1.msra.mxu0 %v4798
      %v4800 = vand.u32 %v4107, 4294901760
      %v4801 = vsub.f32 %v4107, %v4800
      %4802 = vmatprep.subr.mxu0 %v4801
      %v4803 = vand.u32 %v4106, 4294901760
      %v4804 = vsub.f32 %v4106, %v4803
      %4805 = vmatpush1.msra.mxu0 %v4804
      %v4806 = vand.u32 %v4109, 4294901760
      %v4807 = vsub.f32 %v4109, %v4806
      %4808 = vmatprep.subr.mxu0 %v4807
      %v4809 = vand.u32 %v4108, 4294901760
      %v4810 = vsub.f32 %v4108, %v4809
      %4811 = vmatpush1.msra.mxu0 %v4810
      %v4812 = vand.u32 %v4111, 4294901760
      %v4813 = vsub.f32 %v4111, %v4812
      %4814 = vmatprep.subr.mxu0 %v4813
      %v4815 = vand.u32 %v4110, 4294901760
      %v4816 = vsub.f32 %v4110, %v4815
      %4817 = vmatpush1.msra.mxu0 %v4816
      %4818 = vmatprep.subr.mxu0 0.0
      %4819 = vmatpush1.msra.mxu0 0.0
      %4820 = vmatprep.subr.mxu0 0.0
      %4821 = vmatpush1.msra.mxu0 0.0
      %4822 = vmatprep.subr.mxu0 0.0
      %4823 = vmatpush1.msra.mxu0 0.0
      %4824 = vmatprep.subr.mxu0 0.0
      %4825 = vmatpush1.msra.mxu0 0.0
      %4826 = vmatprep.subr.mxu0 0.0
      %4827 = vmatpush1.msra.mxu0 0.0
      %4828 = vmatprep.subr.mxu0 0.0
      %4829 = vmatpush1.msra.mxu0 0.0
      %4830 = vmatprep.subr.mxu0 0.0
      %4831 = vmatpush1.msra.mxu0 0.0
      %4832 = vmatprep.subr.mxu0 0.0
      %4833 = vmatpush1.msra.mxu0 0.0
      %4834 = vmatprep.subr.mxu0 0.0
      %4835 = vmatpush1.msra.mxu0 0.0
      %4836 = vmatprep.subr.mxu0 0.0
      %4837 = vmatpush1.msra.mxu0 0.0
      %4838 = vmatprep.subr.mxu0 0.0
      %4839 = vmatpush1.msra.mxu0 0.0
      %4840 = vmatprep.subr.mxu0 0.0
      %4841 = vmatpush1.msra.mxu0 0.0
      %4842 = vmatprep.subr.mxu0 0.0
      %4843 = vmatpush1.msra.mxu0 0.0
      %4844 = vmatprep.subr.mxu0 0.0
      %4845 = vmatpush1.msra.mxu0 0.0
      %4846 = vmatprep.subr.mxu0 0.0
      %4847 = vmatpush1.msra.mxu0 0.0
      %4848 = vmatprep.subr.mxu0 0.0
      %4849 = vmatpush1.msra.mxu0 0.0
      %4850 = vmatprep.mubr.f32.mxu0 0.0
      %v4851 = vand.u32 %v164, 4294901760
      %v4852 = vsub.f32 %v164, %v4851
      %4853 = vmatmul.mubr.f32.gmra.mrb[0].mxu0 %v4852
      %v4854 = vpop.f32.mrb[0].mxu0
      %v4855 = vadd.f32 %v4613, %v4854
      %v4856 = vpop.f32.mrb[0].mxu0
      %v4857 = vadd.f32 %v4615, %v4856
      %4858 = vmatprep.mubr.f32.mxu0 0.0
      %v4859 = vand.u32 %v165, 4294901760
      %v4860 = vsub.f32 %v165, %v4859
      %4861 = vmatmul.mubr.f32.gmra.mrb[0].mxu0 %v4860
      %v4862 = vpop.f32.mrb[0].mxu0
      %v4863 = vadd.f32 %v4620, %v4862
      %v4864 = vpop.f32.mrb[0].mxu0
      %v4865 = vadd.f32 %v4622, %v4864
      %4866 = vmatprep.mubr.f32.mxu0 0.0
      %v4867 = vand.u32 %v166, 4294901760
      %v4868 = vsub.f32 %v166, %v4867
      %4869 = vmatmul.mubr.f32.gmra.mrb[0].mxu0 %v4868
      %v4870 = vpop.f32.mrb[0].mxu0
      %v4871 = vadd.f32 %v4627, %v4870
      %v4872 = vpop.f32.mrb[0].mxu0
      %v4873 = vadd.f32 %v4629, %v4872
      %4874 = vmatprep.mubr.f32.mxu0 0.0
      %v4875 = vand.u32 %v167, 4294901760
      %v4876 = vsub.f32 %v167, %v4875
      %4877 = vmatmul.mubr.f32.gmra.mrb[0].mxu0 %v4876
      %v4878 = vpop.f32.mrb[0].mxu0
      %v4879 = vadd.f32 %v4634, %v4878
      %v4880 = vpop.f32.mrb[0].mxu0
      %v4881 = vadd.f32 %v4636, %v4880
      %4882 = vmatprep.mubr.f32.mxu0 0.0
      %v4883 = vand.u32 %v168, 4294901760
      %v4884 = vsub.f32 %v168, %v4883
      %4885 = vmatmul.mubr.f32.gmra.mrb[0].mxu0 %v4884
      %v4886 = vpop.f32.mrb[0].mxu0
      %v4887 = vadd.f32 %v4641, %v4886
      %v4888 = vpop.f32.mrb[0].mxu0
      %v4889 = vadd.f32 %v4643, %v4888
      %4890 = vmatprep.mubr.f32.mxu0 0.0
      %v4891 = vand.u32 %v169, 4294901760
      %v4892 = vsub.f32 %v169, %v4891
      %4893 = vmatmul.mubr.f32.gmra.mrb[0].mxu0 %v4892
      %v4894 = vpop.f32.mrb[0].mxu0
      %v4895 = vadd.f32 %v4648, %v4894
      %v4896 = vpop.f32.mrb[0].mxu0
      %v4897 = vadd.f32 %v4650, %v4896
      %4898 = vmatprep.mubr.f32.mxu0 0.0
      %v4899 = vand.u32 %v170, 4294901760
      %v4900 = vsub.f32 %v170, %v4899
      %4901 = vmatmul.mubr.f32.gmra.mrb[0].mxu0 %v4900
      %v4902 = vpop.f32.mrb[0].mxu0
      %v4903 = vadd.f32 %v4655, %v4902
      %v4904 = vpop.f32.mrb[0].mxu0
      %v4905 = vadd.f32 %v4657, %v4904
      %4906 = vmatprep.mubr.f32.mxu0 0.0
      %v4907 = vand.u32 %v171, 4294901760
      %v4908 = vsub.f32 %v171, %v4907
      %4909 = vmatmul.mubr.f32.gmra.mrb[0].mxu0 %v4908
      %v4910 = vpop.f32.mrb[0].mxu0
      %v4911 = vadd.f32 %v4662, %v4910
      %v4912 = vpop.f32.mrb[0].mxu0
      %v4913 = vadd.f32 %v4664, %v4912
      %4914 = vmatprep.mubr.f32.mxu0 0.0
      %v4915 = vand.u32 %v172, 4294901760
      %v4916 = vsub.f32 %v172, %v4915
      %4917 = vmatmul.mubr.f32.gmra.mrb[0].mxu0 %v4916
      %v4918 = vpop.f32.mrb[0].mxu0
      %v4919 = vadd.f32 %v4669, %v4918
      %v4920 = vpop.f32.mrb[0].mxu0
      %v4921 = vadd.f32 %v4671, %v4920
      %4922 = vmatprep.mubr.f32.mxu0 0.0
      %v4923 = vand.u32 %v173, 4294901760
      %v4924 = vsub.f32 %v173, %v4923
      %4925 = vmatmul.mubr.f32.gmra.mrb[0].mxu0 %v4924
      %v4926 = vpop.f32.mrb[0].mxu0
      %v4927 = vadd.f32 %v4676, %v4926
      %v4928 = vpop.f32.mrb[0].mxu0
      %v4929 = vadd.f32 %v4678, %v4928
      %4930 = vmatprep.mubr.f32.mxu0 0.0
      %v4931 = vand.u32 %v174, 4294901760
      %v4932 = vsub.f32 %v174, %v4931
      %4933 = vmatmul.mubr.f32.gmra.mrb[0].mxu0 %v4932
      %v4934 = vpop.f32.mrb[0].mxu0
      %v4935 = vadd.f32 %v4683, %v4934
      %v4936 = vpop.f32.mrb[0].mxu0
      %v4937 = vadd.f32 %v4685, %v4936
      %4938 = vmatprep.mubr.f32.mxu0 0.0
      %v4939 = vand.u32 %v175, 4294901760
      %v4940 = vsub.f32 %v175, %v4939
      %4941 = vmatmul.mubr.f32.gmra.mrb[0].mxu0 %v4940
      %v4942 = vpop.f32.mrb[0].mxu0
      %v4943 = vadd.f32 %v4690, %v4942
      %v4944 = vpop.f32.mrb[0].mxu0
      %v4945 = vadd.f32 %v4692, %v4944
      %4946 = vmatprep.mubr.f32.mxu0 0.0
      %v4947 = vand.u32 %v176, 4294901760
      %v4948 = vsub.f32 %v176, %v4947
      %4949 = vmatmul.mubr.f32.gmra.mrb[0].mxu0 %v4948
      %v4950 = vpop.f32.mrb[0].mxu0
      %v4951 = vadd.f32 %v4697, %v4950
      %v4952 = vpop.f32.mrb[0].mxu0
      %v4953 = vadd.f32 %v4699, %v4952
      %4954 = vmatprep.mubr.f32.mxu0 0.0
      %v4955 = vand.u32 %v177, 4294901760
      %v4956 = vsub.f32 %v177, %v4955
      %4957 = vmatmul.mubr.f32.gmra.mrb[0].mxu0 %v4956
      %v4958 = vpop.f32.mrb[0].mxu0
      %v4959 = vadd.f32 %v4704, %v4958
      %v4960 = vpop.f32.mrb[0].mxu0
      %v4961 = vadd.f32 %v4706, %v4960
      %4962 = vmatprep.mubr.f32.mxu0 0.0
      %v4963 = vand.u32 %v178, 4294901760
      %v4964 = vsub.f32 %v178, %v4963
      %4965 = vmatmul.mubr.f32.gmra.mrb[0].mxu0 %v4964
      %v4966 = vpop.f32.mrb[0].mxu0
      %v4967 = vadd.f32 %v4711, %v4966
      %v4968 = vpop.f32.mrb[0].mxu0
      %v4969 = vadd.f32 %v4713, %v4968
      %4970 = vmatprep.mubr.f32.mxu0 0.0
      %v4971 = vand.u32 %v179, 4294901760
      %v4972 = vsub.f32 %v179, %v4971
      %4973 = vmatmul.mubr.f32.gmra.mrb[0].mxu0 %v4972
      %v4974 = vpop.f32.mrb[0].mxu0
      %v4975 = vadd.f32 %v4718, %v4974
      %v4976 = vpop.f32.mrb[0].mxu0
      %v4977 = vadd.f32 %v4720, %v4976
      %4978 = vdwg.mxu0
      %v4979 = vand.u32 %v4081, 4294901760
      %4980 = vmatprep.subr.mxu0 %v4979
      %v4981 = vand.u32 %v4080, 4294901760
      %4982 = vmatpush1.msra.mxu0 %v4981
      %v4983 = vand.u32 %v4083, 4294901760
      %4984 = vmatprep.subr.mxu0 %v4983
      %v4985 = vand.u32 %v4082, 4294901760
      %4986 = vmatpush1.msra.mxu0 %v4985
      %v4987 = vand.u32 %v4085, 4294901760
      %4988 = vmatprep.subr.mxu0 %v4987
      %v4989 = vand.u32 %v4084, 4294901760
      %4990 = vmatpush1.msra.mxu0 %v4989
      %v4991 = vand.u32 %v4087, 4294901760
      %4992 = vmatprep.subr.mxu0 %v4991
      %v4993 = vand.u32 %v4086, 4294901760
      %4994 = vmatpush1.msra.mxu0 %v4993
      %v4995 = vand.u32 %v4089, 4294901760
      %4996 = vmatprep.subr.mxu0 %v4995
      %v4997 = vand.u32 %v4088, 4294901760
      %4998 = vmatpush1.msra.mxu0 %v4997
      %v4999 = vand.u32 %v4091, 4294901760
      %5000 = vmatprep.subr.mxu0 %v4999
      %v5001 = vand.u32 %v4090, 4294901760
      %5002 = vmatpush1.msra.mxu0 %v5001
      %v5003 = vand.u32 %v4093, 4294901760
      %5004 = vmatprep.subr.mxu0 %v5003
      %v5005 = vand.u32 %v4092, 4294901760
      %5006 = vmatpush1.msra.mxu0 %v5005
      %v5007 = vand.u32 %v4095, 4294901760
      %5008 = vmatprep.subr.mxu0 %v5007
      %v5009 = vand.u32 %v4094, 4294901760
      %5010 = vmatpush1.msra.mxu0 %v5009
      %v5011 = vand.u32 %v4097, 4294901760
      %5012 = vmatprep.subr.mxu0 %v5011
      %v5013 = vand.u32 %v4096, 4294901760
      %5014 = vmatpush1.msra.mxu0 %v5013
      %v5015 = vand.u32 %v4099, 4294901760
      %5016 = vmatprep.subr.mxu0 %v5015
      %v5017 = vand.u32 %v4098, 4294901760
      %5018 = vmatpush1.msra.mxu0 %v5017
      %v5019 = vand.u32 %v4101, 4294901760
      %5020 = vmatprep.subr.mxu0 %v5019
      %v5021 = vand.u32 %v4100, 4294901760
      %5022 = vmatpush1.msra.mxu0 %v5021
      %v5023 = vand.u32 %v4103, 4294901760
      %5024 = vmatprep.subr.mxu0 %v5023
      %v5025 = vand.u32 %v4102, 4294901760
      %5026 = vmatpush1.msra.mxu0 %v5025
      %v5027 = vand.u32 %v4105, 4294901760
      %5028 = vmatprep.subr.mxu0 %v5027
      %v5029 = vand.u32 %v4104, 4294901760
      %5030 = vmatpush1.msra.mxu0 %v5029
      %v5031 = vand.u32 %v4107, 4294901760
      %5032 = vmatprep.subr.mxu0 %v5031
      %v5033 = vand.u32 %v4106, 4294901760
      %5034 = vmatpush1.msra.mxu0 %v5033
      %v5035 = vand.u32 %v4109, 4294901760
      %5036 = vmatprep.subr.mxu0 %v5035
      %v5037 = vand.u32 %v4108, 4294901760
      %5038 = vmatpush1.msra.mxu0 %v5037
      %v5039 = vand.u32 %v4111, 4294901760
      %5040 = vmatprep.subr.mxu0 %v5039
      %v5041 = vand.u32 %v4110, 4294901760
      %5042 = vmatpush1.msra.mxu0 %v5041
      %5043 = vmatprep.subr.mxu0 0.0
      %5044 = vmatpush1.msra.mxu0 0.0
      %5045 = vmatprep.subr.mxu0 0.0
      %5046 = vmatpush1.msra.mxu0 0.0
      %5047 = vmatprep.subr.mxu0 0.0
      %5048 = vmatpush1.msra.mxu0 0.0
      %5049 = vmatprep.subr.mxu0 0.0
      %5050 = vmatpush1.msra.mxu0 0.0
      %5051 = vmatprep.subr.mxu0 0.0
      %5052 = vmatpush1.msra.mxu0 0.0
      %5053 = vmatprep.subr.mxu0 0.0
      %5054 = vmatpush1.msra.mxu0 0.0
      %5055 = vmatprep.subr.mxu0 0.0
      %5056 = vmatpush1.msra.mxu0 0.0
      %5057 = vmatprep.subr.mxu0 0.0
      %5058 = vmatpush1.msra.mxu0 0.0
      %5059 = vmatprep.subr.mxu0 0.0
      %5060 = vmatpush1.msra.mxu0 0.0
      %5061 = vmatprep.subr.mxu0 0.0
      %5062 = vmatpush1.msra.mxu0 0.0
      %5063 = vmatprep.subr.mxu0 0.0
      %5064 = vmatpush1.msra.mxu0 0.0
      %5065 = vmatprep.subr.mxu0 0.0
      %5066 = vmatpush1.msra.mxu0 0.0
      %5067 = vmatprep.subr.mxu0 0.0
      %5068 = vmatpush1.msra.mxu0 0.0
      %5069 = vmatprep.subr.mxu0 0.0
      %5070 = vmatpush1.msra.mxu0 0.0
      %5071 = vmatprep.subr.mxu0 0.0
      %5072 = vmatpush1.msra.mxu0 0.0
      %5073 = vmatprep.subr.mxu0 0.0
      %5074 = vmatpush1.msra.mxu0 0.0
      %5075 = vmatprep.mubr.f32.mxu0 0.0
      %v5076 = vand.u32 %v164, 4294901760
      %v5077 = vsub.f32 %v164, %v5076
      %v5078 = vand.u32 %v5077, 4294901760
      %5079 = vmatmul.mubr.f32.gmra.mrb[0].mxu0 %v5078
      %v5080 = vpop.f32.mrb[0].mxu0
      %v5081 = vadd.f32 %v4855, %v5080
      %v5082 = vpop.f32.mrb[0].mxu0
      %v5083 = vadd.f32 %v4857, %v5082
      %5084 = vmatprep.mubr.f32.mxu0 0.0
      %v5085 = vand.u32 %v165, 4294901760
      %v5086 = vsub.f32 %v165, %v5085
      %v5087 = vand.u32 %v5086, 4294901760
      %5088 = vmatmul.mubr.f32.gmra.mrb[0].mxu0 %v5087
      %v5089 = vpop.f32.mrb[0].mxu0
      %v5090 = vadd.f32 %v4863, %v5089
      %v5091 = vpop.f32.mrb[0].mxu0
      %v5092 = vadd.f32 %v4865, %v5091
      %5093 = vmatprep.mubr.f32.mxu0 0.0
      %v5094 = vand.u32 %v166, 4294901760
      %v5095 = vsub.f32 %v166, %v5094
      %v5096 = vand.u32 %v5095, 4294901760
      %5097 = vmatmul.mubr.f32.gmra.mrb[0].mxu0 %v5096
      %v5098 = vpop.f32.mrb[0].mxu0
      %v5099 = vadd.f32 %v4871, %v5098
      %v5100 = vpop.f32.mrb[0].mxu0
      %v5101 = vadd.f32 %v4873, %v5100
      %5102 = vmatprep.mubr.f32.mxu0 0.0
      %v5103 = vand.u32 %v167, 4294901760
      %v5104 = vsub.f32 %v167, %v5103
      %v5105 = vand.u32 %v5104, 4294901760
      %5106 = vmatmul.mubr.f32.gmra.mrb[0].mxu0 %v5105
      %v5107 = vpop.f32.mrb[0].mxu0
      %v5108 = vadd.f32 %v4879, %v5107
      %v5109 = vpop.f32.mrb[0].mxu0
      %v5110 = vadd.f32 %v4881, %v5109
      %5111 = vmatprep.mubr.f32.mxu0 0.0
      %v5112 = vand.u32 %v168, 4294901760
      %v5113 = vsub.f32 %v168, %v5112
      %v5114 = vand.u32 %v5113, 4294901760
      %5115 = vmatmul.mubr.f32.gmra.mrb[0].mxu0 %v5114
      %v5116 = vpop.f32.mrb[0].mxu0
      %v5117 = vadd.f32 %v4887, %v5116
      %v5118 = vpop.f32.mrb[0].mxu0
      %v5119 = vadd.f32 %v4889, %v5118
      %5120 = vmatprep.mubr.f32.mxu0 0.0
      %v5121 = vand.u32 %v169, 4294901760
      %v5122 = vsub.f32 %v169, %v5121
      %v5123 = vand.u32 %v5122, 4294901760
      %5124 = vmatmul.mubr.f32.gmra.mrb[0].mxu0 %v5123
      %v5125 = vpop.f32.mrb[0].mxu0
      %v5126 = vadd.f32 %v4895, %v5125
      %v5127 = vpop.f32.mrb[0].mxu0
      %v5128 = vadd.f32 %v4897, %v5127
      %5129 = vmatprep.mubr.f32.mxu0 0.0
      %v5130 = vand.u32 %v170, 4294901760
      %v5131 = vsub.f32 %v170, %v5130
      %v5132 = vand.u32 %v5131, 4294901760
      %5133 = vmatmul.mubr.f32.gmra.mrb[0].mxu0 %v5132
      %v5134 = vpop.f32.mrb[0].mxu0
      %v5135 = vadd.f32 %v4903, %v5134
      %v5136 = vpop.f32.mrb[0].mxu0
      %v5137 = vadd.f32 %v4905, %v5136
      %5138 = vmatprep.mubr.f32.mxu0 0.0
      %v5139 = vand.u32 %v171, 4294901760
      %v5140 = vsub.f32 %v171, %v5139
      %v5141 = vand.u32 %v5140, 4294901760
      %5142 = vmatmul.mubr.f32.gmra.mrb[0].mxu0 %v5141
      %v5143 = vpop.f32.mrb[0].mxu0
      %v5144 = vadd.f32 %v4911, %v5143
      %v5145 = vpop.f32.mrb[0].mxu0
      %v5146 = vadd.f32 %v4913, %v5145
      %5147 = vmatprep.mubr.f32.mxu0 0.0
      %v5148 = vand.u32 %v172, 4294901760
      %v5149 = vsub.f32 %v172, %v5148
      %v5150 = vand.u32 %v5149, 4294901760
      %5151 = vmatmul.mubr.f32.gmra.mrb[0].mxu0 %v5150
      %v5152 = vpop.f32.mrb[0].mxu0
      %v5153 = vadd.f32 %v4919, %v5152
      %v5154 = vpop.f32.mrb[0].mxu0
      %v5155 = vadd.f32 %v4921, %v5154
      %5156 = vmatprep.mubr.f32.mxu0 0.0
      %v5157 = vand.u32 %v173, 4294901760
      %v5158 = vsub.f32 %v173, %v5157
      %v5159 = vand.u32 %v5158, 4294901760
      %5160 = vmatmul.mubr.f32.gmra.mrb[0].mxu0 %v5159
      %v5161 = vpop.f32.mrb[0].mxu0
      %v5162 = vadd.f32 %v4927, %v5161
      %v5163 = vpop.f32.mrb[0].mxu0
      %v5164 = vadd.f32 %v4929, %v5163
      %5165 = vmatprep.mubr.f32.mxu0 0.0
      %v5166 = vand.u32 %v174, 4294901760
      %v5167 = vsub.f32 %v174, %v5166
      %v5168 = vand.u32 %v5167, 4294901760
      %5169 = vmatmul.mubr.f32.gmra.mrb[0].mxu0 %v5168
      %v5170 = vpop.f32.mrb[0].mxu0
      %v5171 = vadd.f32 %v4935, %v5170
      %v5172 = vpop.f32.mrb[0].mxu0
      %v5173 = vadd.f32 %v4937, %v5172
      %5174 = vmatprep.mubr.f32.mxu0 0.0
      %v5175 = vand.u32 %v175, 4294901760
      %v5176 = vsub.f32 %v175, %v5175
      %v5177 = vand.u32 %v5176, 4294901760
      %5178 = vmatmul.mubr.f32.gmra.mrb[0].mxu0 %v5177
      %v5179 = vpop.f32.mrb[0].mxu0
      %v5180 = vadd.f32 %v4943, %v5179
      %v5181 = vpop.f32.mrb[0].mxu0
      %v5182 = vadd.f32 %v4945, %v5181
      %5183 = vmatprep.mubr.f32.mxu0 0.0
      %v5184 = vand.u32 %v176, 4294901760
      %v5185 = vsub.f32 %v176, %v5184
      %v5186 = vand.u32 %v5185, 4294901760
      %5187 = vmatmul.mubr.f32.gmra.mrb[0].mxu0 %v5186
      %v5188 = vpop.f32.mrb[0].mxu0
      %v5189 = vadd.f32 %v4951, %v5188
      %v5190 = vpop.f32.mrb[0].mxu0
      %v5191 = vadd.f32 %v4953, %v5190
      %5192 = vmatprep.mubr.f32.mxu0 0.0
      %v5193 = vand.u32 %v177, 4294901760
      %v5194 = vsub.f32 %v177, %v5193
      %v5195 = vand.u32 %v5194, 4294901760
      %5196 = vmatmul.mubr.f32.gmra.mrb[0].mxu0 %v5195
      %v5197 = vpop.f32.mrb[0].mxu0
      %v5198 = vadd.f32 %v4959, %v5197
      %v5199 = vpop.f32.mrb[0].mxu0
      %v5200 = vadd.f32 %v4961, %v5199
      %5201 = vmatprep.mubr.f32.mxu0 0.0
      %v5202 = vand.u32 %v178, 4294901760
      %v5203 = vsub.f32 %v178, %v5202
      %v5204 = vand.u32 %v5203, 4294901760
      %5205 = vmatmul.mubr.f32.gmra.mrb[0].mxu0 %v5204
      %v5206 = vpop.f32.mrb[0].mxu0
      %v5207 = vadd.f32 %v4967, %v5206
      %v5208 = vpop.f32.mrb[0].mxu0
      %v5209 = vadd.f32 %v4969, %v5208
      %5210 = vmatprep.mubr.f32.mxu0 0.0
      %v5211 = vand.u32 %v179, 4294901760
      %v5212 = vsub.f32 %v179, %v5211
      %v5213 = vand.u32 %v5212, 4294901760
      %5214 = vmatmul.mubr.f32.gmra.mrb[0].mxu0 %v5213
      %v5215 = vpop.f32.mrb[0].mxu0
      %v5216 = vadd.f32 %v4975, %v5215
      %v5217 = vpop.f32.mrb[0].mxu0
      %v5218 = vadd.f32 %v4977, %v5217
      %5219 = vdwg.mxu0
      %v5220 = vand.u32 %v4081, 4294901760
      %v5221 = vsub.f32 %v4081, %v5220
      %v5222 = vand.u32 %v5221, 4294901760
      %5223 = vmatprep.subr.mxu0 %v5222
      %v5224 = vand.u32 %v4080, 4294901760
      %v5225 = vsub.f32 %v4080, %v5224
      %v5226 = vand.u32 %v5225, 4294901760
      %5227 = vmatpush1.msra.mxu0 %v5226
      %v5228 = vand.u32 %v4083, 4294901760
      %v5229 = vsub.f32 %v4083, %v5228
      %v5230 = vand.u32 %v5229, 4294901760
      %5231 = vmatprep.subr.mxu0 %v5230
      %v5232 = vand.u32 %v4082, 4294901760
      %v5233 = vsub.f32 %v4082, %v5232
      %v5234 = vand.u32 %v5233, 4294901760
      %5235 = vmatpush1.msra.mxu0 %v5234
      %v5236 = vand.u32 %v4085, 4294901760
      %v5237 = vsub.f32 %v4085, %v5236
      %v5238 = vand.u32 %v5237, 4294901760
      %5239 = vmatprep.subr.mxu0 %v5238
      %v5240 = vand.u32 %v4084, 4294901760
      %v5241 = vsub.f32 %v4084, %v5240
      %v5242 = vand.u32 %v5241, 4294901760
      %5243 = vmatpush1.msra.mxu0 %v5242
      %v5244 = vand.u32 %v4087, 4294901760
      %v5245 = vsub.f32 %v4087, %v5244
      %v5246 = vand.u32 %v5245, 4294901760
      %5247 = vmatprep.subr.mxu0 %v5246
      %v5248 = vand.u32 %v4086, 4294901760
      %v5249 = vsub.f32 %v4086, %v5248
      %v5250 = vand.u32 %v5249, 4294901760
      %5251 = vmatpush1.msra.mxu0 %v5250
      %v5252 = vand.u32 %v4089, 4294901760
      %v5253 = vsub.f32 %v4089, %v5252
      %v5254 = vand.u32 %v5253, 4294901760
      %5255 = vmatprep.subr.mxu0 %v5254
      %v5256 = vand.u32 %v4088, 4294901760
      %v5257 = vsub.f32 %v4088, %v5256
      %v5258 = vand.u32 %v5257, 4294901760
      %5259 = vmatpush1.msra.mxu0 %v5258
      %v5260 = vand.u32 %v4091, 4294901760
      %v5261 = vsub.f32 %v4091, %v5260
      %v5262 = vand.u32 %v5261, 4294901760
      %5263 = vmatprep.subr.mxu0 %v5262
      %v5264 = vand.u32 %v4090, 4294901760
      %v5265 = vsub.f32 %v4090, %v5264
      %v5266 = vand.u32 %v5265, 4294901760
      %5267 = vmatpush1.msra.mxu0 %v5266
      %v5268 = vand.u32 %v4093, 4294901760
      %v5269 = vsub.f32 %v4093, %v5268
      %v5270 = vand.u32 %v5269, 4294901760
      %5271 = vmatprep.subr.mxu0 %v5270
      %v5272 = vand.u32 %v4092, 4294901760
      %v5273 = vsub.f32 %v4092, %v5272
      %v5274 = vand.u32 %v5273, 4294901760
      %5275 = vmatpush1.msra.mxu0 %v5274
      %v5276 = vand.u32 %v4095, 4294901760
      %v5277 = vsub.f32 %v4095, %v5276
      %v5278 = vand.u32 %v5277, 4294901760
      %5279 = vmatprep.subr.mxu0 %v5278
      %v5280 = vand.u32 %v4094, 4294901760
      %v5281 = vsub.f32 %v4094, %v5280
      %v5282 = vand.u32 %v5281, 4294901760
      %5283 = vmatpush1.msra.mxu0 %v5282
      %v5284 = vand.u32 %v4097, 4294901760
      %v5285 = vsub.f32 %v4097, %v5284
      %v5286 = vand.u32 %v5285, 4294901760
      %5287 = vmatprep.subr.mxu0 %v5286
      %v5288 = vand.u32 %v4096, 4294901760
      %v5289 = vsub.f32 %v4096, %v5288
      %v5290 = vand.u32 %v5289, 4294901760
      %5291 = vmatpush1.msra.mxu0 %v5290
      %v5292 = vand.u32 %v4099, 4294901760
      %v5293 = vsub.f32 %v4099, %v5292
      %v5294 = vand.u32 %v5293, 4294901760
      %5295 = vmatprep.subr.mxu0 %v5294
      %v5296 = vand.u32 %v4098, 4294901760
      %v5297 = vsub.f32 %v4098, %v5296
      %v5298 = vand.u32 %v5297, 4294901760
      %5299 = vmatpush1.msra.mxu0 %v5298
      %v5300 = vand.u32 %v4101, 4294901760
      %v5301 = vsub.f32 %v4101, %v5300
      %v5302 = vand.u32 %v5301, 4294901760
      %5303 = vmatprep.subr.mxu0 %v5302
      %v5304 = vand.u32 %v4100, 4294901760
      %v5305 = vsub.f32 %v4100, %v5304
      %v5306 = vand.u32 %v5305, 4294901760
      %5307 = vmatpush1.msra.mxu0 %v5306
      %v5308 = vand.u32 %v4103, 4294901760
      %v5309 = vsub.f32 %v4103, %v5308
      %v5310 = vand.u32 %v5309, 4294901760
      %5311 = vmatprep.subr.mxu0 %v5310
      %v5312 = vand.u32 %v4102, 4294901760
      %v5313 = vsub.f32 %v4102, %v5312
      %v5314 = vand.u32 %v5313, 4294901760
      %5315 = vmatpush1.msra.mxu0 %v5314
      %v5316 = vand.u32 %v4105, 4294901760
      %v5317 = vsub.f32 %v4105, %v5316
      %v5318 = vand.u32 %v5317, 4294901760
      %5319 = vmatprep.subr.mxu0 %v5318
      %v5320 = vand.u32 %v4104, 4294901760
      %v5321 = vsub.f32 %v4104, %v5320
      %v5322 = vand.u32 %v5321, 4294901760
      %5323 = vmatpush1.msra.mxu0 %v5322
      %v5324 = vand.u32 %v4107, 4294901760
      %v5325 = vsub.f32 %v4107, %v5324
      %v5326 = vand.u32 %v5325, 4294901760
      %5327 = vmatprep.subr.mxu0 %v5326
      %v5328 = vand.u32 %v4106, 4294901760
      %v5329 = vsub.f32 %v4106, %v5328
      %v5330 = vand.u32 %v5329, 4294901760
      %5331 = vmatpush1.msra.mxu0 %v5330
      %v5332 = vand.u32 %v4109, 4294901760
      %v5333 = vsub.f32 %v4109, %v5332
      %v5334 = vand.u32 %v5333, 4294901760
      %5335 = vmatprep.subr.mxu0 %v5334
      %v5336 = vand.u32 %v4108, 4294901760
      %v5337 = vsub.f32 %v4108, %v5336
      %v5338 = vand.u32 %v5337, 4294901760
      %5339 = vmatpush1.msra.mxu0 %v5338
      %v5340 = vand.u32 %v4111, 4294901760
      %v5341 = vsub.f32 %v4111, %v5340
      %v5342 = vand.u32 %v5341, 4294901760
      %5343 = vmatprep.subr.mxu0 %v5342
      %v5344 = vand.u32 %v4110, 4294901760
      %v5345 = vsub.f32 %v4110, %v5344
      %v5346 = vand.u32 %v5345, 4294901760
      %5347 = vmatpush1.msra.mxu0 %v5346
      %5348 = vmatprep.subr.mxu0 0.0
      %5349 = vmatpush1.msra.mxu0 0.0
      %5350 = vmatprep.subr.mxu0 0.0
      %5351 = vmatpush1.msra.mxu0 0.0
      %5352 = vmatprep.subr.mxu0 0.0
      %5353 = vmatpush1.msra.mxu0 0.0
      %5354 = vmatprep.subr.mxu0 0.0
      %5355 = vmatpush1.msra.mxu0 0.0
      %5356 = vmatprep.subr.mxu0 0.0
      %5357 = vmatpush1.msra.mxu0 0.0
      %5358 = vmatprep.subr.mxu0 0.0
      %5359 = vmatpush1.msra.mxu0 0.0
      %5360 = vmatprep.subr.mxu0 0.0
      %5361 = vmatpush1.msra.mxu0 0.0
      %5362 = vmatprep.subr.mxu0 0.0
      %5363 = vmatpush1.msra.mxu0 0.0
      %5364 = vmatprep.subr.mxu0 0.0
      %5365 = vmatpush1.msra.mxu0 0.0
      %5366 = vmatprep.subr.mxu0 0.0
      %5367 = vmatpush1.msra.mxu0 0.0
      %5368 = vmatprep.subr.mxu0 0.0
      %5369 = vmatpush1.msra.mxu0 0.0
      %5370 = vmatprep.subr.mxu0 0.0
      %5371 = vmatpush1.msra.mxu0 0.0
      %5372 = vmatprep.subr.mxu0 0.0
      %5373 = vmatpush1.msra.mxu0 0.0
      %5374 = vmatprep.subr.mxu0 0.0
      %5375 = vmatpush1.msra.mxu0 0.0
      %5376 = vmatprep.subr.mxu0 0.0
      %5377 = vmatpush1.msra.mxu0 0.0
      %5378 = vmatprep.subr.mxu0 0.0
      %5379 = vmatpush1.msra.mxu0 0.0
      %5380 = vmatprep.mubr.f32.mxu0 0.0
      %v5381 = vand.u32 %v164, 4294901760
      %5382 = vmatmul.mubr.f32.gmra.mrb[0].mxu0 %v5381
      %v5383 = vpop.f32.mrb[0].mxu0
      %v5384 = vadd.f32 %v5081, %v5383
      %v5385 = vpop.f32.mrb[0].mxu0
      %v5386 = vadd.f32 %v5083, %v5385
      %5387 = vmatprep.mubr.f32.mxu0 0.0
      %v5388 = vand.u32 %v165, 4294901760
      %5389 = vmatmul.mubr.f32.gmra.mrb[0].mxu0 %v5388
      %v5390 = vpop.f32.mrb[0].mxu0
      %v5391 = vadd.f32 %v5090, %v5390
      %v5392 = vpop.f32.mrb[0].mxu0
      %v5393 = vadd.f32 %v5092, %v5392
      %5394 = vmatprep.mubr.f32.mxu0 0.0
      %v5395 = vand.u32 %v166, 4294901760
      %5396 = vmatmul.mubr.f32.gmra.mrb[0].mxu0 %v5395
      %v5397 = vpop.f32.mrb[0].mxu0
      %v5398 = vadd.f32 %v5099, %v5397
      %v5399 = vpop.f32.mrb[0].mxu0
      %v5400 = vadd.f32 %v5101, %v5399
      %5401 = vmatprep.mubr.f32.mxu0 0.0
      %v5402 = vand.u32 %v167, 4294901760
      %5403 = vmatmul.mubr.f32.gmra.mrb[0].mxu0 %v5402
      %v5404 = vpop.f32.mrb[0].mxu0
      %v5405 = vadd.f32 %v5108, %v5404
      %v5406 = vpop.f32.mrb[0].mxu0
      %v5407 = vadd.f32 %v5110, %v5406
      %5408 = vmatprep.mubr.f32.mxu0 0.0
      %v5409 = vand.u32 %v168, 4294901760
      %5410 = vmatmul.mubr.f32.gmra.mrb[0].mxu0 %v5409
      %v5411 = vpop.f32.mrb[0].mxu0
      %v5412 = vadd.f32 %v5117, %v5411
      %v5413 = vpop.f32.mrb[0].mxu0
      %v5414 = vadd.f32 %v5119, %v5413
      %5415 = vmatprep.mubr.f32.mxu0 0.0
      %v5416 = vand.u32 %v169, 4294901760
      %5417 = vmatmul.mubr.f32.gmra.mrb[0].mxu0 %v5416
      %v5418 = vpop.f32.mrb[0].mxu0
      %v5419 = vadd.f32 %v5126, %v5418
      %v5420 = vpop.f32.mrb[0].mxu0
      %v5421 = vadd.f32 %v5128, %v5420
      %5422 = vmatprep.mubr.f32.mxu0 0.0
      %v5423 = vand.u32 %v170, 4294901760
      %5424 = vmatmul.mubr.f32.gmra.mrb[0].mxu0 %v5423
      %v5425 = vpop.f32.mrb[0].mxu0
      %v5426 = vadd.f32 %v5135, %v5425
      %v5427 = vpop.f32.mrb[0].mxu0
      %v5428 = vadd.f32 %v5137, %v5427
      %5429 = vmatprep.mubr.f32.mxu0 0.0
      %v5430 = vand.u32 %v171, 4294901760
      %5431 = vmatmul.mubr.f32.gmra.mrb[0].mxu0 %v5430
      %v5432 = vpop.f32.mrb[0].mxu0
      %v5433 = vadd.f32 %v5144, %v5432
      %v5434 = vpop.f32.mrb[0].mxu0
      %v5435 = vadd.f32 %v5146, %v5434
      %5436 = vmatprep.mubr.f32.mxu0 0.0
      %v5437 = vand.u32 %v172, 4294901760
      %5438 = vmatmul.mubr.f32.gmra.mrb[0].mxu0 %v5437
      %v5439 = vpop.f32.mrb[0].mxu0
      %v5440 = vadd.f32 %v5153, %v5439
      %v5441 = vpop.f32.mrb[0].mxu0
      %v5442 = vadd.f32 %v5155, %v5441
      %5443 = vmatprep.mubr.f32.mxu0 0.0
      %v5444 = vand.u32 %v173, 4294901760
      %5445 = vmatmul.mubr.f32.gmra.mrb[0].mxu0 %v5444
      %v5446 = vpop.f32.mrb[0].mxu0
      %v5447 = vadd.f32 %v5162, %v5446
      %v5448 = vpop.f32.mrb[0].mxu0
      %v5449 = vadd.f32 %v5164, %v5448
      %5450 = vmatprep.mubr.f32.mxu0 0.0
      %v5451 = vand.u32 %v174, 4294901760
      %5452 = vmatmul.mubr.f32.gmra.mrb[0].mxu0 %v5451
      %v5453 = vpop.f32.mrb[0].mxu0
      %v5454 = vadd.f32 %v5171, %v5453
      %v5455 = vpop.f32.mrb[0].mxu0
      %v5456 = vadd.f32 %v5173, %v5455
      %5457 = vmatprep.mubr.f32.mxu0 0.0
      %v5458 = vand.u32 %v175, 4294901760
      %5459 = vmatmul.mubr.f32.gmra.mrb[0].mxu0 %v5458
      %v5460 = vpop.f32.mrb[0].mxu0
      %v5461 = vadd.f32 %v5180, %v5460
      %v5462 = vpop.f32.mrb[0].mxu0
      %v5463 = vadd.f32 %v5182, %v5462
      %5464 = vmatprep.mubr.f32.mxu0 0.0
      %v5465 = vand.u32 %v176, 4294901760
      %5466 = vmatmul.mubr.f32.gmra.mrb[0].mxu0 %v5465
      %v5467 = vpop.f32.mrb[0].mxu0
      %v5468 = vadd.f32 %v5189, %v5467
      %v5469 = vpop.f32.mrb[0].mxu0
      %v5470 = vadd.f32 %v5191, %v5469
      %5471 = vmatprep.mubr.f32.mxu0 0.0
      %v5472 = vand.u32 %v177, 4294901760
      %5473 = vmatmul.mubr.f32.gmra.mrb[0].mxu0 %v5472
      %v5474 = vpop.f32.mrb[0].mxu0
      %v5475 = vadd.f32 %v5198, %v5474
      %v5476 = vpop.f32.mrb[0].mxu0
      %v5477 = vadd.f32 %v5200, %v5476
      %5478 = vmatprep.mubr.f32.mxu0 0.0
      %v5479 = vand.u32 %v178, 4294901760
      %5480 = vmatmul.mubr.f32.gmra.mrb[0].mxu0 %v5479
      %v5481 = vpop.f32.mrb[0].mxu0
      %v5482 = vadd.f32 %v5207, %v5481
      %v5483 = vpop.f32.mrb[0].mxu0
      %v5484 = vadd.f32 %v5209, %v5483
      %5485 = vmatprep.mubr.f32.mxu0 0.0
      %v5486 = vand.u32 %v179, 4294901760
      %5487 = vmatmul.mubr.f32.gmra.mrb[0].mxu0 %v5486
      %v5488 = vpop.f32.mrb[0].mxu0
      %v5489 = vadd.f32 %v5216, %v5488
      %v5490 = vpop.f32.mrb[0].mxu0
      %v5491 = vadd.f32 %v5218, %v5490
      %5492 = vdwg.mxu0
      %v5493 = vand.u32 %v4081, 4294901760
      %5494 = vmatprep.subr.mxu0 %v5493
      %v5495 = vand.u32 %v4080, 4294901760
      %5496 = vmatpush1.msra.mxu0 %v5495
      %v5497 = vand.u32 %v4083, 4294901760
      %5498 = vmatprep.subr.mxu0 %v5497
      %v5499 = vand.u32 %v4082, 4294901760
      %5500 = vmatpush1.msra.mxu0 %v5499
      %v5501 = vand.u32 %v4085, 4294901760
      %5502 = vmatprep.subr.mxu0 %v5501
      %v5503 = vand.u32 %v4084, 4294901760
      %5504 = vmatpush1.msra.mxu0 %v5503
      %v5505 = vand.u32 %v4087, 4294901760
      %5506 = vmatprep.subr.mxu0 %v5505
      %v5507 = vand.u32 %v4086, 4294901760
      %5508 = vmatpush1.msra.mxu0 %v5507
      %v5509 = vand.u32 %v4089, 4294901760
      %5510 = vmatprep.subr.mxu0 %v5509
      %v5511 = vand.u32 %v4088, 4294901760
      %5512 = vmatpush1.msra.mxu0 %v5511
      %v5513 = vand.u32 %v4091, 4294901760
      %5514 = vmatprep.subr.mxu0 %v5513
      %v5515 = vand.u32 %v4090, 4294901760
      %5516 = vmatpush1.msra.mxu0 %v5515
      %v5517 = vand.u32 %v4093, 4294901760
      %5518 = vmatprep.subr.mxu0 %v5517
      %v5519 = vand.u32 %v4092, 4294901760
      %5520 = vmatpush1.msra.mxu0 %v5519
      %v5521 = vand.u32 %v4095, 4294901760
      %5522 = vmatprep.subr.mxu0 %v5521
      %v5523 = vand.u32 %v4094, 4294901760
      %5524 = vmatpush1.msra.mxu0 %v5523
      %v5525 = vand.u32 %v4097, 4294901760
      %5526 = vmatprep.subr.mxu0 %v5525
      %v5527 = vand.u32 %v4096, 4294901760
      %5528 = vmatpush1.msra.mxu0 %v5527
      %v5529 = vand.u32 %v4099, 4294901760
      %5530 = vmatprep.subr.mxu0 %v5529
      %v5531 = vand.u32 %v4098, 4294901760
      %5532 = vmatpush1.msra.mxu0 %v5531
      %v5533 = vand.u32 %v4101, 4294901760
      %5534 = vmatprep.subr.mxu0 %v5533
      %v5535 = vand.u32 %v4100, 4294901760
      %5536 = vmatpush1.msra.mxu0 %v5535
      %v5537 = vand.u32 %v4103, 4294901760
      %5538 = vmatprep.subr.mxu0 %v5537
      %v5539 = vand.u32 %v4102, 4294901760
      %5540 = vmatpush1.msra.mxu0 %v5539
      %v5541 = vand.u32 %v4105, 4294901760
      %5542 = vmatprep.subr.mxu0 %v5541
      %v5543 = vand.u32 %v4104, 4294901760
      %5544 = vmatpush1.msra.mxu0 %v5543
      %v5545 = vand.u32 %v4107, 4294901760
      %5546 = vmatprep.subr.mxu0 %v5545
      %v5547 = vand.u32 %v4106, 4294901760
      %5548 = vmatpush1.msra.mxu0 %v5547
      %v5549 = vand.u32 %v4109, 4294901760
      %5550 = vmatprep.subr.mxu0 %v5549
      %v5551 = vand.u32 %v4108, 4294901760
      %5552 = vmatpush1.msra.mxu0 %v5551
      %v5553 = vand.u32 %v4111, 4294901760
      %5554 = vmatprep.subr.mxu0 %v5553
      %v5555 = vand.u32 %v4110, 4294901760
      %5556 = vmatpush1.msra.mxu0 %v5555
      %5557 = vmatprep.subr.mxu0 0.0
      %5558 = vmatpush1.msra.mxu0 0.0
      %5559 = vmatprep.subr.mxu0 0.0
      %5560 = vmatpush1.msra.mxu0 0.0
      %5561 = vmatprep.subr.mxu0 0.0
      %5562 = vmatpush1.msra.mxu0 0.0
      %5563 = vmatprep.subr.mxu0 0.0
      %5564 = vmatpush1.msra.mxu0 0.0
      %5565 = vmatprep.subr.mxu0 0.0
      %5566 = vmatpush1.msra.mxu0 0.0
      %5567 = vmatprep.subr.mxu0 0.0
      %5568 = vmatpush1.msra.mxu0 0.0
      %5569 = vmatprep.subr.mxu0 0.0
      %5570 = vmatpush1.msra.mxu0 0.0
      %5571 = vmatprep.subr.mxu0 0.0
      %5572 = vmatpush1.msra.mxu0 0.0
      %5573 = vmatprep.subr.mxu0 0.0
      %5574 = vmatpush1.msra.mxu0 0.0
      %5575 = vmatprep.subr.mxu0 0.0
      %5576 = vmatpush1.msra.mxu0 0.0
      %5577 = vmatprep.subr.mxu0 0.0
      %5578 = vmatpush1.msra.mxu0 0.0
      %5579 = vmatprep.subr.mxu0 0.0
      %5580 = vmatpush1.msra.mxu0 0.0
      %5581 = vmatprep.subr.mxu0 0.0
      %5582 = vmatpush1.msra.mxu0 0.0
      %5583 = vmatprep.subr.mxu0 0.0
      %5584 = vmatpush1.msra.mxu0 0.0
      %5585 = vmatprep.subr.mxu0 0.0
      %5586 = vmatpush1.msra.mxu0 0.0
      %5587 = vmatprep.subr.mxu0 0.0
      %5588 = vmatpush1.msra.mxu0 0.0
      %5589 = vmatprep.mubr.f32.mxu0 0.0
      %v5590 = vand.u32 %v164, 4294901760
      %5591 = vmatmul.mubr.f32.gmra.mrb[0].mxu0 %v5590
      %v5592 = vpop.f32.mrb[0].mxu0
      %v5593 = vadd.f32 %v5384, %v5592
      %v5594 = vpop.f32.mrb[0].mxu0
      %v5595 = vadd.f32 %v5386, %v5594
      %5596 = vmatprep.mubr.f32.mxu0 0.0
      %v5597 = vand.u32 %v165, 4294901760
      %5598 = vmatmul.mubr.f32.gmra.mrb[0].mxu0 %v5597
      %v5599 = vpop.f32.mrb[0].mxu0
      %v5600 = vadd.f32 %v5391, %v5599
      %v5601 = vpop.f32.mrb[0].mxu0
      %v5602 = vadd.f32 %v5393, %v5601
      %5603 = vmatprep.mubr.f32.mxu0 0.0
      %v5604 = vand.u32 %v166, 4294901760
      %5605 = vmatmul.mubr.f32.gmra.mrb[0].mxu0 %v5604
      %v5606 = vpop.f32.mrb[0].mxu0
      %v5607 = vadd.f32 %v5398, %v5606
      %v5608 = vpop.f32.mrb[0].mxu0
      %v5609 = vadd.f32 %v5400, %v5608
      %5610 = vmatprep.mubr.f32.mxu0 0.0
      %v5611 = vand.u32 %v167, 4294901760
      %5612 = vmatmul.mubr.f32.gmra.mrb[0].mxu0 %v5611
      %v5613 = vpop.f32.mrb[0].mxu0
      %v5614 = vadd.f32 %v5405, %v5613
      %v5615 = vpop.f32.mrb[0].mxu0
      %v5616 = vadd.f32 %v5407, %v5615
      %5617 = vmatprep.mubr.f32.mxu0 0.0
      %v5618 = vand.u32 %v168, 4294901760
      %5619 = vmatmul.mubr.f32.gmra.mrb[0].mxu0 %v5618
      %v5620 = vpop.f32.mrb[0].mxu0
      %v5621 = vadd.f32 %v5412, %v5620
      %v5622 = vpop.f32.mrb[0].mxu0
      %v5623 = vadd.f32 %v5414, %v5622
      %5624 = vmatprep.mubr.f32.mxu0 0.0
      %v5625 = vand.u32 %v169, 4294901760
      %5626 = vmatmul.mubr.f32.gmra.mrb[0].mxu0 %v5625
      %v5627 = vpop.f32.mrb[0].mxu0
      %v5628 = vadd.f32 %v5419, %v5627
      %v5629 = vpop.f32.mrb[0].mxu0
      %v5630 = vadd.f32 %v5421, %v5629
      %5631 = vmatprep.mubr.f32.mxu0 0.0
      %v5632 = vand.u32 %v170, 4294901760
      %5633 = vmatmul.mubr.f32.gmra.mrb[0].mxu0 %v5632
      %v5634 = vpop.f32.mrb[0].mxu0
      %v5635 = vadd.f32 %v5426, %v5634
      %v5636 = vpop.f32.mrb[0].mxu0
      %v5637 = vadd.f32 %v5428, %v5636
      %5638 = vmatprep.mubr.f32.mxu0 0.0
      %v5639 = vand.u32 %v171, 4294901760
      %5640 = vmatmul.mubr.f32.gmra.mrb[0].mxu0 %v5639
      %v5641 = vpop.f32.mrb[0].mxu0
      %v5642 = vadd.f32 %v5433, %v5641
      %v5643 = vpop.f32.mrb[0].mxu0
      %v5644 = vadd.f32 %v5435, %v5643
      %5645 = vmatprep.mubr.f32.mxu0 0.0
      %v5646 = vand.u32 %v172, 4294901760
      %5647 = vmatmul.mubr.f32.gmra.mrb[0].mxu0 %v5646
      %v5648 = vpop.f32.mrb[0].mxu0
      %v5649 = vadd.f32 %v5440, %v5648
      %v5650 = vpop.f32.mrb[0].mxu0
      %v5651 = vadd.f32 %v5442, %v5650
      %5652 = vmatprep.mubr.f32.mxu0 0.0
      %v5653 = vand.u32 %v173, 4294901760
      %5654 = vmatmul.mubr.f32.gmra.mrb[0].mxu0 %v5653
      %v5655 = vpop.f32.mrb[0].mxu0
      %v5656 = vadd.f32 %v5447, %v5655
      %v5657 = vpop.f32.mrb[0].mxu0
      %v5658 = vadd.f32 %v5449, %v5657
      %5659 = vmatprep.mubr.f32.mxu0 0.0
      %v5660 = vand.u32 %v174, 4294901760
      %5661 = vmatmul.mubr.f32.gmra.mrb[0].mxu0 %v5660
      %v5662 = vpop.f32.mrb[0].mxu0
      %v5663 = vadd.f32 %v5454, %v5662
      %v5664 = vpop.f32.mrb[0].mxu0
      %v5665 = vadd.f32 %v5456, %v5664
      %5666 = vmatprep.mubr.f32.mxu0 0.0
      %v5667 = vand.u32 %v175, 4294901760
      %5668 = vmatmul.mubr.f32.gmra.mrb[0].mxu0 %v5667
      %v5669 = vpop.f32.mrb[0].mxu0
      %v5670 = vadd.f32 %v5461, %v5669
      %v5671 = vpop.f32.mrb[0].mxu0
      %v5672 = vadd.f32 %v5463, %v5671
      %5673 = vmatprep.mubr.f32.mxu0 0.0
      %v5674 = vand.u32 %v176, 4294901760
      %5675 = vmatmul.mubr.f32.gmra.mrb[0].mxu0 %v5674
      %v5676 = vpop.f32.mrb[0].mxu0
      %v5677 = vadd.f32 %v5468, %v5676
      %v5678 = vpop.f32.mrb[0].mxu0
      %v5679 = vadd.f32 %v5470, %v5678
      %5680 = vmatprep.mubr.f32.mxu0 0.0
      %v5681 = vand.u32 %v177, 4294901760
      %5682 = vmatmul.mubr.f32.gmra.mrb[0].mxu0 %v5681
      %v5683 = vpop.f32.mrb[0].mxu0
      %v5684 = vadd.f32 %v5475, %v5683
      %v5685 = vpop.f32.mrb[0].mxu0
      %v5686 = vadd.f32 %v5477, %v5685
      %5687 = vmatprep.mubr.f32.mxu0 0.0
      %v5688 = vand.u32 %v178, 4294901760
      %5689 = vmatmul.mubr.f32.gmra.mrb[0].mxu0 %v5688
      %v5690 = vpop.f32.mrb[0].mxu0
      %v5691 = vadd.f32 %v5482, %v5690
      %v5692 = vpop.f32.mrb[0].mxu0
      %v5693 = vadd.f32 %v5484, %v5692
      %5694 = vmatprep.mubr.f32.mxu0 0.0
      %v5695 = vand.u32 %v179, 4294901760
      %5696 = vmatmul.mubr.f32.gmra.mrb[0].mxu0 %v5695
      %v5697 = vpop.f32.mrb[0].mxu0
      %v5698 = vadd.f32 %v5489, %v5697
      %v5699 = vpop.f32.mrb[0].mxu0
      %v5700 = vadd.f32 %v5491, %v5699
      %5701 = vdwg.mxu0
      %v5702 = vand.u32 %v1771, 4294901760
      %5703 = vmatprep.subr.mxu0 %v5702
      %v5704 = vand.u32 %v1770, 4294901760
      %5705 = vmatpush1.msra.mxu0 %v5704
      %v5706 = vand.u32 %v1773, 4294901760
      %5707 = vmatprep.subr.mxu0 %v5706
      %v5708 = vand.u32 %v1772, 4294901760
      %5709 = vmatpush1.msra.mxu0 %v5708
      %v5710 = vand.u32 %v1775, 4294901760
      %5711 = vmatprep.subr.mxu0 %v5710
      %v5712 = vand.u32 %v1774, 4294901760
      %5713 = vmatpush1.msra.mxu0 %v5712
      %v5714 = vand.u32 %v1777, 4294901760
      %5715 = vmatprep.subr.mxu0 %v5714
      %v5716 = vand.u32 %v1776, 4294901760
      %5717 = vmatpush1.msra.mxu0 %v5716
      %v5718 = vand.u32 %v1779, 4294901760
      %5719 = vmatprep.subr.mxu0 %v5718
      %v5720 = vand.u32 %v1778, 4294901760
      %5721 = vmatpush1.msra.mxu0 %v5720
      %v5722 = vand.u32 %v1781, 4294901760
      %5723 = vmatprep.subr.mxu0 %v5722
      %v5724 = vand.u32 %v1780, 4294901760
      %5725 = vmatpush1.msra.mxu0 %v5724
      %v5726 = vand.u32 %v1783, 4294901760
      %5727 = vmatprep.subr.mxu0 %v5726
      %v5728 = vand.u32 %v1782, 4294901760
      %5729 = vmatpush1.msra.mxu0 %v5728
      %v5730 = vand.u32 %v1785, 4294901760
      %5731 = vmatprep.subr.mxu0 %v5730
      %v5732 = vand.u32 %v1784, 4294901760
      %5733 = vmatpush1.msra.mxu0 %v5732
      %v5734 = vand.u32 %v1787, 4294901760
      %5735 = vmatprep.subr.mxu0 %v5734
      %v5736 = vand.u32 %v1786, 4294901760
      %5737 = vmatpush1.msra.mxu0 %v5736
      %v5738 = vand.u32 %v1789, 4294901760
      %5739 = vmatprep.subr.mxu0 %v5738
      %v5740 = vand.u32 %v1788, 4294901760
      %5741 = vmatpush1.msra.mxu0 %v5740
      %v5742 = vand.u32 %v1791, 4294901760
      %5743 = vmatprep.subr.mxu0 %v5742
      %v5744 = vand.u32 %v1790, 4294901760
      %5745 = vmatpush1.msra.mxu0 %v5744
      %v5746 = vand.u32 %v1793, 4294901760
      %5747 = vmatprep.subr.mxu0 %v5746
      %v5748 = vand.u32 %v1792, 4294901760
      %5749 = vmatpush1.msra.mxu0 %v5748
      %v5750 = vand.u32 %v1795, 4294901760
      %5751 = vmatprep.subr.mxu0 %v5750
      %v5752 = vand.u32 %v1794, 4294901760
      %5753 = vmatpush1.msra.mxu0 %v5752
      %v5754 = vand.u32 %v1797, 4294901760
      %5755 = vmatprep.subr.mxu0 %v5754
      %v5756 = vand.u32 %v1796, 4294901760
      %5757 = vmatpush1.msra.mxu0 %v5756
      %v5758 = vand.u32 %v1799, 4294901760
      %5759 = vmatprep.subr.mxu0 %v5758
      %v5760 = vand.u32 %v1798, 4294901760
      %5761 = vmatpush1.msra.mxu0 %v5760
      %v5762 = vand.u32 %v1801, 4294901760
      %5763 = vmatprep.subr.mxu0 %v5762
      %v5764 = vand.u32 %v1800, 4294901760
      %5765 = vmatpush1.msra.mxu0 %v5764
      %v5766 = vand.u32 %v1803, 4294901760
      %5767 = vmatprep.subr.mxu0 %v5766
      %v5768 = vand.u32 %v1802, 4294901760
      %5769 = vmatpush1.msra.mxu0 %v5768
      %v5770 = vand.u32 %v1805, 4294901760
      %5771 = vmatprep.subr.mxu0 %v5770
      %v5772 = vand.u32 %v1804, 4294901760
      %5773 = vmatpush1.msra.mxu0 %v5772
      %v5774 = vand.u32 %v1807, 4294901760
      %5775 = vmatprep.subr.mxu0 %v5774
      %v5776 = vand.u32 %v1806, 4294901760
      %5777 = vmatpush1.msra.mxu0 %v5776
      %v5778 = vand.u32 %v1809, 4294901760
      %5779 = vmatprep.subr.mxu0 %v5778
      %v5780 = vand.u32 %v1808, 4294901760
      %5781 = vmatpush1.msra.mxu0 %v5780
      %v5782 = vand.u32 %v1811, 4294901760
      %5783 = vmatprep.subr.mxu0 %v5782
      %v5784 = vand.u32 %v1810, 4294901760
      %5785 = vmatpush1.msra.mxu0 %v5784
      %v5786 = vand.u32 %v1813, 4294901760
      %5787 = vmatprep.subr.mxu0 %v5786
      %v5788 = vand.u32 %v1812, 4294901760
      %5789 = vmatpush1.msra.mxu0 %v5788
      %v5790 = vand.u32 %v1815, 4294901760
      %5791 = vmatprep.subr.mxu0 %v5790
      %v5792 = vand.u32 %v1814, 4294901760
      %5793 = vmatpush1.msra.mxu0 %v5792
      %v5794 = vand.u32 %v1817, 4294901760
      %5795 = vmatprep.subr.mxu0 %v5794
      %v5796 = vand.u32 %v1816, 4294901760
      %5797 = vmatpush1.msra.mxu0 %v5796
      %v5798 = vand.u32 %v1819, 4294901760
      %5799 = vmatprep.subr.mxu0 %v5798
      %v5800 = vand.u32 %v1818, 4294901760
      %5801 = vmatpush1.msra.mxu0 %v5800
      %v5802 = vand.u32 %v1821, 4294901760
      %5803 = vmatprep.subr.mxu0 %v5802
      %v5804 = vand.u32 %v1820, 4294901760
      %5805 = vmatpush1.msra.mxu0 %v5804
      %v5806 = vand.u32 %v1823, 4294901760
      %5807 = vmatprep.subr.mxu0 %v5806
      %v5808 = vand.u32 %v1822, 4294901760
      %5809 = vmatpush1.msra.mxu0 %v5808
      %v5810 = vand.u32 %v1825, 4294901760
      %5811 = vmatprep.subr.mxu0 %v5810
      %v5812 = vand.u32 %v1824, 4294901760
      %5813 = vmatpush1.msra.mxu0 %v5812
      %v5814 = vand.u32 %v1827, 4294901760
      %5815 = vmatprep.subr.mxu0 %v5814
      %v5816 = vand.u32 %v1826, 4294901760
      %5817 = vmatpush1.msra.mxu0 %v5816
      %v5818 = vand.u32 %v1829, 4294901760
      %5819 = vmatprep.subr.mxu0 %v5818
      %v5820 = vand.u32 %v1828, 4294901760
      %5821 = vmatpush1.msra.mxu0 %v5820
      %v5822 = vand.u32 %v1831, 4294901760
      %5823 = vmatprep.subr.mxu0 %v5822
      %v5824 = vand.u32 %v1830, 4294901760
      %5825 = vmatpush1.msra.mxu0 %v5824
      %v5826 = vand.u32 %v1833, 4294901760
      %5827 = vmatprep.subr.mxu0 %v5826
      %v5828 = vand.u32 %v1832, 4294901760
      %5829 = vmatpush1.msra.mxu0 %v5828
      %v5830 = vand.u32 %v5595, 4294901760
      %v5831 = vsub.f32 %v5595, %v5830
      %v5832 = vand.u32 %v5831, 4294901760
      %v5833 = vsub.f32 %v5831, %v5832
      %v5834 = vand.u32 %v5833, 4294901760
      %5835 = vmatprep.mubr.f32.mxu0 %v5834
      %v5836 = vand.u32 %v5593, 4294901760
      %v5837 = vsub.f32 %v5593, %v5836
      %v5838 = vand.u32 %v5837, 4294901760
      %v5839 = vsub.f32 %v5837, %v5838
      %v5840 = vand.u32 %v5839, 4294901760
      %5841 = vmatmul.mubr.f32.gmra.mrb[0].mxu0 %v5840
      %v5842 = vpop.f32.mrb[0].mxu0
      %v5843 = vadd.f32 %v1834, %v5842
      %v5844 = vpop.f32.mrb[0].mxu0
      %v5845 = vadd.f32 %v1835, %v5844
      %v5846 = vand.u32 %v5602, 4294901760
      %v5847 = vsub.f32 %v5602, %v5846
      %v5848 = vand.u32 %v5847, 4294901760
      %v5849 = vsub.f32 %v5847, %v5848
      %v5850 = vand.u32 %v5849, 4294901760
      %5851 = vmatprep.mubr.f32.mxu0 %v5850
      %v5852 = vand.u32 %v5600, 4294901760
      %v5853 = vsub.f32 %v5600, %v5852
      %v5854 = vand.u32 %v5853, 4294901760
      %v5855 = vsub.f32 %v5853, %v5854
      %v5856 = vand.u32 %v5855, 4294901760
      %5857 = vmatmul.mubr.f32.gmra.mrb[0].mxu0 %v5856
      %v5858 = vpop.f32.mrb[0].mxu0
      %v5859 = vadd.f32 %v1836, %v5858
      %v5860 = vpop.f32.mrb[0].mxu0
      %v5861 = vadd.f32 %v1837, %v5860
      %v5862 = vand.u32 %v5609, 4294901760
      %v5863 = vsub.f32 %v5609, %v5862
      %v5864 = vand.u32 %v5863, 4294901760
      %v5865 = vsub.f32 %v5863, %v5864
      %v5866 = vand.u32 %v5865, 4294901760
      %5867 = vmatprep.mubr.f32.mxu0 %v5866
      %v5868 = vand.u32 %v5607, 4294901760
      %v5869 = vsub.f32 %v5607, %v5868
      %v5870 = vand.u32 %v5869, 4294901760
      %v5871 = vsub.f32 %v5869, %v5870
      %v5872 = vand.u32 %v5871, 4294901760
      %5873 = vmatmul.mubr.f32.gmra.mrb[0].mxu0 %v5872
      %v5874 = vpop.f32.mrb[0].mxu0
      %v5875 = vadd.f32 %v1838, %v5874
      %v5876 = vpop.f32.mrb[0].mxu0
      %v5877 = vadd.f32 %v1839, %v5876
      %v5878 = vand.u32 %v5616, 4294901760
      %v5879 = vsub.f32 %v5616, %v5878
      %v5880 = vand.u32 %v5879, 4294901760
      %v5881 = vsub.f32 %v5879, %v5880
      %v5882 = vand.u32 %v5881, 4294901760
      %5883 = vmatprep.mubr.f32.mxu0 %v5882
      %v5884 = vand.u32 %v5614, 4294901760
      %v5885 = vsub.f32 %v5614, %v5884
      %v5886 = vand.u32 %v5885, 4294901760
      %v5887 = vsub.f32 %v5885, %v5886
      %v5888 = vand.u32 %v5887, 4294901760
      %5889 = vmatmul.mubr.f32.gmra.mrb[0].mxu0 %v5888
      %v5890 = vpop.f32.mrb[0].mxu0
      %v5891 = vadd.f32 %v1840, %v5890
      %v5892 = vpop.f32.mrb[0].mxu0
      %v5893 = vadd.f32 %v1841, %v5892
      %v5894 = vand.u32 %v5623, 4294901760
      %v5895 = vsub.f32 %v5623, %v5894
      %v5896 = vand.u32 %v5895, 4294901760
      %v5897 = vsub.f32 %v5895, %v5896
      %v5898 = vand.u32 %v5897, 4294901760
      %5899 = vmatprep.mubr.f32.mxu0 %v5898
      %v5900 = vand.u32 %v5621, 4294901760
      %v5901 = vsub.f32 %v5621, %v5900
      %v5902 = vand.u32 %v5901, 4294901760
      %v5903 = vsub.f32 %v5901, %v5902
      %v5904 = vand.u32 %v5903, 4294901760
      %5905 = vmatmul.mubr.f32.gmra.mrb[0].mxu0 %v5904
      %v5906 = vpop.f32.mrb[0].mxu0
      %v5907 = vadd.f32 %v1842, %v5906
      %v5908 = vpop.f32.mrb[0].mxu0
      %v5909 = vadd.f32 %v1843, %v5908
      %v5910 = vand.u32 %v5630, 4294901760
      %v5911 = vsub.f32 %v5630, %v5910
      %v5912 = vand.u32 %v5911, 4294901760
      %v5913 = vsub.f32 %v5911, %v5912
      %v5914 = vand.u32 %v5913, 4294901760
      %5915 = vmatprep.mubr.f32.mxu0 %v5914
      %v5916 = vand.u32 %v5628, 4294901760
      %v5917 = vsub.f32 %v5628, %v5916
      %v5918 = vand.u32 %v5917, 4294901760
      %v5919 = vsub.f32 %v5917, %v5918
      %v5920 = vand.u32 %v5919, 4294901760
      %5921 = vmatmul.mubr.f32.gmra.mrb[0].mxu0 %v5920
      %v5922 = vpop.f32.mrb[0].mxu0
      %v5923 = vadd.f32 %v1844, %v5922
      %v5924 = vpop.f32.mrb[0].mxu0
      %v5925 = vadd.f32 %v1845, %v5924
      %v5926 = vand.u32 %v5637, 4294901760
      %v5927 = vsub.f32 %v5637, %v5926
      %v5928 = vand.u32 %v5927, 4294901760
      %v5929 = vsub.f32 %v5927, %v5928
      %v5930 = vand.u32 %v5929, 4294901760
      %5931 = vmatprep.mubr.f32.mxu0 %v5930
      %v5932 = vand.u32 %v5635, 4294901760
      %v5933 = vsub.f32 %v5635, %v5932
      %v5934 = vand.u32 %v5933, 4294901760
      %v5935 = vsub.f32 %v5933, %v5934
      %v5936 = vand.u32 %v5935, 4294901760
      %5937 = vmatmul.mubr.f32.gmra.mrb[0].mxu0 %v5936
      %v5938 = vpop.f32.mrb[0].mxu0
      %v5939 = vadd.f32 %v1846, %v5938
      %v5940 = vpop.f32.mrb[0].mxu0
      %v5941 = vadd.f32 %v1847, %v5940
      %v5942 = vand.u32 %v5644, 4294901760
      %v5943 = vsub.f32 %v5644, %v5942
      %v5944 = vand.u32 %v5943, 4294901760
      %v5945 = vsub.f32 %v5943, %v5944
      %v5946 = vand.u32 %v5945, 4294901760
      %5947 = vmatprep.mubr.f32.mxu0 %v5946
      %v5948 = vand.u32 %v5642, 4294901760
      %v5949 = vsub.f32 %v5642, %v5948
      %v5950 = vand.u32 %v5949, 4294901760
      %v5951 = vsub.f32 %v5949, %v5950
      %v5952 = vand.u32 %v5951, 4294901760
      %5953 = vmatmul.mubr.f32.gmra.mrb[0].mxu0 %v5952
      %v5954 = vpop.f32.mrb[0].mxu0
      %v5955 = vadd.f32 %v1848, %v5954
      %v5956 = vpop.f32.mrb[0].mxu0
      %v5957 = vadd.f32 %v1849, %v5956
      %v5958 = vand.u32 %v5651, 4294901760
      %v5959 = vsub.f32 %v5651, %v5958
      %v5960 = vand.u32 %v5959, 4294901760
      %v5961 = vsub.f32 %v5959, %v5960
      %v5962 = vand.u32 %v5961, 4294901760
      %5963 = vmatprep.mubr.f32.mxu0 %v5962
      %v5964 = vand.u32 %v5649, 4294901760
      %v5965 = vsub.f32 %v5649, %v5964
      %v5966 = vand.u32 %v5965, 4294901760
      %v5967 = vsub.f32 %v5965, %v5966
      %v5968 = vand.u32 %v5967, 4294901760
      %5969 = vmatmul.mubr.f32.gmra.mrb[0].mxu0 %v5968
      %v5970 = vpop.f32.mrb[0].mxu0
      %v5971 = vadd.f32 %v1850, %v5970
      %v5972 = vpop.f32.mrb[0].mxu0
      %v5973 = vadd.f32 %v1851, %v5972
      %v5974 = vand.u32 %v5658, 4294901760
      %v5975 = vsub.f32 %v5658, %v5974
      %v5976 = vand.u32 %v5975, 4294901760
      %v5977 = vsub.f32 %v5975, %v5976
      %v5978 = vand.u32 %v5977, 4294901760
      %5979 = vmatprep.mubr.f32.mxu0 %v5978
      %v5980 = vand.u32 %v5656, 4294901760
      %v5981 = vsub.f32 %v5656, %v5980
      %v5982 = vand.u32 %v5981, 4294901760
      %v5983 = vsub.f32 %v5981, %v5982
      %v5984 = vand.u32 %v5983, 4294901760
      %5985 = vmatmul.mubr.f32.gmra.mrb[0].mxu0 %v5984
      %v5986 = vpop.f32.mrb[0].mxu0
      %v5987 = vadd.f32 %v1852, %v5986
      %v5988 = vpop.f32.mrb[0].mxu0
      %v5989 = vadd.f32 %v1853, %v5988
      %v5990 = vand.u32 %v5665, 4294901760
      %v5991 = vsub.f32 %v5665, %v5990
      %v5992 = vand.u32 %v5991, 4294901760
      %v5993 = vsub.f32 %v5991, %v5992
      %v5994 = vand.u32 %v5993, 4294901760
      %5995 = vmatprep.mubr.f32.mxu0 %v5994
      %v5996 = vand.u32 %v5663, 4294901760
      %v5997 = vsub.f32 %v5663, %v5996
      %v5998 = vand.u32 %v5997, 4294901760
      %v5999 = vsub.f32 %v5997, %v5998
      %v6000 = vand.u32 %v5999, 4294901760
      %6001 = vmatmul.mubr.f32.gmra.mrb[0].mxu0 %v6000
      %v6002 = vpop.f32.mrb[0].mxu0
      %v6003 = vadd.f32 %v1854, %v6002
      %v6004 = vpop.f32.mrb[0].mxu0
      %v6005 = vadd.f32 %v1855, %v6004
      %v6006 = vand.u32 %v5672, 4294901760
      %v6007 = vsub.f32 %v5672, %v6006
      %v6008 = vand.u32 %v6007, 4294901760
      %v6009 = vsub.f32 %v6007, %v6008
      %v6010 = vand.u32 %v6009, 4294901760
      %6011 = vmatprep.mubr.f32.mxu0 %v6010
      %v6012 = vand.u32 %v5670, 4294901760
      %v6013 = vsub.f32 %v5670, %v6012
      %v6014 = vand.u32 %v6013, 4294901760
      %v6015 = vsub.f32 %v6013, %v6014
      %v6016 = vand.u32 %v6015, 4294901760
      %6017 = vmatmul.mubr.f32.gmra.mrb[0].mxu0 %v6016
      %v6018 = vpop.f32.mrb[0].mxu0
      %v6019 = vadd.f32 %v1856, %v6018
      %v6020 = vpop.f32.mrb[0].mxu0
      %v6021 = vadd.f32 %v1857, %v6020
      %v6022 = vand.u32 %v5679, 4294901760
      %v6023 = vsub.f32 %v5679, %v6022
      %v6024 = vand.u32 %v6023, 4294901760
      %v6025 = vsub.f32 %v6023, %v6024
      %v6026 = vand.u32 %v6025, 4294901760
      %6027 = vmatprep.mubr.f32.mxu0 %v6026
      %v6028 = vand.u32 %v5677, 4294901760
      %v6029 = vsub.f32 %v5677, %v6028
      %v6030 = vand.u32 %v6029, 4294901760
      %v6031 = vsub.f32 %v6029, %v6030
      %v6032 = vand.u32 %v6031, 4294901760
      %6033 = vmatmul.mubr.f32.gmra.mrb[0].mxu0 %v6032
      %v6034 = vpop.f32.mrb[0].mxu0
      %v6035 = vadd.f32 %v1858, %v6034
      %v6036 = vpop.f32.mrb[0].mxu0
      %v6037 = vadd.f32 %v1859, %v6036
      %v6038 = vand.u32 %v5686, 4294901760
      %v6039 = vsub.f32 %v5686, %v6038
      %v6040 = vand.u32 %v6039, 4294901760
      %v6041 = vsub.f32 %v6039, %v6040
      %v6042 = vand.u32 %v6041, 4294901760
      %6043 = vmatprep.mubr.f32.mxu0 %v6042
      %v6044 = vand.u32 %v5684, 4294901760
      %v6045 = vsub.f32 %v5684, %v6044
      %v6046 = vand.u32 %v6045, 4294901760
      %v6047 = vsub.f32 %v6045, %v6046
      %v6048 = vand.u32 %v6047, 4294901760
      %6049 = vmatmul.mubr.f32.gmra.mrb[0].mxu0 %v6048
      %v6050 = vpop.f32.mrb[0].mxu0
      %v6051 = vadd.f32 %v1860, %v6050
      %v6052 = vpop.f32.mrb[0].mxu0
      %v6053 = vadd.f32 %v1861, %v6052
      %v6054 = vand.u32 %v5693, 4294901760
      %v6055 = vsub.f32 %v5693, %v6054
      %v6056 = vand.u32 %v6055, 4294901760
      %v6057 = vsub.f32 %v6055, %v6056
      %v6058 = vand.u32 %v6057, 4294901760
      %6059 = vmatprep.mubr.f32.mxu0 %v6058
      %v6060 = vand.u32 %v5691, 4294901760
      %v6061 = vsub.f32 %v5691, %v6060
      %v6062 = vand.u32 %v6061, 4294901760
      %v6063 = vsub.f32 %v6061, %v6062
      %v6064 = vand.u32 %v6063, 4294901760
      %6065 = vmatmul.mubr.f32.gmra.mrb[0].mxu0 %v6064
      %v6066 = vpop.f32.mrb[0].mxu0
      %v6067 = vadd.f32 %v1862, %v6066
      %v6068 = vpop.f32.mrb[0].mxu0
      %v6069 = vadd.f32 %v1863, %v6068
      %v6070 = vand.u32 %v5700, 4294901760
      %v6071 = vsub.f32 %v5700, %v6070
      %v6072 = vand.u32 %v6071, 4294901760
      %v6073 = vsub.f32 %v6071, %v6072
      %v6074 = vand.u32 %v6073, 4294901760
      %6075 = vmatprep.mubr.f32.mxu0 %v6074
      %v6076 = vand.u32 %v5698, 4294901760
      %v6077 = vsub.f32 %v5698, %v6076
      %v6078 = vand.u32 %v6077, 4294901760
      %v6079 = vsub.f32 %v6077, %v6078
      %v6080 = vand.u32 %v6079, 4294901760
      %6081 = vmatmul.mubr.f32.gmra.mrb[0].mxu0 %v6080
      %v6082 = vpop.f32.mrb[0].mxu0
      %v6083 = vadd.f32 %v1864, %v6082
      %v6084 = vpop.f32.mrb[0].mxu0
      %v6085 = vadd.f32 %v1865, %v6084
      %6086 = vdwg.mxu0
      %v6087 = vand.u32 %v1771, 4294901760
      %v6088 = vsub.f32 %v1771, %v6087
      %v6089 = vand.u32 %v6088, 4294901760
      %v6090 = vsub.f32 %v6088, %v6089
      %v6091 = vand.u32 %v6090, 4294901760
      %6092 = vmatprep.subr.mxu0 %v6091
      %v6093 = vand.u32 %v1770, 4294901760
      %v6094 = vsub.f32 %v1770, %v6093
      %v6095 = vand.u32 %v6094, 4294901760
      %v6096 = vsub.f32 %v6094, %v6095
      %v6097 = vand.u32 %v6096, 4294901760
      %6098 = vmatpush1.msra.mxu0 %v6097
      %v6099 = vand.u32 %v1773, 4294901760
      %v6100 = vsub.f32 %v1773, %v6099
      %v6101 = vand.u32 %v6100, 4294901760
      %v6102 = vsub.f32 %v6100, %v6101
      %v6103 = vand.u32 %v6102, 4294901760
      %6104 = vmatprep.subr.mxu0 %v6103
      %v6105 = vand.u32 %v1772, 4294901760
      %v6106 = vsub.f32 %v1772, %v6105
      %v6107 = vand.u32 %v6106, 4294901760
      %v6108 = vsub.f32 %v6106, %v6107
      %v6109 = vand.u32 %v6108, 4294901760
      %6110 = vmatpush1.msra.mxu0 %v6109
      %v6111 = vand.u32 %v1775, 4294901760
      %v6112 = vsub.f32 %v1775, %v6111
      %v6113 = vand.u32 %v6112, 4294901760
      %v6114 = vsub.f32 %v6112, %v6113
      %v6115 = vand.u32 %v6114, 4294901760
      %6116 = vmatprep.subr.mxu0 %v6115
      %v6117 = vand.u32 %v1774, 4294901760
      %v6118 = vsub.f32 %v1774, %v6117
      %v6119 = vand.u32 %v6118, 4294901760
      %v6120 = vsub.f32 %v6118, %v6119
      %v6121 = vand.u32 %v6120, 4294901760
      %6122 = vmatpush1.msra.mxu0 %v6121
      %v6123 = vand.u32 %v1777, 4294901760
      %v6124 = vsub.f32 %v1777, %v6123
      %v6125 = vand.u32 %v6124, 4294901760
      %v6126 = vsub.f32 %v6124, %v6125
      %v6127 = vand.u32 %v6126, 4294901760
      %6128 = vmatprep.subr.mxu0 %v6127
      %v6129 = vand.u32 %v1776, 4294901760
      %v6130 = vsub.f32 %v1776, %v6129
      %v6131 = vand.u32 %v6130, 4294901760
      %v6132 = vsub.f32 %v6130, %v6131
      %v6133 = vand.u32 %v6132, 4294901760
      %6134 = vmatpush1.msra.mxu0 %v6133
      %v6135 = vand.u32 %v1779, 4294901760
      %v6136 = vsub.f32 %v1779, %v6135
      %v6137 = vand.u32 %v6136, 4294901760
      %v6138 = vsub.f32 %v6136, %v6137
      %v6139 = vand.u32 %v6138, 4294901760
      %6140 = vmatprep.subr.mxu0 %v6139
      %v6141 = vand.u32 %v1778, 4294901760
      %v6142 = vsub.f32 %v1778, %v6141
      %v6143 = vand.u32 %v6142, 4294901760
      %v6144 = vsub.f32 %v6142, %v6143
      %v6145 = vand.u32 %v6144, 4294901760
      %6146 = vmatpush1.msra.mxu0 %v6145
      %v6147 = vand.u32 %v1781, 4294901760
      %v6148 = vsub.f32 %v1781, %v6147
      %v6149 = vand.u32 %v6148, 4294901760
      %v6150 = vsub.f32 %v6148, %v6149
      %v6151 = vand.u32 %v6150, 4294901760
      %6152 = vmatprep.subr.mxu0 %v6151
      %v6153 = vand.u32 %v1780, 4294901760
      %v6154 = vsub.f32 %v1780, %v6153
      %v6155 = vand.u32 %v6154, 4294901760
      %v6156 = vsub.f32 %v6154, %v6155
      %v6157 = vand.u32 %v6156, 4294901760
      %6158 = vmatpush1.msra.mxu0 %v6157
      %v6159 = vand.u32 %v1783, 4294901760
      %v6160 = vsub.f32 %v1783, %v6159
      %v6161 = vand.u32 %v6160, 4294901760
      %v6162 = vsub.f32 %v6160, %v6161
      %v6163 = vand.u32 %v6162, 4294901760
      %6164 = vmatprep.subr.mxu0 %v6163
      %v6165 = vand.u32 %v1782, 4294901760
      %v6166 = vsub.f32 %v1782, %v6165
      %v6167 = vand.u32 %v6166, 4294901760
      %v6168 = vsub.f32 %v6166, %v6167
      %v6169 = vand.u32 %v6168, 4294901760
      %6170 = vmatpush1.msra.mxu0 %v6169
      %v6171 = vand.u32 %v1785, 4294901760
      %v6172 = vsub.f32 %v1785, %v6171
      %v6173 = vand.u32 %v6172, 4294901760
      %v6174 = vsub.f32 %v6172, %v6173
      %v6175 = vand.u32 %v6174, 4294901760
      %6176 = vmatprep.subr.mxu0 %v6175
      %v6177 = vand.u32 %v1784, 4294901760
      %v6178 = vsub.f32 %v1784, %v6177
      %v6179 = vand.u32 %v6178, 4294901760
      %v6180 = vsub.f32 %v6178, %v6179
      %v6181 = vand.u32 %v6180, 4294901760
      %6182 = vmatpush1.msra.mxu0 %v6181
      %v6183 = vand.u32 %v1787, 4294901760
      %v6184 = vsub.f32 %v1787, %v6183
      %v6185 = vand.u32 %v6184, 4294901760
      %v6186 = vsub.f32 %v6184, %v6185
      %v6187 = vand.u32 %v6186, 4294901760
      %6188 = vmatprep.subr.mxu0 %v6187
      %v6189 = vand.u32 %v1786, 4294901760
      %v6190 = vsub.f32 %v1786, %v6189
      %v6191 = vand.u32 %v6190, 4294901760
      %v6192 = vsub.f32 %v6190, %v6191
      %v6193 = vand.u32 %v6192, 4294901760
      %6194 = vmatpush1.msra.mxu0 %v6193
      %v6195 = vand.u32 %v1789, 4294901760
      %v6196 = vsub.f32 %v1789, %v6195
      %v6197 = vand.u32 %v6196, 4294901760
      %v6198 = vsub.f32 %v6196, %v6197
      %v6199 = vand.u32 %v6198, 4294901760
      %6200 = vmatprep.subr.mxu0 %v6199
      %v6201 = vand.u32 %v1788, 4294901760
      %v6202 = vsub.f32 %v1788, %v6201
      %v6203 = vand.u32 %v6202, 4294901760
      %v6204 = vsub.f32 %v6202, %v6203
      %v6205 = vand.u32 %v6204, 4294901760
      %6206 = vmatpush1.msra.mxu0 %v6205
      %v6207 = vand.u32 %v1791, 4294901760
      %v6208 = vsub.f32 %v1791, %v6207
      %v6209 = vand.u32 %v6208, 4294901760
      %v6210 = vsub.f32 %v6208, %v6209
      %v6211 = vand.u32 %v6210, 4294901760
      %6212 = vmatprep.subr.mxu0 %v6211
      %v6213 = vand.u32 %v1790, 4294901760
      %v6214 = vsub.f32 %v1790, %v6213
      %v6215 = vand.u32 %v6214, 4294901760
      %v6216 = vsub.f32 %v6214, %v6215
      %v6217 = vand.u32 %v6216, 4294901760
      %6218 = vmatpush1.msra.mxu0 %v6217
      %v6219 = vand.u32 %v1793, 4294901760
      %v6220 = vsub.f32 %v1793, %v6219
      %v6221 = vand.u32 %v6220, 4294901760
      %v6222 = vsub.f32 %v6220, %v6221
      %v6223 = vand.u32 %v6222, 4294901760
      %6224 = vmatprep.subr.mxu0 %v6223
      %v6225 = vand.u32 %v1792, 4294901760
      %v6226 = vsub.f32 %v1792, %v6225
      %v6227 = vand.u32 %v6226, 4294901760
      %v6228 = vsub.f32 %v6226, %v6227
      %v6229 = vand.u32 %v6228, 4294901760
      %6230 = vmatpush1.msra.mxu0 %v6229
      %v6231 = vand.u32 %v1795, 4294901760
      %v6232 = vsub.f32 %v1795, %v6231
      %v6233 = vand.u32 %v6232, 4294901760
      %v6234 = vsub.f32 %v6232, %v6233
      %v6235 = vand.u32 %v6234, 4294901760
      %6236 = vmatprep.subr.mxu0 %v6235
      %v6237 = vand.u32 %v1794, 4294901760
      %v6238 = vsub.f32 %v1794, %v6237
      %v6239 = vand.u32 %v6238, 4294901760
      %v6240 = vsub.f32 %v6238, %v6239
      %v6241 = vand.u32 %v6240, 4294901760
      %6242 = vmatpush1.msra.mxu0 %v6241
      %v6243 = vand.u32 %v1797, 4294901760
      %v6244 = vsub.f32 %v1797, %v6243
      %v6245 = vand.u32 %v6244, 4294901760
      %v6246 = vsub.f32 %v6244, %v6245
      %v6247 = vand.u32 %v6246, 4294901760
      %6248 = vmatprep.subr.mxu0 %v6247
      %v6249 = vand.u32 %v1796, 4294901760
      %v6250 = vsub.f32 %v1796, %v6249
      %v6251 = vand.u32 %v6250, 4294901760
      %v6252 = vsub.f32 %v6250, %v6251
      %v6253 = vand.u32 %v6252, 4294901760
      %6254 = vmatpush1.msra.mxu0 %v6253
      %v6255 = vand.u32 %v1799, 4294901760
      %v6256 = vsub.f32 %v1799, %v6255
      %v6257 = vand.u32 %v6256, 4294901760
      %v6258 = vsub.f32 %v6256, %v6257
      %v6259 = vand.u32 %v6258, 4294901760
      %6260 = vmatprep.subr.mxu0 %v6259
      %v6261 = vand.u32 %v1798, 4294901760
      %v6262 = vsub.f32 %v1798, %v6261
      %v6263 = vand.u32 %v6262, 4294901760
      %v6264 = vsub.f32 %v6262, %v6263
      %v6265 = vand.u32 %v6264, 4294901760
      %6266 = vmatpush1.msra.mxu0 %v6265
      %v6267 = vand.u32 %v1801, 4294901760
      %v6268 = vsub.f32 %v1801, %v6267
      %v6269 = vand.u32 %v6268, 4294901760
      %v6270 = vsub.f32 %v6268, %v6269
      %v6271 = vand.u32 %v6270, 4294901760
      %6272 = vmatprep.subr.mxu0 %v6271
      %v6273 = vand.u32 %v1800, 4294901760
      %v6274 = vsub.f32 %v1800, %v6273
      %v6275 = vand.u32 %v6274, 4294901760
      %v6276 = vsub.f32 %v6274, %v6275
      %v6277 = vand.u32 %v6276, 4294901760
      %6278 = vmatpush1.msra.mxu0 %v6277
      %v6279 = vand.u32 %v1803, 4294901760
      %v6280 = vsub.f32 %v1803, %v6279
      %v6281 = vand.u32 %v6280, 4294901760
      %v6282 = vsub.f32 %v6280, %v6281
      %v6283 = vand.u32 %v6282, 4294901760
      %6284 = vmatprep.subr.mxu0 %v6283
      %v6285 = vand.u32 %v1802, 4294901760
      %v6286 = vsub.f32 %v1802, %v6285
      %v6287 = vand.u32 %v6286, 4294901760
      %v6288 = vsub.f32 %v6286, %v6287
      %v6289 = vand.u32 %v6288, 4294901760
      %6290 = vmatpush1.msra.mxu0 %v6289
      %v6291 = vand.u32 %v1805, 4294901760
      %v6292 = vsub.f32 %v1805, %v6291
      %v6293 = vand.u32 %v6292, 4294901760
      %v6294 = vsub.f32 %v6292, %v6293
      %v6295 = vand.u32 %v6294, 4294901760
      %6296 = vmatprep.subr.mxu0 %v6295
      %v6297 = vand.u32 %v1804, 4294901760
      %v6298 = vsub.f32 %v1804, %v6297
      %v6299 = vand.u32 %v6298, 4294901760
      %v6300 = vsub.f32 %v6298, %v6299
      %v6301 = vand.u32 %v6300, 4294901760
      %6302 = vmatpush1.msra.mxu0 %v6301
      %v6303 = vand.u32 %v1807, 4294901760
      %v6304 = vsub.f32 %v1807, %v6303
      %v6305 = vand.u32 %v6304, 4294901760
      %v6306 = vsub.f32 %v6304, %v6305
      %v6307 = vand.u32 %v6306, 4294901760
      %6308 = vmatprep.subr.mxu0 %v6307
      %v6309 = vand.u32 %v1806, 4294901760
      %v6310 = vsub.f32 %v1806, %v6309
      %v6311 = vand.u32 %v6310, 4294901760
      %v6312 = vsub.f32 %v6310, %v6311
      %v6313 = vand.u32 %v6312, 4294901760
      %6314 = vmatpush1.msra.mxu0 %v6313
      %v6315 = vand.u32 %v1809, 4294901760
      %v6316 = vsub.f32 %v1809, %v6315
      %v6317 = vand.u32 %v6316, 4294901760
      %v6318 = vsub.f32 %v6316, %v6317
      %v6319 = vand.u32 %v6318, 4294901760
      %6320 = vmatprep.subr.mxu0 %v6319
      %v6321 = vand.u32 %v1808, 4294901760
      %v6322 = vsub.f32 %v1808, %v6321
      %v6323 = vand.u32 %v6322, 4294901760
      %v6324 = vsub.f32 %v6322, %v6323
      %v6325 = vand.u32 %v6324, 4294901760
      %6326 = vmatpush1.msra.mxu0 %v6325
      %v6327 = vand.u32 %v1811, 4294901760
      %v6328 = vsub.f32 %v1811, %v6327
      %v6329 = vand.u32 %v6328, 4294901760
      %v6330 = vsub.f32 %v6328, %v6329
      %v6331 = vand.u32 %v6330, 4294901760
      %6332 = vmatprep.subr.mxu0 %v6331
      %v6333 = vand.u32 %v1810, 4294901760
      %v6334 = vsub.f32 %v1810, %v6333
      %v6335 = vand.u32 %v6334, 4294901760
      %v6336 = vsub.f32 %v6334, %v6335
      %v6337 = vand.u32 %v6336, 4294901760
      %6338 = vmatpush1.msra.mxu0 %v6337
      %v6339 = vand.u32 %v1813, 4294901760
      %v6340 = vsub.f32 %v1813, %v6339
      %v6341 = vand.u32 %v6340, 4294901760
      %v6342 = vsub.f32 %v6340, %v6341
      %v6343 = vand.u32 %v6342, 4294901760
      %6344 = vmatprep.subr.mxu0 %v6343
      %v6345 = vand.u32 %v1812, 4294901760
      %v6346 = vsub.f32 %v1812, %v6345
      %v6347 = vand.u32 %v6346, 4294901760
      %v6348 = vsub.f32 %v6346, %v6347
      %v6349 = vand.u32 %v6348, 4294901760
      %6350 = vmatpush1.msra.mxu0 %v6349
      %v6351 = vand.u32 %v1815, 4294901760
      %v6352 = vsub.f32 %v1815, %v6351
      %v6353 = vand.u32 %v6352, 4294901760
      %v6354 = vsub.f32 %v6352, %v6353
      %v6355 = vand.u32 %v6354, 4294901760
      %6356 = vmatprep.subr.mxu0 %v6355
      %v6357 = vand.u32 %v1814, 4294901760
      %v6358 = vsub.f32 %v1814, %v6357
      %v6359 = vand.u32 %v6358, 4294901760
      %v6360 = vsub.f32 %v6358, %v6359
      %v6361 = vand.u32 %v6360, 4294901760
      %6362 = vmatpush1.msra.mxu0 %v6361
      %v6363 = vand.u32 %v1817, 4294901760
      %v6364 = vsub.f32 %v1817, %v6363
      %v6365 = vand.u32 %v6364, 4294901760
      %v6366 = vsub.f32 %v6364, %v6365
      %v6367 = vand.u32 %v6366, 4294901760
      %6368 = vmatprep.subr.mxu0 %v6367
      %v6369 = vand.u32 %v1816, 4294901760
      %v6370 = vsub.f32 %v1816, %v6369
      %v6371 = vand.u32 %v6370, 4294901760
      %v6372 = vsub.f32 %v6370, %v6371
      %v6373 = vand.u32 %v6372, 4294901760
      %6374 = vmatpush1.msra.mxu0 %v6373
      %v6375 = vand.u32 %v1819, 4294901760
      %v6376 = vsub.f32 %v1819, %v6375
      %v6377 = vand.u32 %v6376, 4294901760
      %v6378 = vsub.f32 %v6376, %v6377
      %v6379 = vand.u32 %v6378, 4294901760
      %6380 = vmatprep.subr.mxu0 %v6379
      %v6381 = vand.u32 %v1818, 4294901760
      %v6382 = vsub.f32 %v1818, %v6381
      %v6383 = vand.u32 %v6382, 4294901760
      %v6384 = vsub.f32 %v6382, %v6383
      %v6385 = vand.u32 %v6384, 4294901760
      %6386 = vmatpush1.msra.mxu0 %v6385
      %v6387 = vand.u32 %v1821, 4294901760
      %v6388 = vsub.f32 %v1821, %v6387
      %v6389 = vand.u32 %v6388, 4294901760
      %v6390 = vsub.f32 %v6388, %v6389
      %v6391 = vand.u32 %v6390, 4294901760
      %6392 = vmatprep.subr.mxu0 %v6391
      %v6393 = vand.u32 %v1820, 4294901760
      %v6394 = vsub.f32 %v1820, %v6393
      %v6395 = vand.u32 %v6394, 4294901760
      %v6396 = vsub.f32 %v6394, %v6395
      %v6397 = vand.u32 %v6396, 4294901760
      %6398 = vmatpush1.msra.mxu0 %v6397
      %v6399 = vand.u32 %v1823, 4294901760
      %v6400 = vsub.f32 %v1823, %v6399
      %v6401 = vand.u32 %v6400, 4294901760
      %v6402 = vsub.f32 %v6400, %v6401
      %v6403 = vand.u32 %v6402, 4294901760
      %6404 = vmatprep.subr.mxu0 %v6403
      %v6405 = vand.u32 %v1822, 4294901760
      %v6406 = vsub.f32 %v1822, %v6405
      %v6407 = vand.u32 %v6406, 4294901760
      %v6408 = vsub.f32 %v6406, %v6407
      %v6409 = vand.u32 %v6408, 4294901760
      %6410 = vmatpush1.msra.mxu0 %v6409
      %v6411 = vand.u32 %v1825, 4294901760
      %v6412 = vsub.f32 %v1825, %v6411
      %v6413 = vand.u32 %v6412, 4294901760
      %v6414 = vsub.f32 %v6412, %v6413
      %v6415 = vand.u32 %v6414, 4294901760
      %6416 = vmatprep.subr.mxu0 %v6415
      %v6417 = vand.u32 %v1824, 4294901760
      %v6418 = vsub.f32 %v1824, %v6417
      %v6419 = vand.u32 %v6418, 4294901760
      %v6420 = vsub.f32 %v6418, %v6419
      %v6421 = vand.u32 %v6420, 4294901760
      %6422 = vmatpush1.msra.mxu0 %v6421
      %v6423 = vand.u32 %v1827, 4294901760
      %v6424 = vsub.f32 %v1827, %v6423
      %v6425 = vand.u32 %v6424, 4294901760
      %v6426 = vsub.f32 %v6424, %v6425
      %v6427 = vand.u32 %v6426, 4294901760
      %6428 = vmatprep.subr.mxu0 %v6427
      %v6429 = vand.u32 %v1826, 4294901760
      %v6430 = vsub.f32 %v1826, %v6429
      %v6431 = vand.u32 %v6430, 4294901760
      %v6432 = vsub.f32 %v6430, %v6431
      %v6433 = vand.u32 %v6432, 4294901760
      %6434 = vmatpush1.msra.mxu0 %v6433
      %v6435 = vand.u32 %v1829, 4294901760
      %v6436 = vsub.f32 %v1829, %v6435
      %v6437 = vand.u32 %v6436, 4294901760
      %v6438 = vsub.f32 %v6436, %v6437
      %v6439 = vand.u32 %v6438, 4294901760
      %6440 = vmatprep.subr.mxu0 %v6439
      %v6441 = vand.u32 %v1828, 4294901760
      %v6442 = vsub.f32 %v1828, %v6441
      %v6443 = vand.u32 %v6442, 4294901760
      %v6444 = vsub.f32 %v6442, %v6443
      %v6445 = vand.u32 %v6444, 4294901760
      %6446 = vmatpush1.msra.mxu0 %v6445
      %v6447 = vand.u32 %v1831, 4294901760
      %v6448 = vsub.f32 %v1831, %v6447
      %v6449 = vand.u32 %v6448, 4294901760
      %v6450 = vsub.f32 %v6448, %v6449
      %v6451 = vand.u32 %v6450, 4294901760
      %6452 = vmatprep.subr.mxu0 %v6451
      %v6453 = vand.u32 %v1830, 4294901760
      %v6454 = vsub.f32 %v1830, %v6453
      %v6455 = vand.u32 %v6454, 4294901760
      %v6456 = vsub.f32 %v6454, %v6455
      %v6457 = vand.u32 %v6456, 4294901760
      %6458 = vmatpush1.msra.mxu0 %v6457
      %v6459 = vand.u32 %v1833, 4294901760
      %v6460 = vsub.f32 %v1833, %v6459
      %v6461 = vand.u32 %v6460, 4294901760
      %v6462 = vsub.f32 %v6460, %v6461
      %v6463 = vand.u32 %v6462, 4294901760
      %6464 = vmatprep.subr.mxu0 %v6463
      %v6465 = vand.u32 %v1832, 4294901760
      %v6466 = vsub.f32 %v1832, %v6465
      %v6467 = vand.u32 %v6466, 4294901760
      %v6468 = vsub.f32 %v6466, %v6467
      %v6469 = vand.u32 %v6468, 4294901760
      %6470 = vmatpush1.msra.mxu0 %v6469
      %v6471 = vand.u32 %v5595, 4294901760
      %6472 = vmatprep.mubr.f32.mxu0 %v6471
      %v6473 = vand.u32 %v5593, 4294901760
      %6474 = vmatmul.mubr.f32.gmra.mrb[0].mxu0 %v6473
      %v6475 = vpop.f32.mrb[0].mxu0
      %v6476 = vadd.f32 %v5843, %v6475
      %v6477 = vpop.f32.mrb[0].mxu0
      %v6478 = vadd.f32 %v5845, %v6477
      %v6479 = vand.u32 %v5602, 4294901760
      %6480 = vmatprep.mubr.f32.mxu0 %v6479
      %v6481 = vand.u32 %v5600, 4294901760
      %6482 = vmatmul.mubr.f32.gmra.mrb[0].mxu0 %v6481
      %v6483 = vpop.f32.mrb[0].mxu0
      %v6484 = vadd.f32 %v5859, %v6483
      %v6485 = vpop.f32.mrb[0].mxu0
      %v6486 = vadd.f32 %v5861, %v6485
      %v6487 = vand.u32 %v5609, 4294901760
      %6488 = vmatprep.mubr.f32.mxu0 %v6487
      %v6489 = vand.u32 %v5607, 4294901760
      %6490 = vmatmul.mubr.f32.gmra.mrb[0].mxu0 %v6489
      %v6491 = vpop.f32.mrb[0].mxu0
      %v6492 = vadd.f32 %v5875, %v6491
      %v6493 = vpop.f32.mrb[0].mxu0
      %v6494 = vadd.f32 %v5877, %v6493
      %v6495 = vand.u32 %v5616, 4294901760
      %6496 = vmatprep.mubr.f32.mxu0 %v6495
      %v6497 = vand.u32 %v5614, 4294901760
      %6498 = vmatmul.mubr.f32.gmra.mrb[0].mxu0 %v6497
      %v6499 = vpop.f32.mrb[0].mxu0
      %v6500 = vadd.f32 %v5891, %v6499
      %v6501 = vpop.f32.mrb[0].mxu0
      %v6502 = vadd.f32 %v5893, %v6501
      %v6503 = vand.u32 %v5623, 4294901760
      %6504 = vmatprep.mubr.f32.mxu0 %v6503
      %v6505 = vand.u32 %v5621, 4294901760
      %6506 = vmatmul.mubr.f32.gmra.mrb[0].mxu0 %v6505
      %v6507 = vpop.f32.mrb[0].mxu0
      %v6508 = vadd.f32 %v5907, %v6507
      %v6509 = vpop.f32.mrb[0].mxu0
      %v6510 = vadd.f32 %v5909, %v6509
      %v6511 = vand.u32 %v5630, 4294901760
      %6512 = vmatprep.mubr.f32.mxu0 %v6511
      %v6513 = vand.u32 %v5628, 4294901760
      %6514 = vmatmul.mubr.f32.gmra.mrb[0].mxu0 %v6513
      %v6515 = vpop.f32.mrb[0].mxu0
      %v6516 = vadd.f32 %v5923, %v6515
      %v6517 = vpop.f32.mrb[0].mxu0
      %v6518 = vadd.f32 %v5925, %v6517
      %v6519 = vand.u32 %v5637, 4294901760
      %6520 = vmatprep.mubr.f32.mxu0 %v6519
      %v6521 = vand.u32 %v5635, 4294901760
      %6522 = vmatmul.mubr.f32.gmra.mrb[0].mxu0 %v6521
      %v6523 = vpop.f32.mrb[0].mxu0
      %v6524 = vadd.f32 %v5939, %v6523
      %v6525 = vpop.f32.mrb[0].mxu0
      %v6526 = vadd.f32 %v5941, %v6525
      %v6527 = vand.u32 %v5644, 4294901760
      %6528 = vmatprep.mubr.f32.mxu0 %v6527
      %v6529 = vand.u32 %v5642, 4294901760
      %6530 = vmatmul.mubr.f32.gmra.mrb[0].mxu0 %v6529
      %v6531 = vpop.f32.mrb[0].mxu0
      %v6532 = vadd.f32 %v5955, %v6531
      %v6533 = vpop.f32.mrb[0].mxu0
      %v6534 = vadd.f32 %v5957, %v6533
      %v6535 = vand.u32 %v5651, 4294901760
      %6536 = vmatprep.mubr.f32.mxu0 %v6535
      %v6537 = vand.u32 %v5649, 4294901760
      %6538 = vmatmul.mubr.f32.gmra.mrb[0].mxu0 %v6537
      %v6539 = vpop.f32.mrb[0].mxu0
      %v6540 = vadd.f32 %v5971, %v6539
      %v6541 = vpop.f32.mrb[0].mxu0
      %v6542 = vadd.f32 %v5973, %v6541
      %v6543 = vand.u32 %v5658, 4294901760
      %6544 = vmatprep.mubr.f32.mxu0 %v6543
      %v6545 = vand.u32 %v5656, 4294901760
      %6546 = vmatmul.mubr.f32.gmra.mrb[0].mxu0 %v6545
      %v6547 = vpop.f32.mrb[0].mxu0
      %v6548 = vadd.f32 %v5987, %v6547
      %v6549 = vpop.f32.mrb[0].mxu0
      %v6550 = vadd.f32 %v5989, %v6549
      %v6551 = vand.u32 %v5665, 4294901760
      %6552 = vmatprep.mubr.f32.mxu0 %v6551
      %v6553 = vand.u32 %v5663, 4294901760
      %6554 = vmatmul.mubr.f32.gmra.mrb[0].mxu0 %v6553
      %v6555 = vpop.f32.mrb[0].mxu0
      %v6556 = vadd.f32 %v6003, %v6555
      %v6557 = vpop.f32.mrb[0].mxu0
      %v6558 = vadd.f32 %v6005, %v6557
      %v6559 = vand.u32 %v5672, 4294901760
      %6560 = vmatprep.mubr.f32.mxu0 %v6559
      %v6561 = vand.u32 %v5670, 4294901760
      %6562 = vmatmul.mubr.f32.gmra.mrb[0].mxu0 %v6561
      %v6563 = vpop.f32.mrb[0].mxu0
      %v6564 = vadd.f32 %v6019, %v6563
      %v6565 = vpop.f32.mrb[0].mxu0
      %v6566 = vadd.f32 %v6021, %v6565
      %v6567 = vand.u32 %v5679, 4294901760
      %6568 = vmatprep.mubr.f32.mxu0 %v6567
      %v6569 = vand.u32 %v5677, 4294901760
      %6570 = vmatmul.mubr.f32.gmra.mrb[0].mxu0 %v6569
      %v6571 = vpop.f32.mrb[0].mxu0
      %v6572 = vadd.f32 %v6035, %v6571
      %v6573 = vpop.f32.mrb[0].mxu0
      %v6574 = vadd.f32 %v6037, %v6573
      %v6575 = vand.u32 %v5686, 4294901760
      %6576 = vmatprep.mubr.f32.mxu0 %v6575
      %v6577 = vand.u32 %v5684, 4294901760
      %6578 = vmatmul.mubr.f32.gmra.mrb[0].mxu0 %v6577
      %v6579 = vpop.f32.mrb[0].mxu0
      %v6580 = vadd.f32 %v6051, %v6579
      %v6581 = vpop.f32.mrb[0].mxu0
      %v6582 = vadd.f32 %v6053, %v6581
      %v6583 = vand.u32 %v5693, 4294901760
      %6584 = vmatprep.mubr.f32.mxu0 %v6583
      %v6585 = vand.u32 %v5691, 4294901760
      %6586 = vmatmul.mubr.f32.gmra.mrb[0].mxu0 %v6585
      %v6587 = vpop.f32.mrb[0].mxu0
      %v6588 = vadd.f32 %v6067, %v6587
      %v6589 = vpop.f32.mrb[0].mxu0
      %v6590 = vadd.f32 %v6069, %v6589
      %v6591 = vand.u32 %v5700, 4294901760
      %6592 = vmatprep.mubr.f32.mxu0 %v6591
      %v6593 = vand.u32 %v5698, 4294901760
      %6594 = vmatmul.mubr.f32.gmra.mrb[0].mxu0 %v6593
      %v6595 = vpop.f32.mrb[0].mxu0
      %v6596 = vadd.f32 %v6083, %v6595
      %v6597 = vpop.f32.mrb[0].mxu0
      %v6598 = vadd.f32 %v6085, %v6597
      %6599 = vdwg.mxu0
      %v6600 = vand.u32 %v1771, 4294901760
      %v6601 = vsub.f32 %v1771, %v6600
      %6602 = vmatprep.subr.mxu0 %v6601
      %v6603 = vand.u32 %v1770, 4294901760
      %v6604 = vsub.f32 %v1770, %v6603
      %6605 = vmatpush1.msra.mxu0 %v6604
      %v6606 = vand.u32 %v1773, 4294901760
      %v6607 = vsub.f32 %v1773, %v6606
      %6608 = vmatprep.subr.mxu0 %v6607
      %v6609 = vand.u32 %v1772, 4294901760
      %v6610 = vsub.f32 %v1772, %v6609
      %6611 = vmatpush1.msra.mxu0 %v6610
      %v6612 = vand.u32 %v1775, 4294901760
      %v6613 = vsub.f32 %v1775, %v6612
      %6614 = vmatprep.subr.mxu0 %v6613
      %v6615 = vand.u32 %v1774, 4294901760
      %v6616 = vsub.f32 %v1774, %v6615
      %6617 = vmatpush1.msra.mxu0 %v6616
      %v6618 = vand.u32 %v1777, 4294901760
      %v6619 = vsub.f32 %v1777, %v6618
      %6620 = vmatprep.subr.mxu0 %v6619
      %v6621 = vand.u32 %v1776, 4294901760
      %v6622 = vsub.f32 %v1776, %v6621
      %6623 = vmatpush1.msra.mxu0 %v6622
      %v6624 = vand.u32 %v1779, 4294901760
      %v6625 = vsub.f32 %v1779, %v6624
      %6626 = vmatprep.subr.mxu0 %v6625
      %v6627 = vand.u32 %v1778, 4294901760
      %v6628 = vsub.f32 %v1778, %v6627
      %6629 = vmatpush1.msra.mxu0 %v6628
      %v6630 = vand.u32 %v1781, 4294901760
      %v6631 = vsub.f32 %v1781, %v6630
      %6632 = vmatprep.subr.mxu0 %v6631
      %v6633 = vand.u32 %v1780, 4294901760
      %v6634 = vsub.f32 %v1780, %v6633
      %6635 = vmatpush1.msra.mxu0 %v6634
      %v6636 = vand.u32 %v1783, 4294901760
      %v6637 = vsub.f32 %v1783, %v6636
      %6638 = vmatprep.subr.mxu0 %v6637
      %v6639 = vand.u32 %v1782, 4294901760
      %v6640 = vsub.f32 %v1782, %v6639
      %6641 = vmatpush1.msra.mxu0 %v6640
      %v6642 = vand.u32 %v1785, 4294901760
      %v6643 = vsub.f32 %v1785, %v6642
      %6644 = vmatprep.subr.mxu0 %v6643
      %v6645 = vand.u32 %v1784, 4294901760
      %v6646 = vsub.f32 %v1784, %v6645
      %6647 = vmatpush1.msra.mxu0 %v6646
      %v6648 = vand.u32 %v1787, 4294901760
      %v6649 = vsub.f32 %v1787, %v6648
      %6650 = vmatprep.subr.mxu0 %v6649
      %v6651 = vand.u32 %v1786, 4294901760
      %v6652 = vsub.f32 %v1786, %v6651
      %6653 = vmatpush1.msra.mxu0 %v6652
      %v6654 = vand.u32 %v1789, 4294901760
      %v6655 = vsub.f32 %v1789, %v6654
      %6656 = vmatprep.subr.mxu0 %v6655
      %v6657 = vand.u32 %v1788, 4294901760
      %v6658 = vsub.f32 %v1788, %v6657
      %6659 = vmatpush1.msra.mxu0 %v6658
      %v6660 = vand.u32 %v1791, 4294901760
      %v6661 = vsub.f32 %v1791, %v6660
      %6662 = vmatprep.subr.mxu0 %v6661
      %v6663 = vand.u32 %v1790, 4294901760
      %v6664 = vsub.f32 %v1790, %v6663
      %6665 = vmatpush1.msra.mxu0 %v6664
      %v6666 = vand.u32 %v1793, 4294901760
      %v6667 = vsub.f32 %v1793, %v6666
      %6668 = vmatprep.subr.mxu0 %v6667
      %v6669 = vand.u32 %v1792, 4294901760
      %v6670 = vsub.f32 %v1792, %v6669
      %6671 = vmatpush1.msra.mxu0 %v6670
      %v6672 = vand.u32 %v1795, 4294901760
      %v6673 = vsub.f32 %v1795, %v6672
      %6674 = vmatprep.subr.mxu0 %v6673
      %v6675 = vand.u32 %v1794, 4294901760
      %v6676 = vsub.f32 %v1794, %v6675
      %6677 = vmatpush1.msra.mxu0 %v6676
      %v6678 = vand.u32 %v1797, 4294901760
      %v6679 = vsub.f32 %v1797, %v6678
      %6680 = vmatprep.subr.mxu0 %v6679
      %v6681 = vand.u32 %v1796, 4294901760
      %v6682 = vsub.f32 %v1796, %v6681
      %6683 = vmatpush1.msra.mxu0 %v6682
      %v6684 = vand.u32 %v1799, 4294901760
      %v6685 = vsub.f32 %v1799, %v6684
      %6686 = vmatprep.subr.mxu0 %v6685
      %v6687 = vand.u32 %v1798, 4294901760
      %v6688 = vsub.f32 %v1798, %v6687
      %6689 = vmatpush1.msra.mxu0 %v6688
      %v6690 = vand.u32 %v1801, 4294901760
      %v6691 = vsub.f32 %v1801, %v6690
      %6692 = vmatprep.subr.mxu0 %v6691
      %v6693 = vand.u32 %v1800, 4294901760
      %v6694 = vsub.f32 %v1800, %v6693
      %6695 = vmatpush1.msra.mxu0 %v6694
      %v6696 = vand.u32 %v1803, 4294901760
      %v6697 = vsub.f32 %v1803, %v6696
      %6698 = vmatprep.subr.mxu0 %v6697
      %v6699 = vand.u32 %v1802, 4294901760
      %v6700 = vsub.f32 %v1802, %v6699
      %6701 = vmatpush1.msra.mxu0 %v6700
      %v6702 = vand.u32 %v1805, 4294901760
      %v6703 = vsub.f32 %v1805, %v6702
      %6704 = vmatprep.subr.mxu0 %v6703
      %v6705 = vand.u32 %v1804, 4294901760
      %v6706 = vsub.f32 %v1804, %v6705
      %6707 = vmatpush1.msra.mxu0 %v6706
      %v6708 = vand.u32 %v1807, 4294901760
      %v6709 = vsub.f32 %v1807, %v6708
      %6710 = vmatprep.subr.mxu0 %v6709
      %v6711 = vand.u32 %v1806, 4294901760
      %v6712 = vsub.f32 %v1806, %v6711
      %6713 = vmatpush1.msra.mxu0 %v6712
      %v6714 = vand.u32 %v1809, 4294901760
      %v6715 = vsub.f32 %v1809, %v6714
      %6716 = vmatprep.subr.mxu0 %v6715
      %v6717 = vand.u32 %v1808, 4294901760
      %v6718 = vsub.f32 %v1808, %v6717
      %6719 = vmatpush1.msra.mxu0 %v6718
      %v6720 = vand.u32 %v1811, 4294901760
      %v6721 = vsub.f32 %v1811, %v6720
      %6722 = vmatprep.subr.mxu0 %v6721
      %v6723 = vand.u32 %v1810, 4294901760
      %v6724 = vsub.f32 %v1810, %v6723
      %6725 = vmatpush1.msra.mxu0 %v6724
      %v6726 = vand.u32 %v1813, 4294901760
      %v6727 = vsub.f32 %v1813, %v6726
      %6728 = vmatprep.subr.mxu0 %v6727
      %v6729 = vand.u32 %v1812, 4294901760
      %v6730 = vsub.f32 %v1812, %v6729
      %6731 = vmatpush1.msra.mxu0 %v6730
      %v6732 = vand.u32 %v1815, 4294901760
      %v6733 = vsub.f32 %v1815, %v6732
      %6734 = vmatprep.subr.mxu0 %v6733
      %v6735 = vand.u32 %v1814, 4294901760
      %v6736 = vsub.f32 %v1814, %v6735
      %6737 = vmatpush1.msra.mxu0 %v6736
      %v6738 = vand.u32 %v1817, 4294901760
      %v6739 = vsub.f32 %v1817, %v6738
      %6740 = vmatprep.subr.mxu0 %v6739
      %v6741 = vand.u32 %v1816, 4294901760
      %v6742 = vsub.f32 %v1816, %v6741
      %6743 = vmatpush1.msra.mxu0 %v6742
      %v6744 = vand.u32 %v1819, 4294901760
      %v6745 = vsub.f32 %v1819, %v6744
      %6746 = vmatprep.subr.mxu0 %v6745
      %v6747 = vand.u32 %v1818, 4294901760
      %v6748 = vsub.f32 %v1818, %v6747
      %6749 = vmatpush1.msra.mxu0 %v6748
      %v6750 = vand.u32 %v1821, 4294901760
      %v6751 = vsub.f32 %v1821, %v6750
      %6752 = vmatprep.subr.mxu0 %v6751
      %v6753 = vand.u32 %v1820, 4294901760
      %v6754 = vsub.f32 %v1820, %v6753
      %6755 = vmatpush1.msra.mxu0 %v6754
      %v6756 = vand.u32 %v1823, 4294901760
      %v6757 = vsub.f32 %v1823, %v6756
      %6758 = vmatprep.subr.mxu0 %v6757
      %v6759 = vand.u32 %v1822, 4294901760
      %v6760 = vsub.f32 %v1822, %v6759
      %6761 = vmatpush1.msra.mxu0 %v6760
      %v6762 = vand.u32 %v1825, 4294901760
      %v6763 = vsub.f32 %v1825, %v6762
      %6764 = vmatprep.subr.mxu0 %v6763
      %v6765 = vand.u32 %v1824, 4294901760
      %v6766 = vsub.f32 %v1824, %v6765
      %6767 = vmatpush1.msra.mxu0 %v6766
      %v6768 = vand.u32 %v1827, 4294901760
      %v6769 = vsub.f32 %v1827, %v6768
      %6770 = vmatprep.subr.mxu0 %v6769
      %v6771 = vand.u32 %v1826, 4294901760
      %v6772 = vsub.f32 %v1826, %v6771
      %6773 = vmatpush1.msra.mxu0 %v6772
      %v6774 = vand.u32 %v1829, 4294901760
      %v6775 = vsub.f32 %v1829, %v6774
      %6776 = vmatprep.subr.mxu0 %v6775
      %v6777 = vand.u32 %v1828, 4294901760
      %v6778 = vsub.f32 %v1828, %v6777
      %6779 = vmatpush1.msra.mxu0 %v6778
      %v6780 = vand.u32 %v1831, 4294901760
      %v6781 = vsub.f32 %v1831, %v6780
      %6782 = vmatprep.subr.mxu0 %v6781
      %v6783 = vand.u32 %v1830, 4294901760
      %v6784 = vsub.f32 %v1830, %v6783
      %6785 = vmatpush1.msra.mxu0 %v6784
      %v6786 = vand.u32 %v1833, 4294901760
      %v6787 = vsub.f32 %v1833, %v6786
      %6788 = vmatprep.subr.mxu0 %v6787
      %v6789 = vand.u32 %v1832, 4294901760
      %v6790 = vsub.f32 %v1832, %v6789
      %6791 = vmatpush1.msra.mxu0 %v6790
      %v6792 = vand.u32 %v5595, 4294901760
      %v6793 = vsub.f32 %v5595, %v6792
      %6794 = vmatprep.mubr.f32.mxu0 %v6793
      %v6795 = vand.u32 %v5593, 4294901760
      %v6796 = vsub.f32 %v5593, %v6795
      %6797 = vmatmul.mubr.f32.gmra.mrb[0].mxu0 %v6796
      %v6798 = vpop.f32.mrb[0].mxu0
      %v6799 = vadd.f32 %v6476, %v6798
      %v6800 = vpop.f32.mrb[0].mxu0
      %v6801 = vadd.f32 %v6478, %v6800
      %v6802 = vand.u32 %v5602, 4294901760
      %v6803 = vsub.f32 %v5602, %v6802
      %6804 = vmatprep.mubr.f32.mxu0 %v6803
      %v6805 = vand.u32 %v5600, 4294901760
      %v6806 = vsub.f32 %v5600, %v6805
      %6807 = vmatmul.mubr.f32.gmra.mrb[0].mxu0 %v6806
      %v6808 = vpop.f32.mrb[0].mxu0
      %v6809 = vadd.f32 %v6484, %v6808
      %v6810 = vpop.f32.mrb[0].mxu0
      %v6811 = vadd.f32 %v6486, %v6810
      %v6812 = vand.u32 %v5609, 4294901760
      %v6813 = vsub.f32 %v5609, %v6812
      %6814 = vmatprep.mubr.f32.mxu0 %v6813
      %v6815 = vand.u32 %v5607, 4294901760
      %v6816 = vsub.f32 %v5607, %v6815
      %6817 = vmatmul.mubr.f32.gmra.mrb[0].mxu0 %v6816
      %v6818 = vpop.f32.mrb[0].mxu0
      %v6819 = vadd.f32 %v6492, %v6818
      %v6820 = vpop.f32.mrb[0].mxu0
      %v6821 = vadd.f32 %v6494, %v6820
      %v6822 = vand.u32 %v5616, 4294901760
      %v6823 = vsub.f32 %v5616, %v6822
      %6824 = vmatprep.mubr.f32.mxu0 %v6823
      %v6825 = vand.u32 %v5614, 4294901760
      %v6826 = vsub.f32 %v5614, %v6825
      %6827 = vmatmul.mubr.f32.gmra.mrb[0].mxu0 %v6826
      %v6828 = vpop.f32.mrb[0].mxu0
      %v6829 = vadd.f32 %v6500, %v6828
      %v6830 = vpop.f32.mrb[0].mxu0
      %v6831 = vadd.f32 %v6502, %v6830
      %v6832 = vand.u32 %v5623, 4294901760
      %v6833 = vsub.f32 %v5623, %v6832
      %6834 = vmatprep.mubr.f32.mxu0 %v6833
      %v6835 = vand.u32 %v5621, 4294901760
      %v6836 = vsub.f32 %v5621, %v6835
      %6837 = vmatmul.mubr.f32.gmra.mrb[0].mxu0 %v6836
      %v6838 = vpop.f32.mrb[0].mxu0
      %v6839 = vadd.f32 %v6508, %v6838
      %v6840 = vpop.f32.mrb[0].mxu0
      %v6841 = vadd.f32 %v6510, %v6840
      %v6842 = vand.u32 %v5630, 4294901760
      %v6843 = vsub.f32 %v5630, %v6842
      %6844 = vmatprep.mubr.f32.mxu0 %v6843
      %v6845 = vand.u32 %v5628, 4294901760
      %v6846 = vsub.f32 %v5628, %v6845
      %6847 = vmatmul.mubr.f32.gmra.mrb[0].mxu0 %v6846
      %v6848 = vpop.f32.mrb[0].mxu0
      %v6849 = vadd.f32 %v6516, %v6848
      %v6850 = vpop.f32.mrb[0].mxu0
      %v6851 = vadd.f32 %v6518, %v6850
      %v6852 = vand.u32 %v5637, 4294901760
      %v6853 = vsub.f32 %v5637, %v6852
      %6854 = vmatprep.mubr.f32.mxu0 %v6853
      %v6855 = vand.u32 %v5635, 4294901760
      %v6856 = vsub.f32 %v5635, %v6855
      %6857 = vmatmul.mubr.f32.gmra.mrb[0].mxu0 %v6856
      %v6858 = vpop.f32.mrb[0].mxu0
      %v6859 = vadd.f32 %v6524, %v6858
      %v6860 = vpop.f32.mrb[0].mxu0
      %v6861 = vadd.f32 %v6526, %v6860
      %v6862 = vand.u32 %v5644, 4294901760
      %v6863 = vsub.f32 %v5644, %v6862
      %6864 = vmatprep.mubr.f32.mxu0 %v6863
      %v6865 = vand.u32 %v5642, 4294901760
      %v6866 = vsub.f32 %v5642, %v6865
      %6867 = vmatmul.mubr.f32.gmra.mrb[0].mxu0 %v6866
      %v6868 = vpop.f32.mrb[0].mxu0
      %v6869 = vadd.f32 %v6532, %v6868
      %v6870 = vpop.f32.mrb[0].mxu0
      %v6871 = vadd.f32 %v6534, %v6870
      %v6872 = vand.u32 %v5651, 4294901760
      %v6873 = vsub.f32 %v5651, %v6872
      %6874 = vmatprep.mubr.f32.mxu0 %v6873
      %v6875 = vand.u32 %v5649, 4294901760
      %v6876 = vsub.f32 %v5649, %v6875
      %6877 = vmatmul.mubr.f32.gmra.mrb[0].mxu0 %v6876
      %v6878 = vpop.f32.mrb[0].mxu0
      %v6879 = vadd.f32 %v6540, %v6878
      %v6880 = vpop.f32.mrb[0].mxu0
      %v6881 = vadd.f32 %v6542, %v6880
      %v6882 = vand.u32 %v5658, 4294901760
      %v6883 = vsub.f32 %v5658, %v6882
      %6884 = vmatprep.mubr.f32.mxu0 %v6883
      %v6885 = vand.u32 %v5656, 4294901760
      %v6886 = vsub.f32 %v5656, %v6885
      %6887 = vmatmul.mubr.f32.gmra.mrb[0].mxu0 %v6886
      %v6888 = vpop.f32.mrb[0].mxu0
      %v6889 = vadd.f32 %v6548, %v6888
      %v6890 = vpop.f32.mrb[0].mxu0
      %v6891 = vadd.f32 %v6550, %v6890
      %v6892 = vand.u32 %v5665, 4294901760
      %v6893 = vsub.f32 %v5665, %v6892
      %6894 = vmatprep.mubr.f32.mxu0 %v6893
      %v6895 = vand.u32 %v5663, 4294901760
      %v6896 = vsub.f32 %v5663, %v6895
      %6897 = vmatmul.mubr.f32.gmra.mrb[0].mxu0 %v6896
      %v6898 = vpop.f32.mrb[0].mxu0
      %v6899 = vadd.f32 %v6556, %v6898
      %v6900 = vpop.f32.mrb[0].mxu0
      %v6901 = vadd.f32 %v6558, %v6900
      %v6902 = vand.u32 %v5672, 4294901760
      %v6903 = vsub.f32 %v5672, %v6902
      %6904 = vmatprep.mubr.f32.mxu0 %v6903
      %v6905 = vand.u32 %v5670, 4294901760
      %v6906 = vsub.f32 %v5670, %v6905
      %6907 = vmatmul.mubr.f32.gmra.mrb[0].mxu0 %v6906
      %v6908 = vpop.f32.mrb[0].mxu0
      %v6909 = vadd.f32 %v6564, %v6908
      %v6910 = vpop.f32.mrb[0].mxu0
      %v6911 = vadd.f32 %v6566, %v6910
      %v6912 = vand.u32 %v5679, 4294901760
      %v6913 = vsub.f32 %v5679, %v6912
      %6914 = vmatprep.mubr.f32.mxu0 %v6913
      %v6915 = vand.u32 %v5677, 4294901760
      %v6916 = vsub.f32 %v5677, %v6915
      %6917 = vmatmul.mubr.f32.gmra.mrb[0].mxu0 %v6916
      %v6918 = vpop.f32.mrb[0].mxu0
      %v6919 = vadd.f32 %v6572, %v6918
      %v6920 = vpop.f32.mrb[0].mxu0
      %v6921 = vadd.f32 %v6574, %v6920
      %v6922 = vand.u32 %v5686, 4294901760
      %v6923 = vsub.f32 %v5686, %v6922
      %6924 = vmatprep.mubr.f32.mxu0 %v6923
      %v6925 = vand.u32 %v5684, 4294901760
      %v6926 = vsub.f32 %v5684, %v6925
      %6927 = vmatmul.mubr.f32.gmra.mrb[0].mxu0 %v6926
      %v6928 = vpop.f32.mrb[0].mxu0
      %v6929 = vadd.f32 %v6580, %v6928
      %v6930 = vpop.f32.mrb[0].mxu0
      %v6931 = vadd.f32 %v6582, %v6930
      %v6932 = vand.u32 %v5693, 4294901760
      %v6933 = vsub.f32 %v5693, %v6932
      %6934 = vmatprep.mubr.f32.mxu0 %v6933
      %v6935 = vand.u32 %v5691, 4294901760
      %v6936 = vsub.f32 %v5691, %v6935
      %6937 = vmatmul.mubr.f32.gmra.mrb[0].mxu0 %v6936
      %v6938 = vpop.f32.mrb[0].mxu0
      %v6939 = vadd.f32 %v6588, %v6938
      %v6940 = vpop.f32.mrb[0].mxu0
      %v6941 = vadd.f32 %v6590, %v6940
      %v6942 = vand.u32 %v5700, 4294901760
      %v6943 = vsub.f32 %v5700, %v6942
      %6944 = vmatprep.mubr.f32.mxu0 %v6943
      %v6945 = vand.u32 %v5698, 4294901760
      %v6946 = vsub.f32 %v5698, %v6945
      %6947 = vmatmul.mubr.f32.gmra.mrb[0].mxu0 %v6946
      %v6948 = vpop.f32.mrb[0].mxu0
      %v6949 = vadd.f32 %v6596, %v6948
      %v6950 = vpop.f32.mrb[0].mxu0
      %v6951 = vadd.f32 %v6598, %v6950
      %6952 = vdwg.mxu0
      %v6953 = vand.u32 %v1771, 4294901760
      %6954 = vmatprep.subr.mxu0 %v6953
      %v6955 = vand.u32 %v1770, 4294901760
      %6956 = vmatpush1.msra.mxu0 %v6955
      %v6957 = vand.u32 %v1773, 4294901760
      %6958 = vmatprep.subr.mxu0 %v6957
      %v6959 = vand.u32 %v1772, 4294901760
      %6960 = vmatpush1.msra.mxu0 %v6959
      %v6961 = vand.u32 %v1775, 4294901760
      %6962 = vmatprep.subr.mxu0 %v6961
      %v6963 = vand.u32 %v1774, 4294901760
      %6964 = vmatpush1.msra.mxu0 %v6963
      %v6965 = vand.u32 %v1777, 4294901760
      %6966 = vmatprep.subr.mxu0 %v6965
      %v6967 = vand.u32 %v1776, 4294901760
      %6968 = vmatpush1.msra.mxu0 %v6967
      %v6969 = vand.u32 %v1779, 4294901760
      %6970 = vmatprep.subr.mxu0 %v6969
      %v6971 = vand.u32 %v1778, 4294901760
      %6972 = vmatpush1.msra.mxu0 %v6971
      %v6973 = vand.u32 %v1781, 4294901760
      %6974 = vmatprep.subr.mxu0 %v6973
      %v6975 = vand.u32 %v1780, 4294901760
      %6976 = vmatpush1.msra.mxu0 %v6975
      %v6977 = vand.u32 %v1783, 4294901760
      %6978 = vmatprep.subr.mxu0 %v6977
      %v6979 = vand.u32 %v1782, 4294901760
      %6980 = vmatpush1.msra.mxu0 %v6979
      %v6981 = vand.u32 %v1785, 4294901760
      %6982 = vmatprep.subr.mxu0 %v6981
      %v6983 = vand.u32 %v1784, 4294901760
      %6984 = vmatpush1.msra.mxu0 %v6983
      %v6985 = vand.u32 %v1787, 4294901760
      %6986 = vmatprep.subr.mxu0 %v6985
      %v6987 = vand.u32 %v1786, 4294901760
      %6988 = vmatpush1.msra.mxu0 %v6987
      %v6989 = vand.u32 %v1789, 4294901760
      %6990 = vmatprep.subr.mxu0 %v6989
      %v6991 = vand.u32 %v1788, 4294901760
      %6992 = vmatpush1.msra.mxu0 %v6991
      %v6993 = vand.u32 %v1791, 4294901760
      %6994 = vmatprep.subr.mxu0 %v6993
      %v6995 = vand.u32 %v1790, 4294901760
      %6996 = vmatpush1.msra.mxu0 %v6995
      %v6997 = vand.u32 %v1793, 4294901760
      %6998 = vmatprep.subr.mxu0 %v6997
      %v6999 = vand.u32 %v1792, 4294901760
      %7000 = vmatpush1.msra.mxu0 %v6999
      %v7001 = vand.u32 %v1795, 4294901760
      %7002 = vmatprep.subr.mxu0 %v7001
      %v7003 = vand.u32 %v1794, 4294901760
      %7004 = vmatpush1.msra.mxu0 %v7003
      %v7005 = vand.u32 %v1797, 4294901760
      %7006 = vmatprep.subr.mxu0 %v7005
      %v7007 = vand.u32 %v1796, 4294901760
      %7008 = vmatpush1.msra.mxu0 %v7007
      %v7009 = vand.u32 %v1799, 4294901760
      %7010 = vmatprep.subr.mxu0 %v7009
      %v7011 = vand.u32 %v1798, 4294901760
      %7012 = vmatpush1.msra.mxu0 %v7011
      %v7013 = vand.u32 %v1801, 4294901760
      %7014 = vmatprep.subr.mxu0 %v7013
      %v7015 = vand.u32 %v1800, 4294901760
      %7016 = vmatpush1.msra.mxu0 %v7015
      %v7017 = vand.u32 %v1803, 4294901760
      %7018 = vmatprep.subr.mxu0 %v7017
      %v7019 = vand.u32 %v1802, 4294901760
      %7020 = vmatpush1.msra.mxu0 %v7019
      %v7021 = vand.u32 %v1805, 4294901760
      %7022 = vmatprep.subr.mxu0 %v7021
      %v7023 = vand.u32 %v1804, 4294901760
      %7024 = vmatpush1.msra.mxu0 %v7023
      %v7025 = vand.u32 %v1807, 4294901760
      %7026 = vmatprep.subr.mxu0 %v7025
      %v7027 = vand.u32 %v1806, 4294901760
      %7028 = vmatpush1.msra.mxu0 %v7027
      %v7029 = vand.u32 %v1809, 4294901760
      %7030 = vmatprep.subr.mxu0 %v7029
      %v7031 = vand.u32 %v1808, 4294901760
      %7032 = vmatpush1.msra.mxu0 %v7031
      %v7033 = vand.u32 %v1811, 4294901760
      %7034 = vmatprep.subr.mxu0 %v7033
      %v7035 = vand.u32 %v1810, 4294901760
      %7036 = vmatpush1.msra.mxu0 %v7035
      %v7037 = vand.u32 %v1813, 4294901760
      %7038 = vmatprep.subr.mxu0 %v7037
      %v7039 = vand.u32 %v1812, 4294901760
      %7040 = vmatpush1.msra.mxu0 %v7039
      %v7041 = vand.u32 %v1815, 4294901760
      %7042 = vmatprep.subr.mxu0 %v7041
      %v7043 = vand.u32 %v1814, 4294901760
      %7044 = vmatpush1.msra.mxu0 %v7043
      %v7045 = vand.u32 %v1817, 4294901760
      %7046 = vmatprep.subr.mxu0 %v7045
      %v7047 = vand.u32 %v1816, 4294901760
      %7048 = vmatpush1.msra.mxu0 %v7047
      %v7049 = vand.u32 %v1819, 4294901760
      %7050 = vmatprep.subr.mxu0 %v7049
      %v7051 = vand.u32 %v1818, 4294901760
      %7052 = vmatpush1.msra.mxu0 %v7051
      %v7053 = vand.u32 %v1821, 4294901760
      %7054 = vmatprep.subr.mxu0 %v7053
      %v7055 = vand.u32 %v1820, 4294901760
      %7056 = vmatpush1.msra.mxu0 %v7055
      %v7057 = vand.u32 %v1823, 4294901760
      %7058 = vmatprep.subr.mxu0 %v7057
      %v7059 = vand.u32 %v1822, 4294901760
      %7060 = vmatpush1.msra.mxu0 %v7059
      %v7061 = vand.u32 %v1825, 4294901760
      %7062 = vmatprep.subr.mxu0 %v7061
      %v7063 = vand.u32 %v1824, 4294901760
      %7064 = vmatpush1.msra.mxu0 %v7063
      %v7065 = vand.u32 %v1827, 4294901760
      %7066 = vmatprep.subr.mxu0 %v7065
      %v7067 = vand.u32 %v1826, 4294901760
      %7068 = vmatpush1.msra.mxu0 %v7067
      %v7069 = vand.u32 %v1829, 4294901760
      %7070 = vmatprep.subr.mxu0 %v7069
      %v7071 = vand.u32 %v1828, 4294901760
      %7072 = vmatpush1.msra.mxu0 %v7071
      %v7073 = vand.u32 %v1831, 4294901760
      %7074 = vmatprep.subr.mxu0 %v7073
      %v7075 = vand.u32 %v1830, 4294901760
      %7076 = vmatpush1.msra.mxu0 %v7075
      %v7077 = vand.u32 %v1833, 4294901760
      %7078 = vmatprep.subr.mxu0 %v7077
      %v7079 = vand.u32 %v1832, 4294901760
      %7080 = vmatpush1.msra.mxu0 %v7079
      %v7081 = vand.u32 %v5595, 4294901760
      %v7082 = vsub.f32 %v5595, %v7081
      %v7083 = vand.u32 %v7082, 4294901760
      %7084 = vmatprep.mubr.f32.mxu0 %v7083
      %v7085 = vand.u32 %v5593, 4294901760
      %v7086 = vsub.f32 %v5593, %v7085
      %v7087 = vand.u32 %v7086, 4294901760
      %7088 = vmatmul.mubr.f32.gmra.mrb[0].mxu0 %v7087
      %v7089 = vpop.f32.mrb[0].mxu0
      %v7090 = vadd.f32 %v6799, %v7089
      %v7091 = vpop.f32.mrb[0].mxu0
      %v7092 = vadd.f32 %v6801, %v7091
      %v7093 = vand.u32 %v5602, 4294901760
      %v7094 = vsub.f32 %v5602, %v7093
      %v7095 = vand.u32 %v7094, 4294901760
      %7096 = vmatprep.mubr.f32.mxu0 %v7095
      %v7097 = vand.u32 %v5600, 4294901760
      %v7098 = vsub.f32 %v5600, %v7097
      %v7099 = vand.u32 %v7098, 4294901760
      %7100 = vmatmul.mubr.f32.gmra.mrb[0].mxu0 %v7099
      %v7101 = vpop.f32.mrb[0].mxu0
      %v7102 = vadd.f32 %v6809, %v7101
      %v7103 = vpop.f32.mrb[0].mxu0
      %v7104 = vadd.f32 %v6811, %v7103
      %v7105 = vand.u32 %v5609, 4294901760
      %v7106 = vsub.f32 %v5609, %v7105
      %v7107 = vand.u32 %v7106, 4294901760
      %7108 = vmatprep.mubr.f32.mxu0 %v7107
      %v7109 = vand.u32 %v5607, 4294901760
      %v7110 = vsub.f32 %v5607, %v7109
      %v7111 = vand.u32 %v7110, 4294901760
      %7112 = vmatmul.mubr.f32.gmra.mrb[0].mxu0 %v7111
      %v7113 = vpop.f32.mrb[0].mxu0
      %v7114 = vadd.f32 %v6819, %v7113
      %v7115 = vpop.f32.mrb[0].mxu0
      %v7116 = vadd.f32 %v6821, %v7115
      %v7117 = vand.u32 %v5616, 4294901760
      %v7118 = vsub.f32 %v5616, %v7117
      %v7119 = vand.u32 %v7118, 4294901760
      %7120 = vmatprep.mubr.f32.mxu0 %v7119
      %v7121 = vand.u32 %v5614, 4294901760
      %v7122 = vsub.f32 %v5614, %v7121
      %v7123 = vand.u32 %v7122, 4294901760
      %7124 = vmatmul.mubr.f32.gmra.mrb[0].mxu0 %v7123
      %v7125 = vpop.f32.mrb[0].mxu0
      %v7126 = vadd.f32 %v6829, %v7125
      %v7127 = vpop.f32.mrb[0].mxu0
      %v7128 = vadd.f32 %v6831, %v7127
      %v7129 = vand.u32 %v5623, 4294901760
      %v7130 = vsub.f32 %v5623, %v7129
      %v7131 = vand.u32 %v7130, 4294901760
      %7132 = vmatprep.mubr.f32.mxu0 %v7131
      %v7133 = vand.u32 %v5621, 4294901760
      %v7134 = vsub.f32 %v5621, %v7133
      %v7135 = vand.u32 %v7134, 4294901760
      %7136 = vmatmul.mubr.f32.gmra.mrb[0].mxu0 %v7135
      %v7137 = vpop.f32.mrb[0].mxu0
      %v7138 = vadd.f32 %v6839, %v7137
      %v7139 = vpop.f32.mrb[0].mxu0
      %v7140 = vadd.f32 %v6841, %v7139
      %v7141 = vand.u32 %v5630, 4294901760
      %v7142 = vsub.f32 %v5630, %v7141
      %v7143 = vand.u32 %v7142, 4294901760
      %7144 = vmatprep.mubr.f32.mxu0 %v7143
      %v7145 = vand.u32 %v5628, 4294901760
      %v7146 = vsub.f32 %v5628, %v7145
      %v7147 = vand.u32 %v7146, 4294901760
      %7148 = vmatmul.mubr.f32.gmra.mrb[0].mxu0 %v7147
      %v7149 = vpop.f32.mrb[0].mxu0
      %v7150 = vadd.f32 %v6849, %v7149
      %v7151 = vpop.f32.mrb[0].mxu0
      %v7152 = vadd.f32 %v6851, %v7151
      %v7153 = vand.u32 %v5637, 4294901760
      %v7154 = vsub.f32 %v5637, %v7153
      %v7155 = vand.u32 %v7154, 4294901760
      %7156 = vmatprep.mubr.f32.mxu0 %v7155
      %v7157 = vand.u32 %v5635, 4294901760
      %v7158 = vsub.f32 %v5635, %v7157
      %v7159 = vand.u32 %v7158, 4294901760
      %7160 = vmatmul.mubr.f32.gmra.mrb[0].mxu0 %v7159
      %v7161 = vpop.f32.mrb[0].mxu0
      %v7162 = vadd.f32 %v6859, %v7161
      %v7163 = vpop.f32.mrb[0].mxu0
      %v7164 = vadd.f32 %v6861, %v7163
      %v7165 = vand.u32 %v5644, 4294901760
      %v7166 = vsub.f32 %v5644, %v7165
      %v7167 = vand.u32 %v7166, 4294901760
      %7168 = vmatprep.mubr.f32.mxu0 %v7167
      %v7169 = vand.u32 %v5642, 4294901760
      %v7170 = vsub.f32 %v5642, %v7169
      %v7171 = vand.u32 %v7170, 4294901760
      %7172 = vmatmul.mubr.f32.gmra.mrb[0].mxu0 %v7171
      %v7173 = vpop.f32.mrb[0].mxu0
      %v7174 = vadd.f32 %v6869, %v7173
      %v7175 = vpop.f32.mrb[0].mxu0
      %v7176 = vadd.f32 %v6871, %v7175
      %v7177 = vand.u32 %v5651, 4294901760
      %v7178 = vsub.f32 %v5651, %v7177
      %v7179 = vand.u32 %v7178, 4294901760
      %7180 = vmatprep.mubr.f32.mxu0 %v7179
      %v7181 = vand.u32 %v5649, 4294901760
      %v7182 = vsub.f32 %v5649, %v7181
      %v7183 = vand.u32 %v7182, 4294901760
      %7184 = vmatmul.mubr.f32.gmra.mrb[0].mxu0 %v7183
      %v7185 = vpop.f32.mrb[0].mxu0
      %v7186 = vadd.f32 %v6879, %v7185
      %v7187 = vpop.f32.mrb[0].mxu0
      %v7188 = vadd.f32 %v6881, %v7187
      %v7189 = vand.u32 %v5658, 4294901760
      %v7190 = vsub.f32 %v5658, %v7189
      %v7191 = vand.u32 %v7190, 4294901760
      %7192 = vmatprep.mubr.f32.mxu0 %v7191
      %v7193 = vand.u32 %v5656, 4294901760
      %v7194 = vsub.f32 %v5656, %v7193
      %v7195 = vand.u32 %v7194, 4294901760
      %7196 = vmatmul.mubr.f32.gmra.mrb[0].mxu0 %v7195
      %v7197 = vpop.f32.mrb[0].mxu0
      %v7198 = vadd.f32 %v6889, %v7197
      %v7199 = vpop.f32.mrb[0].mxu0
      %v7200 = vadd.f32 %v6891, %v7199
      %v7201 = vand.u32 %v5665, 4294901760
      %v7202 = vsub.f32 %v5665, %v7201
      %v7203 = vand.u32 %v7202, 4294901760
      %7204 = vmatprep.mubr.f32.mxu0 %v7203
      %v7205 = vand.u32 %v5663, 4294901760
      %v7206 = vsub.f32 %v5663, %v7205
      %v7207 = vand.u32 %v7206, 4294901760
      %7208 = vmatmul.mubr.f32.gmra.mrb[0].mxu0 %v7207
      %v7209 = vpop.f32.mrb[0].mxu0
      %v7210 = vadd.f32 %v6899, %v7209
      %v7211 = vpop.f32.mrb[0].mxu0
      %v7212 = vadd.f32 %v6901, %v7211
      %v7213 = vand.u32 %v5672, 4294901760
      %v7214 = vsub.f32 %v5672, %v7213
      %v7215 = vand.u32 %v7214, 4294901760
      %7216 = vmatprep.mubr.f32.mxu0 %v7215
      %v7217 = vand.u32 %v5670, 4294901760
      %v7218 = vsub.f32 %v5670, %v7217
      %v7219 = vand.u32 %v7218, 4294901760
      %7220 = vmatmul.mubr.f32.gmra.mrb[0].mxu0 %v7219
      %v7221 = vpop.f32.mrb[0].mxu0
      %v7222 = vadd.f32 %v6909, %v7221
      %v7223 = vpop.f32.mrb[0].mxu0
      %v7224 = vadd.f32 %v6911, %v7223
      %v7225 = vand.u32 %v5679, 4294901760
      %v7226 = vsub.f32 %v5679, %v7225
      %v7227 = vand.u32 %v7226, 4294901760
      %7228 = vmatprep.mubr.f32.mxu0 %v7227
      %v7229 = vand.u32 %v5677, 4294901760
      %v7230 = vsub.f32 %v5677, %v7229
      %v7231 = vand.u32 %v7230, 4294901760
      %7232 = vmatmul.mubr.f32.gmra.mrb[0].mxu0 %v7231
      %v7233 = vpop.f32.mrb[0].mxu0
      %v7234 = vadd.f32 %v6919, %v7233
      %v7235 = vpop.f32.mrb[0].mxu0
      %v7236 = vadd.f32 %v6921, %v7235
      %v7237 = vand.u32 %v5686, 4294901760
      %v7238 = vsub.f32 %v5686, %v7237
      %v7239 = vand.u32 %v7238, 4294901760
      %7240 = vmatprep.mubr.f32.mxu0 %v7239
      %v7241 = vand.u32 %v5684, 4294901760
      %v7242 = vsub.f32 %v5684, %v7241
      %v7243 = vand.u32 %v7242, 4294901760
      %7244 = vmatmul.mubr.f32.gmra.mrb[0].mxu0 %v7243
      %v7245 = vpop.f32.mrb[0].mxu0
      %v7246 = vadd.f32 %v6929, %v7245
      %v7247 = vpop.f32.mrb[0].mxu0
      %v7248 = vadd.f32 %v6931, %v7247
      %v7249 = vand.u32 %v5693, 4294901760
      %v7250 = vsub.f32 %v5693, %v7249
      %v7251 = vand.u32 %v7250, 4294901760
      %7252 = vmatprep.mubr.f32.mxu0 %v7251
      %v7253 = vand.u32 %v5691, 4294901760
      %v7254 = vsub.f32 %v5691, %v7253
      %v7255 = vand.u32 %v7254, 4294901760
      %7256 = vmatmul.mubr.f32.gmra.mrb[0].mxu0 %v7255
      %v7257 = vpop.f32.mrb[0].mxu0
      %v7258 = vadd.f32 %v6939, %v7257
      %v7259 = vpop.f32.mrb[0].mxu0
      %v7260 = vadd.f32 %v6941, %v7259
      %v7261 = vand.u32 %v5700, 4294901760
      %v7262 = vsub.f32 %v5700, %v7261
      %v7263 = vand.u32 %v7262, 4294901760
      %7264 = vmatprep.mubr.f32.mxu0 %v7263
      %v7265 = vand.u32 %v5698, 4294901760
      %v7266 = vsub.f32 %v5698, %v7265
      %v7267 = vand.u32 %v7266, 4294901760
      %7268 = vmatmul.mubr.f32.gmra.mrb[0].mxu0 %v7267
      %v7269 = vpop.f32.mrb[0].mxu0
      %v7270 = vadd.f32 %v6949, %v7269
      %v7271 = vpop.f32.mrb[0].mxu0
      %v7272 = vadd.f32 %v6951, %v7271
      %7273 = vdwg.mxu0
      %v7274 = vand.u32 %v1771, 4294901760
      %v7275 = vsub.f32 %v1771, %v7274
      %v7276 = vand.u32 %v7275, 4294901760
      %7277 = vmatprep.subr.mxu0 %v7276
      %v7278 = vand.u32 %v1770, 4294901760
      %v7279 = vsub.f32 %v1770, %v7278
      %v7280 = vand.u32 %v7279, 4294901760
      %7281 = vmatpush1.msra.mxu0 %v7280
      %v7282 = vand.u32 %v1773, 4294901760
      %v7283 = vsub.f32 %v1773, %v7282
      %v7284 = vand.u32 %v7283, 4294901760
      %7285 = vmatprep.subr.mxu0 %v7284
      %v7286 = vand.u32 %v1772, 4294901760
      %v7287 = vsub.f32 %v1772, %v7286
      %v7288 = vand.u32 %v7287, 4294901760
      %7289 = vmatpush1.msra.mxu0 %v7288
      %v7290 = vand.u32 %v1775, 4294901760
      %v7291 = vsub.f32 %v1775, %v7290
      %v7292 = vand.u32 %v7291, 4294901760
      %7293 = vmatprep.subr.mxu0 %v7292
      %v7294 = vand.u32 %v1774, 4294901760
      %v7295 = vsub.f32 %v1774, %v7294
      %v7296 = vand.u32 %v7295, 4294901760
      %7297 = vmatpush1.msra.mxu0 %v7296
      %v7298 = vand.u32 %v1777, 4294901760
      %v7299 = vsub.f32 %v1777, %v7298
      %v7300 = vand.u32 %v7299, 4294901760
      %7301 = vmatprep.subr.mxu0 %v7300
      %v7302 = vand.u32 %v1776, 4294901760
      %v7303 = vsub.f32 %v1776, %v7302
      %v7304 = vand.u32 %v7303, 4294901760
      %7305 = vmatpush1.msra.mxu0 %v7304
      %v7306 = vand.u32 %v1779, 4294901760
      %v7307 = vsub.f32 %v1779, %v7306
      %v7308 = vand.u32 %v7307, 4294901760
      %7309 = vmatprep.subr.mxu0 %v7308
      %v7310 = vand.u32 %v1778, 4294901760
      %v7311 = vsub.f32 %v1778, %v7310
      %v7312 = vand.u32 %v7311, 4294901760
      %7313 = vmatpush1.msra.mxu0 %v7312
      %v7314 = vand.u32 %v1781, 4294901760
      %v7315 = vsub.f32 %v1781, %v7314
      %v7316 = vand.u32 %v7315, 4294901760
      %7317 = vmatprep.subr.mxu0 %v7316
      %v7318 = vand.u32 %v1780, 4294901760
      %v7319 = vsub.f32 %v1780, %v7318
      %v7320 = vand.u32 %v7319, 4294901760
      %7321 = vmatpush1.msra.mxu0 %v7320
      %v7322 = vand.u32 %v1783, 4294901760
      %v7323 = vsub.f32 %v1783, %v7322
      %v7324 = vand.u32 %v7323, 4294901760
      %7325 = vmatprep.subr.mxu0 %v7324
      %v7326 = vand.u32 %v1782, 4294901760
      %v7327 = vsub.f32 %v1782, %v7326
      %v7328 = vand.u32 %v7327, 4294901760
      %7329 = vmatpush1.msra.mxu0 %v7328
      %v7330 = vand.u32 %v1785, 4294901760
      %v7331 = vsub.f32 %v1785, %v7330
      %v7332 = vand.u32 %v7331, 4294901760
      %7333 = vmatprep.subr.mxu0 %v7332
      %v7334 = vand.u32 %v1784, 4294901760
      %v7335 = vsub.f32 %v1784, %v7334
      %v7336 = vand.u32 %v7335, 4294901760
      %7337 = vmatpush1.msra.mxu0 %v7336
      %v7338 = vand.u32 %v1787, 4294901760
      %v7339 = vsub.f32 %v1787, %v7338
      %v7340 = vand.u32 %v7339, 4294901760
      %7341 = vmatprep.subr.mxu0 %v7340
      %v7342 = vand.u32 %v1786, 4294901760
      %v7343 = vsub.f32 %v1786, %v7342
      %v7344 = vand.u32 %v7343, 4294901760
      %7345 = vmatpush1.msra.mxu0 %v7344
      %v7346 = vand.u32 %v1789, 4294901760
      %v7347 = vsub.f32 %v1789, %v7346
      %v7348 = vand.u32 %v7347, 4294901760
      %7349 = vmatprep.subr.mxu0 %v7348
      %v7350 = vand.u32 %v1788, 4294901760
      %v7351 = vsub.f32 %v1788, %v7350
      %v7352 = vand.u32 %v7351, 4294901760
      %7353 = vmatpush1.msra.mxu0 %v7352
      %v7354 = vand.u32 %v1791, 4294901760
      %v7355 = vsub.f32 %v1791, %v7354
      %v7356 = vand.u32 %v7355, 4294901760
      %7357 = vmatprep.subr.mxu0 %v7356
      %v7358 = vand.u32 %v1790, 4294901760
      %v7359 = vsub.f32 %v1790, %v7358
      %v7360 = vand.u32 %v7359, 4294901760
      %7361 = vmatpush1.msra.mxu0 %v7360
      %v7362 = vand.u32 %v1793, 4294901760
      %v7363 = vsub.f32 %v1793, %v7362
      %v7364 = vand.u32 %v7363, 4294901760
      %7365 = vmatprep.subr.mxu0 %v7364
      %v7366 = vand.u32 %v1792, 4294901760
      %v7367 = vsub.f32 %v1792, %v7366
      %v7368 = vand.u32 %v7367, 4294901760
      %7369 = vmatpush1.msra.mxu0 %v7368
      %v7370 = vand.u32 %v1795, 4294901760
      %v7371 = vsub.f32 %v1795, %v7370
      %v7372 = vand.u32 %v7371, 4294901760
      %7373 = vmatprep.subr.mxu0 %v7372
      %v7374 = vand.u32 %v1794, 4294901760
      %v7375 = vsub.f32 %v1794, %v7374
      %v7376 = vand.u32 %v7375, 4294901760
      %7377 = vmatpush1.msra.mxu0 %v7376
      %v7378 = vand.u32 %v1797, 4294901760
      %v7379 = vsub.f32 %v1797, %v7378
      %v7380 = vand.u32 %v7379, 4294901760
      %7381 = vmatprep.subr.mxu0 %v7380
      %v7382 = vand.u32 %v1796, 4294901760
      %v7383 = vsub.f32 %v1796, %v7382
      %v7384 = vand.u32 %v7383, 4294901760
      %7385 = vmatpush1.msra.mxu0 %v7384
      %v7386 = vand.u32 %v1799, 4294901760
      %v7387 = vsub.f32 %v1799, %v7386
      %v7388 = vand.u32 %v7387, 4294901760
      %7389 = vmatprep.subr.mxu0 %v7388
      %v7390 = vand.u32 %v1798, 4294901760
      %v7391 = vsub.f32 %v1798, %v7390
      %v7392 = vand.u32 %v7391, 4294901760
      %7393 = vmatpush1.msra.mxu0 %v7392
      %v7394 = vand.u32 %v1801, 4294901760
      %v7395 = vsub.f32 %v1801, %v7394
      %v7396 = vand.u32 %v7395, 4294901760
      %7397 = vmatprep.subr.mxu0 %v7396
      %v7398 = vand.u32 %v1800, 4294901760
      %v7399 = vsub.f32 %v1800, %v7398
      %v7400 = vand.u32 %v7399, 4294901760
      %7401 = vmatpush1.msra.mxu0 %v7400
      %v7402 = vand.u32 %v1803, 4294901760
      %v7403 = vsub.f32 %v1803, %v7402
      %v7404 = vand.u32 %v7403, 4294901760
      %7405 = vmatprep.subr.mxu0 %v7404
      %v7406 = vand.u32 %v1802, 4294901760
      %v7407 = vsub.f32 %v1802, %v7406
      %v7408 = vand.u32 %v7407, 4294901760
      %7409 = vmatpush1.msra.mxu0 %v7408
      %v7410 = vand.u32 %v1805, 4294901760
      %v7411 = vsub.f32 %v1805, %v7410
      %v7412 = vand.u32 %v7411, 4294901760
      %7413 = vmatprep.subr.mxu0 %v7412
      %v7414 = vand.u32 %v1804, 4294901760
      %v7415 = vsub.f32 %v1804, %v7414
      %v7416 = vand.u32 %v7415, 4294901760
      %7417 = vmatpush1.msra.mxu0 %v7416
      %v7418 = vand.u32 %v1807, 4294901760
      %v7419 = vsub.f32 %v1807, %v7418
      %v7420 = vand.u32 %v7419, 4294901760
      %7421 = vmatprep.subr.mxu0 %v7420
      %v7422 = vand.u32 %v1806, 4294901760
      %v7423 = vsub.f32 %v1806, %v7422
      %v7424 = vand.u32 %v7423, 4294901760
      %7425 = vmatpush1.msra.mxu0 %v7424
      %v7426 = vand.u32 %v1809, 4294901760
      %v7427 = vsub.f32 %v1809, %v7426
      %v7428 = vand.u32 %v7427, 4294901760
      %7429 = vmatprep.subr.mxu0 %v7428
      %v7430 = vand.u32 %v1808, 4294901760
      %v7431 = vsub.f32 %v1808, %v7430
      %v7432 = vand.u32 %v7431, 4294901760
      %7433 = vmatpush1.msra.mxu0 %v7432
      %v7434 = vand.u32 %v1811, 4294901760
      %v7435 = vsub.f32 %v1811, %v7434
      %v7436 = vand.u32 %v7435, 4294901760
      %7437 = vmatprep.subr.mxu0 %v7436
      %v7438 = vand.u32 %v1810, 4294901760
      %v7439 = vsub.f32 %v1810, %v7438
      %v7440 = vand.u32 %v7439, 4294901760
      %7441 = vmatpush1.msra.mxu0 %v7440
      %v7442 = vand.u32 %v1813, 4294901760
      %v7443 = vsub.f32 %v1813, %v7442
      %v7444 = vand.u32 %v7443, 4294901760
      %7445 = vmatprep.subr.mxu0 %v7444
      %v7446 = vand.u32 %v1812, 4294901760
      %v7447 = vsub.f32 %v1812, %v7446
      %v7448 = vand.u32 %v7447, 4294901760
      %7449 = vmatpush1.msra.mxu0 %v7448
      %v7450 = vand.u32 %v1815, 4294901760
      %v7451 = vsub.f32 %v1815, %v7450
      %v7452 = vand.u32 %v7451, 4294901760
      %7453 = vmatprep.subr.mxu0 %v7452
      %v7454 = vand.u32 %v1814, 4294901760
      %v7455 = vsub.f32 %v1814, %v7454
      %v7456 = vand.u32 %v7455, 4294901760
      %7457 = vmatpush1.msra.mxu0 %v7456
      %v7458 = vand.u32 %v1817, 4294901760
      %v7459 = vsub.f32 %v1817, %v7458
      %v7460 = vand.u32 %v7459, 4294901760
      %7461 = vmatprep.subr.mxu0 %v7460
      %v7462 = vand.u32 %v1816, 4294901760
      %v7463 = vsub.f32 %v1816, %v7462
      %v7464 = vand.u32 %v7463, 4294901760
      %7465 = vmatpush1.msra.mxu0 %v7464
      %v7466 = vand.u32 %v1819, 4294901760
      %v7467 = vsub.f32 %v1819, %v7466
      %v7468 = vand.u32 %v7467, 4294901760
      %7469 = vmatprep.subr.mxu0 %v7468
      %v7470 = vand.u32 %v1818, 4294901760
      %v7471 = vsub.f32 %v1818, %v7470
      %v7472 = vand.u32 %v7471, 4294901760
      %7473 = vmatpush1.msra.mxu0 %v7472
      %v7474 = vand.u32 %v1821, 4294901760
      %v7475 = vsub.f32 %v1821, %v7474
      %v7476 = vand.u32 %v7475, 4294901760
      %7477 = vmatprep.subr.mxu0 %v7476
      %v7478 = vand.u32 %v1820, 4294901760
      %v7479 = vsub.f32 %v1820, %v7478
      %v7480 = vand.u32 %v7479, 4294901760
      %7481 = vmatpush1.msra.mxu0 %v7480
      %v7482 = vand.u32 %v1823, 4294901760
      %v7483 = vsub.f32 %v1823, %v7482
      %v7484 = vand.u32 %v7483, 4294901760
      %7485 = vmatprep.subr.mxu0 %v7484
      %v7486 = vand.u32 %v1822, 4294901760
      %v7487 = vsub.f32 %v1822, %v7486
      %v7488 = vand.u32 %v7487, 4294901760
      %7489 = vmatpush1.msra.mxu0 %v7488
      %v7490 = vand.u32 %v1825, 4294901760
      %v7491 = vsub.f32 %v1825, %v7490
      %v7492 = vand.u32 %v7491, 4294901760
      %7493 = vmatprep.subr.mxu0 %v7492
      %v7494 = vand.u32 %v1824, 4294901760
      %v7495 = vsub.f32 %v1824, %v7494
      %v7496 = vand.u32 %v7495, 4294901760
      %7497 = vmatpush1.msra.mxu0 %v7496
      %v7498 = vand.u32 %v1827, 4294901760
      %v7499 = vsub.f32 %v1827, %v7498
      %v7500 = vand.u32 %v7499, 4294901760
      %7501 = vmatprep.subr.mxu0 %v7500
      %v7502 = vand.u32 %v1826, 4294901760
      %v7503 = vsub.f32 %v1826, %v7502
      %v7504 = vand.u32 %v7503, 4294901760
      %7505 = vmatpush1.msra.mxu0 %v7504
      %v7506 = vand.u32 %v1829, 4294901760
      %v7507 = vsub.f32 %v1829, %v7506
      %v7508 = vand.u32 %v7507, 4294901760
      %7509 = vmatprep.subr.mxu0 %v7508
      %v7510 = vand.u32 %v1828, 4294901760
      %v7511 = vsub.f32 %v1828, %v7510
      %v7512 = vand.u32 %v7511, 4294901760
      %7513 = vmatpush1.msra.mxu0 %v7512
      %v7514 = vand.u32 %v1831, 4294901760
      %v7515 = vsub.f32 %v1831, %v7514
      %v7516 = vand.u32 %v7515, 4294901760
      %7517 = vmatprep.subr.mxu0 %v7516
      %v7518 = vand.u32 %v1830, 4294901760
      %v7519 = vsub.f32 %v1830, %v7518
      %v7520 = vand.u32 %v7519, 4294901760
      %7521 = vmatpush1.msra.mxu0 %v7520
      %v7522 = vand.u32 %v1833, 4294901760
      %v7523 = vsub.f32 %v1833, %v7522
      %v7524 = vand.u32 %v7523, 4294901760
      %7525 = vmatprep.subr.mxu0 %v7524
      %v7526 = vand.u32 %v1832, 4294901760
      %v7527 = vsub.f32 %v1832, %v7526
      %v7528 = vand.u32 %v7527, 4294901760
      %7529 = vmatpush1.msra.mxu0 %v7528
      %v7530 = vand.u32 %v5595, 4294901760
      %7531 = vmatprep.mubr.f32.mxu0 %v7530
      %v7532 = vand.u32 %v5593, 4294901760
      %7533 = vmatmul.mubr.f32.gmra.mrb[0].mxu0 %v7532
      %v7534 = vpop.f32.mrb[0].mxu0
      %v7535 = vadd.f32 %v7090, %v7534
      %v7536 = vpop.f32.mrb[0].mxu0
      %v7537 = vadd.f32 %v7092, %v7536
      %v7538 = vand.u32 %v5602, 4294901760
      %7539 = vmatprep.mubr.f32.mxu0 %v7538
      %v7540 = vand.u32 %v5600, 4294901760
      %7541 = vmatmul.mubr.f32.gmra.mrb[0].mxu0 %v7540
      %v7542 = vpop.f32.mrb[0].mxu0
      %v7543 = vadd.f32 %v7102, %v7542
      %v7544 = vpop.f32.mrb[0].mxu0
      %v7545 = vadd.f32 %v7104, %v7544
      %v7546 = vand.u32 %v5609, 4294901760
      %7547 = vmatprep.mubr.f32.mxu0 %v7546
      %v7548 = vand.u32 %v5607, 4294901760
      %7549 = vmatmul.mubr.f32.gmra.mrb[0].mxu0 %v7548
      %v7550 = vpop.f32.mrb[0].mxu0
      %v7551 = vadd.f32 %v7114, %v7550
      %v7552 = vpop.f32.mrb[0].mxu0
      %v7553 = vadd.f32 %v7116, %v7552
      %v7554 = vand.u32 %v5616, 4294901760
      %7555 = vmatprep.mubr.f32.mxu0 %v7554
      %v7556 = vand.u32 %v5614, 4294901760
      %7557 = vmatmul.mubr.f32.gmra.mrb[0].mxu0 %v7556
      %v7558 = vpop.f32.mrb[0].mxu0
      %v7559 = vadd.f32 %v7126, %v7558
      %v7560 = vpop.f32.mrb[0].mxu0
      %v7561 = vadd.f32 %v7128, %v7560
      %v7562 = vand.u32 %v5623, 4294901760
      %7563 = vmatprep.mubr.f32.mxu0 %v7562
      %v7564 = vand.u32 %v5621, 4294901760
      %7565 = vmatmul.mubr.f32.gmra.mrb[0].mxu0 %v7564
      %v7566 = vpop.f32.mrb[0].mxu0
      %v7567 = vadd.f32 %v7138, %v7566
      %v7568 = vpop.f32.mrb[0].mxu0
      %v7569 = vadd.f32 %v7140, %v7568
      %v7570 = vand.u32 %v5630, 4294901760
      %7571 = vmatprep.mubr.f32.mxu0 %v7570
      %v7572 = vand.u32 %v5628, 4294901760
      %7573 = vmatmul.mubr.f32.gmra.mrb[0].mxu0 %v7572
      %v7574 = vpop.f32.mrb[0].mxu0
      %v7575 = vadd.f32 %v7150, %v7574
      %v7576 = vpop.f32.mrb[0].mxu0
      %v7577 = vadd.f32 %v7152, %v7576
      %v7578 = vand.u32 %v5637, 4294901760
      %7579 = vmatprep.mubr.f32.mxu0 %v7578
      %v7580 = vand.u32 %v5635, 4294901760
      %7581 = vmatmul.mubr.f32.gmra.mrb[0].mxu0 %v7580
      %v7582 = vpop.f32.mrb[0].mxu0
      %v7583 = vadd.f32 %v7162, %v7582
      %v7584 = vpop.f32.mrb[0].mxu0
      %v7585 = vadd.f32 %v7164, %v7584
      %v7586 = vand.u32 %v5644, 4294901760
      %7587 = vmatprep.mubr.f32.mxu0 %v7586
      %v7588 = vand.u32 %v5642, 4294901760
      %7589 = vmatmul.mubr.f32.gmra.mrb[0].mxu0 %v7588
      %v7590 = vpop.f32.mrb[0].mxu0
      %v7591 = vadd.f32 %v7174, %v7590
      %v7592 = vpop.f32.mrb[0].mxu0
      %v7593 = vadd.f32 %v7176, %v7592
      %v7594 = vand.u32 %v5651, 4294901760
      %7595 = vmatprep.mubr.f32.mxu0 %v7594
      %v7596 = vand.u32 %v5649, 4294901760
      %7597 = vmatmul.mubr.f32.gmra.mrb[0].mxu0 %v7596
      %v7598 = vpop.f32.mrb[0].mxu0
      %v7599 = vadd.f32 %v7186, %v7598
      %v7600 = vpop.f32.mrb[0].mxu0
      %v7601 = vadd.f32 %v7188, %v7600
      %v7602 = vand.u32 %v5658, 4294901760
      %7603 = vmatprep.mubr.f32.mxu0 %v7602
      %v7604 = vand.u32 %v5656, 4294901760
      %7605 = vmatmul.mubr.f32.gmra.mrb[0].mxu0 %v7604
      %v7606 = vpop.f32.mrb[0].mxu0
      %v7607 = vadd.f32 %v7198, %v7606
      %v7608 = vpop.f32.mrb[0].mxu0
      %v7609 = vadd.f32 %v7200, %v7608
      %v7610 = vand.u32 %v5665, 4294901760
      %7611 = vmatprep.mubr.f32.mxu0 %v7610
      %v7612 = vand.u32 %v5663, 4294901760
      %7613 = vmatmul.mubr.f32.gmra.mrb[0].mxu0 %v7612
      %v7614 = vpop.f32.mrb[0].mxu0
      %v7615 = vadd.f32 %v7210, %v7614
      %v7616 = vpop.f32.mrb[0].mxu0
      %v7617 = vadd.f32 %v7212, %v7616
      %v7618 = vand.u32 %v5672, 4294901760
      %7619 = vmatprep.mubr.f32.mxu0 %v7618
      %v7620 = vand.u32 %v5670, 4294901760
      %7621 = vmatmul.mubr.f32.gmra.mrb[0].mxu0 %v7620
      %v7622 = vpop.f32.mrb[0].mxu0
      %v7623 = vadd.f32 %v7222, %v7622
      %v7624 = vpop.f32.mrb[0].mxu0
      %v7625 = vadd.f32 %v7224, %v7624
      %v7626 = vand.u32 %v5679, 4294901760
      %7627 = vmatprep.mubr.f32.mxu0 %v7626
      %v7628 = vand.u32 %v5677, 4294901760
      %7629 = vmatmul.mubr.f32.gmra.mrb[0].mxu0 %v7628
      %v7630 = vpop.f32.mrb[0].mxu0
      %v7631 = vadd.f32 %v7234, %v7630
      %v7632 = vpop.f32.mrb[0].mxu0
      %v7633 = vadd.f32 %v7236, %v7632
      %v7634 = vand.u32 %v5686, 4294901760
      %7635 = vmatprep.mubr.f32.mxu0 %v7634
      %v7636 = vand.u32 %v5684, 4294901760
      %7637 = vmatmul.mubr.f32.gmra.mrb[0].mxu0 %v7636
      %v7638 = vpop.f32.mrb[0].mxu0
      %v7639 = vadd.f32 %v7246, %v7638
      %v7640 = vpop.f32.mrb[0].mxu0
      %v7641 = vadd.f32 %v7248, %v7640
      %v7642 = vand.u32 %v5693, 4294901760
      %7643 = vmatprep.mubr.f32.mxu0 %v7642
      %v7644 = vand.u32 %v5691, 4294901760
      %7645 = vmatmul.mubr.f32.gmra.mrb[0].mxu0 %v7644
      %v7646 = vpop.f32.mrb[0].mxu0
      %v7647 = vadd.f32 %v7258, %v7646
      %v7648 = vpop.f32.mrb[0].mxu0
      %v7649 = vadd.f32 %v7260, %v7648
      %v7650 = vand.u32 %v5700, 4294901760
      %7651 = vmatprep.mubr.f32.mxu0 %v7650
      %v7652 = vand.u32 %v5698, 4294901760
      %7653 = vmatmul.mubr.f32.gmra.mrb[0].mxu0 %v7652
      %v7654 = vpop.f32.mrb[0].mxu0
      %v7655 = vadd.f32 %v7270, %v7654
      %v7656 = vpop.f32.mrb[0].mxu0
      %v7657 = vadd.f32 %v7272, %v7656
      %7658 = vdwg.mxu0
      %v7659 = vand.u32 %v1771, 4294901760
      %7660 = vmatprep.subr.mxu0 %v7659
      %v7661 = vand.u32 %v1770, 4294901760
      %7662 = vmatpush1.msra.mxu0 %v7661
      %v7663 = vand.u32 %v1773, 4294901760
      %7664 = vmatprep.subr.mxu0 %v7663
      %v7665 = vand.u32 %v1772, 4294901760
      %7666 = vmatpush1.msra.mxu0 %v7665
      %v7667 = vand.u32 %v1775, 4294901760
      %7668 = vmatprep.subr.mxu0 %v7667
      %v7669 = vand.u32 %v1774, 4294901760
      %7670 = vmatpush1.msra.mxu0 %v7669
      %v7671 = vand.u32 %v1777, 4294901760
      %7672 = vmatprep.subr.mxu0 %v7671
      %v7673 = vand.u32 %v1776, 4294901760
      %7674 = vmatpush1.msra.mxu0 %v7673
      %v7675 = vand.u32 %v1779, 4294901760
      %7676 = vmatprep.subr.mxu0 %v7675
      %v7677 = vand.u32 %v1778, 4294901760
      %7678 = vmatpush1.msra.mxu0 %v7677
      %v7679 = vand.u32 %v1781, 4294901760
      %7680 = vmatprep.subr.mxu0 %v7679
      %v7681 = vand.u32 %v1780, 4294901760
      %7682 = vmatpush1.msra.mxu0 %v7681
      %v7683 = vand.u32 %v1783, 4294901760
      %7684 = vmatprep.subr.mxu0 %v7683
      %v7685 = vand.u32 %v1782, 4294901760
      %7686 = vmatpush1.msra.mxu0 %v7685
      %v7687 = vand.u32 %v1785, 4294901760
      %7688 = vmatprep.subr.mxu0 %v7687
      %v7689 = vand.u32 %v1784, 4294901760
      %7690 = vmatpush1.msra.mxu0 %v7689
      %v7691 = vand.u32 %v1787, 4294901760
      %7692 = vmatprep.subr.mxu0 %v7691
      %v7693 = vand.u32 %v1786, 4294901760
      %7694 = vmatpush1.msra.mxu0 %v7693
      %v7695 = vand.u32 %v1789, 4294901760
      %7696 = vmatprep.subr.mxu0 %v7695
      %v7697 = vand.u32 %v1788, 4294901760
      %7698 = vmatpush1.msra.mxu0 %v7697
      %v7699 = vand.u32 %v1791, 4294901760
      %7700 = vmatprep.subr.mxu0 %v7699
      %v7701 = vand.u32 %v1790, 4294901760
      %7702 = vmatpush1.msra.mxu0 %v7701
      %v7703 = vand.u32 %v1793, 4294901760
      %7704 = vmatprep.subr.mxu0 %v7703
      %v7705 = vand.u32 %v1792, 4294901760
      %7706 = vmatpush1.msra.mxu0 %v7705
      %v7707 = vand.u32 %v1795, 4294901760
      %7708 = vmatprep.subr.mxu0 %v7707
      %v7709 = vand.u32 %v1794, 4294901760
      %7710 = vmatpush1.msra.mxu0 %v7709
      %v7711 = vand.u32 %v1797, 4294901760
      %7712 = vmatprep.subr.mxu0 %v7711
      %v7713 = vand.u32 %v1796, 4294901760
      %7714 = vmatpush1.msra.mxu0 %v7713
      %v7715 = vand.u32 %v1799, 4294901760
      %7716 = vmatprep.subr.mxu0 %v7715
      %v7717 = vand.u32 %v1798, 4294901760
      %7718 = vmatpush1.msra.mxu0 %v7717
      %v7719 = vand.u32 %v1801, 4294901760
      %7720 = vmatprep.subr.mxu0 %v7719
      %v7721 = vand.u32 %v1800, 4294901760
      %7722 = vmatpush1.msra.mxu0 %v7721
      %v7723 = vand.u32 %v1803, 4294901760
      %7724 = vmatprep.subr.mxu0 %v7723
      %v7725 = vand.u32 %v1802, 4294901760
      %7726 = vmatpush1.msra.mxu0 %v7725
      %v7727 = vand.u32 %v1805, 4294901760
      %7728 = vmatprep.subr.mxu0 %v7727
      %v7729 = vand.u32 %v1804, 4294901760
      %7730 = vmatpush1.msra.mxu0 %v7729
      %v7731 = vand.u32 %v1807, 4294901760
      %7732 = vmatprep.subr.mxu0 %v7731
      %v7733 = vand.u32 %v1806, 4294901760
      %7734 = vmatpush1.msra.mxu0 %v7733
      %v7735 = vand.u32 %v1809, 4294901760
      %7736 = vmatprep.subr.mxu0 %v7735
      %v7737 = vand.u32 %v1808, 4294901760
      %7738 = vmatpush1.msra.mxu0 %v7737
      %v7739 = vand.u32 %v1811, 4294901760
      %7740 = vmatprep.subr.mxu0 %v7739
      %v7741 = vand.u32 %v1810, 4294901760
      %7742 = vmatpush1.msra.mxu0 %v7741
      %v7743 = vand.u32 %v1813, 4294901760
      %7744 = vmatprep.subr.mxu0 %v7743
      %v7745 = vand.u32 %v1812, 4294901760
      %7746 = vmatpush1.msra.mxu0 %v7745
      %v7747 = vand.u32 %v1815, 4294901760
      %7748 = vmatprep.subr.mxu0 %v7747
      %v7749 = vand.u32 %v1814, 4294901760
      %7750 = vmatpush1.msra.mxu0 %v7749
      %v7751 = vand.u32 %v1817, 4294901760
      %7752 = vmatprep.subr.mxu0 %v7751
      %v7753 = vand.u32 %v1816, 4294901760
      %7754 = vmatpush1.msra.mxu0 %v7753
      %v7755 = vand.u32 %v1819, 4294901760
      %7756 = vmatprep.subr.mxu0 %v7755
      %v7757 = vand.u32 %v1818, 4294901760
      %7758 = vmatpush1.msra.mxu0 %v7757
      %v7759 = vand.u32 %v1821, 4294901760
      %7760 = vmatprep.subr.mxu0 %v7759
      %v7761 = vand.u32 %v1820, 4294901760
      %7762 = vmatpush1.msra.mxu0 %v7761
      %v7763 = vand.u32 %v1823, 4294901760
      %7764 = vmatprep.subr.mxu0 %v7763
      %v7765 = vand.u32 %v1822, 4294901760
      %7766 = vmatpush1.msra.mxu0 %v7765
      %v7767 = vand.u32 %v1825, 4294901760
      %7768 = vmatprep.subr.mxu0 %v7767
      %v7769 = vand.u32 %v1824, 4294901760
      %7770 = vmatpush1.msra.mxu0 %v7769
      %v7771 = vand.u32 %v1827, 4294901760
      %7772 = vmatprep.subr.mxu0 %v7771
      %v7773 = vand.u32 %v1826, 4294901760
      %7774 = vmatpush1.msra.mxu0 %v7773
      %v7775 = vand.u32 %v1829, 4294901760
      %7776 = vmatprep.subr.mxu0 %v7775
      %v7777 = vand.u32 %v1828, 4294901760
      %7778 = vmatpush1.msra.mxu0 %v7777
      %v7779 = vand.u32 %v1831, 4294901760
      %7780 = vmatprep.subr.mxu0 %v7779
      %v7781 = vand.u32 %v1830, 4294901760
      %7782 = vmatpush1.msra.mxu0 %v7781
      %v7783 = vand.u32 %v1833, 4294901760
      %7784 = vmatprep.subr.mxu0 %v7783
      %v7785 = vand.u32 %v1832, 4294901760
      %7786 = vmatpush1.msra.mxu0 %v7785
      %v7787 = vand.u32 %v5595, 4294901760
      %7788 = vmatprep.mubr.f32.mxu0 %v7787
      %v7789 = vand.u32 %v5593, 4294901760
      %7790 = vmatmul.mubr.f32.gmra.mrb[0].mxu0 %v7789
      %v7791 = vpop.f32.mrb[0].mxu0
      %v7792 = vadd.f32 %v7535, %v7791
      %v7793 = vpop.f32.mrb[0].mxu0
      %v7794 = vadd.f32 %v7537, %v7793
      %v7795 = vand.u32 %v5602, 4294901760
      %7796 = vmatprep.mubr.f32.mxu0 %v7795
      %v7797 = vand.u32 %v5600, 4294901760
      %7798 = vmatmul.mubr.f32.gmra.mrb[0].mxu0 %v7797
      %v7799 = vpop.f32.mrb[0].mxu0
      %v7800 = vadd.f32 %v7543, %v7799
      %v7801 = vpop.f32.mrb[0].mxu0
      %v7802 = vadd.f32 %v7545, %v7801
      %v7803 = vand.u32 %v5609, 4294901760
      %7804 = vmatprep.mubr.f32.mxu0 %v7803
      %v7805 = vand.u32 %v5607, 4294901760
      %7806 = vmatmul.mubr.f32.gmra.mrb[0].mxu0 %v7805
      %v7807 = vpop.f32.mrb[0].mxu0
      %v7808 = vadd.f32 %v7551, %v7807
      %v7809 = vpop.f32.mrb[0].mxu0
      %v7810 = vadd.f32 %v7553, %v7809
      %v7811 = vand.u32 %v5616, 4294901760
      %7812 = vmatprep.mubr.f32.mxu0 %v7811
      %v7813 = vand.u32 %v5614, 4294901760
      %7814 = vmatmul.mubr.f32.gmra.mrb[0].mxu0 %v7813
      %v7815 = vpop.f32.mrb[0].mxu0
      %v7816 = vadd.f32 %v7559, %v7815
      %v7817 = vpop.f32.mrb[0].mxu0
      %v7818 = vadd.f32 %v7561, %v7817
      %v7819 = vand.u32 %v5623, 4294901760
      %7820 = vmatprep.mubr.f32.mxu0 %v7819
      %v7821 = vand.u32 %v5621, 4294901760
      %7822 = vmatmul.mubr.f32.gmra.mrb[0].mxu0 %v7821
      %v7823 = vpop.f32.mrb[0].mxu0
      %v7824 = vadd.f32 %v7567, %v7823
      %v7825 = vpop.f32.mrb[0].mxu0
      %v7826 = vadd.f32 %v7569, %v7825
      %v7827 = vand.u32 %v5630, 4294901760
      %7828 = vmatprep.mubr.f32.mxu0 %v7827
      %v7829 = vand.u32 %v5628, 4294901760
      %7830 = vmatmul.mubr.f32.gmra.mrb[0].mxu0 %v7829
      %v7831 = vpop.f32.mrb[0].mxu0
      %v7832 = vadd.f32 %v7575, %v7831
      %v7833 = vpop.f32.mrb[0].mxu0
      %v7834 = vadd.f32 %v7577, %v7833
      %v7835 = vand.u32 %v5637, 4294901760
      %7836 = vmatprep.mubr.f32.mxu0 %v7835
      %v7837 = vand.u32 %v5635, 4294901760
      %7838 = vmatmul.mubr.f32.gmra.mrb[0].mxu0 %v7837
      %v7839 = vpop.f32.mrb[0].mxu0
      %v7840 = vadd.f32 %v7583, %v7839
      %v7841 = vpop.f32.mrb[0].mxu0
      %v7842 = vadd.f32 %v7585, %v7841
      %v7843 = vand.u32 %v5644, 4294901760
      %7844 = vmatprep.mubr.f32.mxu0 %v7843
      %v7845 = vand.u32 %v5642, 4294901760
      %7846 = vmatmul.mubr.f32.gmra.mrb[0].mxu0 %v7845
      %v7847 = vpop.f32.mrb[0].mxu0
      %v7848 = vadd.f32 %v7591, %v7847
      %v7849 = vpop.f32.mrb[0].mxu0
      %v7850 = vadd.f32 %v7593, %v7849
      %v7851 = vand.u32 %v5651, 4294901760
      %7852 = vmatprep.mubr.f32.mxu0 %v7851
      %v7853 = vand.u32 %v5649, 4294901760
      %7854 = vmatmul.mubr.f32.gmra.mrb[0].mxu0 %v7853
      %v7855 = vpop.f32.mrb[0].mxu0
      %v7856 = vadd.f32 %v7599, %v7855
      %v7857 = vpop.f32.mrb[0].mxu0
      %v7858 = vadd.f32 %v7601, %v7857
      %v7859 = vand.u32 %v5658, 4294901760
      %7860 = vmatprep.mubr.f32.mxu0 %v7859
      %v7861 = vand.u32 %v5656, 4294901760
      %7862 = vmatmul.mubr.f32.gmra.mrb[0].mxu0 %v7861
      %v7863 = vpop.f32.mrb[0].mxu0
      %v7864 = vadd.f32 %v7607, %v7863
      %v7865 = vpop.f32.mrb[0].mxu0
      %v7866 = vadd.f32 %v7609, %v7865
      %v7867 = vand.u32 %v5665, 4294901760
      %7868 = vmatprep.mubr.f32.mxu0 %v7867
      %v7869 = vand.u32 %v5663, 4294901760
      %7870 = vmatmul.mubr.f32.gmra.mrb[0].mxu0 %v7869
      %v7871 = vpop.f32.mrb[0].mxu0
      %v7872 = vadd.f32 %v7615, %v7871
      %v7873 = vpop.f32.mrb[0].mxu0
      %v7874 = vadd.f32 %v7617, %v7873
      %v7875 = vand.u32 %v5672, 4294901760
      %7876 = vmatprep.mubr.f32.mxu0 %v7875
      %v7877 = vand.u32 %v5670, 4294901760
      %7878 = vmatmul.mubr.f32.gmra.mrb[0].mxu0 %v7877
      %v7879 = vpop.f32.mrb[0].mxu0
      %v7880 = vadd.f32 %v7623, %v7879
      %v7881 = vpop.f32.mrb[0].mxu0
      %v7882 = vadd.f32 %v7625, %v7881
      %v7883 = vand.u32 %v5679, 4294901760
      %7884 = vmatprep.mubr.f32.mxu0 %v7883
      %v7885 = vand.u32 %v5677, 4294901760
      %7886 = vmatmul.mubr.f32.gmra.mrb[0].mxu0 %v7885
      %v7887 = vpop.f32.mrb[0].mxu0
      %v7888 = vadd.f32 %v7631, %v7887
      %v7889 = vpop.f32.mrb[0].mxu0
      %v7890 = vadd.f32 %v7633, %v7889
      %v7891 = vand.u32 %v5686, 4294901760
      %7892 = vmatprep.mubr.f32.mxu0 %v7891
      %v7893 = vand.u32 %v5684, 4294901760
      %7894 = vmatmul.mubr.f32.gmra.mrb[0].mxu0 %v7893
      %v7895 = vpop.f32.mrb[0].mxu0
      %v7896 = vadd.f32 %v7639, %v7895
      %v7897 = vpop.f32.mrb[0].mxu0
      %v7898 = vadd.f32 %v7641, %v7897
      %v7899 = vand.u32 %v5693, 4294901760
      %7900 = vmatprep.mubr.f32.mxu0 %v7899
      %v7901 = vand.u32 %v5691, 4294901760
      %7902 = vmatmul.mubr.f32.gmra.mrb[0].mxu0 %v7901
      %v7903 = vpop.f32.mrb[0].mxu0
      %v7904 = vadd.f32 %v7647, %v7903
      %v7905 = vpop.f32.mrb[0].mxu0
      %v7906 = vadd.f32 %v7649, %v7905
      %v7907 = vand.u32 %v5700, 4294901760
      %7908 = vmatprep.mubr.f32.mxu0 %v7907
      %v7909 = vand.u32 %v5698, 4294901760
      %7910 = vmatmul.mubr.f32.gmra.mrb[0].mxu0 %v7909
      %v7911 = vpop.f32.mrb[0].mxu0
      %v7912 = vadd.f32 %v7655, %v7911
      %v7913 = vpop.f32.mrb[0].mxu0
      %v7914 = vadd.f32 %v7657, %v7913
      %7915 = vdwg.mxu0
      %v7916 = vmax.f32 %v7792, 0.0
      %v7917 = vmax.f32 %v7794, 0.0
      %v7918 = vmax.f32 %v7800, 0.0
      %v7919 = vmax.f32 %v7802, 0.0
      %v7920 = vmax.f32 %v7808, 0.0
      %v7921 = vmax.f32 %v7810, 0.0
      %v7922 = vmax.f32 %v7816, 0.0
      %v7923 = vmax.f32 %v7818, 0.0
      %v7924 = vmax.f32 %v7824, 0.0
      %v7925 = vmax.f32 %v7826, 0.0
      %v7926 = vmax.f32 %v7832, 0.0
      %v7927 = vmax.f32 %v7834, 0.0
      %v7928 = vmax.f32 %v7840, 0.0
      %v7929 = vmax.f32 %v7842, 0.0
      %v7930 = vmax.f32 %v7848, 0.0
      %v7931 = vmax.f32 %v7850, 0.0
      %v7932 = vmax.f32 %v7856, 0.0
      %v7933 = vmax.f32 %v7858, 0.0
      %v7934 = vmax.f32 %v7864, 0.0
      %v7935 = vmax.f32 %v7866, 0.0
      %v7936 = vmax.f32 %v7872, 0.0
      %v7937 = vmax.f32 %v7874, 0.0
      %v7938 = vmax.f32 %v7880, 0.0
      %v7939 = vmax.f32 %v7882, 0.0
      %v7940 = vmax.f32 %v7888, 0.0
      %v7941 = vmax.f32 %v7890, 0.0
      %v7942 = vmax.f32 %v7896, 0.0
      %v7943 = vmax.f32 %v7898, 0.0
      %v7944 = vmax.f32 %v7904, 0.0
      %v7945 = vmax.f32 %v7906, 0.0
      %v7946 = vmax.f32 %v7912, 0.0
      %v7947 = vmax.f32 %v7914, 0.0
      %7948 = vst [vmem:[#allocation2] sm:$0xff] %v7916
      %7949 = vst [vmem:[#allocation2 + $0x8] sm:$0xff] %v7917
      %7950 = vst [vmem:[#allocation2 + $0x10] sm:$0xff] %v7918
      %7951 = vst [vmem:[#allocation2 + $0x18] sm:$0xff] %v7919
      %7952 = vst [vmem:[#allocation2 + $0x20] sm:$0xff] %v7920
      %7953 = vst [vmem:[#allocation2 + $0x28] sm:$0xff] %v7921
      %7954 = vst [vmem:[#allocation2 + $0x30] sm:$0xff] %v7922
      %7955 = vst [vmem:[#allocation2 + $0x38] sm:$0xff] %v7923
      %7956 = vst [vmem:[#allocation2 + $0x40] sm:$0xff] %v7924
      %7957 = vst [vmem:[#allocation2 + $0x48] sm:$0xff] %v7925
      %7958 = vst [vmem:[#allocation2 + $0x50] sm:$0xff] %v7926
      %7959 = vst [vmem:[#allocation2 + $0x58] sm:$0xff] %v7927
      %7960 = vst [vmem:[#allocation2 + $0x60] sm:$0xff] %v7928
      %7961 = vst [vmem:[#allocation2 + $0x68] sm:$0xff] %v7929
      %7962 = vst [vmem:[#allocation2 + $0x70] sm:$0xff] %v7930
      %7963 = vst [vmem:[#allocation2 + $0x78] sm:$0xff] %v7931
      %7964 = vst [vmem:[#allocation2 + $0x80] sm:$0xff] %v7932
      %7965 = vst [vmem:[#allocation2 + $0x88] sm:$0xff] %v7933
      %7966 = vst [vmem:[#allocation2 + $0x90] sm:$0xff] %v7934
      %7967 = vst [vmem:[#allocation2 + $0x98] sm:$0xff] %v7935
      %7968 = vst [vmem:[#allocation2 + $0xa0] sm:$0xff] %v7936
      %7969 = vst [vmem:[#allocation2 + $0xa8] sm:$0xff] %v7937
      %7970 = vst [vmem:[#allocation2 + $0xb0] sm:$0xff] %v7938
      %7971 = vst [vmem:[#allocation2 + $0xb8] sm:$0xff] %v7939
      %7972 = vst [vmem:[#allocation2 + $0xc0] sm:$0xff] %v7940
      %7973 = vst [vmem:[#allocation2 + $0xc8] sm:$0xff] %v7941
      %7974 = vst [vmem:[#allocation2 + $0xd0] sm:$0xff] %v7942
      %7975 = vst [vmem:[#allocation2 + $0xd8] sm:$0xff] %v7943
      %7976 = vst [vmem:[#allocation2 + $0xe0] sm:$0xff] %v7944
      %7977 = vst [vmem:[#allocation2 + $0xe8] sm:$0xff] %v7945
      %7978 = vst [vmem:[#allocation2 + $0xf0] sm:$0xff] %v7946
      %7979 = vst [vmem:[#allocation2 + $0xf8] sm:$0xff] %v7947
      %v7980 = vsub.f32 %v7916, %v4080
      %v7981 = vsub.f32 %v7917, %v4081
      %v7982 = vsub.f32 %v7918, %v4082
      %v7983 = vsub.f32 %v7919, %v4083
      %v7984 = vsub.f32 %v7920, %v4084
      %v7985 = vsub.f32 %v7921, %v4085
      %v7986 = vsub.f32 %v7922, %v4086
      %v7987 = vsub.f32 %v7923, %v4087
      %v7988 = vsub.f32 %v7924, %v4088
      %v7989 = vsub.f32 %v7925, %v4089
      %v7990 = vsub.f32 %v7926, %v4090
      %v7991 = vsub.f32 %v7927, %v4091
      %v7992 = vsub.f32 %v7928, %v4092
      %v7993 = vsub.f32 %v7929, %v4093
      %v7994 = vsub.f32 %v7930, %v4094
      %v7995 = vsub.f32 %v7931, %v4095
      %v7996 = vsub.f32 %v7932, %v4096
      %v7997 = vsub.f32 %v7933, %v4097
      %v7998 = vsub.f32 %v7934, %v4098
      %v7999 = vsub.f32 %v7935, %v4099
      %v8000 = vsub.f32 %v7936, %v4100
      %v8001 = vsub.f32 %v7937, %v4101
      %v8002 = vsub.f32 %v7938, %v4102
      %v8003 = vsub.f32 %v7939, %v4103
      %v8004 = vsub.f32 %v7940, %v4104
      %v8005 = vsub.f32 %v7941, %v4105
      %v8006 = vsub.f32 %v7942, %v4106
      %v8007 = vsub.f32 %v7943, %v4107
      %v8008 = vsub.f32 %v7944, %v4108
      %v8009 = vsub.f32 %v7945, %v4109
      %v8010 = vsub.f32 %v7946, %v4110
      %v8011 = vsub.f32 %v7947, %v4111
      %v8012 = vand.u32 2147483647, %v7980
      %v8013 = vand.u32 2147483647, %v7981
      %v8014 = vand.u32 2147483647, %v7982
      %v8015 = vand.u32 2147483647, %v7983
      %v8016 = vand.u32 2147483647, %v7984
      %v8017 = vand.u32 2147483647, %v7985
      %v8018 = vand.u32 2147483647, %v7986
      %v8019 = vand.u32 2147483647, %v7987
      %v8020 = vand.u32 2147483647, %v7988
      %v8021 = vand.u32 2147483647, %v7989
      %v8022 = vand.u32 2147483647, %v7990
      %v8023 = vand.u32 2147483647, %v7991
      %v8024 = vand.u32 2147483647, %v7992
      %v8025 = vand.u32 2147483647, %v7993
      %v8026 = vand.u32 2147483647, %v7994
      %v8027 = vand.u32 2147483647, %v7995
      %v8028 = vand.u32 2147483647, %v7996
      %v8029 = vand.u32 2147483647, %v7997
      %v8030 = vand.u32 2147483647, %v7998
      %v8031 = vand.u32 2147483647, %v7999
      %v8032 = vand.u32 2147483647, %v8000
      %v8033 = vand.u32 2147483647, %v8001
      %v8034 = vand.u32 2147483647, %v8002
      %v8035 = vand.u32 2147483647, %v8003
      %v8036 = vand.u32 2147483647, %v8004
      %v8037 = vand.u32 2147483647, %v8005
      %v8038 = vand.u32 2147483647, %v8006
      %v8039 = vand.u32 2147483647, %v8007
      %v8040 = vand.u32 2147483647, %v8008
      %v8041 = vand.u32 2147483647, %v8009
      %v8042 = vand.u32 2147483647, %v8010
      %v8043 = vand.u32 2147483647, %v8011
      %v8044 = vmax.f32 %v8012, %v8016
      %v8045 = vmax.f32 %v8013, %v8017
      %v8046 = vmax.f32 %v8014, %v8018
      %v8047 = vmax.f32 %v8015, %v8019
      %v8048 = vmax.f32 %v8044, %v8020
      %v8049 = vmax.f32 %v8045, %v8021
      %v8050 = vmax.f32 %v8046, %v8022
      %v8051 = vmax.f32 %v8047, %v8023
      %v8052 = vmax.f32 %v8048, %v8024
      %v8053 = vmax.f32 %v8049, %v8025
      %v8054 = vmax.f32 %v8050, %v8026
      %v8055 = vmax.f32 %v8051, %v8027
      %v8056 = vmax.f32 %v8052, %v8028
      %v8057 = vmax.f32 %v8053, %v8029
      %v8058 = vmax.f32 %v8054, %v8030
      %v8059 = vmax.f32 %v8055, %v8031
      %v8060 = vmax.f32 %v8056, %v8032
      %v8061 = vmax.f32 %v8057, %v8033
      %v8062 = vmax.f32 %v8058, %v8034
      %v8063 = vmax.f32 %v8059, %v8035
      %v8064 = vmax.f32 %v8060, %v8036
      %v8065 = vmax.f32 %v8061, %v8037
      %v8066 = vmax.f32 %v8062, %v8038
      %v8067 = vmax.f32 %v8063, %v8039
      %v8068 = vmax.f32 %v8064, %v8040
      %v8069 = vmax.f32 %v8065, %v8041
      %v8070 = vmax.f32 %v8066, %v8042
      %v8071 = vmax.f32 %v8067, %v8043
      %v8072 = vmax.f32 %v8068, %v8069
      %v8073 = vmax.f32 %v8070, %v8071
      %v8074 = vmax.f32 %v8072, %v8073
      %8075 = vmax.xlane.f32.xlu0 %v8074
      %v8076 = vpop.xlane.xlu0 %8075
      %v8077 = vrot.slane %v8076, 4
      %v8078 = vmax.f32 %v8076, %v8077
      %v8079 = vrot.slane %v8078, 2
      %v8080 = vmax.f32 %v8078, %v8079
      %v8081 = vrot.slane %v8080, 1
      %v8082 = vmax.f32 %v8080, %v8081
      %s8083 = vtos %v8082
      %v8084 = vand.u32 2147483647, %v7916
      %v8085 = vand.u32 2147483647, %v7917
      %v8086 = vand.u32 2147483647, %v7918
      %v8087 = vand.u32 2147483647, %v7919
      %v8088 = vand.u32 2147483647, %v7920
      %v8089 = vand.u32 2147483647, %v7921
      %v8090 = vand.u32 2147483647, %v7922
      %v8091 = vand.u32 2147483647, %v7923
      %v8092 = vand.u32 2147483647, %v7924
      %v8093 = vand.u32 2147483647, %v7925
      %v8094 = vand.u32 2147483647, %v7926
      %v8095 = vand.u32 2147483647, %v7927
      %v8096 = vand.u32 2147483647, %v7928
      %v8097 = vand.u32 2147483647, %v7929
      %v8098 = vand.u32 2147483647, %v7930
      %v8099 = vand.u32 2147483647, %v7931
      %v8100 = vand.u32 2147483647, %v7932
      %v8101 = vand.u32 2147483647, %v7933
      %v8102 = vand.u32 2147483647, %v7934
      %v8103 = vand.u32 2147483647, %v7935
      %v8104 = vand.u32 2147483647, %v7936
      %v8105 = vand.u32 2147483647, %v7937
      %v8106 = vand.u32 2147483647, %v7938
      %v8107 = vand.u32 2147483647, %v7939
      %v8108 = vand.u32 2147483647, %v7940
      %v8109 = vand.u32 2147483647, %v7941
      %v8110 = vand.u32 2147483647, %v7942
      %v8111 = vand.u32 2147483647, %v7943
      %v8112 = vand.u32 2147483647, %v7944
      %v8113 = vand.u32 2147483647, %v7945
      %v8114 = vand.u32 2147483647, %v7946
      %v8115 = vand.u32 2147483647, %v7947
      %v8116 = vmax.f32 %v8084, %v8088
      %v8117 = vmax.f32 %v8085, %v8089
      %v8118 = vmax.f32 %v8086, %v8090
      %v8119 = vmax.f32 %v8087, %v8091
      %v8120 = vmax.f32 %v8116, %v8092
      %v8121 = vmax.f32 %v8117, %v8093
      %v8122 = vmax.f32 %v8118, %v8094
      %v8123 = vmax.f32 %v8119, %v8095
      %v8124 = vmax.f32 %v8120, %v8096
      %v8125 = vmax.f32 %v8121, %v8097
      %v8126 = vmax.f32 %v8122, %v8098
      %v8127 = vmax.f32 %v8123, %v8099
      %v8128 = vmax.f32 %v8124, %v8100
      %v8129 = vmax.f32 %v8125, %v8101
      %v8130 = vmax.f32 %v8126, %v8102
      %v8131 = vmax.f32 %v8127, %v8103
      %v8132 = vmax.f32 %v8128, %v8104
      %v8133 = vmax.f32 %v8129, %v8105
      %v8134 = vmax.f32 %v8130, %v8106
      %v8135 = vmax.f32 %v8131, %v8107
      %v8136 = vmax.f32 %v8132, %v8108
      %v8137 = vmax.f32 %v8133, %v8109
      %v8138 = vmax.f32 %v8134, %v8110
      %v8139 = vmax.f32 %v8135, %v8111
      %v8140 = vmax.f32 %v8136, %v8112
      %v8141 = vmax.f32 %v8137, %v8113
      %v8142 = vmax.f32 %v8138, %v8114
      %v8143 = vmax.f32 %v8139, %v8115
      %v8144 = vmax.f32 %v8140, %v8141
      %v8145 = vmax.f32 %v8142, %v8143
      %v8146 = vmax.f32 %v8144, %v8145
      %8147 = vmax.xlane.f32.xlu0 %v8146
      %v8148 = vpop.xlane.xlu0 %8147
      %v8149 = vrot.slane %v8148, 4
      %v8150 = vmax.f32 %v8148, %v8149
      %v8151 = vrot.slane %v8150, 2
      %v8152 = vmax.f32 %v8150, %v8151
      %v8153 = vrot.slane %v8152, 1
      %v8154 = vmax.f32 %v8152, %v8153
      %s8155 = vtos %v8154
      %s8156 = sadd.s32 %s121, 1
    $region30: #{tpu_custom_call.1} parent=1 // loop_footer
      _
    $region31: #{tpu_custom_call.1} parent=1 // loop_footer_branch
      %120 = sbr.rel target = $region27
    $region32: #{tpu_custom_call.1} parent=1 // loop_exit
      _
    %v8157 = vld [vmem:[#allocation2] sm:$0xff]
    %v8158 = vld [vmem:[#allocation2 + $0x8] sm:$0xff]
    %v8159 = vld [vmem:[#allocation2 + $0x10] sm:$0xff]
    %v8160 = vld [vmem:[#allocation2 + $0x18] sm:$0xff]
    %v8161 = vld [vmem:[#allocation2 + $0x20] sm:$0xff]
    %v8162 = vld [vmem:[#allocation2 + $0x28] sm:$0xff]
    %v8163 = vld [vmem:[#allocation2 + $0x30] sm:$0xff]
    %v8164 = vld [vmem:[#allocation2 + $0x38] sm:$0xff]
    %v8165 = vld [vmem:[#allocation2 + $0x40] sm:$0xff]
    %v8166 = vld [vmem:[#allocation2 + $0x48] sm:$0xff]
    %v8167 = vld [vmem:[#allocation2 + $0x50] sm:$0xff]
    %v8168 = vld [vmem:[#allocation2 + $0x58] sm:$0xff]
    %v8169 = vld [vmem:[#allocation2 + $0x60] sm:$0xff]
    %v8170 = vld [vmem:[#allocation2 + $0x68] sm:$0xff]
    %v8171 = vld [vmem:[#allocation2 + $0x70] sm:$0xff]
    %v8172 = vld [vmem:[#allocation2 + $0x78] sm:$0xff]
    %v8173 = vld [vmem:[#allocation2 + $0x80] sm:$0xff]
    %v8174 = vld [vmem:[#allocation2 + $0x88] sm:$0xff]
    %v8175 = vld [vmem:[#allocation2 + $0x90] sm:$0xff]
    %v8176 = vld [vmem:[#allocation2 + $0x98] sm:$0xff]
    %v8177 = vld [vmem:[#allocation2 + $0xa0] sm:$0xff]
    %v8178 = vld [vmem:[#allocation2 + $0xa8] sm:$0xff]
    %v8179 = vld [vmem:[#allocation2 + $0xb0] sm:$0xff]
    %v8180 = vld [vmem:[#allocation2 + $0xb8] sm:$0xff]
    %v8181 = vld [vmem:[#allocation2 + $0xc0] sm:$0xff]
    %v8182 = vld [vmem:[#allocation2 + $0xc8] sm:$0xff]
    %v8183 = vld [vmem:[#allocation2 + $0xd0] sm:$0xff]
    %v8184 = vld [vmem:[#allocation2 + $0xd8] sm:$0xff]
    %v8185 = vld [vmem:[#allocation2 + $0xe0] sm:$0xff]
    %v8186 = vld [vmem:[#allocation2 + $0xe8] sm:$0xff]
    %v8187 = vld [vmem:[#allocation2 + $0xf0] sm:$0xff]
    %v8188 = vld [vmem:[#allocation2 + $0xf8] sm:$0xff]
    %8189 = vst [vmem:[#allocation9] sm:$0xff] %v8157
    %8190 = vst [vmem:[#allocation9 + $0x8] sm:$0xff] %v8158
    %8191 = vst [vmem:[#allocation9 + $0x10] sm:$0xff] %v8159
    %8192 = vst [vmem:[#allocation9 + $0x18] sm:$0xff] %v8160
    %8193 = vst [vmem:[#allocation9 + $0x20] sm:$0xff] %v8161
    %8194 = vst [vmem:[#allocation9 + $0x28] sm:$0xff] %v8162
    %8195 = vst [vmem:[#allocation9 + $0x30] sm:$0xff] %v8163
    %8196 = vst [vmem:[#allocation9 + $0x38] sm:$0xff] %v8164
    %8197 = vst [vmem:[#allocation9 + $0x40] sm:$0xff] %v8165
    %8198 = vst [vmem:[#allocation9 + $0x48] sm:$0xff] %v8166
    %8199 = vst [vmem:[#allocation9 + $0x50] sm:$0xff] %v8167
    %8200 = vst [vmem:[#allocation9 + $0x58] sm:$0xff] %v8168
    %8201 = vst [vmem:[#allocation9 + $0x60] sm:$0xff] %v8169
    %8202 = vst [vmem:[#allocation9 + $0x68] sm:$0xff] %v8170
    %8203 = vst [vmem:[#allocation9 + $0x70] sm:$0xff] %v8171
    %8204 = vst [vmem:[#allocation9 + $0x78] sm:$0xff] %v8172
    %8205 = vst [vmem:[#allocation9 + $0x80] sm:$0xff] %v8173
    %8206 = vst [vmem:[#allocation9 + $0x88] sm:$0xff] %v8174
    %8207 = vst [vmem:[#allocation9 + $0x90] sm:$0xff] %v8175
    %8208 = vst [vmem:[#allocation9 + $0x98] sm:$0xff] %v8176
    %8209 = vst [vmem:[#allocation9 + $0xa0] sm:$0xff] %v8177
    %8210 = vst [vmem:[#allocation9 + $0xa8] sm:$0xff] %v8178
    %8211 = vst [vmem:[#allocation9 + $0xb0] sm:$0xff] %v8179
    %8212 = vst [vmem:[#allocation9 + $0xb8] sm:$0xff] %v8180
    %8213 = vst [vmem:[#allocation9 + $0xc0] sm:$0xff] %v8181
    %8214 = vst [vmem:[#allocation9 + $0xc8] sm:$0xff] %v8182
    %8215 = vst [vmem:[#allocation9 + $0xd0] sm:$0xff] %v8183
    %8216 = vst [vmem:[#allocation9 + $0xd8] sm:$0xff] %v8184
    %8217 = vst [vmem:[#allocation9 + $0xe0] sm:$0xff] %v8185
    %8218 = vst [vmem:[#allocation9 + $0xe8] sm:$0xff] %v8186
    %8219 = vst [vmem:[#allocation9 + $0xf0] sm:$0xff] %v8187
    %8220 = vst [vmem:[#allocation9 + $0xf8] sm:$0xff] %v8188
    // Predicated region
    $region33: #{tpu_custom_call.1} parent=1 // pred_check
      _
    $region34: #{tpu_custom_call.1} parent=1 // pred_check_branch
      %8222 = sbr.rel (0) target = $region36
    $region35: #{tpu_custom_call.1} parent=1 // pred_region
      %s8224 = ssub.s32 4096, 4096
      %8225 = vsyncadd [#allocation5], %s8224
      %s8226 = sshll.u32 [#allocation9], 4
      %s8227 = int_to_ptr.vmem [resolvable:$true] %s8226
      %8232 = dma.vmem_to_hbm [thread:$0]  %s8227, 4096, %s3, [#allocation5], 256, 256, 16
    $region36: #{tpu_custom_call.1} parent=1 // pred_fallthru
      _
    // Predicated region
    $region37: #{tpu_custom_call.1} parent=1 // pred_check
      _
    $region38: #{tpu_custom_call.1} parent=1 // pred_check_branch
      %8234 = sbr.rel (0) target = $region40
    $region39: #{tpu_custom_call.1} parent=1 // pred_region
      %8235 = dma.done [#allocation5], 4096
    $region40: #{tpu_custom_call.1} parent=1 // pred_fallthru
      _
    %8236 = vsyncpa [#allocation4], 1
    %8237 = vsyncpa [#allocation7], 1
    %8238 = vsyncpa [#allocation5], 1

</llo_original>
